<compile_context>
chip_gen: v6e
topology: v6e:2x2x1
jax: 0.10.0
libtpu: 0.0.40
codegen_flags: <defaults>
</compile_context>

<pallas_src>
import functools

import numpy as np

import jax
import jax.numpy as jnp
from jax.experimental import pallas as pl
from jax.experimental.pallas import tpu as pltpu


_TAPS = [(dh, dw) for dh in range(3) for dw in range(3)]


# ----------------------------------------------------------------------------
# Host-side constant operators (tiny; no O(HW^2) full-resolution operators).
# ----------------------------------------------------------------------------
def _tap_masks(h, w, tile):
    """(9, 1, tile*h*w) 0/1 masks: tap (dh,dw) in-bounds at each per-image pos."""
    m = np.zeros((9, 1, h * w), np.float32)
    for t, (dh, dw) in enumerate(_TAPS):
        for ph in range(h):
            if not 0 <= ph + dh - 1 < h:
                continue
            for pw in range(w):
                if 0 <= pw + dw - 1 < w:
                    m[t, 0, ph * w + pw] = 1.0
    return np.tile(m, (1, 1, tile))


def _subsample_op(h, w, b):
    """(b*h*w, b*(h//2)*(w//2)) stride-2 selection, block-diagonal over b images."""
    ho, wo = h // 2, w // 2
    s = np.zeros((h * w, ho * wo), np.float32)
    for ph in range(ho):
        for pw in range(wo):
            s[(2 * ph) * w + 2 * pw, ph * wo + pw] = 1.0
    return np.kron(np.eye(b, dtype=np.float32), s)


def _upsample_op(h, w, b):
    """Bilinear x2 (align_corners=False) as (b*h*w, b*4*h*w), block-diag over b."""
    def lin(n):
        m = np.zeros((2 * n, n), np.float32)
        for o in range(2 * n):
            src = max((o + 0.5) * 0.5 - 0.5, 0.0)
            x0 = int(np.floor(src))
            x1 = min(x0 + 1, n - 1)
            lam = src - x0
            m[o, x0] += 1.0 - lam
            m[o, x1] += lam
        return m

    mh, mw = lin(h), lin(w)
    op = np.einsum("pq,rs->qspr", mh, mw).reshape(h * w, 4 * h * w).astype(np.float32)
    return np.kron(np.eye(b, dtype=np.float32), op)


def _shift_mats(h, w, b):
    """(9, b*h*w, b*h*w) 0/1 shift+boundary operators (quarter resolution only)."""
    hw = h * w
    s = np.zeros((9, hw, hw), np.float32)
    for t, (dh, dw) in enumerate(_TAPS):
        for ph in range(h):
            qh = ph + dh - 1
            if not 0 <= qh < h:
                continue
            for pw in range(w):
                qw = pw + dw - 1
                if 0 <= qw < w:
                    s[t, qh * w + qw, ph * w + pw] = 1.0
    eye = np.eye(b, dtype=np.float32)
    return np.stack([np.kron(eye, s[t]) for t in range(9)])


def build_operators(H, W, B, N):
    assert H % 4 == 0 and W % 4 == 0, "H, W must be divisible by 4"
    assert (B * H * W) % 512 == 0, "need 128-lane alignment at full/half levels"
    ops = {
        "mask_full": _tap_masks(H, W, N * B),              # (9, 1, N*B*H*W)
        "mask_half": _tap_masks(H // 2, W // 2, B),        # (9, 1, B*H*W/4)
        "shift_quarter": _shift_mats(H // 4, W // 4, B),   # (9, B*H*W/16, B*H*W/16)
        "sub_full": _subsample_op(H, W, B),                # (B*HW, B*HW/4)
        "sub_half": _subsample_op(H // 2, W // 2, B),      # (B*HW/4, B*HW/16)
        "up_half": _upsample_op(H // 4, W // 4, B),        # (B*HW/16, B*HW/4)
        "up_full": _upsample_op(H // 2, W // 2, B),        # (B*HW/4, B*HW)
    }
    return {k: jnp.asarray(v) for k, v in ops.items()}


# ----------------------------------------------------------------------------
# The fused kernel: whole Fea_Tfusion forward, single invocation (no grid).
# Activation layout: (C, lanes), lanes = [frame, batch, h*w] (batch+frames
# folded onto the lane axis).
# ----------------------------------------------------------------------------
def _fea_tfusion_kernel(
        x_ref,
        w_tatt_ref, w_s1_ref, w_s2_ref, w_s3_ref, w_s4_ref, w_s5_ref,
        w_l1_ref, w_l2_ref, w_l3_ref, w_a1_ref, w_a2_ref, w_f_ref,
        b_all_ref,
        mask_full_ref, mask_half_ref, shiftq_ref,
        sub_full_ref, sub_half_ref, up_half_ref, up_full_ref,
        o_ref,
        *, C, N, B, H, W):
    f32 = jnp.float32
    HW = H * W
    BHW = B * HW

    # Bias slots in b_all_ref (each C rows): 0 tAtt_2, 1 tAtt_1, 2 sAtt_1,
    # 3 sAtt_2, 4 sAtt_3, 5 sAtt_4, 6 sAtt_5, 7 sAtt_L1, 8 sAtt_L2, 9 sAtt_L3,
    # 10 sAtt_add_1, 11 sAtt_add_2, 12 fea_fusion.
    def bias(slot, n=1):
        return b_all_ref[pl.ds(slot * C, n * C), :]

    def lrelu(v):                                    # LeakyReLU(0.1)
        return jnp.where(v >= 0.0, v, 0.1 * v)

    def sigmoid(v):                                  # EUP exp + approx reciprocal
        return pl.reciprocal(1.0 + jnp.exp(-v), approx=True)

    def rolled(x, off):
        """x shifted so result[p] = x[p + off] (wrap lands on masked columns)."""
        L = x.shape[1]
        if off % L == 0:
            return x
        return pltpu.roll(x, shift=(-off) % L, axis=1)

    def im2col_roll(x, mask_ref, w_img):
        """x: (Cin, L) -> (9*Cin, L); masks zero out-of-image taps."""
        L = x.shape[1]
        parts = []
        for t, (dh, dw) in enumerate(_TAPS):
            off = (dh - 1) * w_img + (dw - 1)
            m = mask_ref[t][:, :L]                   # per-image periodic mask
            parts.append(rolled(x, off) * m)
        return jnp.concatenate(parts, axis=0)

    def im2col_shift(x, s_ref):
        """Quarter level (lanes < 128): im2col via 0/1 shift matmuls."""
        parts = [jnp.dot(x, s_ref[t], preferred_element_type=f32) for t in range(9)]
        return jnp.concatenate(parts, axis=0)

    def conv1x1(x, w_ref, slot):
        return jnp.dot(w_ref[...], x, preferred_element_type=f32) + bias(slot)

    def conv3x3_roll(x, w_ref, slot, mask_ref, w_img):
        col = im2col_roll(x, mask_ref, w_img)
        return jnp.dot(w_ref[...], col, preferred_element_type=f32) + bias(slot)

    def conv3x3_shift(x, w_ref, slot, s_ref):
        col = im2col_shift(x, s_ref)
        return jnp.dot(w_ref[...], col, preferred_element_type=f32) + bias(slot)

    def pool_max_avg(x, mask_ref, w_img, sub_ref):
        """3x3 / stride 2 / pad 1 max+avg pool -> (2C, L/4) stacked [max; avg]."""
        L = x.shape[1]
        mx = None
        sm = None
        for t, (dh, dw) in enumerate(_TAPS):
            off = (dh - 1) * w_img + (dw - 1)
            r = rolled(x, off)
            m = mask_ref[t][:, :L]
            rz = r * m                               # zero-padded tap (avg, incl. pad)
            rm = rz - (1.0 - m) * 1e30               # -inf-ish where out of bounds (max)
            sm = rz if sm is None else sm + rz
            mx = rm if mx is None else jnp.maximum(mx, rm)
        stacked = jnp.concatenate([mx, sm * (1.0 / 9.0)], axis=0)   # (2C, L)
        return jnp.dot(stacked, sub_ref[...], preferred_element_type=f32)

    # ---------------- temporal attention -> extraction_fea ----------------
    x_all = x_ref[...]                                        # (C, N*B*HW)
    col_all = im2col_roll(x_all, mask_full_ref, W)            # (9C, N*B*HW)
    # One fused matmul: rows 0:C = tAtt_2 (all frames), rows C:2C = tAtt_1.
    emb = jnp.dot(w_tatt_ref[...], col_all,
                  preferred_element_type=f32) + bias(0, 2)    # (2C, N*B*HW)
    emb_nbr = emb[:C]                                         # tAtt_2(frame i) for all i
    emb_ref = emb[C:, :BHW]                                   # tAtt_1(frame 0)

    fea0 = x_all[:, :BHW]                                     # frame 0, (C, B*HW)
    extraction = jnp.zeros((C, BHW), f32)
    for i in range(N):
        fea_i = x_all[:, i * BHW:(i + 1) * BHW]
        nbr_i = emb_nbr[:, i * BHW:(i + 1) * BHW]
        cor = jnp.mean(nbr_i * emb_ref, axis=0, keepdims=True)   # mean over channels
        extraction = extraction + fea_i * sigmoid(cor)
    extraction = extraction * (1.0 / N)                       # mean over frames

    # ---------------- spatial attention pyramid ----------------
    att = lrelu(conv1x1(fea0, w_s1_ref, 2))                                 # (C, B*HW)
    pooled = pool_max_avg(att, mask_full_ref, W, sub_full_ref)              # (2C, B*HW/4)
    att = lrelu(jnp.dot(w_s2_ref[...], pooled, preferred_element_type=f32)
                + bias(3))                                                  # (C, B*HW/4)

    att_l = lrelu(conv1x1(att, w_l1_ref, 7))                                # (C, B*HW/4)
    pooled_l = pool_max_avg(att_l, mask_half_ref, W // 2, sub_half_ref)     # (2C, B*HW/16)
    att_l = lrelu(conv3x3_shift(pooled_l, w_l2_ref, 8, shiftq_ref))         # (C, B*HW/16)
    att_l = lrelu(conv3x3_shift(att_l, w_l3_ref, 9, shiftq_ref))
    att_l = jnp.dot(att_l, up_half_ref[...], preferred_element_type=f32)    # (C, B*HW/4)

    att = lrelu(conv3x3_roll(att, w_s3_ref, 4, mask_half_ref, W // 2))      # (C, B*HW/4)
    att = att + att_l
    att = lrelu(conv1x1(att, w_s4_ref, 5))
    att = jnp.dot(att, up_full_ref[...], preferred_element_type=f32)        # (C, B*HW)
    att = conv3x3_roll(att, w_s5_ref, 6, mask_full_ref, W)                  # no activation

    att_add = conv1x1(lrelu(conv1x1(att, w_a1_ref, 10)), w_a2_ref, 11)
    att = sigmoid(att)
    fea_sp = fea0 * att * 2.0 + att_add

    fused = jnp.concatenate([extraction, fea_sp], axis=0)     # cat([extraction, fea], C)
    out = lrelu(jnp.dot(w_f_ref[...], fused, preferred_element_type=f32) + bias(12))
    o_ref[...] = out.astype(o_ref.dtype)


# ----------------------------------------------------------------------------
# Module wrapper
# ----------------------------------------------------------------------------
def fea_tfusion_forward(x, params, ops):
    """x: (B, N, C, H, W) float32 (PyTorch NCHW order). Returns (B, C, H, W)."""
    B, N, C, H, W = x.shape
    assert C % 8 == 0, "C must be a multiple of 8 (sublane tile)"
    HW = H * W
    # Layout plumbing only: channels on sublanes, [frame, batch, h*w] on lanes.
    x_all = jnp.transpose(x.reshape(B, N, C, HW), (2, 1, 0, 3)).reshape(C, N * B * HW)

    inputs = [
        x_all,
        params["w_tatt"], params["w_s1"], params["w_s2"], params["w_s3"],
        params["w_s4"], params["w_s5"], params["w_l1"], params["w_l2"],
        params["w_l3"], params["w_a1"], params["w_a2"], params["w_f"],
        params["b_all"],
        ops["mask_full"], ops["mask_half"], ops["shift_quarter"],
        ops["sub_full"], ops["sub_half"], ops["up_half"], ops["up_full"],
    ]

    kernel = functools.partial(_fea_tfusion_kernel, C=C, N=N, B=B, H=H, W=W)
    out = pl.pallas_call(
        kernel,
        out_shape=jax.ShapeDtypeStruct((C, B * HW), x.dtype),
        compiler_params=pltpu.CompilerParams(vmem_limit_bytes=32 * 1024 * 1024),
    )(*inputs)
    return jnp.transpose(out.reshape(C, B, H, W), (1, 0, 2, 3))


# ----------------------------------------------------------------------------
# Deterministic synthetic parameters in the kernel's matmul layout:
#   3x3 conv -> (Cout, 9*Cin) with K ordered [tap (dh*3+dw) outer, cin inner]
#   1x1 conv -> (Cout, Cin); cat-convs keep the cat order on the Cin axis
#   biases packed into one (13*C, 1) array in the kernel's slot order
# TODO(synk): real PyTorch weights map as 3x3 (Cout,Cin,3,3) ->
#             w.permute(0,2,3,1).reshape(Cout, 9*Cin); 1x1 -> w[:, :, 0, 0].
# ----------------------------------------------------------------------------
def init_params(key, c):
    ks = iter(jax.random.split(key, 32))

    def w3(cin):
        return jax.random.normal(next(ks), (c, 9 * cin), jnp.float32) / float(9 * cin) ** 0.5

    def w1(cin):
        return jax.random.normal(next(ks), (c, cin), jnp.float32) / float(cin) ** 0.5

    def b():
        return jax.random.normal(next(ks), (c, 1), jnp.float32) * 0.01

    w_t1, b_t1 = w3(c), b()
    w_t2, b_t2 = w3(c), b()
    w_s1, b_s1 = w1(c), b()
    w_s2, b_s2 = w1(2 * c), b()      # input = cat([maxpool, avgpool], C)
    w_s3, b_s3 = w3(c), b()
    w_s4, b_s4 = w1(c), b()
    w_s5, b_s5 = w3(c), b()
    w_l1, b_l1 = w1(c), b()
    w_l2, b_l2 = w3(2 * c), b()      # input = cat([maxpool, avgpool], C)
    w_l3, b_l3 = w3(c), b()
    w_a1, b_a1 = w1(c), b()
    w_a2, b_a2 = w1(c), b()
    w_f, b_f = w1(2 * c), b()        # input = cat([extraction_fea, fea], C)

    b_all = jnp.concatenate(
        [b_t2, b_t1, b_s1, b_s2, b_s3, b_s4, b_s5,
         b_l1, b_l2, b_l3, b_a1, b_a2, b_f], axis=0)         # (13*C, 1)

    return {
        "w_tatt": jnp.concatenate([w_t2, w_t1], axis=0),     # rows: [tAtt_2 ; tAtt_1]
        "w_s1": w_s1, "w_s2": w_s2, "w_s3": w_s3, "w_s4": w_s4, "w_s5": w_s5,
        "w_l1": w_l1, "w_l2": w_l2, "w_l3": w_l3,
        "w_a1": w_a1, "w_a2": w_a2, "w_f": w_f,
        "b_all": b_all,
    }


if __name__ == "__main__":
    B, N, C, H, W = 2, 3, 16, 16, 16                 # outchannel = 16 (small test size)

    key = jax.random.PRNGKey(0)
    kx, kp = jax.random.split(key)
    x = jax.random.normal(kx, (B, N, C, H, W), jnp.float32)
    params = init_params(kp, C)
    ops = build_operators(H, W, B, N)

    fwd = jax.jit(fea_tfusion_forward)
    out = fwd(x, params, ops)
    jax.block_until_ready(out)

    assert out.shape == (B, C, H, W), out.shape
    assert out.dtype == jnp.float32
    assert bool(jnp.all(jnp.isfinite(out)))
    print("KERNEL_OK")
</pallas_src>

<mosaic_0001>
module attributes {stable_mosaic.version = 11 : i64} {
  func.func @_fea_tfusion_kernel(%arg0: memref<16x1536xf32, #tpu.memory_space<vmem>>, %arg1: memref<32x144xf32, #tpu.memory_space<vmem>>, %arg2: memref<16x16xf32, #tpu.memory_space<vmem>>, %arg3: memref<16x32xf32, #tpu.memory_space<vmem>>, %arg4: memref<16x144xf32, #tpu.memory_space<vmem>>, %arg5: memref<16x16xf32, #tpu.memory_space<vmem>>, %arg6: memref<16x144xf32, #tpu.memory_space<vmem>>, %arg7: memref<16x16xf32, #tpu.memory_space<vmem>>, %arg8: memref<16x288xf32, #tpu.memory_space<vmem>>, %arg9: memref<16x144xf32, #tpu.memory_space<vmem>>, %arg10: memref<16x16xf32, #tpu.memory_space<vmem>>, %arg11: memref<16x16xf32, #tpu.memory_space<vmem>>, %arg12: memref<16x32xf32, #tpu.memory_space<vmem>>, %arg13: memref<208x1xf32, #tpu.memory_space<vmem>>, %arg14: memref<9x1x1536xf32, #tpu.memory_space<vmem>>, %arg15: memref<9x1x128xf32, #tpu.memory_space<vmem>>, %arg16: memref<9x32x32xf32, #tpu.memory_space<vmem>>, %arg17: memref<512x128xf32, #tpu.memory_space<vmem>>, %arg18: memref<128x32xf32, #tpu.memory_space<vmem>>, %arg19: memref<32x128xf32, #tpu.memory_space<vmem>>, %arg20: memref<128x512xf32, #tpu.memory_space<vmem>>, %arg21: memref<16x512xf32, #tpu.memory_space<vmem>>) attributes {dimension_semantics = [], scalar_prefetch = 0 : i64, scratch_operands = 0 : i64, tpu.core_type = #tpu.core_type<tc>} {
    %c0 = arith.constant 0 : index
    %c0_0 = arith.constant 0 : index
    %0 = vector.load %arg0[%c0, %c0_0] : memref<16x1536xf32, #tpu.memory_space<vmem>>, vector<16x1536xf32>
    %c0_1 = arith.constant 0 : index
    %c0_2 = arith.constant 0 : index
    %c0_3 = arith.constant 0 : index
    %1 = vector.load %arg14[%c0_1, %c0_2, %c0_3] : memref<9x1x1536xf32, #tpu.memory_space<vmem>>, vector<1x1x1536xf32>
    %2 = vector.shape_cast %1 : vector<1x1x1536xf32> to vector<1x1536xf32>
    %c17_i32 = arith.constant 17 : i32
    %3 = tpu.dynamic_rotate %0 by %c17_i32 dim 1 : vector<16x1536xf32>, i32 -> vector<16x1536xf32>
    %4 = vector.broadcast %2 : vector<1x1536xf32> to vector<16x1536xf32>
    %5 = arith.mulf %3, %4 : vector<16x1536xf32>
    %c1 = arith.constant 1 : index
    %c0_4 = arith.constant 0 : index
    %c0_5 = arith.constant 0 : index
    %6 = vector.load %arg14[%c1, %c0_4, %c0_5] : memref<9x1x1536xf32, #tpu.memory_space<vmem>>, vector<1x1x1536xf32>
    %7 = vector.shape_cast %6 : vector<1x1x1536xf32> to vector<1x1536xf32>
    %c16_i32 = arith.constant 16 : i32
    %8 = tpu.dynamic_rotate %0 by %c16_i32 dim 1 : vector<16x1536xf32>, i32 -> vector<16x1536xf32>
    %9 = vector.broadcast %7 : vector<1x1536xf32> to vector<16x1536xf32>
    %10 = arith.mulf %8, %9 : vector<16x1536xf32>
    %c2 = arith.constant 2 : index
    %c0_6 = arith.constant 0 : index
    %c0_7 = arith.constant 0 : index
    %11 = vector.load %arg14[%c2, %c0_6, %c0_7] : memref<9x1x1536xf32, #tpu.memory_space<vmem>>, vector<1x1x1536xf32>
    %12 = vector.shape_cast %11 : vector<1x1x1536xf32> to vector<1x1536xf32>
    %c15_i32 = arith.constant 15 : i32
    %13 = tpu.dynamic_rotate %0 by %c15_i32 dim 1 : vector<16x1536xf32>, i32 -> vector<16x1536xf32>
    %14 = vector.broadcast %12 : vector<1x1536xf32> to vector<16x1536xf32>
    %15 = arith.mulf %13, %14 : vector<16x1536xf32>
    %c3 = arith.constant 3 : index
    %c0_8 = arith.constant 0 : index
    %c0_9 = arith.constant 0 : index
    %16 = vector.load %arg14[%c3, %c0_8, %c0_9] : memref<9x1x1536xf32, #tpu.memory_space<vmem>>, vector<1x1x1536xf32>
    %17 = vector.shape_cast %16 : vector<1x1x1536xf32> to vector<1x1536xf32>
    %c1_i32 = arith.constant 1 : i32
    %18 = tpu.dynamic_rotate %0 by %c1_i32 dim 1 : vector<16x1536xf32>, i32 -> vector<16x1536xf32>
    %19 = vector.broadcast %17 : vector<1x1536xf32> to vector<16x1536xf32>
    %20 = arith.mulf %18, %19 : vector<16x1536xf32>
    %c4 = arith.constant 4 : index
    %c0_10 = arith.constant 0 : index
    %c0_11 = arith.constant 0 : index
    %21 = vector.load %arg14[%c4, %c0_10, %c0_11] : memref<9x1x1536xf32, #tpu.memory_space<vmem>>, vector<1x1x1536xf32>
    %22 = vector.shape_cast %21 : vector<1x1x1536xf32> to vector<1x1536xf32>
    %23 = vector.broadcast %22 : vector<1x1536xf32> to vector<16x1536xf32>
    %24 = arith.mulf %0, %23 : vector<16x1536xf32>
    %c5 = arith.constant 5 : index
    %c0_12 = arith.constant 0 : index
    %c0_13 = arith.constant 0 : index
    %25 = vector.load %arg14[%c5, %c0_12, %c0_13] : memref<9x1x1536xf32, #tpu.memory_space<vmem>>, vector<1x1x1536xf32>
    %26 = vector.shape_cast %25 : vector<1x1x1536xf32> to vector<1x1536xf32>
    %c1535_i32 = arith.constant 1535 : i32
    %27 = tpu.dynamic_rotate %0 by %c1535_i32 dim 1 : vector<16x1536xf32>, i32 -> vector<16x1536xf32>
    %28 = vector.broadcast %26 : vector<1x1536xf32> to vector<16x1536xf32>
    %29 = arith.mulf %27, %28 : vector<16x1536xf32>
    %c6 = arith.constant 6 : index
    %c0_14 = arith.constant 0 : index
    %c0_15 = arith.constant 0 : index
    %30 = vector.load %arg14[%c6, %c0_14, %c0_15] : memref<9x1x1536xf32, #tpu.memory_space<vmem>>, vector<1x1x1536xf32>
    %31 = vector.shape_cast %30 : vector<1x1x1536xf32> to vector<1x1536xf32>
    %c1521_i32 = arith.constant 1521 : i32
    %32 = tpu.dynamic_rotate %0 by %c1521_i32 dim 1 : vector<16x1536xf32>, i32 -> vector<16x1536xf32>
    %33 = vector.broadcast %31 : vector<1x1536xf32> to vector<16x1536xf32>
    %34 = arith.mulf %32, %33 : vector<16x1536xf32>
    %c7 = arith.constant 7 : index
    %c0_16 = arith.constant 0 : index
    %c0_17 = arith.constant 0 : index
    %35 = vector.load %arg14[%c7, %c0_16, %c0_17] : memref<9x1x1536xf32, #tpu.memory_space<vmem>>, vector<1x1x1536xf32>
    %36 = vector.shape_cast %35 : vector<1x1x1536xf32> to vector<1x1536xf32>
    %c1520_i32 = arith.constant 1520 : i32
    %37 = tpu.dynamic_rotate %0 by %c1520_i32 dim 1 : vector<16x1536xf32>, i32 -> vector<16x1536xf32>
    %38 = vector.broadcast %36 : vector<1x1536xf32> to vector<16x1536xf32>
    %39 = arith.mulf %37, %38 : vector<16x1536xf32>
    %c8 = arith.constant 8 : index
    %c0_18 = arith.constant 0 : index
    %c0_19 = arith.constant 0 : index
    %40 = vector.load %arg14[%c8, %c0_18, %c0_19] : memref<9x1x1536xf32, #tpu.memory_space<vmem>>, vector<1x1x1536xf32>
    %41 = vector.shape_cast %40 : vector<1x1x1536xf32> to vector<1x1536xf32>
    %c1519_i32 = arith.constant 1519 : i32
    %42 = tpu.dynamic_rotate %0 by %c1519_i32 dim 1 : vector<16x1536xf32>, i32 -> vector<16x1536xf32>
    %43 = vector.broadcast %41 : vector<1x1536xf32> to vector<16x1536xf32>
    %44 = arith.mulf %42, %43 : vector<16x1536xf32>
    %45 = tpu.concatenate %5, %10, %15, %20, %24, %29, %34, %39, %44 in 0 : vector<16x1536xf32>, vector<16x1536xf32>, vector<16x1536xf32>, vector<16x1536xf32>, vector<16x1536xf32>, vector<16x1536xf32>, vector<16x1536xf32>, vector<16x1536xf32>, vector<16x1536xf32> -> vector<144x1536xf32>
    %c0_20 = arith.constant 0 : index
    %c0_21 = arith.constant 0 : index
    %46 = vector.load %arg1[%c0_20, %c0_21] : memref<32x144xf32, #tpu.memory_space<vmem>>, vector<32x144xf32>
    %cst = arith.constant dense<0.000000e+00> : vector<32x1536xf32>
    %47 = tpu.matmul %46, %45, %cst {dimension_numbers = #tpu.dot_dimension_numbers<[1], [0], [0], [1], [0, 0, 1, 1], [], []>} : vector<32x144xf32>, vector<144x1536xf32>, vector<32x1536xf32> -> vector<32x1536xf32>
    %c0_22 = arith.constant 0 : index
    %c0_23 = arith.constant 0 : index
    %48 = vector.load %arg13[%c0_22, %c0_23] : memref<208x1xf32, #tpu.memory_space<vmem>>, vector<32x1xf32>
    %49 = vector.broadcast %48 : vector<32x1xf32> to vector<32x1536xf32>
    %50 = arith.addf %47, %49 : vector<32x1536xf32>
    %51 = vector.extract_strided_slice %50 {offsets = [0, 0], sizes = [16, 1536], strides = [1, 1]} : vector<32x1536xf32> to vector<16x1536xf32>
    %52 = vector.extract_strided_slice %50 {offsets = [16, 0], sizes = [16, 512], strides = [1, 1]} : vector<32x1536xf32> to vector<16x512xf32>
    %53 = vector.extract_strided_slice %0 {offsets = [0, 0], sizes = [16, 512], strides = [1, 1]} : vector<16x1536xf32> to vector<16x512xf32>
    %cst_24 = arith.constant 0.000000e+00 : f32
    %54 = vector.broadcast %cst_24 : f32 to vector<16x512xf32>
    %55 = vector.extract_strided_slice %0 {offsets = [0, 0], sizes = [16, 512], strides = [1, 1]} : vector<16x1536xf32> to vector<16x512xf32>
    %56 = vector.extract_strided_slice %51 {offsets = [0, 0], sizes = [16, 512], strides = [1, 1]} : vector<16x1536xf32> to vector<16x512xf32>
    %57 = arith.mulf %56, %52 : vector<16x512xf32>
    %cst_25 = arith.constant dense<0.000000e+00> : vector<512xf32>
    %58 = vector.multi_reduction <add>, %57, %cst_25 [0] : vector<16x512xf32> to vector<512xf32>
    %59 = vector.shape_cast %58 : vector<512xf32> to vector<1x512xf32>
    %cst_26 = arith.constant 1.600000e+01 : f32
    %60 = vector.broadcast %cst_26 : f32 to vector<1x512xf32>
    %61 = arith.divf %59, %60 : vector<1x512xf32>
    %cst_27 = arith.constant 0.000000e+00 : f32
    %62 = vector.broadcast %cst_27 : f32 to vector<1x512xf32>
    %63 = arith.subf %62, %61 : vector<1x512xf32>
    %64 = math.exp %63 : vector<1x512xf32>
    %cst_28 = arith.constant 1.000000e+00 : f32
    %65 = vector.broadcast %cst_28 : f32 to vector<1x512xf32>
    %66 = arith.addf %65, %64 : vector<1x512xf32>
    %67 = tpu.reciprocal %66 {approx = true} : vector<1x512xf32> -> vector<1x512xf32>
    %68 = vector.broadcast %67 : vector<1x512xf32> to vector<16x512xf32>
    %69 = arith.mulf %55, %68 : vector<16x512xf32>
    %70 = arith.addf %54, %69 : vector<16x512xf32>
    %71 = vector.extract_strided_slice %0 {offsets = [0, 512], sizes = [16, 512], strides = [1, 1]} : vector<16x1536xf32> to vector<16x512xf32>
    %72 = vector.extract_strided_slice %51 {offsets = [0, 512], sizes = [16, 512], strides = [1, 1]} : vector<16x1536xf32> to vector<16x512xf32>
    %73 = arith.mulf %72, %52 : vector<16x512xf32>
    %cst_29 = arith.constant dense<0.000000e+00> : vector<512xf32>
    %74 = vector.multi_reduction <add>, %73, %cst_29 [0] : vector<16x512xf32> to vector<512xf32>
    %75 = vector.shape_cast %74 : vector<512xf32> to vector<1x512xf32>
    %cst_30 = arith.constant 1.600000e+01 : f32
    %76 = vector.broadcast %cst_30 : f32 to vector<1x512xf32>
    %77 = arith.divf %75, %76 : vector<1x512xf32>
    %cst_31 = arith.constant 0.000000e+00 : f32
    %78 = vector.broadcast %cst_31 : f32 to vector<1x512xf32>
    %79 = arith.subf %78, %77 : vector<1x512xf32>
    %80 = math.exp %79 : vector<1x512xf32>
    %cst_32 = arith.constant 1.000000e+00 : f32
    %81 = vector.broadcast %cst_32 : f32 to vector<1x512xf32>
    %82 = arith.addf %81, %80 : vector<1x512xf32>
    %83 = tpu.reciprocal %82 {approx = true} : vector<1x512xf32> -> vector<1x512xf32>
    %84 = vector.broadcast %83 : vector<1x512xf32> to vector<16x512xf32>
    %85 = arith.mulf %71, %84 : vector<16x512xf32>
    %86 = arith.addf %70, %85 : vector<16x512xf32>
    %87 = vector.extract_strided_slice %0 {offsets = [0, 1024], sizes = [16, 512], strides = [1, 1]} : vector<16x1536xf32> to vector<16x512xf32>
    %88 = vector.extract_strided_slice %51 {offsets = [0, 1024], sizes = [16, 512], strides = [1, 1]} : vector<16x1536xf32> to vector<16x512xf32>
    %89 = arith.mulf %88, %52 : vector<16x512xf32>
    %cst_33 = arith.constant dense<0.000000e+00> : vector<512xf32>
    %90 = vector.multi_reduction <add>, %89, %cst_33 [0] : vector<16x512xf32> to vector<512xf32>
    %91 = vector.shape_cast %90 : vector<512xf32> to vector<1x512xf32>
    %cst_34 = arith.constant 1.600000e+01 : f32
    %92 = vector.broadcast %cst_34 : f32 to vector<1x512xf32>
    %93 = arith.divf %91, %92 : vector<1x512xf32>
    %cst_35 = arith.constant 0.000000e+00 : f32
    %94 = vector.broadcast %cst_35 : f32 to vector<1x512xf32>
    %95 = arith.subf %94, %93 : vector<1x512xf32>
    %96 = math.exp %95 : vector<1x512xf32>
    %cst_36 = arith.constant 1.000000e+00 : f32
    %97 = vector.broadcast %cst_36 : f32 to vector<1x512xf32>
    %98 = arith.addf %97, %96 : vector<1x512xf32>
    %99 = tpu.reciprocal %98 {approx = true} : vector<1x512xf32> -> vector<1x512xf32>
    %100 = vector.broadcast %99 : vector<1x512xf32> to vector<16x512xf32>
    %101 = arith.mulf %87, %100 : vector<16x512xf32>
    %102 = arith.addf %86, %101 : vector<16x512xf32>
    %cst_37 = arith.constant 0.333333343 : f32
    %103 = vector.broadcast %cst_37 : f32 to vector<16x512xf32>
    %104 = arith.mulf %102, %103 : vector<16x512xf32>
    %c0_38 = arith.constant 0 : index
    %c0_39 = arith.constant 0 : index
    %105 = vector.load %arg2[%c0_38, %c0_39] : memref<16x16xf32, #tpu.memory_space<vmem>>, vector<16x16xf32>
    %cst_40 = arith.constant dense<0.000000e+00> : vector<16x512xf32>
    %106 = tpu.matmul %105, %53, %cst_40 {dimension_numbers = #tpu.dot_dimension_numbers<[1], [0], [0], [1], [0, 0, 1, 1], [], []>} : vector<16x16xf32>, vector<16x512xf32>, vector<16x512xf32> -> vector<16x512xf32>
    %c32 = arith.constant 32 : index
    %c0_41 = arith.constant 0 : index
    %107 = vector.load %arg13[%c32, %c0_41] : memref<208x1xf32, #tpu.memory_space<vmem>>, vector<16x1xf32>
    %108 = vector.broadcast %107 : vector<16x1xf32> to vector<16x512xf32>
    %109 = arith.addf %106, %108 : vector<16x512xf32>
    %cst_42 = arith.constant 0.000000e+00 : f32
    %110 = vector.broadcast %cst_42 : f32 to vector<16x512xf32>
    %111 = arith.cmpf oge, %109, %110 : vector<16x512xf32>
    %cst_43 = arith.constant 1.000000e-01 : f32
    %112 = vector.broadcast %cst_43 : f32 to vector<16x512xf32>
    %113 = arith.mulf %112, %109 : vector<16x512xf32>
    %114 = arith.select %111, %109, %113 : vector<16x512xi1>, vector<16x512xf32>
    %c17_i32_44 = arith.constant 17 : i32
    %115 = tpu.dynamic_rotate %114 by %c17_i32_44 dim 1 : vector<16x512xf32>, i32 -> vector<16x512xf32>
    %c0_45 = arith.constant 0 : index
    %c0_46 = arith.constant 0 : index
    %c0_47 = arith.constant 0 : index
    %116 = vector.load %arg14[%c0_45, %c0_46, %c0_47] : memref<9x1x1536xf32, #tpu.memory_space<vmem>>, vector<1x1x1536xf32>
    %117 = vector.shape_cast %116 : vector<1x1x1536xf32> to vector<1x1536xf32>
    %118 = vector.extract_strided_slice %117 {offsets = [0, 0], sizes = [1, 512], strides = [1, 1]} : vector<1x1536xf32> to vector<1x512xf32>
    %119 = vector.broadcast %118 : vector<1x512xf32> to vector<16x512xf32>
    %120 = arith.mulf %115, %119 : vector<16x512xf32>
    %cst_48 = arith.constant 1.000000e+00 : f32
    %121 = vector.broadcast %cst_48 : f32 to vector<1x512xf32>
    %122 = arith.subf %121, %118 : vector<1x512xf32>
    %cst_49 = arith.constant 1.000000e+30 : f32
    %123 = vector.broadcast %cst_49 : f32 to vector<1x512xf32>
    %124 = arith.mulf %122, %123 : vector<1x512xf32>
    %125 = vector.broadcast %124 : vector<1x512xf32> to vector<16x512xf32>
    %126 = arith.subf %120, %125 : vector<16x512xf32>
    %c16_i32_50 = arith.constant 16 : i32
    %127 = tpu.dynamic_rotate %114 by %c16_i32_50 dim 1 : vector<16x512xf32>, i32 -> vector<16x512xf32>
    %c1_51 = arith.constant 1 : index
    %c0_52 = arith.constant 0 : index
    %c0_53 = arith.constant 0 : index
    %128 = vector.load %arg14[%c1_51, %c0_52, %c0_53] : memref<9x1x1536xf32, #tpu.memory_space<vmem>>, vector<1x1x1536xf32>
    %129 = vector.shape_cast %128 : vector<1x1x1536xf32> to vector<1x1536xf32>
    %130 = vector.extract_strided_slice %129 {offsets = [0, 0], sizes = [1, 512], strides = [1, 1]} : vector<1x1536xf32> to vector<1x512xf32>
    %131 = vector.broadcast %130 : vector<1x512xf32> to vector<16x512xf32>
    %132 = arith.mulf %127, %131 : vector<16x512xf32>
    %cst_54 = arith.constant 1.000000e+00 : f32
    %133 = vector.broadcast %cst_54 : f32 to vector<1x512xf32>
    %134 = arith.subf %133, %130 : vector<1x512xf32>
    %cst_55 = arith.constant 1.000000e+30 : f32
    %135 = vector.broadcast %cst_55 : f32 to vector<1x512xf32>
    %136 = arith.mulf %134, %135 : vector<1x512xf32>
    %137 = vector.broadcast %136 : vector<1x512xf32> to vector<16x512xf32>
    %138 = arith.subf %132, %137 : vector<16x512xf32>
    %139 = arith.addf %120, %132 : vector<16x512xf32>
    %140 = arith.maximumf %126, %138 : vector<16x512xf32>
    %c15_i32_56 = arith.constant 15 : i32
    %141 = tpu.dynamic_rotate %114 by %c15_i32_56 dim 1 : vector<16x512xf32>, i32 -> vector<16x512xf32>
    %c2_57 = arith.constant 2 : index
    %c0_58 = arith.constant 0 : index
    %c0_59 = arith.constant 0 : index
    %142 = vector.load %arg14[%c2_57, %c0_58, %c0_59] : memref<9x1x1536xf32, #tpu.memory_space<vmem>>, vector<1x1x1536xf32>
    %143 = vector.shape_cast %142 : vector<1x1x1536xf32> to vector<1x1536xf32>
    %144 = vector.extract_strided_slice %143 {offsets = [0, 0], sizes = [1, 512], strides = [1, 1]} : vector<1x1536xf32> to vector<1x512xf32>
    %145 = vector.broadcast %144 : vector<1x512xf32> to vector<16x512xf32>
    %146 = arith.mulf %141, %145 : vector<16x512xf32>
    %cst_60 = arith.constant 1.000000e+00 : f32
    %147 = vector.broadcast %cst_60 : f32 to vector<1x512xf32>
    %148 = arith.subf %147, %144 : vector<1x512xf32>
    %cst_61 = arith.constant 1.000000e+30 : f32
    %149 = vector.broadcast %cst_61 : f32 to vector<1x512xf32>
    %150 = arith.mulf %148, %149 : vector<1x512xf32>
    %151 = vector.broadcast %150 : vector<1x512xf32> to vector<16x512xf32>
    %152 = arith.subf %146, %151 : vector<16x512xf32>
    %153 = arith.addf %139, %146 : vector<16x512xf32>
    %154 = arith.maximumf %140, %152 : vector<16x512xf32>
    %c1_i32_62 = arith.constant 1 : i32
    %155 = tpu.dynamic_rotate %114 by %c1_i32_62 dim 1 : vector<16x512xf32>, i32 -> vector<16x512xf32>
    %c3_63 = arith.constant 3 : index
    %c0_64 = arith.constant 0 : index
    %c0_65 = arith.constant 0 : index
    %156 = vector.load %arg14[%c3_63, %c0_64, %c0_65] : memref<9x1x1536xf32, #tpu.memory_space<vmem>>, vector<1x1x1536xf32>
    %157 = vector.shape_cast %156 : vector<1x1x1536xf32> to vector<1x1536xf32>
    %158 = vector.extract_strided_slice %157 {offsets = [0, 0], sizes = [1, 512], strides = [1, 1]} : vector<1x1536xf32> to vector<1x512xf32>
    %159 = vector.broadcast %158 : vector<1x512xf32> to vector<16x512xf32>
    %160 = arith.mulf %155, %159 : vector<16x512xf32>
    %cst_66 = arith.constant 1.000000e+00 : f32
    %161 = vector.broadcast %cst_66 : f32 to vector<1x512xf32>
    %162 = arith.subf %161, %158 : vector<1x512xf32>
    %cst_67 = arith.constant 1.000000e+30 : f32
    %163 = vector.broadcast %cst_67 : f32 to vector<1x512xf32>
    %164 = arith.mulf %162, %163 : vector<1x512xf32>
    %165 = vector.broadcast %164 : vector<1x512xf32> to vector<16x512xf32>
    %166 = arith.subf %160, %165 : vector<16x512xf32>
    %167 = arith.addf %153, %160 : vector<16x512xf32>
    %168 = arith.maximumf %154, %166 : vector<16x512xf32>
    %c4_68 = arith.constant 4 : index
    %c0_69 = arith.constant 0 : index
    %c0_70 = arith.constant 0 : index
    %169 = vector.load %arg14[%c4_68, %c0_69, %c0_70] : memref<9x1x1536xf32, #tpu.memory_space<vmem>>, vector<1x1x1536xf32>
    %170 = vector.shape_cast %169 : vector<1x1x1536xf32> to vector<1x1536xf32>
    %171 = vector.extract_strided_slice %170 {offsets = [0, 0], sizes = [1, 512], strides = [1, 1]} : vector<1x1536xf32> to vector<1x512xf32>
    %172 = vector.broadcast %171 : vector<1x512xf32> to vector<16x512xf32>
    %173 = arith.mulf %114, %172 : vector<16x512xf32>
    %cst_71 = arith.constant 1.000000e+00 : f32
    %174 = vector.broadcast %cst_71 : f32 to vector<1x512xf32>
    %175 = arith.subf %174, %171 : vector<1x512xf32>
    %cst_72 = arith.constant 1.000000e+30 : f32
    %176 = vector.broadcast %cst_72 : f32 to vector<1x512xf32>
    %177 = arith.mulf %175, %176 : vector<1x512xf32>
    %178 = vector.broadcast %177 : vector<1x512xf32> to vector<16x512xf32>
    %179 = arith.subf %173, %178 : vector<16x512xf32>
    %180 = arith.addf %167, %173 : vector<16x512xf32>
    %181 = arith.maximumf %168, %179 : vector<16x512xf32>
    %c511_i32 = arith.constant 511 : i32
    %182 = tpu.dynamic_rotate %114 by %c511_i32 dim 1 : vector<16x512xf32>, i32 -> vector<16x512xf32>
    %c5_73 = arith.constant 5 : index
    %c0_74 = arith.constant 0 : index
    %c0_75 = arith.constant 0 : index
    %183 = vector.load %arg14[%c5_73, %c0_74, %c0_75] : memref<9x1x1536xf32, #tpu.memory_space<vmem>>, vector<1x1x1536xf32>
    %184 = vector.shape_cast %183 : vector<1x1x1536xf32> to vector<1x1536xf32>
    %185 = vector.extract_strided_slice %184 {offsets = [0, 0], sizes = [1, 512], strides = [1, 1]} : vector<1x1536xf32> to vector<1x512xf32>
    %186 = vector.broadcast %185 : vector<1x512xf32> to vector<16x512xf32>
    %187 = arith.mulf %182, %186 : vector<16x512xf32>
    %cst_76 = arith.constant 1.000000e+00 : f32
    %188 = vector.broadcast %cst_76 : f32 to vector<1x512xf32>
    %189 = arith.subf %188, %185 : vector<1x512xf32>
    %cst_77 = arith.constant 1.000000e+30 : f32
    %190 = vector.broadcast %cst_77 : f32 to vector<1x512xf32>
    %191 = arith.mulf %189, %190 : vector<1x512xf32>
    %192 = vector.broadcast %191 : vector<1x512xf32> to vector<16x512xf32>
    %193 = arith.subf %187, %192 : vector<16x512xf32>
    %194 = arith.addf %180, %187 : vector<16x512xf32>
    %195 = arith.maximumf %181, %193 : vector<16x512xf32>
    %c497_i32 = arith.constant 497 : i32
    %196 = tpu.dynamic_rotate %114 by %c497_i32 dim 1 : vector<16x512xf32>, i32 -> vector<16x512xf32>
    %c6_78 = arith.constant 6 : index
    %c0_79 = arith.constant 0 : index
    %c0_80 = arith.constant 0 : index
    %197 = vector.load %arg14[%c6_78, %c0_79, %c0_80] : memref<9x1x1536xf32, #tpu.memory_space<vmem>>, vector<1x1x1536xf32>
    %198 = vector.shape_cast %197 : vector<1x1x1536xf32> to vector<1x1536xf32>
    %199 = vector.extract_strided_slice %198 {offsets = [0, 0], sizes = [1, 512], strides = [1, 1]} : vector<1x1536xf32> to vector<1x512xf32>
    %200 = vector.broadcast %199 : vector<1x512xf32> to vector<16x512xf32>
    %201 = arith.mulf %196, %200 : vector<16x512xf32>
    %cst_81 = arith.constant 1.000000e+00 : f32
    %202 = vector.broadcast %cst_81 : f32 to vector<1x512xf32>
    %203 = arith.subf %202, %199 : vector<1x512xf32>
    %cst_82 = arith.constant 1.000000e+30 : f32
    %204 = vector.broadcast %cst_82 : f32 to vector<1x512xf32>
    %205 = arith.mulf %203, %204 : vector<1x512xf32>
    %206 = vector.broadcast %205 : vector<1x512xf32> to vector<16x512xf32>
    %207 = arith.subf %201, %206 : vector<16x512xf32>
    %208 = arith.addf %194, %201 : vector<16x512xf32>
    %209 = arith.maximumf %195, %207 : vector<16x512xf32>
    %c496_i32 = arith.constant 496 : i32
    %210 = tpu.dynamic_rotate %114 by %c496_i32 dim 1 : vector<16x512xf32>, i32 -> vector<16x512xf32>
    %c7_83 = arith.constant 7 : index
    %c0_84 = arith.constant 0 : index
    %c0_85 = arith.constant 0 : index
    %211 = vector.load %arg14[%c7_83, %c0_84, %c0_85] : memref<9x1x1536xf32, #tpu.memory_space<vmem>>, vector<1x1x1536xf32>
    %212 = vector.shape_cast %211 : vector<1x1x1536xf32> to vector<1x1536xf32>
    %213 = vector.extract_strided_slice %212 {offsets = [0, 0], sizes = [1, 512], strides = [1, 1]} : vector<1x1536xf32> to vector<1x512xf32>
    %214 = vector.broadcast %213 : vector<1x512xf32> to vector<16x512xf32>
    %215 = arith.mulf %210, %214 : vector<16x512xf32>
    %cst_86 = arith.constant 1.000000e+00 : f32
    %216 = vector.broadcast %cst_86 : f32 to vector<1x512xf32>
    %217 = arith.subf %216, %213 : vector<1x512xf32>
    %cst_87 = arith.constant 1.000000e+30 : f32
    %218 = vector.broadcast %cst_87 : f32 to vector<1x512xf32>
    %219 = arith.mulf %217, %218 : vector<1x512xf32>
    %220 = vector.broadcast %219 : vector<1x512xf32> to vector<16x512xf32>
    %221 = arith.subf %215, %220 : vector<16x512xf32>
    %222 = arith.addf %208, %215 : vector<16x512xf32>
    %223 = arith.maximumf %209, %221 : vector<16x512xf32>
    %c495_i32 = arith.constant 495 : i32
    %224 = tpu.dynamic_rotate %114 by %c495_i32 dim 1 : vector<16x512xf32>, i32 -> vector<16x512xf32>
    %c8_88 = arith.constant 8 : index
    %c0_89 = arith.constant 0 : index
    %c0_90 = arith.constant 0 : index
    %225 = vector.load %arg14[%c8_88, %c0_89, %c0_90] : memref<9x1x1536xf32, #tpu.memory_space<vmem>>, vector<1x1x1536xf32>
    %226 = vector.shape_cast %225 : vector<1x1x1536xf32> to vector<1x1536xf32>
    %227 = vector.extract_strided_slice %226 {offsets = [0, 0], sizes = [1, 512], strides = [1, 1]} : vector<1x1536xf32> to vector<1x512xf32>
    %228 = vector.broadcast %227 : vector<1x512xf32> to vector<16x512xf32>
    %229 = arith.mulf %224, %228 : vector<16x512xf32>
    %cst_91 = arith.constant 1.000000e+00 : f32
    %230 = vector.broadcast %cst_91 : f32 to vector<1x512xf32>
    %231 = arith.subf %230, %227 : vector<1x512xf32>
    %cst_92 = arith.constant 1.000000e+30 : f32
    %232 = vector.broadcast %cst_92 : f32 to vector<1x512xf32>
    %233 = arith.mulf %231, %232 : vector<1x512xf32>
    %234 = vector.broadcast %233 : vector<1x512xf32> to vector<16x512xf32>
    %235 = arith.subf %229, %234 : vector<16x512xf32>
    %236 = arith.addf %222, %229 : vector<16x512xf32>
    %237 = arith.maximumf %223, %235 : vector<16x512xf32>
    %cst_93 = arith.constant 0.111111112 : f32
    %238 = vector.broadcast %cst_93 : f32 to vector<16x512xf32>
    %239 = arith.mulf %236, %238 : vector<16x512xf32>
    %240 = tpu.concatenate %237, %239 in 0 : vector<16x512xf32>, vector<16x512xf32> -> vector<32x512xf32>
    %c0_94 = arith.constant 0 : index
    %c0_95 = arith.constant 0 : index
    %241 = vector.load %arg17[%c0_94, %c0_95] : memref<512x128xf32, #tpu.memory_space<vmem>>, vector<512x128xf32>
    %cst_96 = arith.constant dense<0.000000e+00> : vector<32x128xf32>
    %242 = tpu.matmul %240, %241, %cst_96 {dimension_numbers = #tpu.dot_dimension_numbers<[1], [0], [0], [1], [0, 0, 1, 1], [], []>} : vector<32x512xf32>, vector<512x128xf32>, vector<32x128xf32> -> vector<32x128xf32>
    %c0_97 = arith.constant 0 : index
    %c0_98 = arith.constant 0 : index
    %243 = vector.load %arg3[%c0_97, %c0_98] : memref<16x32xf32, #tpu.memory_space<vmem>>, vector<16x32xf32>
    %cst_99 = arith.constant dense<0.000000e+00> : vector<16x128xf32>
    %244 = tpu.matmul %243, %242, %cst_99 {dimension_numbers = #tpu.dot_dimension_numbers<[1], [0], [0], [1], [0, 0, 1, 1], [], []>} : vector<16x32xf32>, vector<32x128xf32>, vector<16x128xf32> -> vector<16x128xf32>
    %c48 = arith.constant 48 : index
    %c0_100 = arith.constant 0 : index
    %245 = vector.load %arg13[%c48, %c0_100] : memref<208x1xf32, #tpu.memory_space<vmem>>, vector<16x1xf32>
    %246 = vector.broadcast %245 : vector<16x1xf32> to vector<16x128xf32>
    %247 = arith.addf %244, %246 : vector<16x128xf32>
    %cst_101 = arith.constant 0.000000e+00 : f32
    %248 = vector.broadcast %cst_101 : f32 to vector<16x128xf32>
    %249 = arith.cmpf oge, %247, %248 : vector<16x128xf32>
    %cst_102 = arith.constant 1.000000e-01 : f32
    %250 = vector.broadcast %cst_102 : f32 to vector<16x128xf32>
    %251 = arith.mulf %250, %247 : vector<16x128xf32>
    %252 = arith.select %249, %247, %251 : vector<16x128xi1>, vector<16x128xf32>
    %c0_103 = arith.constant 0 : index
    %c0_104 = arith.constant 0 : index
    %253 = vector.load %arg7[%c0_103, %c0_104] : memref<16x16xf32, #tpu.memory_space<vmem>>, vector<16x16xf32>
    %cst_105 = arith.constant dense<0.000000e+00> : vector<16x128xf32>
    %254 = tpu.matmul %253, %252, %cst_105 {dimension_numbers = #tpu.dot_dimension_numbers<[1], [0], [0], [1], [0, 0, 1, 1], [], []>} : vector<16x16xf32>, vector<16x128xf32>, vector<16x128xf32> -> vector<16x128xf32>
    %c112 = arith.constant 112 : index
    %c0_106 = arith.constant 0 : index
    %255 = vector.load %arg13[%c112, %c0_106] : memref<208x1xf32, #tpu.memory_space<vmem>>, vector<16x1xf32>
    %256 = vector.broadcast %255 : vector<16x1xf32> to vector<16x128xf32>
    %257 = arith.addf %254, %256 : vector<16x128xf32>
    %cst_107 = arith.constant 0.000000e+00 : f32
    %258 = vector.broadcast %cst_107 : f32 to vector<16x128xf32>
    %259 = arith.cmpf oge, %257, %258 : vector<16x128xf32>
    %cst_108 = arith.constant 1.000000e-01 : f32
    %260 = vector.broadcast %cst_108 : f32 to vector<16x128xf32>
    %261 = arith.mulf %260, %257 : vector<16x128xf32>
    %262 = arith.select %259, %257, %261 : vector<16x128xi1>, vector<16x128xf32>
    %c9_i32 = arith.constant 9 : i32
    %263 = tpu.dynamic_rotate %262 by %c9_i32 dim 1 : vector<16x128xf32>, i32 -> vector<16x128xf32>
    %c0_109 = arith.constant 0 : index
    %c0_110 = arith.constant 0 : index
    %c0_111 = arith.constant 0 : index
    %264 = vector.load %arg15[%c0_109, %c0_110, %c0_111] : memref<9x1x128xf32, #tpu.memory_space<vmem>>, vector<1x1x128xf32>
    %265 = vector.shape_cast %264 : vector<1x1x128xf32> to vector<1x128xf32>
    %266 = vector.broadcast %265 : vector<1x128xf32> to vector<16x128xf32>
    %267 = arith.mulf %263, %266 : vector<16x128xf32>
    %cst_112 = arith.constant 1.000000e+00 : f32
    %268 = vector.broadcast %cst_112 : f32 to vector<1x128xf32>
    %269 = arith.subf %268, %265 : vector<1x128xf32>
    %cst_113 = arith.constant 1.000000e+30 : f32
    %270 = vector.broadcast %cst_113 : f32 to vector<1x128xf32>
    %271 = arith.mulf %269, %270 : vector<1x128xf32>
    %272 = vector.broadcast %271 : vector<1x128xf32> to vector<16x128xf32>
    %273 = arith.subf %267, %272 : vector<16x128xf32>
    %c8_i32 = arith.constant 8 : i32
    %274 = tpu.dynamic_rotate %262 by %c8_i32 dim 1 : vector<16x128xf32>, i32 -> vector<16x128xf32>
    %c1_114 = arith.constant 1 : index
    %c0_115 = arith.constant 0 : index
    %c0_116 = arith.constant 0 : index
    %275 = vector.load %arg15[%c1_114, %c0_115, %c0_116] : memref<9x1x128xf32, #tpu.memory_space<vmem>>, vector<1x1x128xf32>
    %276 = vector.shape_cast %275 : vector<1x1x128xf32> to vector<1x128xf32>
    %277 = vector.broadcast %276 : vector<1x128xf32> to vector<16x128xf32>
    %278 = arith.mulf %274, %277 : vector<16x128xf32>
    %cst_117 = arith.constant 1.000000e+00 : f32
    %279 = vector.broadcast %cst_117 : f32 to vector<1x128xf32>
    %280 = arith.subf %279, %276 : vector<1x128xf32>
    %cst_118 = arith.constant 1.000000e+30 : f32
    %281 = vector.broadcast %cst_118 : f32 to vector<1x128xf32>
    %282 = arith.mulf %280, %281 : vector<1x128xf32>
    %283 = vector.broadcast %282 : vector<1x128xf32> to vector<16x128xf32>
    %284 = arith.subf %278, %283 : vector<16x128xf32>
    %285 = arith.addf %267, %278 : vector<16x128xf32>
    %286 = arith.maximumf %273, %284 : vector<16x128xf32>
    %c7_i32 = arith.constant 7 : i32
    %287 = tpu.dynamic_rotate %262 by %c7_i32 dim 1 : vector<16x128xf32>, i32 -> vector<16x128xf32>
    %c2_119 = arith.constant 2 : index
    %c0_120 = arith.constant 0 : index
    %c0_121 = arith.constant 0 : index
    %288 = vector.load %arg15[%c2_119, %c0_120, %c0_121] : memref<9x1x128xf32, #tpu.memory_space<vmem>>, vector<1x1x128xf32>
    %289 = vector.shape_cast %288 : vector<1x1x128xf32> to vector<1x128xf32>
    %290 = vector.broadcast %289 : vector<1x128xf32> to vector<16x128xf32>
    %291 = arith.mulf %287, %290 : vector<16x128xf32>
    %cst_122 = arith.constant 1.000000e+00 : f32
    %292 = vector.broadcast %cst_122 : f32 to vector<1x128xf32>
    %293 = arith.subf %292, %289 : vector<1x128xf32>
    %cst_123 = arith.constant 1.000000e+30 : f32
    %294 = vector.broadcast %cst_123 : f32 to vector<1x128xf32>
    %295 = arith.mulf %293, %294 : vector<1x128xf32>
    %296 = vector.broadcast %295 : vector<1x128xf32> to vector<16x128xf32>
    %297 = arith.subf %291, %296 : vector<16x128xf32>
    %298 = arith.addf %285, %291 : vector<16x128xf32>
    %299 = arith.maximumf %286, %297 : vector<16x128xf32>
    %c1_i32_124 = arith.constant 1 : i32
    %300 = tpu.dynamic_rotate %262 by %c1_i32_124 dim 1 : vector<16x128xf32>, i32 -> vector<16x128xf32>
    %c3_125 = arith.constant 3 : index
    %c0_126 = arith.constant 0 : index
    %c0_127 = arith.constant 0 : index
    %301 = vector.load %arg15[%c3_125, %c0_126, %c0_127] : memref<9x1x128xf32, #tpu.memory_space<vmem>>, vector<1x1x128xf32>
    %302 = vector.shape_cast %301 : vector<1x1x128xf32> to vector<1x128xf32>
    %303 = vector.broadcast %302 : vector<1x128xf32> to vector<16x128xf32>
    %304 = arith.mulf %300, %303 : vector<16x128xf32>
    %cst_128 = arith.constant 1.000000e+00 : f32
    %305 = vector.broadcast %cst_128 : f32 to vector<1x128xf32>
    %306 = arith.subf %305, %302 : vector<1x128xf32>
    %cst_129 = arith.constant 1.000000e+30 : f32
    %307 = vector.broadcast %cst_129 : f32 to vector<1x128xf32>
    %308 = arith.mulf %306, %307 : vector<1x128xf32>
    %309 = vector.broadcast %308 : vector<1x128xf32> to vector<16x128xf32>
    %310 = arith.subf %304, %309 : vector<16x128xf32>
    %311 = arith.addf %298, %304 : vector<16x128xf32>
    %312 = arith.maximumf %299, %310 : vector<16x128xf32>
    %c4_130 = arith.constant 4 : index
    %c0_131 = arith.constant 0 : index
    %c0_132 = arith.constant 0 : index
    %313 = vector.load %arg15[%c4_130, %c0_131, %c0_132] : memref<9x1x128xf32, #tpu.memory_space<vmem>>, vector<1x1x128xf32>
    %314 = vector.shape_cast %313 : vector<1x1x128xf32> to vector<1x128xf32>
    %315 = vector.broadcast %314 : vector<1x128xf32> to vector<16x128xf32>
    %316 = arith.mulf %262, %315 : vector<16x128xf32>
    %cst_133 = arith.constant 1.000000e+00 : f32
    %317 = vector.broadcast %cst_133 : f32 to vector<1x128xf32>
    %318 = arith.subf %317, %314 : vector<1x128xf32>
    %cst_134 = arith.constant 1.000000e+30 : f32
    %319 = vector.broadcast %cst_134 : f32 to vector<1x128xf32>
    %320 = arith.mulf %318, %319 : vector<1x128xf32>
    %321 = vector.broadcast %320 : vector<1x128xf32> to vector<16x128xf32>
    %322 = arith.subf %316, %321 : vector<16x128xf32>
    %323 = arith.addf %311, %316 : vector<16x128xf32>
    %324 = arith.maximumf %312, %322 : vector<16x128xf32>
    %c127_i32 = arith.constant 127 : i32
    %325 = tpu.dynamic_rotate %262 by %c127_i32 dim 1 : vector<16x128xf32>, i32 -> vector<16x128xf32>
    %c5_135 = arith.constant 5 : index
    %c0_136 = arith.constant 0 : index
    %c0_137 = arith.constant 0 : index
    %326 = vector.load %arg15[%c5_135, %c0_136, %c0_137] : memref<9x1x128xf32, #tpu.memory_space<vmem>>, vector<1x1x128xf32>
    %327 = vector.shape_cast %326 : vector<1x1x128xf32> to vector<1x128xf32>
    %328 = vector.broadcast %327 : vector<1x128xf32> to vector<16x128xf32>
    %329 = arith.mulf %325, %328 : vector<16x128xf32>
    %cst_138 = arith.constant 1.000000e+00 : f32
    %330 = vector.broadcast %cst_138 : f32 to vector<1x128xf32>
    %331 = arith.subf %330, %327 : vector<1x128xf32>
    %cst_139 = arith.constant 1.000000e+30 : f32
    %332 = vector.broadcast %cst_139 : f32 to vector<1x128xf32>
    %333 = arith.mulf %331, %332 : vector<1x128xf32>
    %334 = vector.broadcast %333 : vector<1x128xf32> to vector<16x128xf32>
    %335 = arith.subf %329, %334 : vector<16x128xf32>
    %336 = arith.addf %323, %329 : vector<16x128xf32>
    %337 = arith.maximumf %324, %335 : vector<16x128xf32>
    %c121_i32 = arith.constant 121 : i32
    %338 = tpu.dynamic_rotate %262 by %c121_i32 dim 1 : vector<16x128xf32>, i32 -> vector<16x128xf32>
    %c6_140 = arith.constant 6 : index
    %c0_141 = arith.constant 0 : index
    %c0_142 = arith.constant 0 : index
    %339 = vector.load %arg15[%c6_140, %c0_141, %c0_142] : memref<9x1x128xf32, #tpu.memory_space<vmem>>, vector<1x1x128xf32>
    %340 = vector.shape_cast %339 : vector<1x1x128xf32> to vector<1x128xf32>
    %341 = vector.broadcast %340 : vector<1x128xf32> to vector<16x128xf32>
    %342 = arith.mulf %338, %341 : vector<16x128xf32>
    %cst_143 = arith.constant 1.000000e+00 : f32
    %343 = vector.broadcast %cst_143 : f32 to vector<1x128xf32>
    %344 = arith.subf %343, %340 : vector<1x128xf32>
    %cst_144 = arith.constant 1.000000e+30 : f32
    %345 = vector.broadcast %cst_144 : f32 to vector<1x128xf32>
    %346 = arith.mulf %344, %345 : vector<1x128xf32>
    %347 = vector.broadcast %346 : vector<1x128xf32> to vector<16x128xf32>
    %348 = arith.subf %342, %347 : vector<16x128xf32>
    %349 = arith.addf %336, %342 : vector<16x128xf32>
    %350 = arith.maximumf %337, %348 : vector<16x128xf32>
    %c120_i32 = arith.constant 120 : i32
    %351 = tpu.dynamic_rotate %262 by %c120_i32 dim 1 : vector<16x128xf32>, i32 -> vector<16x128xf32>
    %c7_145 = arith.constant 7 : index
    %c0_146 = arith.constant 0 : index
    %c0_147 = arith.constant 0 : index
    %352 = vector.load %arg15[%c7_145, %c0_146, %c0_147] : memref<9x1x128xf32, #tpu.memory_space<vmem>>, vector<1x1x128xf32>
    %353 = vector.shape_cast %352 : vector<1x1x128xf32> to vector<1x128xf32>
    %354 = vector.broadcast %353 : vector<1x128xf32> to vector<16x128xf32>
    %355 = arith.mulf %351, %354 : vector<16x128xf32>
    %cst_148 = arith.constant 1.000000e+00 : f32
    %356 = vector.broadcast %cst_148 : f32 to vector<1x128xf32>
    %357 = arith.subf %356, %353 : vector<1x128xf32>
    %cst_149 = arith.constant 1.000000e+30 : f32
    %358 = vector.broadcast %cst_149 : f32 to vector<1x128xf32>
    %359 = arith.mulf %357, %358 : vector<1x128xf32>
    %360 = vector.broadcast %359 : vector<1x128xf32> to vector<16x128xf32>
    %361 = arith.subf %355, %360 : vector<16x128xf32>
    %362 = arith.addf %349, %355 : vector<16x128xf32>
    %363 = arith.maximumf %350, %361 : vector<16x128xf32>
    %c119_i32 = arith.constant 119 : i32
    %364 = tpu.dynamic_rotate %262 by %c119_i32 dim 1 : vector<16x128xf32>, i32 -> vector<16x128xf32>
    %c8_150 = arith.constant 8 : index
    %c0_151 = arith.constant 0 : index
    %c0_152 = arith.constant 0 : index
    %365 = vector.load %arg15[%c8_150, %c0_151, %c0_152] : memref<9x1x128xf32, #tpu.memory_space<vmem>>, vector<1x1x128xf32>
    %366 = vector.shape_cast %365 : vector<1x1x128xf32> to vector<1x128xf32>
    %367 = vector.broadcast %366 : vector<1x128xf32> to vector<16x128xf32>
    %368 = arith.mulf %364, %367 : vector<16x128xf32>
    %cst_153 = arith.constant 1.000000e+00 : f32
    %369 = vector.broadcast %cst_153 : f32 to vector<1x128xf32>
    %370 = arith.subf %369, %366 : vector<1x128xf32>
    %cst_154 = arith.constant 1.000000e+30 : f32
    %371 = vector.broadcast %cst_154 : f32 to vector<1x128xf32>
    %372 = arith.mulf %370, %371 : vector<1x128xf32>
    %373 = vector.broadcast %372 : vector<1x128xf32> to vector<16x128xf32>
    %374 = arith.subf %368, %373 : vector<16x128xf32>
    %375 = arith.addf %362, %368 : vector<16x128xf32>
    %376 = arith.maximumf %363, %374 : vector<16x128xf32>
    %cst_155 = arith.constant 0.111111112 : f32
    %377 = vector.broadcast %cst_155 : f32 to vector<16x128xf32>
    %378 = arith.mulf %375, %377 : vector<16x128xf32>
    %379 = tpu.concatenate %376, %378 in 0 : vector<16x128xf32>, vector<16x128xf32> -> vector<32x128xf32>
    %c0_156 = arith.constant 0 : index
    %c0_157 = arith.constant 0 : index
    %380 = vector.load %arg18[%c0_156, %c0_157] : memref<128x32xf32, #tpu.memory_space<vmem>>, vector<128x32xf32>
    %cst_158 = arith.constant dense<0.000000e+00> : vector<32x32xf32>
    %381 = tpu.matmul %379, %380, %cst_158 {dimension_numbers = #tpu.dot_dimension_numbers<[1], [0], [0], [1], [0, 0, 1, 1], [], []>} : vector<32x128xf32>, vector<128x32xf32>, vector<32x32xf32> -> vector<32x32xf32>
    %c0_159 = arith.constant 0 : index
    %c0_160 = arith.constant 0 : index
    %c0_161 = arith.constant 0 : index
    %382 = vector.load %arg16[%c0_159, %c0_160, %c0_161] : memref<9x32x32xf32, #tpu.memory_space<vmem>>, vector<1x32x32xf32>
    %383 = vector.shape_cast %382 : vector<1x32x32xf32> to vector<32x32xf32>
    %cst_162 = arith.constant dense<0.000000e+00> : vector<32x32xf32>
    %384 = tpu.matmul %381, %383, %cst_162 {dimension_numbers = #tpu.dot_dimension_numbers<[1], [0], [0], [1], [0, 0, 1, 1], [], []>} : vector<32x32xf32>, vector<32x32xf32>, vector<32x32xf32> -> vector<32x32xf32>
    %c1_163 = arith.constant 1 : index
    %c0_164 = arith.constant 0 : index
    %c0_165 = arith.constant 0 : index
    %385 = vector.load %arg16[%c1_163, %c0_164, %c0_165] : memref<9x32x32xf32, #tpu.memory_space<vmem>>, vector<1x32x32xf32>
    %386 = vector.shape_cast %385 : vector<1x32x32xf32> to vector<32x32xf32>
    %cst_166 = arith.constant dense<0.000000e+00> : vector<32x32xf32>
    %387 = tpu.matmul %381, %386, %cst_166 {dimension_numbers = #tpu.dot_dimension_numbers<[1], [0], [0], [1], [0, 0, 1, 1], [], []>} : vector<32x32xf32>, vector<32x32xf32>, vector<32x32xf32> -> vector<32x32xf32>
    %c2_167 = arith.constant 2 : index
    %c0_168 = arith.constant 0 : index
    %c0_169 = arith.constant 0 : index
    %388 = vector.load %arg16[%c2_167, %c0_168, %c0_169] : memref<9x32x32xf32, #tpu.memory_space<vmem>>, vector<1x32x32xf32>
    %389 = vector.shape_cast %388 : vector<1x32x32xf32> to vector<32x32xf32>
    %cst_170 = arith.constant dense<0.000000e+00> : vector<32x32xf32>
    %390 = tpu.matmul %381, %389, %cst_170 {dimension_numbers = #tpu.dot_dimension_numbers<[1], [0], [0], [1], [0, 0, 1, 1], [], []>} : vector<32x32xf32>, vector<32x32xf32>, vector<32x32xf32> -> vector<32x32xf32>
    %c3_171 = arith.constant 3 : index
    %c0_172 = arith.constant 0 : index
    %c0_173 = arith.constant 0 : index
    %391 = vector.load %arg16[%c3_171, %c0_172, %c0_173] : memref<9x32x32xf32, #tpu.memory_space<vmem>>, vector<1x32x32xf32>
    %392 = vector.shape_cast %391 : vector<1x32x32xf32> to vector<32x32xf32>
    %cst_174 = arith.constant dense<0.000000e+00> : vector<32x32xf32>
    %393 = tpu.matmul %381, %392, %cst_174 {dimension_numbers = #tpu.dot_dimension_numbers<[1], [0], [0], [1], [0, 0, 1, 1], [], []>} : vector<32x32xf32>, vector<32x32xf32>, vector<32x32xf32> -> vector<32x32xf32>
    %c4_175 = arith.constant 4 : index
    %c0_176 = arith.constant 0 : index
    %c0_177 = arith.constant 0 : index
    %394 = vector.load %arg16[%c4_175, %c0_176, %c0_177] : memref<9x32x32xf32, #tpu.memory_space<vmem>>, vector<1x32x32xf32>
    %395 = vector.shape_cast %394 : vector<1x32x32xf32> to vector<32x32xf32>
    %cst_178 = arith.constant dense<0.000000e+00> : vector<32x32xf32>
    %396 = tpu.matmul %381, %395, %cst_178 {dimension_numbers = #tpu.dot_dimension_numbers<[1], [0], [0], [1], [0, 0, 1, 1], [], []>} : vector<32x32xf32>, vector<32x32xf32>, vector<32x32xf32> -> vector<32x32xf32>
    %c5_179 = arith.constant 5 : index
    %c0_180 = arith.constant 0 : index
    %c0_181 = arith.constant 0 : index
    %397 = vector.load %arg16[%c5_179, %c0_180, %c0_181] : memref<9x32x32xf32, #tpu.memory_space<vmem>>, vector<1x32x32xf32>
    %398 = vector.shape_cast %397 : vector<1x32x32xf32> to vector<32x32xf32>
    %cst_182 = arith.constant dense<0.000000e+00> : vector<32x32xf32>
    %399 = tpu.matmul %381, %398, %cst_182 {dimension_numbers = #tpu.dot_dimension_numbers<[1], [0], [0], [1], [0, 0, 1, 1], [], []>} : vector<32x32xf32>, vector<32x32xf32>, vector<32x32xf32> -> vector<32x32xf32>
    %c6_183 = arith.constant 6 : index
    %c0_184 = arith.constant 0 : index
    %c0_185 = arith.constant 0 : index
    %400 = vector.load %arg16[%c6_183, %c0_184, %c0_185] : memref<9x32x32xf32, #tpu.memory_space<vmem>>, vector<1x32x32xf32>
    %401 = vector.shape_cast %400 : vector<1x32x32xf32> to vector<32x32xf32>
    %cst_186 = arith.constant dense<0.000000e+00> : vector<32x32xf32>
    %402 = tpu.matmul %381, %401, %cst_186 {dimension_numbers = #tpu.dot_dimension_numbers<[1], [0], [0], [1], [0, 0, 1, 1], [], []>} : vector<32x32xf32>, vector<32x32xf32>, vector<32x32xf32> -> vector<32x32xf32>
    %c7_187 = arith.constant 7 : index
    %c0_188 = arith.constant 0 : index
    %c0_189 = arith.constant 0 : index
    %403 = vector.load %arg16[%c7_187, %c0_188, %c0_189] : memref<9x32x32xf32, #tpu.memory_space<vmem>>, vector<1x32x32xf32>
    %404 = vector.shape_cast %403 : vector<1x32x32xf32> to vector<32x32xf32>
    %cst_190 = arith.constant dense<0.000000e+00> : vector<32x32xf32>
    %405 = tpu.matmul %381, %404, %cst_190 {dimension_numbers = #tpu.dot_dimension_numbers<[1], [0], [0], [1], [0, 0, 1, 1], [], []>} : vector<32x32xf32>, vector<32x32xf32>, vector<32x32xf32> -> vector<32x32xf32>
    %c8_191 = arith.constant 8 : index
    %c0_192 = arith.constant 0 : index
    %c0_193 = arith.constant 0 : index
    %406 = vector.load %arg16[%c8_191, %c0_192, %c0_193] : memref<9x32x32xf32, #tpu.memory_space<vmem>>, vector<1x32x32xf32>
    %407 = vector.shape_cast %406 : vector<1x32x32xf32> to vector<32x32xf32>
    %cst_194 = arith.constant dense<0.000000e+00> : vector<32x32xf32>
    %408 = tpu.matmul %381, %407, %cst_194 {dimension_numbers = #tpu.dot_dimension_numbers<[1], [0], [0], [1], [0, 0, 1, 1], [], []>} : vector<32x32xf32>, vector<32x32xf32>, vector<32x32xf32> -> vector<32x32xf32>
    %409 = tpu.concatenate %384, %387, %390, %393, %396, %399, %402, %405, %408 in 0 : vector<32x32xf32>, vector<32x32xf32>, vector<32x32xf32>, vector<32x32xf32>, vector<32x32xf32>, vector<32x32xf32>, vector<32x32xf32>, vector<32x32xf32>, vector<32x32xf32> -> vector<288x32xf32>
    %c0_195 = arith.constant 0 : index
    %c0_196 = arith.constant 0 : index
    %410 = vector.load %arg8[%c0_195, %c0_196] : memref<16x288xf32, #tpu.memory_space<vmem>>, vector<16x288xf32>
    %cst_197 = arith.constant dense<0.000000e+00> : vector<16x32xf32>
    %411 = tpu.matmul %410, %409, %cst_197 {dimension_numbers = #tpu.dot_dimension_numbers<[1], [0], [0], [1], [0, 0, 1, 1], [], []>} : vector<16x288xf32>, vector<288x32xf32>, vector<16x32xf32> -> vector<16x32xf32>
    %c128 = arith.constant 128 : index
    %c0_198 = arith.constant 0 : index
    %412 = vector.load %arg13[%c128, %c0_198] : memref<208x1xf32, #tpu.memory_space<vmem>>, vector<16x1xf32>
    %413 = vector.broadcast %412 : vector<16x1xf32> to vector<16x32xf32>
    %414 = arith.addf %411, %413 : vector<16x32xf32>
    %cst_199 = arith.constant 0.000000e+00 : f32
    %415 = vector.broadcast %cst_199 : f32 to vector<16x32xf32>
    %416 = arith.cmpf oge, %414, %415 : vector<16x32xf32>
    %cst_200 = arith.constant 1.000000e-01 : f32
    %417 = vector.broadcast %cst_200 : f32 to vector<16x32xf32>
    %418 = arith.mulf %417, %414 : vector<16x32xf32>
    %419 = arith.select %416, %414, %418 : vector<16x32xi1>, vector<16x32xf32>
    %c0_201 = arith.constant 0 : index
    %c0_202 = arith.constant 0 : index
    %c0_203 = arith.constant 0 : index
    %420 = vector.load %arg16[%c0_201, %c0_202, %c0_203] : memref<9x32x32xf32, #tpu.memory_space<vmem>>, vector<1x32x32xf32>
    %421 = vector.shape_cast %420 : vector<1x32x32xf32> to vector<32x32xf32>
    %cst_204 = arith.constant dense<0.000000e+00> : vector<16x32xf32>
    %422 = tpu.matmul %419, %421, %cst_204 {dimension_numbers = #tpu.dot_dimension_numbers<[1], [0], [0], [1], [0, 0, 1, 1], [], []>} : vector<16x32xf32>, vector<32x32xf32>, vector<16x32xf32> -> vector<16x32xf32>
    %c1_205 = arith.constant 1 : index
    %c0_206 = arith.constant 0 : index
    %c0_207 = arith.constant 0 : index
    %423 = vector.load %arg16[%c1_205, %c0_206, %c0_207] : memref<9x32x32xf32, #tpu.memory_space<vmem>>, vector<1x32x32xf32>
    %424 = vector.shape_cast %423 : vector<1x32x32xf32> to vector<32x32xf32>
    %cst_208 = arith.constant dense<0.000000e+00> : vector<16x32xf32>
    %425 = tpu.matmul %419, %424, %cst_208 {dimension_numbers = #tpu.dot_dimension_numbers<[1], [0], [0], [1], [0, 0, 1, 1], [], []>} : vector<16x32xf32>, vector<32x32xf32>, vector<16x32xf32> -> vector<16x32xf32>
    %c2_209 = arith.constant 2 : index
    %c0_210 = arith.constant 0 : index
    %c0_211 = arith.constant 0 : index
    %426 = vector.load %arg16[%c2_209, %c0_210, %c0_211] : memref<9x32x32xf32, #tpu.memory_space<vmem>>, vector<1x32x32xf32>
    %427 = vector.shape_cast %426 : vector<1x32x32xf32> to vector<32x32xf32>
    %cst_212 = arith.constant dense<0.000000e+00> : vector<16x32xf32>
    %428 = tpu.matmul %419, %427, %cst_212 {dimension_numbers = #tpu.dot_dimension_numbers<[1], [0], [0], [1], [0, 0, 1, 1], [], []>} : vector<16x32xf32>, vector<32x32xf32>, vector<16x32xf32> -> vector<16x32xf32>
    %c3_213 = arith.constant 3 : index
    %c0_214 = arith.constant 0 : index
    %c0_215 = arith.constant 0 : index
    %429 = vector.load %arg16[%c3_213, %c0_214, %c0_215] : memref<9x32x32xf32, #tpu.memory_space<vmem>>, vector<1x32x32xf32>
    %430 = vector.shape_cast %429 : vector<1x32x32xf32> to vector<32x32xf32>
    %cst_216 = arith.constant dense<0.000000e+00> : vector<16x32xf32>
    %431 = tpu.matmul %419, %430, %cst_216 {dimension_numbers = #tpu.dot_dimension_numbers<[1], [0], [0], [1], [0, 0, 1, 1], [], []>} : vector<16x32xf32>, vector<32x32xf32>, vector<16x32xf32> -> vector<16x32xf32>
    %c4_217 = arith.constant 4 : index
    %c0_218 = arith.constant 0 : index
    %c0_219 = arith.constant 0 : index
    %432 = vector.load %arg16[%c4_217, %c0_218, %c0_219] : memref<9x32x32xf32, #tpu.memory_space<vmem>>, vector<1x32x32xf32>
    %433 = vector.shape_cast %432 : vector<1x32x32xf32> to vector<32x32xf32>
    %cst_220 = arith.constant dense<0.000000e+00> : vector<16x32xf32>
    %434 = tpu.matmul %419, %433, %cst_220 {dimension_numbers = #tpu.dot_dimension_numbers<[1], [0], [0], [1], [0, 0, 1, 1], [], []>} : vector<16x32xf32>, vector<32x32xf32>, vector<16x32xf32> -> vector<16x32xf32>
    %c5_221 = arith.constant 5 : index
    %c0_222 = arith.constant 0 : index
    %c0_223 = arith.constant 0 : index
    %435 = vector.load %arg16[%c5_221, %c0_222, %c0_223] : memref<9x32x32xf32, #tpu.memory_space<vmem>>, vector<1x32x32xf32>
    %436 = vector.shape_cast %435 : vector<1x32x32xf32> to vector<32x32xf32>
    %cst_224 = arith.constant dense<0.000000e+00> : vector<16x32xf32>
    %437 = tpu.matmul %419, %436, %cst_224 {dimension_numbers = #tpu.dot_dimension_numbers<[1], [0], [0], [1], [0, 0, 1, 1], [], []>} : vector<16x32xf32>, vector<32x32xf32>, vector<16x32xf32> -> vector<16x32xf32>
    %c6_225 = arith.constant 6 : index
    %c0_226 = arith.constant 0 : index
    %c0_227 = arith.constant 0 : index
    %438 = vector.load %arg16[%c6_225, %c0_226, %c0_227] : memref<9x32x32xf32, #tpu.memory_space<vmem>>, vector<1x32x32xf32>
    %439 = vector.shape_cast %438 : vector<1x32x32xf32> to vector<32x32xf32>
    %cst_228 = arith.constant dense<0.000000e+00> : vector<16x32xf32>
    %440 = tpu.matmul %419, %439, %cst_228 {dimension_numbers = #tpu.dot_dimension_numbers<[1], [0], [0], [1], [0, 0, 1, 1], [], []>} : vector<16x32xf32>, vector<32x32xf32>, vector<16x32xf32> -> vector<16x32xf32>
    %c7_229 = arith.constant 7 : index
    %c0_230 = arith.constant 0 : index
    %c0_231 = arith.constant 0 : index
    %441 = vector.load %arg16[%c7_229, %c0_230, %c0_231] : memref<9x32x32xf32, #tpu.memory_space<vmem>>, vector<1x32x32xf32>
    %442 = vector.shape_cast %441 : vector<1x32x32xf32> to vector<32x32xf32>
    %cst_232 = arith.constant dense<0.000000e+00> : vector<16x32xf32>
    %443 = tpu.matmul %419, %442, %cst_232 {dimension_numbers = #tpu.dot_dimension_numbers<[1], [0], [0], [1], [0, 0, 1, 1], [], []>} : vector<16x32xf32>, vector<32x32xf32>, vector<16x32xf32> -> vector<16x32xf32>
    %c8_233 = arith.constant 8 : index
    %c0_234 = arith.constant 0 : index
    %c0_235 = arith.constant 0 : index
    %444 = vector.load %arg16[%c8_233, %c0_234, %c0_235] : memref<9x32x32xf32, #tpu.memory_space<vmem>>, vector<1x32x32xf32>
    %445 = vector.shape_cast %444 : vector<1x32x32xf32> to vector<32x32xf32>
    %cst_236 = arith.constant dense<0.000000e+00> : vector<16x32xf32>
    %446 = tpu.matmul %419, %445, %cst_236 {dimension_numbers = #tpu.dot_dimension_numbers<[1], [0], [0], [1], [0, 0, 1, 1], [], []>} : vector<16x32xf32>, vector<32x32xf32>, vector<16x32xf32> -> vector<16x32xf32>
    %447 = tpu.concatenate %422, %425, %428, %431, %434, %437, %440, %443, %446 in 0 : vector<16x32xf32>, vector<16x32xf32>, vector<16x32xf32>, vector<16x32xf32>, vector<16x32xf32>, vector<16x32xf32>, vector<16x32xf32>, vector<16x32xf32>, vector<16x32xf32> -> vector<144x32xf32>
    %c0_237 = arith.constant 0 : index
    %c0_238 = arith.constant 0 : index
    %448 = vector.load %arg9[%c0_237, %c0_238] : memref<16x144xf32, #tpu.memory_space<vmem>>, vector<16x144xf32>
    %cst_239 = arith.constant dense<0.000000e+00> : vector<16x32xf32>
    %449 = tpu.matmul %448, %447, %cst_239 {dimension_numbers = #tpu.dot_dimension_numbers<[1], [0], [0], [1], [0, 0, 1, 1], [], []>} : vector<16x144xf32>, vector<144x32xf32>, vector<16x32xf32> -> vector<16x32xf32>
    %c144 = arith.constant 144 : index
    %c0_240 = arith.constant 0 : index
    %450 = vector.load %arg13[%c144, %c0_240] : memref<208x1xf32, #tpu.memory_space<vmem>>, vector<16x1xf32>
    %451 = vector.broadcast %450 : vector<16x1xf32> to vector<16x32xf32>
    %452 = arith.addf %449, %451 : vector<16x32xf32>
    %cst_241 = arith.constant 0.000000e+00 : f32
    %453 = vector.broadcast %cst_241 : f32 to vector<16x32xf32>
    %454 = arith.cmpf oge, %452, %453 : vector<16x32xf32>
    %cst_242 = arith.constant 1.000000e-01 : f32
    %455 = vector.broadcast %cst_242 : f32 to vector<16x32xf32>
    %456 = arith.mulf %455, %452 : vector<16x32xf32>
    %457 = arith.select %454, %452, %456 : vector<16x32xi1>, vector<16x32xf32>
    %c0_243 = arith.constant 0 : index
    %c0_244 = arith.constant 0 : index
    %458 = vector.load %arg19[%c0_243, %c0_244] : memref<32x128xf32, #tpu.memory_space<vmem>>, vector<32x128xf32>
    %cst_245 = arith.constant dense<0.000000e+00> : vector<16x128xf32>
    %459 = tpu.matmul %457, %458, %cst_245 {dimension_numbers = #tpu.dot_dimension_numbers<[1], [0], [0], [1], [0, 0, 1, 1], [], []>} : vector<16x32xf32>, vector<32x128xf32>, vector<16x128xf32> -> vector<16x128xf32>
    %c0_246 = arith.constant 0 : index
    %c0_247 = arith.constant 0 : index
    %c0_248 = arith.constant 0 : index
    %460 = vector.load %arg15[%c0_246, %c0_247, %c0_248] : memref<9x1x128xf32, #tpu.memory_space<vmem>>, vector<1x1x128xf32>
    %461 = vector.shape_cast %460 : vector<1x1x128xf32> to vector<1x128xf32>
    %c9_i32_249 = arith.constant 9 : i32
    %462 = tpu.dynamic_rotate %252 by %c9_i32_249 dim 1 : vector<16x128xf32>, i32 -> vector<16x128xf32>
    %463 = vector.broadcast %461 : vector<1x128xf32> to vector<16x128xf32>
    %464 = arith.mulf %462, %463 : vector<16x128xf32>
    %c1_250 = arith.constant 1 : index
    %c0_251 = arith.constant 0 : index
    %c0_252 = arith.constant 0 : index
    %465 = vector.load %arg15[%c1_250, %c0_251, %c0_252] : memref<9x1x128xf32, #tpu.memory_space<vmem>>, vector<1x1x128xf32>
    %466 = vector.shape_cast %465 : vector<1x1x128xf32> to vector<1x128xf32>
    %c8_i32_253 = arith.constant 8 : i32
    %467 = tpu.dynamic_rotate %252 by %c8_i32_253 dim 1 : vector<16x128xf32>, i32 -> vector<16x128xf32>
    %468 = vector.broadcast %466 : vector<1x128xf32> to vector<16x128xf32>
    %469 = arith.mulf %467, %468 : vector<16x128xf32>
    %c2_254 = arith.constant 2 : index
    %c0_255 = arith.constant 0 : index
    %c0_256 = arith.constant 0 : index
    %470 = vector.load %arg15[%c2_254, %c0_255, %c0_256] : memref<9x1x128xf32, #tpu.memory_space<vmem>>, vector<1x1x128xf32>
    %471 = vector.shape_cast %470 : vector<1x1x128xf32> to vector<1x128xf32>
    %c7_i32_257 = arith.constant 7 : i32
    %472 = tpu.dynamic_rotate %252 by %c7_i32_257 dim 1 : vector<16x128xf32>, i32 -> vector<16x128xf32>
    %473 = vector.broadcast %471 : vector<1x128xf32> to vector<16x128xf32>
    %474 = arith.mulf %472, %473 : vector<16x128xf32>
    %c3_258 = arith.constant 3 : index
    %c0_259 = arith.constant 0 : index
    %c0_260 = arith.constant 0 : index
    %475 = vector.load %arg15[%c3_258, %c0_259, %c0_260] : memref<9x1x128xf32, #tpu.memory_space<vmem>>, vector<1x1x128xf32>
    %476 = vector.shape_cast %475 : vector<1x1x128xf32> to vector<1x128xf32>
    %c1_i32_261 = arith.constant 1 : i32
    %477 = tpu.dynamic_rotate %252 by %c1_i32_261 dim 1 : vector<16x128xf32>, i32 -> vector<16x128xf32>
    %478 = vector.broadcast %476 : vector<1x128xf32> to vector<16x128xf32>
    %479 = arith.mulf %477, %478 : vector<16x128xf32>
    %c4_262 = arith.constant 4 : index
    %c0_263 = arith.constant 0 : index
    %c0_264 = arith.constant 0 : index
    %480 = vector.load %arg15[%c4_262, %c0_263, %c0_264] : memref<9x1x128xf32, #tpu.memory_space<vmem>>, vector<1x1x128xf32>
    %481 = vector.shape_cast %480 : vector<1x1x128xf32> to vector<1x128xf32>
    %482 = vector.broadcast %481 : vector<1x128xf32> to vector<16x128xf32>
    %483 = arith.mulf %252, %482 : vector<16x128xf32>
    %c5_265 = arith.constant 5 : index
    %c0_266 = arith.constant 0 : index
    %c0_267 = arith.constant 0 : index
    %484 = vector.load %arg15[%c5_265, %c0_266, %c0_267] : memref<9x1x128xf32, #tpu.memory_space<vmem>>, vector<1x1x128xf32>
    %485 = vector.shape_cast %484 : vector<1x1x128xf32> to vector<1x128xf32>
    %c127_i32_268 = arith.constant 127 : i32
    %486 = tpu.dynamic_rotate %252 by %c127_i32_268 dim 1 : vector<16x128xf32>, i32 -> vector<16x128xf32>
    %487 = vector.broadcast %485 : vector<1x128xf32> to vector<16x128xf32>
    %488 = arith.mulf %486, %487 : vector<16x128xf32>
    %c6_269 = arith.constant 6 : index
    %c0_270 = arith.constant 0 : index
    %c0_271 = arith.constant 0 : index
    %489 = vector.load %arg15[%c6_269, %c0_270, %c0_271] : memref<9x1x128xf32, #tpu.memory_space<vmem>>, vector<1x1x128xf32>
    %490 = vector.shape_cast %489 : vector<1x1x128xf32> to vector<1x128xf32>
    %c121_i32_272 = arith.constant 121 : i32
    %491 = tpu.dynamic_rotate %252 by %c121_i32_272 dim 1 : vector<16x128xf32>, i32 -> vector<16x128xf32>
    %492 = vector.broadcast %490 : vector<1x128xf32> to vector<16x128xf32>
    %493 = arith.mulf %491, %492 : vector<16x128xf32>
    %c7_273 = arith.constant 7 : index
    %c0_274 = arith.constant 0 : index
    %c0_275 = arith.constant 0 : index
    %494 = vector.load %arg15[%c7_273, %c0_274, %c0_275] : memref<9x1x128xf32, #tpu.memory_space<vmem>>, vector<1x1x128xf32>
    %495 = vector.shape_cast %494 : vector<1x1x128xf32> to vector<1x128xf32>
    %c120_i32_276 = arith.constant 120 : i32
    %496 = tpu.dynamic_rotate %252 by %c120_i32_276 dim 1 : vector<16x128xf32>, i32 -> vector<16x128xf32>
    %497 = vector.broadcast %495 : vector<1x128xf32> to vector<16x128xf32>
    %498 = arith.mulf %496, %497 : vector<16x128xf32>
    %c8_277 = arith.constant 8 : index
    %c0_278 = arith.constant 0 : index
    %c0_279 = arith.constant 0 : index
    %499 = vector.load %arg15[%c8_277, %c0_278, %c0_279] : memref<9x1x128xf32, #tpu.memory_space<vmem>>, vector<1x1x128xf32>
    %500 = vector.shape_cast %499 : vector<1x1x128xf32> to vector<1x128xf32>
    %c119_i32_280 = arith.constant 119 : i32
    %501 = tpu.dynamic_rotate %252 by %c119_i32_280 dim 1 : vector<16x128xf32>, i32 -> vector<16x128xf32>
    %502 = vector.broadcast %500 : vector<1x128xf32> to vector<16x128xf32>
    %503 = arith.mulf %501, %502 : vector<16x128xf32>
    %504 = tpu.concatenate %464, %469, %474, %479, %483, %488, %493, %498, %503 in 0 : vector<16x128xf32>, vector<16x128xf32>, vector<16x128xf32>, vector<16x128xf32>, vector<16x128xf32>, vector<16x128xf32>, vector<16x128xf32>, vector<16x128xf32>, vector<16x128xf32> -> vector<144x128xf32>
    %c0_281 = arith.constant 0 : index
    %c0_282 = arith.constant 0 : index
    %505 = vector.load %arg4[%c0_281, %c0_282] : memref<16x144xf32, #tpu.memory_space<vmem>>, vector<16x144xf32>
    %cst_283 = arith.constant dense<0.000000e+00> : vector<16x128xf32>
    %506 = tpu.matmul %505, %504, %cst_283 {dimension_numbers = #tpu.dot_dimension_numbers<[1], [0], [0], [1], [0, 0, 1, 1], [], []>} : vector<16x144xf32>, vector<144x128xf32>, vector<16x128xf32> -> vector<16x128xf32>
    %c64 = arith.constant 64 : index
    %c0_284 = arith.constant 0 : index
    %507 = vector.load %arg13[%c64, %c0_284] : memref<208x1xf32, #tpu.memory_space<vmem>>, vector<16x1xf32>
    %508 = vector.broadcast %507 : vector<16x1xf32> to vector<16x128xf32>
    %509 = arith.addf %506, %508 : vector<16x128xf32>
    %cst_285 = arith.constant 0.000000e+00 : f32
    %510 = vector.broadcast %cst_285 : f32 to vector<16x128xf32>
    %511 = arith.cmpf oge, %509, %510 : vector<16x128xf32>
    %cst_286 = arith.constant 1.000000e-01 : f32
    %512 = vector.broadcast %cst_286 : f32 to vector<16x128xf32>
    %513 = arith.mulf %512, %509 : vector<16x128xf32>
    %514 = arith.select %511, %509, %513 : vector<16x128xi1>, vector<16x128xf32>
    %515 = arith.addf %514, %459 : vector<16x128xf32>
    %c0_287 = arith.constant 0 : index
    %c0_288 = arith.constant 0 : index
    %516 = vector.load %arg5[%c0_287, %c0_288] : memref<16x16xf32, #tpu.memory_space<vmem>>, vector<16x16xf32>
    %cst_289 = arith.constant dense<0.000000e+00> : vector<16x128xf32>
    %517 = tpu.matmul %516, %515, %cst_289 {dimension_numbers = #tpu.dot_dimension_numbers<[1], [0], [0], [1], [0, 0, 1, 1], [], []>} : vector<16x16xf32>, vector<16x128xf32>, vector<16x128xf32> -> vector<16x128xf32>
    %c80 = arith.constant 80 : index
    %c0_290 = arith.constant 0 : index
    %518 = vector.load %arg13[%c80, %c0_290] : memref<208x1xf32, #tpu.memory_space<vmem>>, vector<16x1xf32>
    %519 = vector.broadcast %518 : vector<16x1xf32> to vector<16x128xf32>
    %520 = arith.addf %517, %519 : vector<16x128xf32>
    %cst_291 = arith.constant 0.000000e+00 : f32
    %521 = vector.broadcast %cst_291 : f32 to vector<16x128xf32>
    %522 = arith.cmpf oge, %520, %521 : vector<16x128xf32>
    %cst_292 = arith.constant 1.000000e-01 : f32
    %523 = vector.broadcast %cst_292 : f32 to vector<16x128xf32>
    %524 = arith.mulf %523, %520 : vector<16x128xf32>
    %525 = arith.select %522, %520, %524 : vector<16x128xi1>, vector<16x128xf32>
    %c0_293 = arith.constant 0 : index
    %c0_294 = arith.constant 0 : index
    %526 = vector.load %arg20[%c0_293, %c0_294] : memref<128x512xf32, #tpu.memory_space<vmem>>, vector<128x512xf32>
    %cst_295 = arith.constant dense<0.000000e+00> : vector<16x512xf32>
    %527 = tpu.matmul %525, %526, %cst_295 {dimension_numbers = #tpu.dot_dimension_numbers<[1], [0], [0], [1], [0, 0, 1, 1], [], []>} : vector<16x128xf32>, vector<128x512xf32>, vector<16x512xf32> -> vector<16x512xf32>
    %c0_296 = arith.constant 0 : index
    %c0_297 = arith.constant 0 : index
    %c0_298 = arith.constant 0 : index
    %528 = vector.load %arg14[%c0_296, %c0_297, %c0_298] : memref<9x1x1536xf32, #tpu.memory_space<vmem>>, vector<1x1x1536xf32>
    %529 = vector.shape_cast %528 : vector<1x1x1536xf32> to vector<1x1536xf32>
    %530 = vector.extract_strided_slice %529 {offsets = [0, 0], sizes = [1, 512], strides = [1, 1]} : vector<1x1536xf32> to vector<1x512xf32>
    %c17_i32_299 = arith.constant 17 : i32
    %531 = tpu.dynamic_rotate %527 by %c17_i32_299 dim 1 : vector<16x512xf32>, i32 -> vector<16x512xf32>
    %532 = vector.broadcast %530 : vector<1x512xf32> to vector<16x512xf32>
    %533 = arith.mulf %531, %532 : vector<16x512xf32>
    %c1_300 = arith.constant 1 : index
    %c0_301 = arith.constant 0 : index
    %c0_302 = arith.constant 0 : index
    %534 = vector.load %arg14[%c1_300, %c0_301, %c0_302] : memref<9x1x1536xf32, #tpu.memory_space<vmem>>, vector<1x1x1536xf32>
    %535 = vector.shape_cast %534 : vector<1x1x1536xf32> to vector<1x1536xf32>
    %536 = vector.extract_strided_slice %535 {offsets = [0, 0], sizes = [1, 512], strides = [1, 1]} : vector<1x1536xf32> to vector<1x512xf32>
    %c16_i32_303 = arith.constant 16 : i32
    %537 = tpu.dynamic_rotate %527 by %c16_i32_303 dim 1 : vector<16x512xf32>, i32 -> vector<16x512xf32>
    %538 = vector.broadcast %536 : vector<1x512xf32> to vector<16x512xf32>
    %539 = arith.mulf %537, %538 : vector<16x512xf32>
    %c2_304 = arith.constant 2 : index
    %c0_305 = arith.constant 0 : index
    %c0_306 = arith.constant 0 : index
    %540 = vector.load %arg14[%c2_304, %c0_305, %c0_306] : memref<9x1x1536xf32, #tpu.memory_space<vmem>>, vector<1x1x1536xf32>
    %541 = vector.shape_cast %540 : vector<1x1x1536xf32> to vector<1x1536xf32>
    %542 = vector.extract_strided_slice %541 {offsets = [0, 0], sizes = [1, 512], strides = [1, 1]} : vector<1x1536xf32> to vector<1x512xf32>
    %c15_i32_307 = arith.constant 15 : i32
    %543 = tpu.dynamic_rotate %527 by %c15_i32_307 dim 1 : vector<16x512xf32>, i32 -> vector<16x512xf32>
    %544 = vector.broadcast %542 : vector<1x512xf32> to vector<16x512xf32>
    %545 = arith.mulf %543, %544 : vector<16x512xf32>
    %c3_308 = arith.constant 3 : index
    %c0_309 = arith.constant 0 : index
    %c0_310 = arith.constant 0 : index
    %546 = vector.load %arg14[%c3_308, %c0_309, %c0_310] : memref<9x1x1536xf32, #tpu.memory_space<vmem>>, vector<1x1x1536xf32>
    %547 = vector.shape_cast %546 : vector<1x1x1536xf32> to vector<1x1536xf32>
    %548 = vector.extract_strided_slice %547 {offsets = [0, 0], sizes = [1, 512], strides = [1, 1]} : vector<1x1536xf32> to vector<1x512xf32>
    %c1_i32_311 = arith.constant 1 : i32
    %549 = tpu.dynamic_rotate %527 by %c1_i32_311 dim 1 : vector<16x512xf32>, i32 -> vector<16x512xf32>
    %550 = vector.broadcast %548 : vector<1x512xf32> to vector<16x512xf32>
    %551 = arith.mulf %549, %550 : vector<16x512xf32>
    %c4_312 = arith.constant 4 : index
    %c0_313 = arith.constant 0 : index
    %c0_314 = arith.constant 0 : index
    %552 = vector.load %arg14[%c4_312, %c0_313, %c0_314] : memref<9x1x1536xf32, #tpu.memory_space<vmem>>, vector<1x1x1536xf32>
    %553 = vector.shape_cast %552 : vector<1x1x1536xf32> to vector<1x1536xf32>
    %554 = vector.extract_strided_slice %553 {offsets = [0, 0], sizes = [1, 512], strides = [1, 1]} : vector<1x1536xf32> to vector<1x512xf32>
    %555 = vector.broadcast %554 : vector<1x512xf32> to vector<16x512xf32>
    %556 = arith.mulf %527, %555 : vector<16x512xf32>
    %c5_315 = arith.constant 5 : index
    %c0_316 = arith.constant 0 : index
    %c0_317 = arith.constant 0 : index
    %557 = vector.load %arg14[%c5_315, %c0_316, %c0_317] : memref<9x1x1536xf32, #tpu.memory_space<vmem>>, vector<1x1x1536xf32>
    %558 = vector.shape_cast %557 : vector<1x1x1536xf32> to vector<1x1536xf32>
    %559 = vector.extract_strided_slice %558 {offsets = [0, 0], sizes = [1, 512], strides = [1, 1]} : vector<1x1536xf32> to vector<1x512xf32>
    %c511_i32_318 = arith.constant 511 : i32
    %560 = tpu.dynamic_rotate %527 by %c511_i32_318 dim 1 : vector<16x512xf32>, i32 -> vector<16x512xf32>
    %561 = vector.broadcast %559 : vector<1x512xf32> to vector<16x512xf32>
    %562 = arith.mulf %560, %561 : vector<16x512xf32>
    %c6_319 = arith.constant 6 : index
    %c0_320 = arith.constant 0 : index
    %c0_321 = arith.constant 0 : index
    %563 = vector.load %arg14[%c6_319, %c0_320, %c0_321] : memref<9x1x1536xf32, #tpu.memory_space<vmem>>, vector<1x1x1536xf32>
    %564 = vector.shape_cast %563 : vector<1x1x1536xf32> to vector<1x1536xf32>
    %565 = vector.extract_strided_slice %564 {offsets = [0, 0], sizes = [1, 512], strides = [1, 1]} : vector<1x1536xf32> to vector<1x512xf32>
    %c497_i32_322 = arith.constant 497 : i32
    %566 = tpu.dynamic_rotate %527 by %c497_i32_322 dim 1 : vector<16x512xf32>, i32 -> vector<16x512xf32>
    %567 = vector.broadcast %565 : vector<1x512xf32> to vector<16x512xf32>
    %568 = arith.mulf %566, %567 : vector<16x512xf32>
    %c7_323 = arith.constant 7 : index
    %c0_324 = arith.constant 0 : index
    %c0_325 = arith.constant 0 : index
    %569 = vector.load %arg14[%c7_323, %c0_324, %c0_325] : memref<9x1x1536xf32, #tpu.memory_space<vmem>>, vector<1x1x1536xf32>
    %570 = vector.shape_cast %569 : vector<1x1x1536xf32> to vector<1x1536xf32>
    %571 = vector.extract_strided_slice %570 {offsets = [0, 0], sizes = [1, 512], strides = [1, 1]} : vector<1x1536xf32> to vector<1x512xf32>
    %c496_i32_326 = arith.constant 496 : i32
    %572 = tpu.dynamic_rotate %527 by %c496_i32_326 dim 1 : vector<16x512xf32>, i32 -> vector<16x512xf32>
    %573 = vector.broadcast %571 : vector<1x512xf32> to vector<16x512xf32>
    %574 = arith.mulf %572, %573 : vector<16x512xf32>
    %c8_327 = arith.constant 8 : index
    %c0_328 = arith.constant 0 : index
    %c0_329 = arith.constant 0 : index
    %575 = vector.load %arg14[%c8_327, %c0_328, %c0_329] : memref<9x1x1536xf32, #tpu.memory_space<vmem>>, vector<1x1x1536xf32>
    %576 = vector.shape_cast %575 : vector<1x1x1536xf32> to vector<1x1536xf32>
    %577 = vector.extract_strided_slice %576 {offsets = [0, 0], sizes = [1, 512], strides = [1, 1]} : vector<1x1536xf32> to vector<1x512xf32>
    %c495_i32_330 = arith.constant 495 : i32
    %578 = tpu.dynamic_rotate %527 by %c495_i32_330 dim 1 : vector<16x512xf32>, i32 -> vector<16x512xf32>
    %579 = vector.broadcast %577 : vector<1x512xf32> to vector<16x512xf32>
    %580 = arith.mulf %578, %579 : vector<16x512xf32>
    %581 = tpu.concatenate %533, %539, %545, %551, %556, %562, %568, %574, %580 in 0 : vector<16x512xf32>, vector<16x512xf32>, vector<16x512xf32>, vector<16x512xf32>, vector<16x512xf32>, vector<16x512xf32>, vector<16x512xf32>, vector<16x512xf32>, vector<16x512xf32> -> vector<144x512xf32>
    %c0_331 = arith.constant 0 : index
    %c0_332 = arith.constant 0 : index
    %582 = vector.load %arg6[%c0_331, %c0_332] : memref<16x144xf32, #tpu.memory_space<vmem>>, vector<16x144xf32>
    %cst_333 = arith.constant dense<0.000000e+00> : vector<16x512xf32>
    %583 = tpu.matmul %582, %581, %cst_333 {dimension_numbers = #tpu.dot_dimension_numbers<[1], [0], [0], [1], [0, 0, 1, 1], [], []>} : vector<16x144xf32>, vector<144x512xf32>, vector<16x512xf32> -> vector<16x512xf32>
    %c96 = arith.constant 96 : index
    %c0_334 = arith.constant 0 : index
    %584 = vector.load %arg13[%c96, %c0_334] : memref<208x1xf32, #tpu.memory_space<vmem>>, vector<16x1xf32>
    %585 = vector.broadcast %584 : vector<16x1xf32> to vector<16x512xf32>
    %586 = arith.addf %583, %585 : vector<16x512xf32>
    %c0_335 = arith.constant 0 : index
    %c0_336 = arith.constant 0 : index
    %587 = vector.load %arg10[%c0_335, %c0_336] : memref<16x16xf32, #tpu.memory_space<vmem>>, vector<16x16xf32>
    %cst_337 = arith.constant dense<0.000000e+00> : vector<16x512xf32>
    %588 = tpu.matmul %587, %586, %cst_337 {dimension_numbers = #tpu.dot_dimension_numbers<[1], [0], [0], [1], [0, 0, 1, 1], [], []>} : vector<16x16xf32>, vector<16x512xf32>, vector<16x512xf32> -> vector<16x512xf32>
    %c160 = arith.constant 160 : index
    %c0_338 = arith.constant 0 : index
    %589 = vector.load %arg13[%c160, %c0_338] : memref<208x1xf32, #tpu.memory_space<vmem>>, vector<16x1xf32>
    %590 = vector.broadcast %589 : vector<16x1xf32> to vector<16x512xf32>
    %591 = arith.addf %588, %590 : vector<16x512xf32>
    %cst_339 = arith.constant 0.000000e+00 : f32
    %592 = vector.broadcast %cst_339 : f32 to vector<16x512xf32>
    %593 = arith.cmpf oge, %591, %592 : vector<16x512xf32>
    %cst_340 = arith.constant 1.000000e-01 : f32
    %594 = vector.broadcast %cst_340 : f32 to vector<16x512xf32>
    %595 = arith.mulf %594, %591 : vector<16x512xf32>
    %596 = arith.select %593, %591, %595 : vector<16x512xi1>, vector<16x512xf32>
    %c0_341 = arith.constant 0 : index
    %c0_342 = arith.constant 0 : index
    %597 = vector.load %arg11[%c0_341, %c0_342] : memref<16x16xf32, #tpu.memory_space<vmem>>, vector<16x16xf32>
    %cst_343 = arith.constant dense<0.000000e+00> : vector<16x512xf32>
    %598 = tpu.matmul %597, %596, %cst_343 {dimension_numbers = #tpu.dot_dimension_numbers<[1], [0], [0], [1], [0, 0, 1, 1], [], []>} : vector<16x16xf32>, vector<16x512xf32>, vector<16x512xf32> -> vector<16x512xf32>
    %c176 = arith.constant 176 : index
    %c0_344 = arith.constant 0 : index
    %599 = vector.load %arg13[%c176, %c0_344] : memref<208x1xf32, #tpu.memory_space<vmem>>, vector<16x1xf32>
    %600 = vector.broadcast %599 : vector<16x1xf32> to vector<16x512xf32>
    %601 = arith.addf %598, %600 : vector<16x512xf32>
    %cst_345 = arith.constant 0.000000e+00 : f32
    %602 = vector.broadcast %cst_345 : f32 to vector<16x512xf32>
    %603 = arith.subf %602, %586 : vector<16x512xf32>
    %604 = math.exp %603 : vector<16x512xf32>
    %cst_346 = arith.constant 1.000000e+00 : f32
    %605 = vector.broadcast %cst_346 : f32 to vector<16x512xf32>
    %606 = arith.addf %605, %604 : vector<16x512xf32>
    %607 = tpu.reciprocal %606 {approx = true} : vector<16x512xf32> -> vector<16x512xf32>
    %608 = arith.mulf %53, %607 : vector<16x512xf32>
    %cst_347 = arith.constant 2.000000e+00 : f32
    %609 = vector.broadcast %cst_347 : f32 to vector<16x512xf32>
    %610 = arith.mulf %608, %609 : vector<16x512xf32>
    %611 = arith.addf %610, %601 : vector<16x512xf32>
    %612 = tpu.concatenate %104, %611 in 0 : vector<16x512xf32>, vector<16x512xf32> -> vector<32x512xf32>
    %c0_348 = arith.constant 0 : index
    %c0_349 = arith.constant 0 : index
    %613 = vector.load %arg12[%c0_348, %c0_349] : memref<16x32xf32, #tpu.memory_space<vmem>>, vector<16x32xf32>
    %cst_350 = arith.constant dense<0.000000e+00> : vector<16x512xf32>
    %614 = tpu.matmul %613, %612, %cst_350 {dimension_numbers = #tpu.dot_dimension_numbers<[1], [0], [0], [1], [0, 0, 1, 1], [], []>} : vector<16x32xf32>, vector<32x512xf32>, vector<16x512xf32> -> vector<16x512xf32>
    %c192 = arith.constant 192 : index
    %c0_351 = arith.constant 0 : index
    %615 = vector.load %arg13[%c192, %c0_351] : memref<208x1xf32, #tpu.memory_space<vmem>>, vector<16x1xf32>
    %616 = vector.broadcast %615 : vector<16x1xf32> to vector<16x512xf32>
    %617 = arith.addf %614, %616 : vector<16x512xf32>
    %cst_352 = arith.constant 0.000000e+00 : f32
    %618 = vector.broadcast %cst_352 : f32 to vector<16x512xf32>
    %619 = arith.cmpf oge, %617, %618 : vector<16x512xf32>
    %cst_353 = arith.constant 1.000000e-01 : f32
    %620 = vector.broadcast %cst_353 : f32 to vector<16x512xf32>
    %621 = arith.mulf %620, %617 : vector<16x512xf32>
    %622 = arith.select %619, %617, %621 : vector<16x512xi1>, vector<16x512xf32>
    %c0_354 = arith.constant 0 : index
    %c0_355 = arith.constant 0 : index
    %623 = vector.load %arg21[%c0_354, %c0_355] : memref<16x512xf32, #tpu.memory_space<vmem>>, vector<16x512xf32>
    tpu.vector_store %arg21[%c0_354, %c0_355], %622 {strides = array<i32>} : memref<16x512xf32, #tpu.memory_space<vmem>>, vector<16x512xf32>,
    return
  }
}

</mosaic_0001>

<llo_original>
// kernel: fea_tfusion_forward.1
$region0: #{fea_tfusion_forward.1}
  #allocation0 [shape = 'u32[]', space=smem, size = 0x4, offset = 0x4, fixed_abs, tag = 'smem constant byte address 0x4 - core index']
  #allocation1 [shape = 'u32[144,128]{1,0:T(1,128)}', space=vmem, size = 0x12000, scoped, tag = 'internal scratch']
  %s0 = inlined_call_operand.vmem [shape: f32[16,1536], index: 0, kind: input, shape index: {}]
  %s1 = inlined_call_operand.vmem [shape: f32[32,144], index: 1, kind: input, shape index: {}]
  %s2 = inlined_call_operand.vmem [shape: f32[16,16], index: 2, kind: input, shape index: {}]
  %s3 = inlined_call_operand.vmem [shape: f32[16,32], index: 3, kind: input, shape index: {}]
  %s4 = inlined_call_operand.vmem [shape: f32[16,144], index: 4, kind: input, shape index: {}]
  %s5 = inlined_call_operand.vmem [shape: f32[16,16], index: 5, kind: input, shape index: {}]
  %s6 = inlined_call_operand.vmem [shape: f32[16,144], index: 6, kind: input, shape index: {}]
  %s7 = inlined_call_operand.vmem [shape: f32[16,16], index: 7, kind: input, shape index: {}]
  %s8 = inlined_call_operand.vmem [shape: f32[16,288], index: 8, kind: input, shape index: {}]
  %s9 = inlined_call_operand.vmem [shape: f32[16,144], index: 9, kind: input, shape index: {}]
  %s10 = inlined_call_operand.vmem [shape: f32[16,16], index: 10, kind: input, shape index: {}]
  %s11 = inlined_call_operand.vmem [shape: f32[16,16], index: 11, kind: input, shape index: {}]
  %s12 = inlined_call_operand.vmem [shape: f32[16,32], index: 12, kind: input, shape index: {}]
  %s13 = inlined_call_operand.vmem [shape: f32[208,1], index: 13, kind: input, shape index: {}]
  %s14 = inlined_call_operand.vmem [shape: f32[9,1,1536], index: 14, kind: input, shape index: {}]
  %s15 = inlined_call_operand.vmem [shape: f32[9,1,128], index: 15, kind: input, shape index: {}]
  %s16 = inlined_call_operand.vmem [shape: f32[9,32,32], index: 16, kind: input, shape index: {}]
  %s17 = inlined_call_operand.vmem [shape: f32[512,128], index: 17, kind: input, shape index: {}]
  %s18 = inlined_call_operand.vmem [shape: f32[128,32], index: 18, kind: input, shape index: {}]
  %s19 = inlined_call_operand.vmem [shape: f32[32,128], index: 19, kind: input, shape index: {}]
  %s20 = inlined_call_operand.vmem [shape: f32[128,512], index: 20, kind: input, shape index: {}]
  %s21 = inlined_call_operand.vmem [shape: f32[16,512], index: 21, kind: output, shape index: {}]
  %s22 = sld [smem:[#allocation0]]
  $region94: #{fea_tfusion_forward.1} parent=0
    _
  %s24 = ssub.s32 1, %s22
  %s25 = scalar_select 0, %s24, %s22
  // Predicated region
  $region2: #{fea_tfusion_forward.1} parent=0 // pred_check
    _
  $region3: #{fea_tfusion_forward.1} parent=0 // pred_check_branch
    %27 = sbr.rel (0) target = $region5
  $region4: #{fea_tfusion_forward.1} parent=0 // pred_region
    _
  $region5: #{fea_tfusion_forward.1} parent=0 // pred_fallthru
    _
  // Predicated region
  $region6: #{fea_tfusion_forward.1} parent=0 // pred_check
    _
  $region7: #{fea_tfusion_forward.1} parent=0 // pred_check_branch
    %29 = sbr.rel (0) target = $region9
  $region8: #{fea_tfusion_forward.1} parent=0 // pred_region
    _
  $region9: #{fea_tfusion_forward.1} parent=0 // pred_fallthru
    _
  // Predicated region
  $region10: #{fea_tfusion_forward.1} parent=0 // pred_check
    _
  $region11: #{fea_tfusion_forward.1} parent=0 // pred_check_branch
    %31 = sbr.rel (0) target = $region13
  $region12: #{fea_tfusion_forward.1} parent=0 // pred_region
    _
  $region13: #{fea_tfusion_forward.1} parent=0 // pred_fallthru
    _
  // Predicated region
  $region14: #{fea_tfusion_forward.1} parent=0 // pred_check
    _
  $region15: #{fea_tfusion_forward.1} parent=0 // pred_check_branch
    %33 = sbr.rel (0) target = $region17
  $region16: #{fea_tfusion_forward.1} parent=0 // pred_region
    _
  $region17: #{fea_tfusion_forward.1} parent=0 // pred_fallthru
    _
  // Predicated region
  $region18: #{fea_tfusion_forward.1} parent=0 // pred_check
    _
  $region19: #{fea_tfusion_forward.1} parent=0 // pred_check_branch
    %35 = sbr.rel (0) target = $region21
  $region20: #{fea_tfusion_forward.1} parent=0 // pred_region
    _
  $region21: #{fea_tfusion_forward.1} parent=0 // pred_fallthru
    _
  // Predicated region
  $region22: #{fea_tfusion_forward.1} parent=0 // pred_check
    _
  $region23: #{fea_tfusion_forward.1} parent=0 // pred_check_branch
    %37 = sbr.rel (0) target = $region25
  $region24: #{fea_tfusion_forward.1} parent=0 // pred_region
    _
  $region25: #{fea_tfusion_forward.1} parent=0 // pred_fallthru
    _
  // Predicated region
  $region26: #{fea_tfusion_forward.1} parent=0 // pred_check
    _
  $region27: #{fea_tfusion_forward.1} parent=0 // pred_check_branch
    %39 = sbr.rel (0) target = $region29
  $region28: #{fea_tfusion_forward.1} parent=0 // pred_region
    _
  $region29: #{fea_tfusion_forward.1} parent=0 // pred_fallthru
    _
  // Predicated region
  $region30: #{fea_tfusion_forward.1} parent=0 // pred_check
    _
  $region31: #{fea_tfusion_forward.1} parent=0 // pred_check_branch
    %41 = sbr.rel (0) target = $region33
  $region32: #{fea_tfusion_forward.1} parent=0 // pred_region
    _
  $region33: #{fea_tfusion_forward.1} parent=0 // pred_fallthru
    _
  // Predicated region
  $region34: #{fea_tfusion_forward.1} parent=0 // pred_check
    _
  $region35: #{fea_tfusion_forward.1} parent=0 // pred_check_branch
    %43 = sbr.rel (0) target = $region37
  $region36: #{fea_tfusion_forward.1} parent=0 // pred_region
    _
  $region37: #{fea_tfusion_forward.1} parent=0 // pred_fallthru
    _
  // Predicated region
  $region38: #{fea_tfusion_forward.1} parent=0 // pred_check
    _
  $region39: #{fea_tfusion_forward.1} parent=0 // pred_check_branch
    %45 = sbr.rel (0) target = $region41
  $region40: #{fea_tfusion_forward.1} parent=0 // pred_region
    _
  $region41: #{fea_tfusion_forward.1} parent=0 // pred_fallthru
    _
  // Predicated region
  $region42: #{fea_tfusion_forward.1} parent=0 // pred_check
    _
  $region43: #{fea_tfusion_forward.1} parent=0 // pred_check_branch
    %47 = sbr.rel (0) target = $region45
  $region44: #{fea_tfusion_forward.1} parent=0 // pred_region
    _
  $region45: #{fea_tfusion_forward.1} parent=0 // pred_fallthru
    _
  // Predicated region
  $region46: #{fea_tfusion_forward.1} parent=0 // pred_check
    _
  $region47: #{fea_tfusion_forward.1} parent=0 // pred_check_branch
    %49 = sbr.rel (0) target = $region49
  $region48: #{fea_tfusion_forward.1} parent=0 // pred_region
    _
  $region49: #{fea_tfusion_forward.1} parent=0 // pred_fallthru
    _
  // Predicated region
  $region50: #{fea_tfusion_forward.1} parent=0 // pred_check
    _
  $region51: #{fea_tfusion_forward.1} parent=0 // pred_check_branch
    %51 = sbr.rel (0) target = $region53
  $region52: #{fea_tfusion_forward.1} parent=0 // pred_region
    _
  $region53: #{fea_tfusion_forward.1} parent=0 // pred_fallthru
    _
  // Predicated region
  $region54: #{fea_tfusion_forward.1} parent=0 // pred_check
    _
  $region55: #{fea_tfusion_forward.1} parent=0 // pred_check_branch
    %53 = sbr.rel (0) target = $region57
  $region56: #{fea_tfusion_forward.1} parent=0 // pred_region
    _
  $region57: #{fea_tfusion_forward.1} parent=0 // pred_fallthru
    _
  // Predicated region
  $region58: #{fea_tfusion_forward.1} parent=0 // pred_check
    _
  $region59: #{fea_tfusion_forward.1} parent=0 // pred_check_branch
    %55 = sbr.rel (0) target = $region61
  $region60: #{fea_tfusion_forward.1} parent=0 // pred_region
    _
  $region61: #{fea_tfusion_forward.1} parent=0 // pred_fallthru
    _
  // Predicated region
  $region62: #{fea_tfusion_forward.1} parent=0 // pred_check
    _
  $region63: #{fea_tfusion_forward.1} parent=0 // pred_check_branch
    %57 = sbr.rel (0) target = $region65
  $region64: #{fea_tfusion_forward.1} parent=0 // pred_region
    _
  $region65: #{fea_tfusion_forward.1} parent=0 // pred_fallthru
    _
  // Predicated region
  $region66: #{fea_tfusion_forward.1} parent=0 // pred_check
    _
  $region67: #{fea_tfusion_forward.1} parent=0 // pred_check_branch
    %59 = sbr.rel (0) target = $region69
  $region68: #{fea_tfusion_forward.1} parent=0 // pred_region
    _
  $region69: #{fea_tfusion_forward.1} parent=0 // pred_fallthru
    _
  // Predicated region
  $region70: #{fea_tfusion_forward.1} parent=0 // pred_check
    _
  $region71: #{fea_tfusion_forward.1} parent=0 // pred_check_branch
    %61 = sbr.rel (0) target = $region73
  $region72: #{fea_tfusion_forward.1} parent=0 // pred_region
    _
  $region73: #{fea_tfusion_forward.1} parent=0 // pred_fallthru
    _
  // Predicated region
  $region74: #{fea_tfusion_forward.1} parent=0 // pred_check
    _
  $region75: #{fea_tfusion_forward.1} parent=0 // pred_check_branch
    %63 = sbr.rel (0) target = $region77
  $region76: #{fea_tfusion_forward.1} parent=0 // pred_region
    _
  $region77: #{fea_tfusion_forward.1} parent=0 // pred_fallthru
    _
  // Predicated region
  $region78: #{fea_tfusion_forward.1} parent=0 // pred_check
    _
  $region79: #{fea_tfusion_forward.1} parent=0 // pred_check_branch
    %65 = sbr.rel (0) target = $region81
  $region80: #{fea_tfusion_forward.1} parent=0 // pred_region
    _
  $region81: #{fea_tfusion_forward.1} parent=0 // pred_fallthru
    _
  // Predicated region
  $region82: #{fea_tfusion_forward.1} parent=0 // pred_check
    _
  $region83: #{fea_tfusion_forward.1} parent=0 // pred_check_branch
    %67 = sbr.rel (0) target = $region85
  $region84: #{fea_tfusion_forward.1} parent=0 // pred_region
    _
  $region85: #{fea_tfusion_forward.1} parent=0 // pred_fallthru
    _
  %v68 = vld [vmem:[%s0] sm:$0xff]
  %v69 = vld [vmem:[%s0 + $0x8] sm:$0xff]
  %v70 = vld [vmem:[%s0 + $0x10] sm:$0xff]
  %v71 = vld [vmem:[%s0 + $0x18] sm:$0xff]
  %v72 = vld [vmem:[%s0 + $0x20] sm:$0xff]
  %v73 = vld [vmem:[%s0 + $0x28] sm:$0xff]
  %v74 = vld [vmem:[%s0 + $0x30] sm:$0xff]
  %v75 = vld [vmem:[%s0 + $0x38] sm:$0xff]
  %v76 = vld [vmem:[%s0 + $0x40] sm:$0xff]
  %v77 = vld [vmem:[%s0 + $0x48] sm:$0xff]
  %v78 = vld [vmem:[%s0 + $0x50] sm:$0xff]
  %v79 = vld [vmem:[%s0 + $0x58] sm:$0xff]
  %v80 = vld [vmem:[%s0 + $0x60] sm:$0xff]
  %v81 = vld [vmem:[%s0 + $0x68] sm:$0xff]
  %v82 = vld [vmem:[%s0 + $0x70] sm:$0xff]
  %v83 = vld [vmem:[%s0 + $0x78] sm:$0xff]
  %v84 = vld [vmem:[%s0 + $0x80] sm:$0xff]
  %v85 = vld [vmem:[%s0 + $0x88] sm:$0xff]
  %v86 = vld [vmem:[%s0 + $0x90] sm:$0xff]
  %v87 = vld [vmem:[%s0 + $0x98] sm:$0xff]
  %v88 = vld [vmem:[%s0 + $0xa0] sm:$0xff]
  %v89 = vld [vmem:[%s0 + $0xa8] sm:$0xff]
  %v90 = vld [vmem:[%s0 + $0xb0] sm:$0xff]
  %v91 = vld [vmem:[%s0 + $0xb8] sm:$0xff]
  %v92 = vld [vmem:[%s14] sm:$0xff]
  %v93 = vld [vmem:[%s14 + $0x8] sm:$0xf]
  %94 = vrot.lane.b32.xlu0 %v68, 17
  %v95 = vpop.permute.xlu0 %94
  %96 = vrot.lane.b32.xlu0 %v80, 17
  %v97 = vpop.permute.xlu0 %96
  %98 = vrot.lane.b32.xlu0 %v69, 17
  %v99 = vpop.permute.xlu0 %98
  %100 = vrot.lane.b32.xlu0 %v81, 17
  %v101 = vpop.permute.xlu0 %100
  %102 = vrot.lane.b32.xlu0 %v70, 17
  %v103 = vpop.permute.xlu0 %102
  %104 = vrot.lane.b32.xlu0 %v82, 17
  %v105 = vpop.permute.xlu0 %104
  %106 = vrot.lane.b32.xlu0 %v71, 17
  %v107 = vpop.permute.xlu0 %106
  %108 = vrot.lane.b32.xlu0 %v83, 17
  %v109 = vpop.permute.xlu0 %108
  %110 = vrot.lane.b32.xlu0 %v72, 17
  %v111 = vpop.permute.xlu0 %110
  %112 = vrot.lane.b32.xlu0 %v84, 17
  %v113 = vpop.permute.xlu0 %112
  %114 = vrot.lane.b32.xlu0 %v73, 17
  %v115 = vpop.permute.xlu0 %114
  %116 = vrot.lane.b32.xlu0 %v85, 17
  %v117 = vpop.permute.xlu0 %116
  %118 = vrot.lane.b32.xlu0 %v74, 17
  %v119 = vpop.permute.xlu0 %118
  %120 = vrot.lane.b32.xlu0 %v86, 17
  %v121 = vpop.permute.xlu0 %120
  %122 = vrot.lane.b32.xlu0 %v75, 17
  %v123 = vpop.permute.xlu0 %122
  %124 = vrot.lane.b32.xlu0 %v87, 17
  %v125 = vpop.permute.xlu0 %124
  %126 = vrot.lane.b32.xlu0 %v76, 17
  %v127 = vpop.permute.xlu0 %126
  %128 = vrot.lane.b32.xlu0 %v88, 17
  %v129 = vpop.permute.xlu0 %128
  %130 = vrot.lane.b32.xlu0 %v77, 17
  %v131 = vpop.permute.xlu0 %130
  %132 = vrot.lane.b32.xlu0 %v89, 17
  %v133 = vpop.permute.xlu0 %132
  %134 = vrot.lane.b32.xlu0 %v78, 17
  %v135 = vpop.permute.xlu0 %134
  %136 = vrot.lane.b32.xlu0 %v90, 17
  %v137 = vpop.permute.xlu0 %136
  %138 = vrot.lane.b32.xlu0 %v79, 17
  %v139 = vpop.permute.xlu0 %138
  %140 = vrot.lane.b32.xlu0 %v91, 17
  %v141 = vpop.permute.xlu0 %140
  %v142 = vlaneseq
  %v143 = vand.u32 %v142, 127
  %vm144 = vcmp.lt.s32.totalorder %v143, 17
  %v145 = vsel %vm144, %v135, %v139
  %v146 = vsel %vm144, %v137, %v141
  %v147 = vsel %vm144, %v131, %v135
  %v148 = vsel %vm144, %v133, %v137
  %v149 = vsel %vm144, %v127, %v131
  %v150 = vsel %vm144, %v129, %v133
  %v151 = vsel %vm144, %v123, %v127
  %v152 = vsel %vm144, %v125, %v129
  %v153 = vsel %vm144, %v119, %v123
  %v154 = vsel %vm144, %v121, %v125
  %v155 = vsel %vm144, %v115, %v119
  %v156 = vsel %vm144, %v117, %v121
  %v157 = vsel %vm144, %v111, %v115
  %v158 = vsel %vm144, %v113, %v117
  %v159 = vsel %vm144, %v107, %v111
  %v160 = vsel %vm144, %v109, %v113
  %v161 = vsel %vm144, %v103, %v107
  %v162 = vsel %vm144, %v105, %v109
  %v163 = vsel %vm144, %v99, %v103
  %v164 = vsel %vm144, %v101, %v105
  %v165 = vsel %vm144, %v95, %v99
  %v166 = vsel %vm144, %v97, %v101
  %v167 = vsel %vm144, %v139, %v95
  %v168 = vsel %vm144, %v141, %v97
  %v171 = vlaneseq
  %v172 = vshrl.u32 %v171, 7
  %v173 = vsub.s32 0, %v172
  %v174 = vrot.slane %v92, %v173
  %v175 = vlaneseq
  %v176 = vshrl.u32 %v175, 7
  %v177 = vsub.s32 1, %v176
  %v178 = vrot.slane %v92, %v177
  %v179 = vlaneseq
  %v180 = vshrl.u32 %v179, 7
  %v181 = vsub.s32 2, %v180
  %v182 = vrot.slane %v92, %v181
  %v183 = vlaneseq
  %v184 = vshrl.u32 %v183, 7
  %v185 = vsub.s32 3, %v184
  %v186 = vrot.slane %v92, %v185
  %v187 = vlaneseq
  %v188 = vshrl.u32 %v187, 7
  %v189 = vsub.s32 4, %v188
  %v190 = vrot.slane %v92, %v189
  %v191 = vlaneseq
  %v192 = vshrl.u32 %v191, 7
  %v193 = vsub.s32 5, %v192
  %v194 = vrot.slane %v92, %v193
  %v195 = vlaneseq
  %v196 = vshrl.u32 %v195, 7
  %v197 = vsub.s32 6, %v196
  %v198 = vrot.slane %v92, %v197
  %v199 = vlaneseq
  %v200 = vshrl.u32 %v199, 7
  %v201 = vsub.s32 7, %v200
  %v202 = vrot.slane %v92, %v201
  %v203 = vlaneseq
  %v204 = vshrl.u32 %v203, 7
  %v205 = vsub.s32 0, %v204
  %v206 = vrot.slane %v93, %v205
  %v207 = vlaneseq
  %v208 = vshrl.u32 %v207, 7
  %v209 = vsub.s32 1, %v208
  %v210 = vrot.slane %v93, %v209
  %v211 = vlaneseq
  %v212 = vshrl.u32 %v211, 7
  %v213 = vsub.s32 2, %v212
  %v214 = vrot.slane %v93, %v213
  %v215 = vlaneseq
  %v216 = vshrl.u32 %v215, 7
  %v217 = vsub.s32 3, %v216
  %v218 = vrot.slane %v93, %v217
  %v231 = vmul.f32 %v167, %v174
  %v232 = vmul.f32 %v165, %v178
  %v233 = vmul.f32 %v163, %v182
  %v234 = vmul.f32 %v161, %v186
  %v235 = vmul.f32 %v159, %v190
  %v236 = vmul.f32 %v157, %v194
  %v237 = vmul.f32 %v155, %v198
  %v238 = vmul.f32 %v153, %v202
  %v239 = vmul.f32 %v151, %v206
  %v240 = vmul.f32 %v149, %v210
  %v241 = vmul.f32 %v147, %v214
  %v242 = vmul.f32 %v145, %v218
  %v243 = vmul.f32 %v168, %v174
  %v244 = vmul.f32 %v166, %v178
  %v245 = vmul.f32 %v164, %v182
  %v246 = vmul.f32 %v162, %v186
  %v247 = vmul.f32 %v160, %v190
  %v248 = vmul.f32 %v158, %v194
  %v249 = vmul.f32 %v156, %v198
  %v250 = vmul.f32 %v154, %v202
  %v251 = vmul.f32 %v152, %v206
  %v252 = vmul.f32 %v150, %v210
  %v253 = vmul.f32 %v148, %v214
  %v254 = vmul.f32 %v146, %v218
  %s255 = scalar_lea.vmem %s14, 12
  %v256 = vld [vmem:[%s255] sm:$0xff]
  %v257 = vld [vmem:[%s255 + $0x8] sm:$0xf]
  %258 = vrot.lane.b32.xlu0 %v68, 16
  %v259 = vpop.permute.xlu0 %258
  %260 = vrot.lane.b32.xlu0 %v80, 16
  %v261 = vpop.permute.xlu0 %260
  %262 = vrot.lane.b32.xlu0 %v69, 16
  %v263 = vpop.permute.xlu0 %262
  %264 = vrot.lane.b32.xlu0 %v81, 16
  %v265 = vpop.permute.xlu0 %264
  %266 = vrot.lane.b32.xlu0 %v70, 16
  %v267 = vpop.permute.xlu0 %266
  %268 = vrot.lane.b32.xlu0 %v82, 16
  %v269 = vpop.permute.xlu0 %268
  %270 = vrot.lane.b32.xlu0 %v71, 16
  %v271 = vpop.permute.xlu0 %270
  %272 = vrot.lane.b32.xlu0 %v83, 16
  %v273 = vpop.permute.xlu0 %272
  %274 = vrot.lane.b32.xlu0 %v72, 16
  %v275 = vpop.permute.xlu0 %274
  %276 = vrot.lane.b32.xlu0 %v84, 16
  %v277 = vpop.permute.xlu0 %276
  %278 = vrot.lane.b32.xlu0 %v73, 16
  %v279 = vpop.permute.xlu0 %278
  %280 = vrot.lane.b32.xlu0 %v85, 16
  %v281 = vpop.permute.xlu0 %280
  %282 = vrot.lane.b32.xlu0 %v74, 16
  %v283 = vpop.permute.xlu0 %282
  %284 = vrot.lane.b32.xlu0 %v86, 16
  %v285 = vpop.permute.xlu0 %284
  %286 = vrot.lane.b32.xlu0 %v75, 16
  %v287 = vpop.permute.xlu0 %286
  %288 = vrot.lane.b32.xlu0 %v87, 16
  %v289 = vpop.permute.xlu0 %288
  %290 = vrot.lane.b32.xlu0 %v76, 16
  %v291 = vpop.permute.xlu0 %290
  %292 = vrot.lane.b32.xlu0 %v88, 16
  %v293 = vpop.permute.xlu0 %292
  %294 = vrot.lane.b32.xlu0 %v77, 16
  %v295 = vpop.permute.xlu0 %294
  %296 = vrot.lane.b32.xlu0 %v89, 16
  %v297 = vpop.permute.xlu0 %296
  %298 = vrot.lane.b32.xlu0 %v78, 16
  %v299 = vpop.permute.xlu0 %298
  %300 = vrot.lane.b32.xlu0 %v90, 16
  %v301 = vpop.permute.xlu0 %300
  %302 = vrot.lane.b32.xlu0 %v79, 16
  %v303 = vpop.permute.xlu0 %302
  %304 = vrot.lane.b32.xlu0 %v91, 16
  %v305 = vpop.permute.xlu0 %304
  %vm306 = vcmp.lt.s32.totalorder %v143, 16
  %v307 = vsel %vm306, %v299, %v303
  %v308 = vsel %vm306, %v301, %v305
  %v309 = vsel %vm306, %v295, %v299
  %v310 = vsel %vm306, %v297, %v301
  %v311 = vsel %vm306, %v291, %v295
  %v312 = vsel %vm306, %v293, %v297
  %v313 = vsel %vm306, %v287, %v291
  %v314 = vsel %vm306, %v289, %v293
  %v315 = vsel %vm306, %v283, %v287
  %v316 = vsel %vm306, %v285, %v289
  %v317 = vsel %vm306, %v279, %v283
  %v318 = vsel %vm306, %v281, %v285
  %v319 = vsel %vm306, %v275, %v279
  %v320 = vsel %vm306, %v277, %v281
  %v321 = vsel %vm306, %v271, %v275
  %v322 = vsel %vm306, %v273, %v277
  %v323 = vsel %vm306, %v267, %v271
  %v324 = vsel %vm306, %v269, %v273
  %v325 = vsel %vm306, %v263, %v267
  %v326 = vsel %vm306, %v265, %v269
  %v327 = vsel %vm306, %v259, %v263
  %v328 = vsel %vm306, %v261, %v265
  %v329 = vsel %vm306, %v303, %v259
  %v330 = vsel %vm306, %v305, %v261
  %v333 = vlaneseq
  %v334 = vshrl.u32 %v333, 7
  %v335 = vsub.s32 0, %v334
  %v336 = vrot.slane %v256, %v335
  %v337 = vlaneseq
  %v338 = vshrl.u32 %v337, 7
  %v339 = vsub.s32 1, %v338
  %v340 = vrot.slane %v256, %v339
  %v341 = vlaneseq
  %v342 = vshrl.u32 %v341, 7
  %v343 = vsub.s32 2, %v342
  %v344 = vrot.slane %v256, %v343
  %v345 = vlaneseq
  %v346 = vshrl.u32 %v345, 7
  %v347 = vsub.s32 3, %v346
  %v348 = vrot.slane %v256, %v347
  %v349 = vlaneseq
  %v350 = vshrl.u32 %v349, 7
  %v351 = vsub.s32 4, %v350
  %v352 = vrot.slane %v256, %v351
  %v353 = vlaneseq
  %v354 = vshrl.u32 %v353, 7
  %v355 = vsub.s32 5, %v354
  %v356 = vrot.slane %v256, %v355
  %v357 = vlaneseq
  %v358 = vshrl.u32 %v357, 7
  %v359 = vsub.s32 6, %v358
  %v360 = vrot.slane %v256, %v359
  %v361 = vlaneseq
  %v362 = vshrl.u32 %v361, 7
  %v363 = vsub.s32 7, %v362
  %v364 = vrot.slane %v256, %v363
  %v365 = vlaneseq
  %v366 = vshrl.u32 %v365, 7
  %v367 = vsub.s32 0, %v366
  %v368 = vrot.slane %v257, %v367
  %v369 = vlaneseq
  %v370 = vshrl.u32 %v369, 7
  %v371 = vsub.s32 1, %v370
  %v372 = vrot.slane %v257, %v371
  %v373 = vlaneseq
  %v374 = vshrl.u32 %v373, 7
  %v375 = vsub.s32 2, %v374
  %v376 = vrot.slane %v257, %v375
  %v377 = vlaneseq
  %v378 = vshrl.u32 %v377, 7
  %v379 = vsub.s32 3, %v378
  %v380 = vrot.slane %v257, %v379
  %v393 = vmul.f32 %v329, %v336
  %v394 = vmul.f32 %v327, %v340
  %v395 = vmul.f32 %v325, %v344
  %v396 = vmul.f32 %v323, %v348
  %v397 = vmul.f32 %v321, %v352
  %v398 = vmul.f32 %v319, %v356
  %v399 = vmul.f32 %v317, %v360
  %v400 = vmul.f32 %v315, %v364
  %v401 = vmul.f32 %v313, %v368
  %v402 = vmul.f32 %v311, %v372
  %v403 = vmul.f32 %v309, %v376
  %v404 = vmul.f32 %v307, %v380
  %v405 = vmul.f32 %v330, %v336
  %v406 = vmul.f32 %v328, %v340
  %v407 = vmul.f32 %v326, %v344
  %v408 = vmul.f32 %v324, %v348
  %v409 = vmul.f32 %v322, %v352
  %v410 = vmul.f32 %v320, %v356
  %v411 = vmul.f32 %v318, %v360
  %v412 = vmul.f32 %v316, %v364
  %v413 = vmul.f32 %v314, %v368
  %v414 = vmul.f32 %v312, %v372
  %v415 = vmul.f32 %v310, %v376
  %v416 = vmul.f32 %v308, %v380
  %s417 = scalar_lea.vmem %s14, 24
  %v418 = vld [vmem:[%s417] sm:$0xff]
  %v419 = vld [vmem:[%s417 + $0x8] sm:$0xf]
  %420 = vrot.lane.b32.xlu0 %v68, 15
  %v421 = vpop.permute.xlu0 %420
  %422 = vrot.lane.b32.xlu0 %v80, 15
  %v423 = vpop.permute.xlu0 %422
  %424 = vrot.lane.b32.xlu0 %v69, 15
  %v425 = vpop.permute.xlu0 %424
  %426 = vrot.lane.b32.xlu0 %v81, 15
  %v427 = vpop.permute.xlu0 %426
  %428 = vrot.lane.b32.xlu0 %v70, 15
  %v429 = vpop.permute.xlu0 %428
  %430 = vrot.lane.b32.xlu0 %v82, 15
  %v431 = vpop.permute.xlu0 %430
  %432 = vrot.lane.b32.xlu0 %v71, 15
  %v433 = vpop.permute.xlu0 %432
  %434 = vrot.lane.b32.xlu0 %v83, 15
  %v435 = vpop.permute.xlu0 %434
  %436 = vrot.lane.b32.xlu0 %v72, 15
  %v437 = vpop.permute.xlu0 %436
  %438 = vrot.lane.b32.xlu0 %v84, 15
  %v439 = vpop.permute.xlu0 %438
  %440 = vrot.lane.b32.xlu0 %v73, 15
  %v441 = vpop.permute.xlu0 %440
  %442 = vrot.lane.b32.xlu0 %v85, 15
  %v443 = vpop.permute.xlu0 %442
  %444 = vrot.lane.b32.xlu0 %v74, 15
  %v445 = vpop.permute.xlu0 %444
  %446 = vrot.lane.b32.xlu0 %v86, 15
  %v447 = vpop.permute.xlu0 %446
  %448 = vrot.lane.b32.xlu0 %v75, 15
  %v449 = vpop.permute.xlu0 %448
  %450 = vrot.lane.b32.xlu0 %v87, 15
  %v451 = vpop.permute.xlu0 %450
  %452 = vrot.lane.b32.xlu0 %v76, 15
  %v453 = vpop.permute.xlu0 %452
  %454 = vrot.lane.b32.xlu0 %v88, 15
  %v455 = vpop.permute.xlu0 %454
  %456 = vrot.lane.b32.xlu0 %v77, 15
  %v457 = vpop.permute.xlu0 %456
  %458 = vrot.lane.b32.xlu0 %v89, 15
  %v459 = vpop.permute.xlu0 %458
  %460 = vrot.lane.b32.xlu0 %v78, 15
  %v461 = vpop.permute.xlu0 %460
  %462 = vrot.lane.b32.xlu0 %v90, 15
  %v463 = vpop.permute.xlu0 %462
  %464 = vrot.lane.b32.xlu0 %v79, 15
  %v465 = vpop.permute.xlu0 %464
  %466 = vrot.lane.b32.xlu0 %v91, 15
  %v467 = vpop.permute.xlu0 %466
  %vm468 = vcmp.lt.s32.totalorder %v143, 15
  %v469 = vsel %vm468, %v461, %v465
  %v470 = vsel %vm468, %v463, %v467
  %v471 = vsel %vm468, %v457, %v461
  %v472 = vsel %vm468, %v459, %v463
  %v473 = vsel %vm468, %v453, %v457
  %v474 = vsel %vm468, %v455, %v459
  %v475 = vsel %vm468, %v449, %v453
  %v476 = vsel %vm468, %v451, %v455
  %v477 = vsel %vm468, %v445, %v449
  %v478 = vsel %vm468, %v447, %v451
  %v479 = vsel %vm468, %v441, %v445
  %v480 = vsel %vm468, %v443, %v447
  %v481 = vsel %vm468, %v437, %v441
  %v482 = vsel %vm468, %v439, %v443
  %v483 = vsel %vm468, %v433, %v437
  %v484 = vsel %vm468, %v435, %v439
  %v485 = vsel %vm468, %v429, %v433
  %v486 = vsel %vm468, %v431, %v435
  %v487 = vsel %vm468, %v425, %v429
  %v488 = vsel %vm468, %v427, %v431
  %v489 = vsel %vm468, %v421, %v425
  %v490 = vsel %vm468, %v423, %v427
  %v491 = vsel %vm468, %v465, %v421
  %v492 = vsel %vm468, %v467, %v423
  %v495 = vlaneseq
  %v496 = vshrl.u32 %v495, 7
  %v497 = vsub.s32 0, %v496
  %v498 = vrot.slane %v418, %v497
  %v499 = vlaneseq
  %v500 = vshrl.u32 %v499, 7
  %v501 = vsub.s32 1, %v500
  %v502 = vrot.slane %v418, %v501
  %v503 = vlaneseq
  %v504 = vshrl.u32 %v503, 7
  %v505 = vsub.s32 2, %v504
  %v506 = vrot.slane %v418, %v505
  %v507 = vlaneseq
  %v508 = vshrl.u32 %v507, 7
  %v509 = vsub.s32 3, %v508
  %v510 = vrot.slane %v418, %v509
  %v511 = vlaneseq
  %v512 = vshrl.u32 %v511, 7
  %v513 = vsub.s32 4, %v512
  %v514 = vrot.slane %v418, %v513
  %v515 = vlaneseq
  %v516 = vshrl.u32 %v515, 7
  %v517 = vsub.s32 5, %v516
  %v518 = vrot.slane %v418, %v517
  %v519 = vlaneseq
  %v520 = vshrl.u32 %v519, 7
  %v521 = vsub.s32 6, %v520
  %v522 = vrot.slane %v418, %v521
  %v523 = vlaneseq
  %v524 = vshrl.u32 %v523, 7
  %v525 = vsub.s32 7, %v524
  %v526 = vrot.slane %v418, %v525
  %v527 = vlaneseq
  %v528 = vshrl.u32 %v527, 7
  %v529 = vsub.s32 0, %v528
  %v530 = vrot.slane %v419, %v529
  %v531 = vlaneseq
  %v532 = vshrl.u32 %v531, 7
  %v533 = vsub.s32 1, %v532
  %v534 = vrot.slane %v419, %v533
  %v535 = vlaneseq
  %v536 = vshrl.u32 %v535, 7
  %v537 = vsub.s32 2, %v536
  %v538 = vrot.slane %v419, %v537
  %v539 = vlaneseq
  %v540 = vshrl.u32 %v539, 7
  %v541 = vsub.s32 3, %v540
  %v542 = vrot.slane %v419, %v541
  %v555 = vmul.f32 %v491, %v498
  %v556 = vmul.f32 %v489, %v502
  %v557 = vmul.f32 %v487, %v506
  %v558 = vmul.f32 %v485, %v510
  %v559 = vmul.f32 %v483, %v514
  %v560 = vmul.f32 %v481, %v518
  %v561 = vmul.f32 %v479, %v522
  %v562 = vmul.f32 %v477, %v526
  %v563 = vmul.f32 %v475, %v530
  %v564 = vmul.f32 %v473, %v534
  %v565 = vmul.f32 %v471, %v538
  %v566 = vmul.f32 %v469, %v542
  %v567 = vmul.f32 %v492, %v498
  %v568 = vmul.f32 %v490, %v502
  %v569 = vmul.f32 %v488, %v506
  %v570 = vmul.f32 %v486, %v510
  %v571 = vmul.f32 %v484, %v514
  %v572 = vmul.f32 %v482, %v518
  %v573 = vmul.f32 %v480, %v522
  %v574 = vmul.f32 %v478, %v526
  %v575 = vmul.f32 %v476, %v530
  %v576 = vmul.f32 %v474, %v534
  %v577 = vmul.f32 %v472, %v538
  %v578 = vmul.f32 %v470, %v542
  %s579 = scalar_lea.vmem %s14, 36
  %v580 = vld [vmem:[%s579] sm:$0xff]
  %v581 = vld [vmem:[%s579 + $0x8] sm:$0xf]
  %582 = vrot.lane.b32.xlu0 %v68, 1
  %v583 = vpop.permute.xlu0 %582
  %584 = vrot.lane.b32.xlu0 %v80, 1
  %v585 = vpop.permute.xlu0 %584
  %586 = vrot.lane.b32.xlu0 %v69, 1
  %v587 = vpop.permute.xlu0 %586
  %588 = vrot.lane.b32.xlu0 %v81, 1
  %v589 = vpop.permute.xlu0 %588
  %590 = vrot.lane.b32.xlu0 %v70, 1
  %v591 = vpop.permute.xlu0 %590
  %592 = vrot.lane.b32.xlu0 %v82, 1
  %v593 = vpop.permute.xlu0 %592
  %594 = vrot.lane.b32.xlu0 %v71, 1
  %v595 = vpop.permute.xlu0 %594
  %596 = vrot.lane.b32.xlu0 %v83, 1
  %v597 = vpop.permute.xlu0 %596
  %598 = vrot.lane.b32.xlu0 %v72, 1
  %v599 = vpop.permute.xlu0 %598
  %600 = vrot.lane.b32.xlu0 %v84, 1
  %v601 = vpop.permute.xlu0 %600
  %602 = vrot.lane.b32.xlu0 %v73, 1
  %v603 = vpop.permute.xlu0 %602
  %604 = vrot.lane.b32.xlu0 %v85, 1
  %v605 = vpop.permute.xlu0 %604
  %606 = vrot.lane.b32.xlu0 %v74, 1
  %v607 = vpop.permute.xlu0 %606
  %608 = vrot.lane.b32.xlu0 %v86, 1
  %v609 = vpop.permute.xlu0 %608
  %610 = vrot.lane.b32.xlu0 %v75, 1
  %v611 = vpop.permute.xlu0 %610
  %612 = vrot.lane.b32.xlu0 %v87, 1
  %v613 = vpop.permute.xlu0 %612
  %614 = vrot.lane.b32.xlu0 %v76, 1
  %v615 = vpop.permute.xlu0 %614
  %616 = vrot.lane.b32.xlu0 %v88, 1
  %v617 = vpop.permute.xlu0 %616
  %618 = vrot.lane.b32.xlu0 %v77, 1
  %v619 = vpop.permute.xlu0 %618
  %620 = vrot.lane.b32.xlu0 %v89, 1
  %v621 = vpop.permute.xlu0 %620
  %622 = vrot.lane.b32.xlu0 %v78, 1
  %v623 = vpop.permute.xlu0 %622
  %624 = vrot.lane.b32.xlu0 %v90, 1
  %v625 = vpop.permute.xlu0 %624
  %626 = vrot.lane.b32.xlu0 %v79, 1
  %v627 = vpop.permute.xlu0 %626
  %628 = vrot.lane.b32.xlu0 %v91, 1
  %v629 = vpop.permute.xlu0 %628
  %vm630 = vcmp.lt.s32.totalorder %v143, 1
  %v631 = vsel %vm630, %v623, %v627
  %v632 = vsel %vm630, %v625, %v629
  %v633 = vsel %vm630, %v619, %v623
  %v634 = vsel %vm630, %v621, %v625
  %v635 = vsel %vm630, %v615, %v619
  %v636 = vsel %vm630, %v617, %v621
  %v637 = vsel %vm630, %v611, %v615
  %v638 = vsel %vm630, %v613, %v617
  %v639 = vsel %vm630, %v607, %v611
  %v640 = vsel %vm630, %v609, %v613
  %v641 = vsel %vm630, %v603, %v607
  %v642 = vsel %vm630, %v605, %v609
  %v643 = vsel %vm630, %v599, %v603
  %v644 = vsel %vm630, %v601, %v605
  %v645 = vsel %vm630, %v595, %v599
  %v646 = vsel %vm630, %v597, %v601
  %v647 = vsel %vm630, %v591, %v595
  %v648 = vsel %vm630, %v593, %v597
  %v649 = vsel %vm630, %v587, %v591
  %v650 = vsel %vm630, %v589, %v593
  %v651 = vsel %vm630, %v583, %v587
  %v652 = vsel %vm630, %v585, %v589
  %v653 = vsel %vm630, %v627, %v583
  %v654 = vsel %vm630, %v629, %v585
  %v657 = vlaneseq
  %v658 = vshrl.u32 %v657, 7
  %v659 = vsub.s32 0, %v658
  %v660 = vrot.slane %v580, %v659
  %v661 = vlaneseq
  %v662 = vshrl.u32 %v661, 7
  %v663 = vsub.s32 1, %v662
  %v664 = vrot.slane %v580, %v663
  %v665 = vlaneseq
  %v666 = vshrl.u32 %v665, 7
  %v667 = vsub.s32 2, %v666
  %v668 = vrot.slane %v580, %v667
  %v669 = vlaneseq
  %v670 = vshrl.u32 %v669, 7
  %v671 = vsub.s32 3, %v670
  %v672 = vrot.slane %v580, %v671
  %v673 = vlaneseq
  %v674 = vshrl.u32 %v673, 7
  %v675 = vsub.s32 4, %v674
  %v676 = vrot.slane %v580, %v675
  %v677 = vlaneseq
  %v678 = vshrl.u32 %v677, 7
  %v679 = vsub.s32 5, %v678
  %v680 = vrot.slane %v580, %v679
  %v681 = vlaneseq
  %v682 = vshrl.u32 %v681, 7
  %v683 = vsub.s32 6, %v682
  %v684 = vrot.slane %v580, %v683
  %v685 = vlaneseq
  %v686 = vshrl.u32 %v685, 7
  %v687 = vsub.s32 7, %v686
  %v688 = vrot.slane %v580, %v687
  %v689 = vlaneseq
  %v690 = vshrl.u32 %v689, 7
  %v691 = vsub.s32 0, %v690
  %v692 = vrot.slane %v581, %v691
  %v693 = vlaneseq
  %v694 = vshrl.u32 %v693, 7
  %v695 = vsub.s32 1, %v694
  %v696 = vrot.slane %v581, %v695
  %v697 = vlaneseq
  %v698 = vshrl.u32 %v697, 7
  %v699 = vsub.s32 2, %v698
  %v700 = vrot.slane %v581, %v699
  %v701 = vlaneseq
  %v702 = vshrl.u32 %v701, 7
  %v703 = vsub.s32 3, %v702
  %v704 = vrot.slane %v581, %v703
  %v717 = vmul.f32 %v653, %v660
  %v718 = vmul.f32 %v651, %v664
  %v719 = vmul.f32 %v649, %v668
  %v720 = vmul.f32 %v647, %v672
  %v721 = vmul.f32 %v645, %v676
  %v722 = vmul.f32 %v643, %v680
  %v723 = vmul.f32 %v641, %v684
  %v724 = vmul.f32 %v639, %v688
  %v725 = vmul.f32 %v637, %v692
  %v726 = vmul.f32 %v635, %v696
  %v727 = vmul.f32 %v633, %v700
  %v728 = vmul.f32 %v631, %v704
  %v729 = vmul.f32 %v654, %v660
  %v730 = vmul.f32 %v652, %v664
  %v731 = vmul.f32 %v650, %v668
  %v732 = vmul.f32 %v648, %v672
  %v733 = vmul.f32 %v646, %v676
  %v734 = vmul.f32 %v644, %v680
  %v735 = vmul.f32 %v642, %v684
  %v736 = vmul.f32 %v640, %v688
  %v737 = vmul.f32 %v638, %v692
  %v738 = vmul.f32 %v636, %v696
  %v739 = vmul.f32 %v634, %v700
  %v740 = vmul.f32 %v632, %v704
  %s741 = scalar_lea.vmem %s14, 48
  %v742 = vld [vmem:[%s741] sm:$0xff]
  %v743 = vld [vmem:[%s741 + $0x8] sm:$0xf]
  %v746 = vlaneseq
  %v747 = vshrl.u32 %v746, 7
  %v748 = vsub.s32 0, %v747
  %v749 = vrot.slane %v742, %v748
  %v750 = vlaneseq
  %v751 = vshrl.u32 %v750, 7
  %v752 = vsub.s32 1, %v751
  %v753 = vrot.slane %v742, %v752
  %v754 = vlaneseq
  %v755 = vshrl.u32 %v754, 7
  %v756 = vsub.s32 2, %v755
  %v757 = vrot.slane %v742, %v756
  %v758 = vlaneseq
  %v759 = vshrl.u32 %v758, 7
  %v760 = vsub.s32 3, %v759
  %v761 = vrot.slane %v742, %v760
  %v762 = vlaneseq
  %v763 = vshrl.u32 %v762, 7
  %v764 = vsub.s32 4, %v763
  %v765 = vrot.slane %v742, %v764
  %v766 = vlaneseq
  %v767 = vshrl.u32 %v766, 7
  %v768 = vsub.s32 5, %v767
  %v769 = vrot.slane %v742, %v768
  %v770 = vlaneseq
  %v771 = vshrl.u32 %v770, 7
  %v772 = vsub.s32 6, %v771
  %v773 = vrot.slane %v742, %v772
  %v774 = vlaneseq
  %v775 = vshrl.u32 %v774, 7
  %v776 = vsub.s32 7, %v775
  %v777 = vrot.slane %v742, %v776
  %v778 = vlaneseq
  %v779 = vshrl.u32 %v778, 7
  %v780 = vsub.s32 0, %v779
  %v781 = vrot.slane %v743, %v780
  %v782 = vlaneseq
  %v783 = vshrl.u32 %v782, 7
  %v784 = vsub.s32 1, %v783
  %v785 = vrot.slane %v743, %v784
  %v786 = vlaneseq
  %v787 = vshrl.u32 %v786, 7
  %v788 = vsub.s32 2, %v787
  %v789 = vrot.slane %v743, %v788
  %v790 = vlaneseq
  %v791 = vshrl.u32 %v790, 7
  %v792 = vsub.s32 3, %v791
  %v793 = vrot.slane %v743, %v792
  %v806 = vmul.f32 %v68, %v749
  %v807 = vmul.f32 %v69, %v753
  %v808 = vmul.f32 %v70, %v757
  %v809 = vmul.f32 %v71, %v761
  %v810 = vmul.f32 %v72, %v765
  %v811 = vmul.f32 %v73, %v769
  %v812 = vmul.f32 %v74, %v773
  %v813 = vmul.f32 %v75, %v777
  %v814 = vmul.f32 %v76, %v781
  %v815 = vmul.f32 %v77, %v785
  %v816 = vmul.f32 %v78, %v789
  %v817 = vmul.f32 %v79, %v793
  %v818 = vmul.f32 %v80, %v749
  %v819 = vmul.f32 %v81, %v753
  %v820 = vmul.f32 %v82, %v757
  %v821 = vmul.f32 %v83, %v761
  %v822 = vmul.f32 %v84, %v765
  %v823 = vmul.f32 %v85, %v769
  %v824 = vmul.f32 %v86, %v773
  %v825 = vmul.f32 %v87, %v777
  %v826 = vmul.f32 %v88, %v781
  %v827 = vmul.f32 %v89, %v785
  %v828 = vmul.f32 %v90, %v789
  %v829 = vmul.f32 %v91, %v793
  %s830 = scalar_lea.vmem %s14, 60
  %v831 = vld [vmem:[%s830] sm:$0xff]
  %v832 = vld [vmem:[%s830 + $0x8] sm:$0xf]
  %833 = vrot.lane.b32.xlu0 %v68, 127
  %v834 = vpop.permute.xlu0 %833
  %835 = vrot.lane.b32.xlu0 %v80, 127
  %v836 = vpop.permute.xlu0 %835
  %837 = vrot.lane.b32.xlu0 %v69, 127
  %v838 = vpop.permute.xlu0 %837
  %839 = vrot.lane.b32.xlu0 %v81, 127
  %v840 = vpop.permute.xlu0 %839
  %841 = vrot.lane.b32.xlu0 %v70, 127
  %v842 = vpop.permute.xlu0 %841
  %843 = vrot.lane.b32.xlu0 %v82, 127
  %v844 = vpop.permute.xlu0 %843
  %845 = vrot.lane.b32.xlu0 %v71, 127
  %v846 = vpop.permute.xlu0 %845
  %847 = vrot.lane.b32.xlu0 %v83, 127
  %v848 = vpop.permute.xlu0 %847
  %849 = vrot.lane.b32.xlu0 %v72, 127
  %v850 = vpop.permute.xlu0 %849
  %851 = vrot.lane.b32.xlu0 %v84, 127
  %v852 = vpop.permute.xlu0 %851
  %853 = vrot.lane.b32.xlu0 %v73, 127
  %v854 = vpop.permute.xlu0 %853
  %855 = vrot.lane.b32.xlu0 %v85, 127
  %v856 = vpop.permute.xlu0 %855
  %857 = vrot.lane.b32.xlu0 %v74, 127
  %v858 = vpop.permute.xlu0 %857
  %859 = vrot.lane.b32.xlu0 %v86, 127
  %v860 = vpop.permute.xlu0 %859
  %861 = vrot.lane.b32.xlu0 %v75, 127
  %v862 = vpop.permute.xlu0 %861
  %863 = vrot.lane.b32.xlu0 %v87, 127
  %v864 = vpop.permute.xlu0 %863
  %865 = vrot.lane.b32.xlu0 %v76, 127
  %v866 = vpop.permute.xlu0 %865
  %867 = vrot.lane.b32.xlu0 %v88, 127
  %v868 = vpop.permute.xlu0 %867
  %869 = vrot.lane.b32.xlu0 %v77, 127
  %v870 = vpop.permute.xlu0 %869
  %871 = vrot.lane.b32.xlu0 %v89, 127
  %v872 = vpop.permute.xlu0 %871
  %873 = vrot.lane.b32.xlu0 %v78, 127
  %v874 = vpop.permute.xlu0 %873
  %875 = vrot.lane.b32.xlu0 %v90, 127
  %v876 = vpop.permute.xlu0 %875
  %877 = vrot.lane.b32.xlu0 %v79, 127
  %v878 = vpop.permute.xlu0 %877
  %879 = vrot.lane.b32.xlu0 %v91, 127
  %v880 = vpop.permute.xlu0 %879
  %vm881 = vcmp.lt.s32.totalorder %v143, 127
  %v882 = vsel %vm881, %v874, %v878
  %v883 = vsel %vm881, %v876, %v880
  %v884 = vsel %vm881, %v870, %v874
  %v885 = vsel %vm881, %v872, %v876
  %v886 = vsel %vm881, %v866, %v870
  %v887 = vsel %vm881, %v868, %v872
  %v888 = vsel %vm881, %v862, %v866
  %v889 = vsel %vm881, %v864, %v868
  %v890 = vsel %vm881, %v858, %v862
  %v891 = vsel %vm881, %v860, %v864
  %v892 = vsel %vm881, %v854, %v858
  %v893 = vsel %vm881, %v856, %v860
  %v894 = vsel %vm881, %v850, %v854
  %v895 = vsel %vm881, %v852, %v856
  %v896 = vsel %vm881, %v846, %v850
  %v897 = vsel %vm881, %v848, %v852
  %v898 = vsel %vm881, %v842, %v846
  %v899 = vsel %vm881, %v844, %v848
  %v900 = vsel %vm881, %v838, %v842
  %v901 = vsel %vm881, %v840, %v844
  %v902 = vsel %vm881, %v834, %v838
  %v903 = vsel %vm881, %v836, %v840
  %v904 = vsel %vm881, %v878, %v834
  %v905 = vsel %vm881, %v880, %v836
  %v908 = vlaneseq
  %v909 = vshrl.u32 %v908, 7
  %v910 = vsub.s32 0, %v909
  %v911 = vrot.slane %v831, %v910
  %v912 = vlaneseq
  %v913 = vshrl.u32 %v912, 7
  %v914 = vsub.s32 1, %v913
  %v915 = vrot.slane %v831, %v914
  %v916 = vlaneseq
  %v917 = vshrl.u32 %v916, 7
  %v918 = vsub.s32 2, %v917
  %v919 = vrot.slane %v831, %v918
  %v920 = vlaneseq
  %v921 = vshrl.u32 %v920, 7
  %v922 = vsub.s32 3, %v921
  %v923 = vrot.slane %v831, %v922
  %v924 = vlaneseq
  %v925 = vshrl.u32 %v924, 7
  %v926 = vsub.s32 4, %v925
  %v927 = vrot.slane %v831, %v926
  %v928 = vlaneseq
  %v929 = vshrl.u32 %v928, 7
  %v930 = vsub.s32 5, %v929
  %v931 = vrot.slane %v831, %v930
  %v932 = vlaneseq
  %v933 = vshrl.u32 %v932, 7
  %v934 = vsub.s32 6, %v933
  %v935 = vrot.slane %v831, %v934
  %v936 = vlaneseq
  %v937 = vshrl.u32 %v936, 7
  %v938 = vsub.s32 7, %v937
  %v939 = vrot.slane %v831, %v938
  %v940 = vlaneseq
  %v941 = vshrl.u32 %v940, 7
  %v942 = vsub.s32 0, %v941
  %v943 = vrot.slane %v832, %v942
  %v944 = vlaneseq
  %v945 = vshrl.u32 %v944, 7
  %v946 = vsub.s32 1, %v945
  %v947 = vrot.slane %v832, %v946
  %v948 = vlaneseq
  %v949 = vshrl.u32 %v948, 7
  %v950 = vsub.s32 2, %v949
  %v951 = vrot.slane %v832, %v950
  %v952 = vlaneseq
  %v953 = vshrl.u32 %v952, 7
  %v954 = vsub.s32 3, %v953
  %v955 = vrot.slane %v832, %v954
  %v968 = vmul.f32 %v902, %v911
  %v969 = vmul.f32 %v900, %v915
  %v970 = vmul.f32 %v898, %v919
  %v971 = vmul.f32 %v896, %v923
  %v972 = vmul.f32 %v894, %v927
  %v973 = vmul.f32 %v892, %v931
  %v974 = vmul.f32 %v890, %v935
  %v975 = vmul.f32 %v888, %v939
  %v976 = vmul.f32 %v886, %v943
  %v977 = vmul.f32 %v884, %v947
  %v978 = vmul.f32 %v882, %v951
  %v979 = vmul.f32 %v904, %v955
  %v980 = vmul.f32 %v903, %v911
  %v981 = vmul.f32 %v901, %v915
  %v982 = vmul.f32 %v899, %v919
  %v983 = vmul.f32 %v897, %v923
  %v984 = vmul.f32 %v895, %v927
  %v985 = vmul.f32 %v893, %v931
  %v986 = vmul.f32 %v891, %v935
  %v987 = vmul.f32 %v889, %v939
  %v988 = vmul.f32 %v887, %v943
  %v989 = vmul.f32 %v885, %v947
  %v990 = vmul.f32 %v883, %v951
  %v991 = vmul.f32 %v905, %v955
  %s992 = scalar_lea.vmem %s14, 72
  %v993 = vld [vmem:[%s992] sm:$0xff]
  %v994 = vld [vmem:[%s992 + $0x8] sm:$0xf]
  %995 = vrot.lane.b32.xlu0 %v68, 113
  %v996 = vpop.permute.xlu0 %995
  %997 = vrot.lane.b32.xlu0 %v80, 113
  %v998 = vpop.permute.xlu0 %997
  %999 = vrot.lane.b32.xlu0 %v69, 113
  %v1000 = vpop.permute.xlu0 %999
  %1001 = vrot.lane.b32.xlu0 %v81, 113
  %v1002 = vpop.permute.xlu0 %1001
  %1003 = vrot.lane.b32.xlu0 %v70, 113
  %v1004 = vpop.permute.xlu0 %1003
  %1005 = vrot.lane.b32.xlu0 %v82, 113
  %v1006 = vpop.permute.xlu0 %1005
  %1007 = vrot.lane.b32.xlu0 %v71, 113
  %v1008 = vpop.permute.xlu0 %1007
  %1009 = vrot.lane.b32.xlu0 %v83, 113
  %v1010 = vpop.permute.xlu0 %1009
  %1011 = vrot.lane.b32.xlu0 %v72, 113
  %v1012 = vpop.permute.xlu0 %1011
  %1013 = vrot.lane.b32.xlu0 %v84, 113
  %v1014 = vpop.permute.xlu0 %1013
  %1015 = vrot.lane.b32.xlu0 %v73, 113
  %v1016 = vpop.permute.xlu0 %1015
  %1017 = vrot.lane.b32.xlu0 %v85, 113
  %v1018 = vpop.permute.xlu0 %1017
  %1019 = vrot.lane.b32.xlu0 %v74, 113
  %v1020 = vpop.permute.xlu0 %1019
  %1021 = vrot.lane.b32.xlu0 %v86, 113
  %v1022 = vpop.permute.xlu0 %1021
  %1023 = vrot.lane.b32.xlu0 %v75, 113
  %v1024 = vpop.permute.xlu0 %1023
  %1025 = vrot.lane.b32.xlu0 %v87, 113
  %v1026 = vpop.permute.xlu0 %1025
  %1027 = vrot.lane.b32.xlu0 %v76, 113
  %v1028 = vpop.permute.xlu0 %1027
  %1029 = vrot.lane.b32.xlu0 %v88, 113
  %v1030 = vpop.permute.xlu0 %1029
  %1031 = vrot.lane.b32.xlu0 %v77, 113
  %v1032 = vpop.permute.xlu0 %1031
  %1033 = vrot.lane.b32.xlu0 %v89, 113
  %v1034 = vpop.permute.xlu0 %1033
  %1035 = vrot.lane.b32.xlu0 %v78, 113
  %v1036 = vpop.permute.xlu0 %1035
  %1037 = vrot.lane.b32.xlu0 %v90, 113
  %v1038 = vpop.permute.xlu0 %1037
  %1039 = vrot.lane.b32.xlu0 %v79, 113
  %v1040 = vpop.permute.xlu0 %1039
  %1041 = vrot.lane.b32.xlu0 %v91, 113
  %v1042 = vpop.permute.xlu0 %1041
  %vm1043 = vcmp.lt.s32.totalorder %v143, 113
  %v1044 = vsel %vm1043, %v1036, %v1040
  %v1045 = vsel %vm1043, %v1038, %v1042
  %v1046 = vsel %vm1043, %v1032, %v1036
  %v1047 = vsel %vm1043, %v1034, %v1038
  %v1048 = vsel %vm1043, %v1028, %v1032
  %v1049 = vsel %vm1043, %v1030, %v1034
  %v1050 = vsel %vm1043, %v1024, %v1028
  %v1051 = vsel %vm1043, %v1026, %v1030
  %v1052 = vsel %vm1043, %v1020, %v1024
  %v1053 = vsel %vm1043, %v1022, %v1026
  %v1054 = vsel %vm1043, %v1016, %v1020
  %v1055 = vsel %vm1043, %v1018, %v1022
  %v1056 = vsel %vm1043, %v1012, %v1016
  %v1057 = vsel %vm1043, %v1014, %v1018
  %v1058 = vsel %vm1043, %v1008, %v1012
  %v1059 = vsel %vm1043, %v1010, %v1014
  %v1060 = vsel %vm1043, %v1004, %v1008
  %v1061 = vsel %vm1043, %v1006, %v1010
  %v1062 = vsel %vm1043, %v1000, %v1004
  %v1063 = vsel %vm1043, %v1002, %v1006
  %v1064 = vsel %vm1043, %v996, %v1000
  %v1065 = vsel %vm1043, %v998, %v1002
  %v1066 = vsel %vm1043, %v1040, %v996
  %v1067 = vsel %vm1043, %v1042, %v998
  %v1070 = vlaneseq
  %v1071 = vshrl.u32 %v1070, 7
  %v1072 = vsub.s32 0, %v1071
  %v1073 = vrot.slane %v993, %v1072
  %v1074 = vlaneseq
  %v1075 = vshrl.u32 %v1074, 7
  %v1076 = vsub.s32 1, %v1075
  %v1077 = vrot.slane %v993, %v1076
  %v1078 = vlaneseq
  %v1079 = vshrl.u32 %v1078, 7
  %v1080 = vsub.s32 2, %v1079
  %v1081 = vrot.slane %v993, %v1080
  %v1082 = vlaneseq
  %v1083 = vshrl.u32 %v1082, 7
  %v1084 = vsub.s32 3, %v1083
  %v1085 = vrot.slane %v993, %v1084
  %v1086 = vlaneseq
  %v1087 = vshrl.u32 %v1086, 7
  %v1088 = vsub.s32 4, %v1087
  %v1089 = vrot.slane %v993, %v1088
  %v1090 = vlaneseq
  %v1091 = vshrl.u32 %v1090, 7
  %v1092 = vsub.s32 5, %v1091
  %v1093 = vrot.slane %v993, %v1092
  %v1094 = vlaneseq
  %v1095 = vshrl.u32 %v1094, 7
  %v1096 = vsub.s32 6, %v1095
  %v1097 = vrot.slane %v993, %v1096
  %v1098 = vlaneseq
  %v1099 = vshrl.u32 %v1098, 7
  %v1100 = vsub.s32 7, %v1099
  %v1101 = vrot.slane %v993, %v1100
  %v1102 = vlaneseq
  %v1103 = vshrl.u32 %v1102, 7
  %v1104 = vsub.s32 0, %v1103
  %v1105 = vrot.slane %v994, %v1104
  %v1106 = vlaneseq
  %v1107 = vshrl.u32 %v1106, 7
  %v1108 = vsub.s32 1, %v1107
  %v1109 = vrot.slane %v994, %v1108
  %v1110 = vlaneseq
  %v1111 = vshrl.u32 %v1110, 7
  %v1112 = vsub.s32 2, %v1111
  %v1113 = vrot.slane %v994, %v1112
  %v1114 = vlaneseq
  %v1115 = vshrl.u32 %v1114, 7
  %v1116 = vsub.s32 3, %v1115
  %v1117 = vrot.slane %v994, %v1116
  %v1130 = vmul.f32 %v1064, %v1073
  %v1131 = vmul.f32 %v1062, %v1077
  %v1132 = vmul.f32 %v1060, %v1081
  %v1133 = vmul.f32 %v1058, %v1085
  %v1134 = vmul.f32 %v1056, %v1089
  %v1135 = vmul.f32 %v1054, %v1093
  %v1136 = vmul.f32 %v1052, %v1097
  %v1137 = vmul.f32 %v1050, %v1101
  %v1138 = vmul.f32 %v1048, %v1105
  %v1139 = vmul.f32 %v1046, %v1109
  %v1140 = vmul.f32 %v1044, %v1113
  %v1141 = vmul.f32 %v1066, %v1117
  %v1142 = vmul.f32 %v1065, %v1073
  %v1143 = vmul.f32 %v1063, %v1077
  %v1144 = vmul.f32 %v1061, %v1081
  %v1145 = vmul.f32 %v1059, %v1085
  %v1146 = vmul.f32 %v1057, %v1089
  %v1147 = vmul.f32 %v1055, %v1093
  %v1148 = vmul.f32 %v1053, %v1097
  %v1149 = vmul.f32 %v1051, %v1101
  %v1150 = vmul.f32 %v1049, %v1105
  %v1151 = vmul.f32 %v1047, %v1109
  %v1152 = vmul.f32 %v1045, %v1113
  %v1153 = vmul.f32 %v1067, %v1117
  %s1154 = scalar_lea.vmem %s14, 84
  %v1155 = vld [vmem:[%s1154] sm:$0xff]
  %v1156 = vld [vmem:[%s1154 + $0x8] sm:$0xf]
  %1157 = vrot.lane.b32.xlu0 %v68, 112
  %v1158 = vpop.permute.xlu0 %1157
  %1159 = vrot.lane.b32.xlu0 %v80, 112
  %v1160 = vpop.permute.xlu0 %1159
  %1161 = vrot.lane.b32.xlu0 %v69, 112
  %v1162 = vpop.permute.xlu0 %1161
  %1163 = vrot.lane.b32.xlu0 %v81, 112
  %v1164 = vpop.permute.xlu0 %1163
  %1165 = vrot.lane.b32.xlu0 %v70, 112
  %v1166 = vpop.permute.xlu0 %1165
  %1167 = vrot.lane.b32.xlu0 %v82, 112
  %v1168 = vpop.permute.xlu0 %1167
  %1169 = vrot.lane.b32.xlu0 %v71, 112
  %v1170 = vpop.permute.xlu0 %1169
  %1171 = vrot.lane.b32.xlu0 %v83, 112
  %v1172 = vpop.permute.xlu0 %1171
  %1173 = vrot.lane.b32.xlu0 %v72, 112
  %v1174 = vpop.permute.xlu0 %1173
  %1175 = vrot.lane.b32.xlu0 %v84, 112
  %v1176 = vpop.permute.xlu0 %1175
  %1177 = vrot.lane.b32.xlu0 %v73, 112
  %v1178 = vpop.permute.xlu0 %1177
  %1179 = vrot.lane.b32.xlu0 %v85, 112
  %v1180 = vpop.permute.xlu0 %1179
  %1181 = vrot.lane.b32.xlu0 %v74, 112
  %v1182 = vpop.permute.xlu0 %1181
  %1183 = vrot.lane.b32.xlu0 %v86, 112
  %v1184 = vpop.permute.xlu0 %1183
  %1185 = vrot.lane.b32.xlu0 %v75, 112
  %v1186 = vpop.permute.xlu0 %1185
  %1187 = vrot.lane.b32.xlu0 %v87, 112
  %v1188 = vpop.permute.xlu0 %1187
  %1189 = vrot.lane.b32.xlu0 %v76, 112
  %v1190 = vpop.permute.xlu0 %1189
  %1191 = vrot.lane.b32.xlu0 %v88, 112
  %v1192 = vpop.permute.xlu0 %1191
  %1193 = vrot.lane.b32.xlu0 %v77, 112
  %v1194 = vpop.permute.xlu0 %1193
  %1195 = vrot.lane.b32.xlu0 %v89, 112
  %v1196 = vpop.permute.xlu0 %1195
  %1197 = vrot.lane.b32.xlu0 %v78, 112
  %v1198 = vpop.permute.xlu0 %1197
  %1199 = vrot.lane.b32.xlu0 %v90, 112
  %v1200 = vpop.permute.xlu0 %1199
  %1201 = vrot.lane.b32.xlu0 %v79, 112
  %v1202 = vpop.permute.xlu0 %1201
  %1203 = vrot.lane.b32.xlu0 %v91, 112
  %v1204 = vpop.permute.xlu0 %1203
  %vm1205 = vcmp.lt.s32.totalorder %v143, 112
  %v1206 = vsel %vm1205, %v1198, %v1202
  %v1207 = vsel %vm1205, %v1200, %v1204
  %v1208 = vsel %vm1205, %v1194, %v1198
  %v1209 = vsel %vm1205, %v1196, %v1200
  %v1210 = vsel %vm1205, %v1190, %v1194
  %v1211 = vsel %vm1205, %v1192, %v1196
  %v1212 = vsel %vm1205, %v1186, %v1190
  %v1213 = vsel %vm1205, %v1188, %v1192
  %v1214 = vsel %vm1205, %v1182, %v1186
  %v1215 = vsel %vm1205, %v1184, %v1188
  %v1216 = vsel %vm1205, %v1178, %v1182
  %v1217 = vsel %vm1205, %v1180, %v1184
  %v1218 = vsel %vm1205, %v1174, %v1178
  %v1219 = vsel %vm1205, %v1176, %v1180
  %v1220 = vsel %vm1205, %v1170, %v1174
  %v1221 = vsel %vm1205, %v1172, %v1176
  %v1222 = vsel %vm1205, %v1166, %v1170
  %v1223 = vsel %vm1205, %v1168, %v1172
  %v1224 = vsel %vm1205, %v1162, %v1166
  %v1225 = vsel %vm1205, %v1164, %v1168
  %v1226 = vsel %vm1205, %v1158, %v1162
  %v1227 = vsel %vm1205, %v1160, %v1164
  %v1228 = vsel %vm1205, %v1202, %v1158
  %v1229 = vsel %vm1205, %v1204, %v1160
  %v1232 = vlaneseq
  %v1233 = vshrl.u32 %v1232, 7
  %v1234 = vsub.s32 0, %v1233
  %v1235 = vrot.slane %v1155, %v1234
  %v1236 = vlaneseq
  %v1237 = vshrl.u32 %v1236, 7
  %v1238 = vsub.s32 1, %v1237
  %v1239 = vrot.slane %v1155, %v1238
  %v1240 = vlaneseq
  %v1241 = vshrl.u32 %v1240, 7
  %v1242 = vsub.s32 2, %v1241
  %v1243 = vrot.slane %v1155, %v1242
  %v1244 = vlaneseq
  %v1245 = vshrl.u32 %v1244, 7
  %v1246 = vsub.s32 3, %v1245
  %v1247 = vrot.slane %v1155, %v1246
  %v1248 = vlaneseq
  %v1249 = vshrl.u32 %v1248, 7
  %v1250 = vsub.s32 4, %v1249
  %v1251 = vrot.slane %v1155, %v1250
  %v1252 = vlaneseq
  %v1253 = vshrl.u32 %v1252, 7
  %v1254 = vsub.s32 5, %v1253
  %v1255 = vrot.slane %v1155, %v1254
  %v1256 = vlaneseq
  %v1257 = vshrl.u32 %v1256, 7
  %v1258 = vsub.s32 6, %v1257
  %v1259 = vrot.slane %v1155, %v1258
  %v1260 = vlaneseq
  %v1261 = vshrl.u32 %v1260, 7
  %v1262 = vsub.s32 7, %v1261
  %v1263 = vrot.slane %v1155, %v1262
  %v1264 = vlaneseq
  %v1265 = vshrl.u32 %v1264, 7
  %v1266 = vsub.s32 0, %v1265
  %v1267 = vrot.slane %v1156, %v1266
  %v1268 = vlaneseq
  %v1269 = vshrl.u32 %v1268, 7
  %v1270 = vsub.s32 1, %v1269
  %v1271 = vrot.slane %v1156, %v1270
  %v1272 = vlaneseq
  %v1273 = vshrl.u32 %v1272, 7
  %v1274 = vsub.s32 2, %v1273
  %v1275 = vrot.slane %v1156, %v1274
  %v1276 = vlaneseq
  %v1277 = vshrl.u32 %v1276, 7
  %v1278 = vsub.s32 3, %v1277
  %v1279 = vrot.slane %v1156, %v1278
  %v1292 = vmul.f32 %v1226, %v1235
  %v1293 = vmul.f32 %v1224, %v1239
  %v1294 = vmul.f32 %v1222, %v1243
  %v1295 = vmul.f32 %v1220, %v1247
  %v1296 = vmul.f32 %v1218, %v1251
  %v1297 = vmul.f32 %v1216, %v1255
  %v1298 = vmul.f32 %v1214, %v1259
  %v1299 = vmul.f32 %v1212, %v1263
  %v1300 = vmul.f32 %v1210, %v1267
  %v1301 = vmul.f32 %v1208, %v1271
  %v1302 = vmul.f32 %v1206, %v1275
  %v1303 = vmul.f32 %v1228, %v1279
  %v1304 = vmul.f32 %v1227, %v1235
  %v1305 = vmul.f32 %v1225, %v1239
  %v1306 = vmul.f32 %v1223, %v1243
  %v1307 = vmul.f32 %v1221, %v1247
  %v1308 = vmul.f32 %v1219, %v1251
  %v1309 = vmul.f32 %v1217, %v1255
  %v1310 = vmul.f32 %v1215, %v1259
  %v1311 = vmul.f32 %v1213, %v1263
  %v1312 = vmul.f32 %v1211, %v1267
  %v1313 = vmul.f32 %v1209, %v1271
  %v1314 = vmul.f32 %v1207, %v1275
  %v1315 = vmul.f32 %v1229, %v1279
  %s1316 = scalar_lea.vmem %s14, 96
  %v1317 = vld [vmem:[%s1316] sm:$0xff]
  %v1318 = vld [vmem:[%s1316 + $0x8] sm:$0xf]
  %1319 = vrot.lane.b32.xlu0 %v68, 111
  %v1320 = vpop.permute.xlu0 %1319
  %1321 = vrot.lane.b32.xlu0 %v80, 111
  %v1322 = vpop.permute.xlu0 %1321
  %1323 = vrot.lane.b32.xlu0 %v69, 111
  %v1324 = vpop.permute.xlu0 %1323
  %1325 = vrot.lane.b32.xlu0 %v81, 111
  %v1326 = vpop.permute.xlu0 %1325
  %1327 = vrot.lane.b32.xlu0 %v70, 111
  %v1328 = vpop.permute.xlu0 %1327
  %1329 = vrot.lane.b32.xlu0 %v82, 111
  %v1330 = vpop.permute.xlu0 %1329
  %1331 = vrot.lane.b32.xlu0 %v71, 111
  %v1332 = vpop.permute.xlu0 %1331
  %1333 = vrot.lane.b32.xlu0 %v83, 111
  %v1334 = vpop.permute.xlu0 %1333
  %1335 = vrot.lane.b32.xlu0 %v72, 111
  %v1336 = vpop.permute.xlu0 %1335
  %1337 = vrot.lane.b32.xlu0 %v84, 111
  %v1338 = vpop.permute.xlu0 %1337
  %1339 = vrot.lane.b32.xlu0 %v73, 111
  %v1340 = vpop.permute.xlu0 %1339
  %1341 = vrot.lane.b32.xlu0 %v85, 111
  %v1342 = vpop.permute.xlu0 %1341
  %1343 = vrot.lane.b32.xlu0 %v74, 111
  %v1344 = vpop.permute.xlu0 %1343
  %1345 = vrot.lane.b32.xlu0 %v86, 111
  %v1346 = vpop.permute.xlu0 %1345
  %1347 = vrot.lane.b32.xlu0 %v75, 111
  %v1348 = vpop.permute.xlu0 %1347
  %1349 = vrot.lane.b32.xlu0 %v87, 111
  %v1350 = vpop.permute.xlu0 %1349
  %1351 = vrot.lane.b32.xlu0 %v76, 111
  %v1352 = vpop.permute.xlu0 %1351
  %1353 = vrot.lane.b32.xlu0 %v88, 111
  %v1354 = vpop.permute.xlu0 %1353
  %1355 = vrot.lane.b32.xlu0 %v77, 111
  %v1356 = vpop.permute.xlu0 %1355
  %1357 = vrot.lane.b32.xlu0 %v89, 111
  %v1358 = vpop.permute.xlu0 %1357
  %1359 = vrot.lane.b32.xlu0 %v78, 111
  %v1360 = vpop.permute.xlu0 %1359
  %1361 = vrot.lane.b32.xlu0 %v90, 111
  %v1362 = vpop.permute.xlu0 %1361
  %1363 = vrot.lane.b32.xlu0 %v79, 111
  %v1364 = vpop.permute.xlu0 %1363
  %1365 = vrot.lane.b32.xlu0 %v91, 111
  %v1366 = vpop.permute.xlu0 %1365
  %vm1367 = vcmp.lt.s32.totalorder %v143, 111
  %v1368 = vsel %vm1367, %v1360, %v1364
  %v1369 = vsel %vm1367, %v1362, %v1366
  %v1370 = vsel %vm1367, %v1356, %v1360
  %v1371 = vsel %vm1367, %v1358, %v1362
  %v1372 = vsel %vm1367, %v1352, %v1356
  %v1373 = vsel %vm1367, %v1354, %v1358
  %v1374 = vsel %vm1367, %v1348, %v1352
  %v1375 = vsel %vm1367, %v1350, %v1354
  %v1376 = vsel %vm1367, %v1344, %v1348
  %v1377 = vsel %vm1367, %v1346, %v1350
  %v1378 = vsel %vm1367, %v1340, %v1344
  %v1379 = vsel %vm1367, %v1342, %v1346
  %v1380 = vsel %vm1367, %v1336, %v1340
  %v1381 = vsel %vm1367, %v1338, %v1342
  %v1382 = vsel %vm1367, %v1332, %v1336
  %v1383 = vsel %vm1367, %v1334, %v1338
  %v1384 = vsel %vm1367, %v1328, %v1332
  %v1385 = vsel %vm1367, %v1330, %v1334
  %v1386 = vsel %vm1367, %v1324, %v1328
  %v1387 = vsel %vm1367, %v1326, %v1330
  %v1388 = vsel %vm1367, %v1320, %v1324
  %v1389 = vsel %vm1367, %v1322, %v1326
  %v1390 = vsel %vm1367, %v1364, %v1320
  %v1391 = vsel %vm1367, %v1366, %v1322
  %v1394 = vlaneseq
  %v1395 = vshrl.u32 %v1394, 7
  %v1396 = vsub.s32 0, %v1395
  %v1397 = vrot.slane %v1317, %v1396
  %v1398 = vlaneseq
  %v1399 = vshrl.u32 %v1398, 7
  %v1400 = vsub.s32 1, %v1399
  %v1401 = vrot.slane %v1317, %v1400
  %v1402 = vlaneseq
  %v1403 = vshrl.u32 %v1402, 7
  %v1404 = vsub.s32 2, %v1403
  %v1405 = vrot.slane %v1317, %v1404
  %v1406 = vlaneseq
  %v1407 = vshrl.u32 %v1406, 7
  %v1408 = vsub.s32 3, %v1407
  %v1409 = vrot.slane %v1317, %v1408
  %v1410 = vlaneseq
  %v1411 = vshrl.u32 %v1410, 7
  %v1412 = vsub.s32 4, %v1411
  %v1413 = vrot.slane %v1317, %v1412
  %v1414 = vlaneseq
  %v1415 = vshrl.u32 %v1414, 7
  %v1416 = vsub.s32 5, %v1415
  %v1417 = vrot.slane %v1317, %v1416
  %v1418 = vlaneseq
  %v1419 = vshrl.u32 %v1418, 7
  %v1420 = vsub.s32 6, %v1419
  %v1421 = vrot.slane %v1317, %v1420
  %v1422 = vlaneseq
  %v1423 = vshrl.u32 %v1422, 7
  %v1424 = vsub.s32 7, %v1423
  %v1425 = vrot.slane %v1317, %v1424
  %v1426 = vlaneseq
  %v1427 = vshrl.u32 %v1426, 7
  %v1428 = vsub.s32 0, %v1427
  %v1429 = vrot.slane %v1318, %v1428
  %v1430 = vlaneseq
  %v1431 = vshrl.u32 %v1430, 7
  %v1432 = vsub.s32 1, %v1431
  %v1433 = vrot.slane %v1318, %v1432
  %v1434 = vlaneseq
  %v1435 = vshrl.u32 %v1434, 7
  %v1436 = vsub.s32 2, %v1435
  %v1437 = vrot.slane %v1318, %v1436
  %v1438 = vlaneseq
  %v1439 = vshrl.u32 %v1438, 7
  %v1440 = vsub.s32 3, %v1439
  %v1441 = vrot.slane %v1318, %v1440
  %v1454 = vmul.f32 %v1388, %v1397
  %v1455 = vmul.f32 %v1386, %v1401
  %v1456 = vmul.f32 %v1384, %v1405
  %v1457 = vmul.f32 %v1382, %v1409
  %v1458 = vmul.f32 %v1380, %v1413
  %v1459 = vmul.f32 %v1378, %v1417
  %v1460 = vmul.f32 %v1376, %v1421
  %v1461 = vmul.f32 %v1374, %v1425
  %v1462 = vmul.f32 %v1372, %v1429
  %v1463 = vmul.f32 %v1370, %v1433
  %v1464 = vmul.f32 %v1368, %v1437
  %v1465 = vmul.f32 %v1390, %v1441
  %v1466 = vmul.f32 %v1389, %v1397
  %v1467 = vmul.f32 %v1387, %v1401
  %v1468 = vmul.f32 %v1385, %v1405
  %v1469 = vmul.f32 %v1383, %v1409
  %v1470 = vmul.f32 %v1381, %v1413
  %v1471 = vmul.f32 %v1379, %v1417
  %v1472 = vmul.f32 %v1377, %v1421
  %v1473 = vmul.f32 %v1375, %v1425
  %v1474 = vmul.f32 %v1373, %v1429
  %v1475 = vmul.f32 %v1371, %v1433
  %v1476 = vmul.f32 %v1369, %v1437
  %v1477 = vmul.f32 %v1391, %v1441
  %v1478 = vld [vmem:[%s1] sm:$0xff]
  %v1479 = vld [vmem:[%s1 + $0x8] sm:$0xff]
  %v1480 = vld [vmem:[%s1 + $0x10] sm:$0xff]
  %v1481 = vld [vmem:[%s1 + $0x18] sm:$0xff]
  %v1482 = vld [vmem:[%s1 + $0x20] sm:$0xff]
  %v1483 = vld [vmem:[%s1 + $0x28] sm:$0xff]
  %v1484 = vld [vmem:[%s1 + $0x30] sm:$0xff]
  %v1485 = vld [vmem:[%s1 + $0x38] sm:$0xff]
  %v1486 = vld [vmem:[%s13] sm:$0xff]
  %v1487 = vld [vmem:[%s13 + $0x8] sm:$0xff]
  %v1488 = vld [vmem:[%s13 + $0x10] sm:$0xff]
  %v1489 = vld [vmem:[%s13 + $0x18] sm:$0xff]
  %1491 = vset.pattern.permute.xlu0 0
  %1492 = vperm.xlu0 %1491, %v1486
  %v1493 = vpop.permute.xlu0 %1492
  %1496 = vset.pattern.permute.xlu0 0
  %1497 = vperm.xlu0 %1496, %v1487
  %v1498 = vpop.permute.xlu0 %1497
  %1501 = vset.pattern.permute.xlu0 0
  %1502 = vperm.xlu0 %1501, %v1488
  %v1503 = vpop.permute.xlu0 %1502
  %1506 = vset.pattern.permute.xlu0 0
  %1507 = vperm.xlu0 %1506, %v1489
  %v1508 = vpop.permute.xlu0 %1507
  %vm1510 = vcmask 130048
  %v1512 = vsel %vm1510, %v1479, 0
  %v1515 = vsel %vm1510, %v1481, 0
  %v1518 = vsel %vm1510, %v1483, 0
  %v1521 = vsel %vm1510, %v1485, 0
  %1523 = vmatprep.subr.mxu0 %v1305
  %1524 = vmatpush1.msra.mxu0 %v1304
  %1525 = vmatprep.subr.mxu0 %v1293
  %1526 = vmatpush1.msra.mxu0 %v1292
  %1527 = vmatprep.subr.mxu0 %v1143
  %1528 = vmatpush1.msra.mxu0 %v1142
  %1529 = vmatprep.subr.mxu0 %v1131
  %1530 = vmatpush1.msra.mxu0 %v1130
  %1531 = vmatprep.subr.mxu0 %v981
  %1532 = vmatpush1.msra.mxu0 %v980
  %1533 = vmatprep.subr.mxu0 %v969
  %1534 = vmatpush1.msra.mxu0 %v968
  %1535 = vmatprep.subr.mxu0 %v819
  %1536 = vmatpush1.msra.mxu0 %v818
  %1537 = vmatprep.subr.mxu0 %v807
  %1538 = vmatpush1.msra.mxu0 %v806
  %1539 = vmatprep.subr.mxu0 %v730
  %1540 = vmatpush1.msra.mxu0 %v729
  %1541 = vmatprep.subr.mxu0 %v718
  %1542 = vmatpush1.msra.mxu0 %v717
  %1543 = vmatprep.subr.mxu0 %v568
  %1544 = vmatpush1.msra.mxu0 %v567
  %1545 = vmatprep.subr.mxu0 %v556
  %1546 = vmatpush1.msra.mxu0 %v555
  %1547 = vmatprep.subr.mxu0 %v406
  %1548 = vmatpush1.msra.mxu0 %v405
  %1549 = vmatprep.subr.mxu0 %v394
  %1550 = vmatpush1.msra.mxu0 %v393
  %1551 = vmatprep.subr.mxu0 %v244
  %1552 = vmatpush1.msra.mxu0 %v243
  %1553 = vmatprep.subr.mxu0 %v232
  %1554 = vmatpush1.msra.mxu0 %v231
  %1555 = vmatprep.subr.mxu0 0.0
  %1556 = vmatpush2.msra.mxu0 0.0
  %1557 = vmatprep.subr.mxu0 0.0
  %1558 = vmatpush2.msra.mxu0 0.0
  %1559 = vmatprep.subr.mxu0 0.0
  %1560 = vmatpush2.msra.mxu0 0.0
  %1561 = vmatprep.subr.mxu0 0.0
  %1562 = vmatpush2.msra.mxu0 0.0
  %1563 = vmatprep.subr.mxu0 0.0
  %1564 = vmatpush2.msra.mxu0 0.0
  %1565 = vmatprep.subr.mxu0 0.0
  %1566 = vmatpush2.msra.mxu0 0.0
  %1567 = vmatprep.subr.mxu0 0.0
  %1568 = vmatpush2.msra.mxu0 0.0
  %1569 = vmatprep.subr.mxu0 0.0
  %1570 = vmatpush2.msra.mxu0 0.0
  %1571 = vmatprep.subr.mxu0 0.0
  %1572 = vmatpush2.msra.mxu0 0.0
  %1573 = vmatprep.subr.mxu0 0.0
  %1574 = vmatpush2.msra.mxu0 0.0
  %1575 = vmatprep.subr.mxu0 0.0
  %1576 = vmatpush2.msra.mxu0 0.0
  %1577 = vmatprep.subr.mxu0 0.0
  %1578 = vmatpush2.msra.mxu0 0.0
  %1579 = vmatprep.subr.mxu0 0.0
  %1580 = vmatpush2.msra.mxu0 0.0
  %1581 = vmatprep.subr.mxu0 0.0
  %1582 = vmatpush2.msra.mxu0 0.0
  %1583 = vmatprep.subr.mxu0 %v1467
  %1584 = vmatpush2.msra.mxu0 %v1466
  %1585 = vmatprep.subr.mxu0 %v1455
  %1586 = vmatpush2.msra.mxu0 %v1454
  %1587 = vmatprep.mubr.f32.mxu0 %v1512
  %1588 = vmatmul.mubr.f32.gmra.mxu0 %v1478
  %v1589 = vpop.f32.mrf.mxu0
  %v1590 = vadd.f32 %v1493, %v1589
  %v1591 = vpop.f32.mrf.mxu0
  %v1592 = vadd.f32 %v1493, %v1591
  %1593 = vmatprep.mubr.f32.mxu0 %v1515
  %1594 = vmatmul.mubr.f32.gmra.mxu0 %v1480
  %v1595 = vpop.f32.mrf.mxu0
  %v1596 = vadd.f32 %v1498, %v1595
  %v1597 = vpop.f32.mrf.mxu0
  %v1598 = vadd.f32 %v1498, %v1597
  %1599 = vmatprep.mubr.f32.mxu0 %v1518
  %1600 = vmatmul.mubr.f32.gmra.mxu0 %v1482
  %v1601 = vpop.f32.mrf.mxu0
  %v1602 = vadd.f32 %v1503, %v1601
  %v1603 = vpop.f32.mrf.mxu0
  %v1604 = vadd.f32 %v1503, %v1603
  %1605 = vmatprep.mubr.f32.mxu0 %v1521
  %1606 = vmatmul.mubr.f32.gmra.mxu0 %v1484
  %v1607 = vpop.f32.mrf.mxu0
  %v1608 = vadd.f32 %v1508, %v1607
  %v1609 = vpop.f32.mrf.mxu0
  %v1610 = vadd.f32 %v1508, %v1609
  %1611 = vdwg.mxu0
  %1612 = vmatprep.subr.mxu0 %v1307
  %1613 = vmatpush1.msra.mxu0 %v1306
  %1614 = vmatprep.subr.mxu0 %v1295
  %1615 = vmatpush1.msra.mxu0 %v1294
  %1616 = vmatprep.subr.mxu0 %v1145
  %1617 = vmatpush1.msra.mxu0 %v1144
  %1618 = vmatprep.subr.mxu0 %v1133
  %1619 = vmatpush1.msra.mxu0 %v1132
  %1620 = vmatprep.subr.mxu0 %v983
  %1621 = vmatpush1.msra.mxu0 %v982
  %1622 = vmatprep.subr.mxu0 %v971
  %1623 = vmatpush1.msra.mxu0 %v970
  %1624 = vmatprep.subr.mxu0 %v821
  %1625 = vmatpush1.msra.mxu0 %v820
  %1626 = vmatprep.subr.mxu0 %v809
  %1627 = vmatpush1.msra.mxu0 %v808
  %1628 = vmatprep.subr.mxu0 %v732
  %1629 = vmatpush1.msra.mxu0 %v731
  %1630 = vmatprep.subr.mxu0 %v720
  %1631 = vmatpush1.msra.mxu0 %v719
  %1632 = vmatprep.subr.mxu0 %v570
  %1633 = vmatpush1.msra.mxu0 %v569
  %1634 = vmatprep.subr.mxu0 %v558
  %1635 = vmatpush1.msra.mxu0 %v557
  %1636 = vmatprep.subr.mxu0 %v408
  %1637 = vmatpush1.msra.mxu0 %v407
  %1638 = vmatprep.subr.mxu0 %v396
  %1639 = vmatpush1.msra.mxu0 %v395
  %1640 = vmatprep.subr.mxu0 %v246
  %1641 = vmatpush1.msra.mxu0 %v245
  %1642 = vmatprep.subr.mxu0 %v234
  %1643 = vmatpush1.msra.mxu0 %v233
  %1644 = vmatprep.subr.mxu0 0.0
  %1645 = vmatpush2.msra.mxu0 0.0
  %1646 = vmatprep.subr.mxu0 0.0
  %1647 = vmatpush2.msra.mxu0 0.0
  %1648 = vmatprep.subr.mxu0 0.0
  %1649 = vmatpush2.msra.mxu0 0.0
  %1650 = vmatprep.subr.mxu0 0.0
  %1651 = vmatpush2.msra.mxu0 0.0
  %1652 = vmatprep.subr.mxu0 0.0
  %1653 = vmatpush2.msra.mxu0 0.0
  %1654 = vmatprep.subr.mxu0 0.0
  %1655 = vmatpush2.msra.mxu0 0.0
  %1656 = vmatprep.subr.mxu0 0.0
  %1657 = vmatpush2.msra.mxu0 0.0
  %1658 = vmatprep.subr.mxu0 0.0
  %1659 = vmatpush2.msra.mxu0 0.0
  %1660 = vmatprep.subr.mxu0 0.0
  %1661 = vmatpush2.msra.mxu0 0.0
  %1662 = vmatprep.subr.mxu0 0.0
  %1663 = vmatpush2.msra.mxu0 0.0
  %1664 = vmatprep.subr.mxu0 0.0
  %1665 = vmatpush2.msra.mxu0 0.0
  %1666 = vmatprep.subr.mxu0 0.0
  %1667 = vmatpush2.msra.mxu0 0.0
  %1668 = vmatprep.subr.mxu0 0.0
  %1669 = vmatpush2.msra.mxu0 0.0
  %1670 = vmatprep.subr.mxu0 0.0
  %1671 = vmatpush2.msra.mxu0 0.0
  %1672 = vmatprep.subr.mxu0 %v1469
  %1673 = vmatpush2.msra.mxu0 %v1468
  %1674 = vmatprep.subr.mxu0 %v1457
  %1675 = vmatpush2.msra.mxu0 %v1456
  %1676 = vmatprep.mubr.f32.mxu0 %v1512
  %1677 = vmatmul.mubr.f32.gmra.mxu0 %v1478
  %v1678 = vpop.f32.mrf.mxu0
  %v1679 = vadd.f32 %v1493, %v1678
  %v1680 = vpop.f32.mrf.mxu0
  %v1681 = vadd.f32 %v1493, %v1680
  %1682 = vmatprep.mubr.f32.mxu0 %v1515
  %1683 = vmatmul.mubr.f32.gmra.mxu0 %v1480
  %v1684 = vpop.f32.mrf.mxu0
  %v1685 = vadd.f32 %v1498, %v1684
  %v1686 = vpop.f32.mrf.mxu0
  %v1687 = vadd.f32 %v1498, %v1686
  %1688 = vmatprep.mubr.f32.mxu0 %v1518
  %1689 = vmatmul.mubr.f32.gmra.mxu0 %v1482
  %v1690 = vpop.f32.mrf.mxu0
  %v1691 = vadd.f32 %v1503, %v1690
  %v1692 = vpop.f32.mrf.mxu0
  %v1693 = vadd.f32 %v1503, %v1692
  %1694 = vmatprep.mubr.f32.mxu0 %v1521
  %1695 = vmatmul.mubr.f32.gmra.mxu0 %v1484
  %v1696 = vpop.f32.mrf.mxu0
  %v1697 = vadd.f32 %v1508, %v1696
  %v1698 = vpop.f32.mrf.mxu0
  %v1699 = vadd.f32 %v1508, %v1698
  %1700 = vdwg.mxu0
  %1701 = vmatprep.subr.mxu0 %v1309
  %1702 = vmatpush1.msra.mxu0 %v1308
  %1703 = vmatprep.subr.mxu0 %v1297
  %1704 = vmatpush1.msra.mxu0 %v1296
  %1705 = vmatprep.subr.mxu0 %v1147
  %1706 = vmatpush1.msra.mxu0 %v1146
  %1707 = vmatprep.subr.mxu0 %v1135
  %1708 = vmatpush1.msra.mxu0 %v1134
  %1709 = vmatprep.subr.mxu0 %v985
  %1710 = vmatpush1.msra.mxu0 %v984
  %1711 = vmatprep.subr.mxu0 %v973
  %1712 = vmatpush1.msra.mxu0 %v972
  %1713 = vmatprep.subr.mxu0 %v823
  %1714 = vmatpush1.msra.mxu0 %v822
  %1715 = vmatprep.subr.mxu0 %v811
  %1716 = vmatpush1.msra.mxu0 %v810
  %1717 = vmatprep.subr.mxu0 %v734
  %1718 = vmatpush1.msra.mxu0 %v733
  %1719 = vmatprep.subr.mxu0 %v722
  %1720 = vmatpush1.msra.mxu0 %v721
  %1721 = vmatprep.subr.mxu0 %v572
  %1722 = vmatpush1.msra.mxu0 %v571
  %1723 = vmatprep.subr.mxu0 %v560
  %1724 = vmatpush1.msra.mxu0 %v559
  %1725 = vmatprep.subr.mxu0 %v410
  %1726 = vmatpush1.msra.mxu0 %v409
  %1727 = vmatprep.subr.mxu0 %v398
  %1728 = vmatpush1.msra.mxu0 %v397
  %1729 = vmatprep.subr.mxu0 %v248
  %1730 = vmatpush1.msra.mxu0 %v247
  %1731 = vmatprep.subr.mxu0 %v236
  %1732 = vmatpush1.msra.mxu0 %v235
  %1733 = vmatprep.subr.mxu0 0.0
  %1734 = vmatpush2.msra.mxu0 0.0
  %1735 = vmatprep.subr.mxu0 0.0
  %1736 = vmatpush2.msra.mxu0 0.0
  %1737 = vmatprep.subr.mxu0 0.0
  %1738 = vmatpush2.msra.mxu0 0.0
  %1739 = vmatprep.subr.mxu0 0.0
  %1740 = vmatpush2.msra.mxu0 0.0
  %1741 = vmatprep.subr.mxu0 0.0
  %1742 = vmatpush2.msra.mxu0 0.0
  %1743 = vmatprep.subr.mxu0 0.0
  %1744 = vmatpush2.msra.mxu0 0.0
  %1745 = vmatprep.subr.mxu0 0.0
  %1746 = vmatpush2.msra.mxu0 0.0
  %1747 = vmatprep.subr.mxu0 0.0
  %1748 = vmatpush2.msra.mxu0 0.0
  %1749 = vmatprep.subr.mxu0 0.0
  %1750 = vmatpush2.msra.mxu0 0.0
  %1751 = vmatprep.subr.mxu0 0.0
  %1752 = vmatpush2.msra.mxu0 0.0
  %1753 = vmatprep.subr.mxu0 0.0
  %1754 = vmatpush2.msra.mxu0 0.0
  %1755 = vmatprep.subr.mxu0 0.0
  %1756 = vmatpush2.msra.mxu0 0.0
  %1757 = vmatprep.subr.mxu0 0.0
  %1758 = vmatpush2.msra.mxu0 0.0
  %1759 = vmatprep.subr.mxu0 0.0
  %1760 = vmatpush2.msra.mxu0 0.0
  %1761 = vmatprep.subr.mxu0 %v1471
  %1762 = vmatpush2.msra.mxu0 %v1470
  %1763 = vmatprep.subr.mxu0 %v1459
  %1764 = vmatpush2.msra.mxu0 %v1458
  %1765 = vmatprep.mubr.f32.mxu0 %v1512
  %1766 = vmatmul.mubr.f32.gmra.mxu0 %v1478
  %v1767 = vpop.f32.mrf.mxu0
  %v1768 = vadd.f32 %v1493, %v1767
  %v1769 = vpop.f32.mrf.mxu0
  %v1770 = vadd.f32 %v1493, %v1769
  %1771 = vmatprep.mubr.f32.mxu0 %v1515
  %1772 = vmatmul.mubr.f32.gmra.mxu0 %v1480
  %v1773 = vpop.f32.mrf.mxu0
  %v1774 = vadd.f32 %v1498, %v1773
  %v1775 = vpop.f32.mrf.mxu0
  %v1776 = vadd.f32 %v1498, %v1775
  %1777 = vmatprep.mubr.f32.mxu0 %v1518
  %1778 = vmatmul.mubr.f32.gmra.mxu0 %v1482
  %v1779 = vpop.f32.mrf.mxu0
  %v1780 = vpop.f32.mrf.mxu0
  %1781 = vmatprep.mubr.f32.mxu0 %v1521
  %1782 = vmatmul.mubr.f32.gmra.mxu0 %v1484
  %v1783 = vpop.f32.mrf.mxu0
  %v1784 = vpop.f32.mrf.mxu0
  %1785 = vdwg.mxu0
  %1786 = vmatprep.subr.mxu0 %v1311
  %1787 = vmatpush1.msra.mxu0 %v1310
  %1788 = vmatprep.subr.mxu0 %v1299
  %1789 = vmatpush1.msra.mxu0 %v1298
  %1790 = vmatprep.subr.mxu0 %v1149
  %1791 = vmatpush1.msra.mxu0 %v1148
  %1792 = vmatprep.subr.mxu0 %v1137
  %1793 = vmatpush1.msra.mxu0 %v1136
  %1794 = vmatprep.subr.mxu0 %v987
  %1795 = vmatpush1.msra.mxu0 %v986
  %1796 = vmatprep.subr.mxu0 %v975
  %1797 = vmatpush1.msra.mxu0 %v974
  %1798 = vmatprep.subr.mxu0 %v825
  %1799 = vmatpush1.msra.mxu0 %v824
  %1800 = vmatprep.subr.mxu0 %v813
  %1801 = vmatpush1.msra.mxu0 %v812
  %1802 = vmatprep.subr.mxu0 %v736
  %1803 = vmatpush1.msra.mxu0 %v735
  %1804 = vmatprep.subr.mxu0 %v724
  %1805 = vmatpush1.msra.mxu0 %v723
  %1806 = vmatprep.subr.mxu0 %v574
  %1807 = vmatpush1.msra.mxu0 %v573
  %1808 = vmatprep.subr.mxu0 %v562
  %1809 = vmatpush1.msra.mxu0 %v561
  %1810 = vmatprep.subr.mxu0 %v412
  %1811 = vmatpush1.msra.mxu0 %v411
  %1812 = vmatprep.subr.mxu0 %v400
  %1813 = vmatpush1.msra.mxu0 %v399
  %1814 = vmatprep.subr.mxu0 %v250
  %1815 = vmatpush1.msra.mxu0 %v249
  %1816 = vmatprep.subr.mxu0 %v238
  %1817 = vmatpush1.msra.mxu0 %v237
  %1818 = vmatprep.subr.mxu0 0.0
  %1819 = vmatpush2.msra.mxu0 0.0
  %1820 = vmatprep.subr.mxu0 0.0
  %1821 = vmatpush2.msra.mxu0 0.0
  %1822 = vmatprep.subr.mxu0 0.0
  %1823 = vmatpush2.msra.mxu0 0.0
  %1824 = vmatprep.subr.mxu0 0.0
  %1825 = vmatpush2.msra.mxu0 0.0
  %1826 = vmatprep.subr.mxu0 0.0
  %1827 = vmatpush2.msra.mxu0 0.0
  %1828 = vmatprep.subr.mxu0 0.0
  %1829 = vmatpush2.msra.mxu0 0.0
  %1830 = vmatprep.subr.mxu0 0.0
  %1831 = vmatpush2.msra.mxu0 0.0
  %1832 = vmatprep.subr.mxu0 0.0
  %1833 = vmatpush2.msra.mxu0 0.0
  %1834 = vmatprep.subr.mxu0 0.0
  %1835 = vmatpush2.msra.mxu0 0.0
  %1836 = vmatprep.subr.mxu0 0.0
  %1837 = vmatpush2.msra.mxu0 0.0
  %1838 = vmatprep.subr.mxu0 0.0
  %1839 = vmatpush2.msra.mxu0 0.0
  %1840 = vmatprep.subr.mxu0 0.0
  %1841 = vmatpush2.msra.mxu0 0.0
  %1842 = vmatprep.subr.mxu0 0.0
  %1843 = vmatpush2.msra.mxu0 0.0
  %1844 = vmatprep.subr.mxu0 0.0
  %1845 = vmatpush2.msra.mxu0 0.0
  %1846 = vmatprep.subr.mxu0 %v1473
  %1847 = vmatpush2.msra.mxu0 %v1472
  %1848 = vmatprep.subr.mxu0 %v1461
  %1849 = vmatpush2.msra.mxu0 %v1460
  %1850 = vmatprep.mubr.f32.mxu0 %v1512
  %1851 = vmatmul.mubr.f32.gmra.mxu0 %v1478
  %v1852 = vpop.f32.mrf.mxu0
  %v1853 = vadd.f32 %v1493, %v1852
  %v1854 = vpop.f32.mrf.mxu0
  %v1855 = vadd.f32 %v1493, %v1854
  %1856 = vmatprep.mubr.f32.mxu0 %v1515
  %1857 = vmatmul.mubr.f32.gmra.mxu0 %v1480
  %v1858 = vpop.f32.mrf.mxu0
  %v1859 = vadd.f32 %v1498, %v1858
  %v1860 = vpop.f32.mrf.mxu0
  %v1861 = vadd.f32 %v1498, %v1860
  %1862 = vmatprep.mubr.f32.mxu0 %v1518
  %1863 = vmatmul.mubr.f32.gmra.mxu0 %v1482
  %v1864 = vpop.f32.mrf.mxu0
  %v1865 = vpop.f32.mrf.mxu0
  %1866 = vmatprep.mubr.f32.mxu0 %v1521
  %1867 = vmatmul.mubr.f32.gmra.mxu0 %v1484
  %v1868 = vpop.f32.mrf.mxu0
  %v1869 = vpop.f32.mrf.mxu0
  %1870 = vdwg.mxu0
  %1871 = vmatprep.subr.mxu0 %v1313
  %1872 = vmatpush1.msra.mxu0 %v1312
  %1873 = vmatprep.subr.mxu0 %v1301
  %1874 = vmatpush1.msra.mxu0 %v1300
  %1875 = vmatprep.subr.mxu0 %v1151
  %1876 = vmatpush1.msra.mxu0 %v1150
  %1877 = vmatprep.subr.mxu0 %v1139
  %1878 = vmatpush1.msra.mxu0 %v1138
  %1879 = vmatprep.subr.mxu0 %v989
  %1880 = vmatpush1.msra.mxu0 %v988
  %1881 = vmatprep.subr.mxu0 %v977
  %1882 = vmatpush1.msra.mxu0 %v976
  %1883 = vmatprep.subr.mxu0 %v827
  %1884 = vmatpush1.msra.mxu0 %v826
  %1885 = vmatprep.subr.mxu0 %v815
  %1886 = vmatpush1.msra.mxu0 %v814
  %1887 = vmatprep.subr.mxu0 %v738
  %1888 = vmatpush1.msra.mxu0 %v737
  %1889 = vmatprep.subr.mxu0 %v726
  %1890 = vmatpush1.msra.mxu0 %v725
  %1891 = vmatprep.subr.mxu0 %v576
  %1892 = vmatpush1.msra.mxu0 %v575
  %1893 = vmatprep.subr.mxu0 %v564
  %1894 = vmatpush1.msra.mxu0 %v563
  %1895 = vmatprep.subr.mxu0 %v414
  %1896 = vmatpush1.msra.mxu0 %v413
  %1897 = vmatprep.subr.mxu0 %v402
  %1898 = vmatpush1.msra.mxu0 %v401
  %1899 = vmatprep.subr.mxu0 %v252
  %1900 = vmatpush1.msra.mxu0 %v251
  %1901 = vmatprep.subr.mxu0 %v240
  %1902 = vmatpush1.msra.mxu0 %v239
  %1903 = vmatprep.subr.mxu0 0.0
  %1904 = vmatpush2.msra.mxu0 0.0
  %1905 = vmatprep.subr.mxu0 0.0
  %1906 = vmatpush2.msra.mxu0 0.0
  %1907 = vmatprep.subr.mxu0 0.0
  %1908 = vmatpush2.msra.mxu0 0.0
  %1909 = vmatprep.subr.mxu0 0.0
  %1910 = vmatpush2.msra.mxu0 0.0
  %1911 = vmatprep.subr.mxu0 0.0
  %1912 = vmatpush2.msra.mxu0 0.0
  %1913 = vmatprep.subr.mxu0 0.0
  %1914 = vmatpush2.msra.mxu0 0.0
  %1915 = vmatprep.subr.mxu0 0.0
  %1916 = vmatpush2.msra.mxu0 0.0
  %1917 = vmatprep.subr.mxu0 0.0
  %1918 = vmatpush2.msra.mxu0 0.0
  %1919 = vmatprep.subr.mxu0 0.0
  %1920 = vmatpush2.msra.mxu0 0.0
  %1921 = vmatprep.subr.mxu0 0.0
  %1922 = vmatpush2.msra.mxu0 0.0
  %1923 = vmatprep.subr.mxu0 0.0
  %1924 = vmatpush2.msra.mxu0 0.0
  %1925 = vmatprep.subr.mxu0 0.0
  %1926 = vmatpush2.msra.mxu0 0.0
  %1927 = vmatprep.subr.mxu0 0.0
  %1928 = vmatpush2.msra.mxu0 0.0
  %1929 = vmatprep.subr.mxu0 0.0
  %1930 = vmatpush2.msra.mxu0 0.0
  %1931 = vmatprep.subr.mxu0 %v1475
  %1932 = vmatpush2.msra.mxu0 %v1474
  %1933 = vmatprep.subr.mxu0 %v1463
  %1934 = vmatpush2.msra.mxu0 %v1462
  %1935 = vmatprep.mubr.f32.mxu0 %v1512
  %1936 = vmatmul.mubr.f32.gmra.mxu0 %v1478
  %v1937 = vpop.f32.mrf.mxu0
  %v1938 = vadd.f32 %v1493, %v1937
  %v1939 = vpop.f32.mrf.mxu0
  %v1940 = vadd.f32 %v1493, %v1939
  %1941 = vmatprep.mubr.f32.mxu0 %v1515
  %1942 = vmatmul.mubr.f32.gmra.mxu0 %v1480
  %v1943 = vpop.f32.mrf.mxu0
  %v1944 = vadd.f32 %v1498, %v1943
  %v1945 = vpop.f32.mrf.mxu0
  %v1946 = vadd.f32 %v1498, %v1945
  %1947 = vmatprep.mubr.f32.mxu0 %v1518
  %1948 = vmatmul.mubr.f32.gmra.mxu0 %v1482
  %v1949 = vpop.f32.mrf.mxu0
  %v1950 = vpop.f32.mrf.mxu0
  %1951 = vmatprep.mubr.f32.mxu0 %v1521
  %1952 = vmatmul.mubr.f32.gmra.mxu0 %v1484
  %v1953 = vpop.f32.mrf.mxu0
  %v1954 = vpop.f32.mrf.mxu0
  %1955 = vdwg.mxu0
  %1956 = vmatprep.subr.mxu0 %v1315
  %1957 = vmatpush1.msra.mxu0 %v1314
  %1958 = vmatprep.subr.mxu0 %v1303
  %1959 = vmatpush1.msra.mxu0 %v1302
  %1960 = vmatprep.subr.mxu0 %v1153
  %1961 = vmatpush1.msra.mxu0 %v1152
  %1962 = vmatprep.subr.mxu0 %v1141
  %1963 = vmatpush1.msra.mxu0 %v1140
  %1964 = vmatprep.subr.mxu0 %v991
  %1965 = vmatpush1.msra.mxu0 %v990
  %1966 = vmatprep.subr.mxu0 %v979
  %1967 = vmatpush1.msra.mxu0 %v978
  %1968 = vmatprep.subr.mxu0 %v829
  %1969 = vmatpush1.msra.mxu0 %v828
  %1970 = vmatprep.subr.mxu0 %v817
  %1971 = vmatpush1.msra.mxu0 %v816
  %1972 = vmatprep.subr.mxu0 %v740
  %1973 = vmatpush1.msra.mxu0 %v739
  %1974 = vmatprep.subr.mxu0 %v728
  %1975 = vmatpush1.msra.mxu0 %v727
  %1976 = vmatprep.subr.mxu0 %v578
  %1977 = vmatpush1.msra.mxu0 %v577
  %1978 = vmatprep.subr.mxu0 %v566
  %1979 = vmatpush1.msra.mxu0 %v565
  %1980 = vmatprep.subr.mxu0 %v416
  %1981 = vmatpush1.msra.mxu0 %v415
  %1982 = vmatprep.subr.mxu0 %v404
  %1983 = vmatpush1.msra.mxu0 %v403
  %1984 = vmatprep.subr.mxu0 %v254
  %1985 = vmatpush1.msra.mxu0 %v253
  %1986 = vmatprep.subr.mxu0 %v242
  %1987 = vmatpush1.msra.mxu0 %v241
  %1988 = vmatprep.subr.mxu0 0.0
  %1989 = vmatpush2.msra.mxu0 0.0
  %1990 = vmatprep.subr.mxu0 0.0
  %1991 = vmatpush2.msra.mxu0 0.0
  %1992 = vmatprep.subr.mxu0 0.0
  %1993 = vmatpush2.msra.mxu0 0.0
  %1994 = vmatprep.subr.mxu0 0.0
  %1995 = vmatpush2.msra.mxu0 0.0
  %1996 = vmatprep.subr.mxu0 0.0
  %1997 = vmatpush2.msra.mxu0 0.0
  %1998 = vmatprep.subr.mxu0 0.0
  %1999 = vmatpush2.msra.mxu0 0.0
  %2000 = vmatprep.subr.mxu0 0.0
  %2001 = vmatpush2.msra.mxu0 0.0
  %2002 = vmatprep.subr.mxu0 0.0
  %2003 = vmatpush2.msra.mxu0 0.0
  %2004 = vmatprep.subr.mxu0 0.0
  %2005 = vmatpush2.msra.mxu0 0.0
  %2006 = vmatprep.subr.mxu0 0.0
  %2007 = vmatpush2.msra.mxu0 0.0
  %2008 = vmatprep.subr.mxu0 0.0
  %2009 = vmatpush2.msra.mxu0 0.0
  %2010 = vmatprep.subr.mxu0 0.0
  %2011 = vmatpush2.msra.mxu0 0.0
  %2012 = vmatprep.subr.mxu0 0.0
  %2013 = vmatpush2.msra.mxu0 0.0
  %2014 = vmatprep.subr.mxu0 0.0
  %2015 = vmatpush2.msra.mxu0 0.0
  %2016 = vmatprep.subr.mxu0 %v1477
  %2017 = vmatpush2.msra.mxu0 %v1476
  %2018 = vmatprep.subr.mxu0 %v1465
  %2019 = vmatpush2.msra.mxu0 %v1464
  %2020 = vmatprep.mubr.f32.mxu0 %v1512
  %2021 = vmatmul.mubr.f32.gmra.mxu0 %v1478
  %v2022 = vpop.f32.mrf.mxu0
  %v2023 = vadd.f32 %v1493, %v2022
  %v2024 = vpop.f32.mrf.mxu0
  %v2025 = vadd.f32 %v1493, %v2024
  %2026 = vmatprep.mubr.f32.mxu0 %v1515
  %2027 = vmatmul.mubr.f32.gmra.mxu0 %v1480
  %v2028 = vpop.f32.mrf.mxu0
  %v2029 = vadd.f32 %v1498, %v2028
  %v2030 = vpop.f32.mrf.mxu0
  %v2031 = vadd.f32 %v1498, %v2030
  %2032 = vmatprep.mubr.f32.mxu0 %v1518
  %2033 = vmatmul.mubr.f32.gmra.mxu0 %v1482
  %v2034 = vpop.f32.mrf.mxu0
  %v2035 = vpop.f32.mrf.mxu0
  %2036 = vmatprep.mubr.f32.mxu0 %v1521
  %2037 = vmatmul.mubr.f32.gmra.mxu0 %v1484
  %v2038 = vpop.f32.mrf.mxu0
  %v2039 = vpop.f32.mrf.mxu0
  %2040 = vdwg.mxu0
  %v2041 = vmul.f32 %v1590, %v1602
  %v2042 = vmul.f32 %v1592, %v1604
  %v2043 = vmul.f32 %v1679, %v1691
  %v2044 = vmul.f32 %v1681, %v1693
  %v2045 = vmul.f32 %v1596, %v1608
  %v2046 = vmul.f32 %v1598, %v1610
  %v2047 = vmul.f32 %v1685, %v1697
  %v2048 = vmul.f32 %v1687, %v1699
  %v2049 = vadd.f32 %v2041, %v2045
  %v2050 = vrot.slane %v2049, 4
  %v2051 = vadd.f32 %v2049, %v2050
  %v2052 = vrot.slane %v2051, 2
  %v2053 = vadd.f32 %v2051, %v2052
  %v2054 = vrot.slane %v2053, 1
  %v2055 = vadd.f32 %v2053, %v2054
  %v2056 = vadd.f32 %v2042, %v2046
  %v2057 = vrot.slane %v2056, 4
  %v2058 = vadd.f32 %v2056, %v2057
  %v2059 = vrot.slane %v2058, 2
  %v2060 = vadd.f32 %v2058, %v2059
  %v2061 = vrot.slane %v2060, 1
  %v2062 = vadd.f32 %v2060, %v2061
  %v2063 = vadd.f32 %v2043, %v2047
  %v2064 = vrot.slane %v2063, 4
  %v2065 = vadd.f32 %v2063, %v2064
  %v2066 = vrot.slane %v2065, 2
  %v2067 = vadd.f32 %v2065, %v2066
  %v2068 = vrot.slane %v2067, 1
  %v2069 = vadd.f32 %v2067, %v2068
  %v2070 = vadd.f32 %v2044, %v2048
  %v2071 = vrot.slane %v2070, 4
  %v2072 = vadd.f32 %v2070, %v2071
  %v2073 = vrot.slane %v2072, 2
  %v2074 = vadd.f32 %v2072, %v2073
  %v2075 = vrot.slane %v2074, 1
  %v2076 = vadd.f32 %v2074, %v2075
  %v2077 = vrcp.pop 16.0
  %v2078 = vmul.f32 %v2055, %v2077
  %v2079 = vmul.f32 %v2062, %v2077
  %v2080 = vmul.f32 %v2069, %v2077
  %v2081 = vmul.f32 %v2076, %v2077
  %v2082 = vsub.f32 0.0, %v2078
  %v2083 = vsub.f32 0.0, %v2079
  %v2084 = vsub.f32 0.0, %v2080
  %v2085 = vsub.f32 0.0, %v2081
  %v2086 = vmul.f32 %v2082, 1.442695
  %v2087 = vpow.pop %v2086
  %v2088 = vmul.f32 %v2083, 1.442695
  %v2089 = vpow.pop %v2088
  %v2090 = vmul.f32 %v2084, 1.442695
  %v2091 = vpow.pop %v2090
  %v2092 = vmul.f32 %v2085, 1.442695
  %v2093 = vpow.pop %v2092
  %v2094 = vadd.f32 %v2087, 1.0
  %v2095 = vadd.f32 %v2089, 1.0
  %v2096 = vadd.f32 %v2091, 1.0
  %v2097 = vadd.f32 %v2093, 1.0
  %v2098 = vrcp.pop %v2094
  %v2099 = vrcp.pop %v2095
  %v2100 = vrcp.pop %v2096
  %v2101 = vrcp.pop %v2097
  %v2102 = vmul.f32 %v68, %v2098
  %v2103 = vmul.f32 %v69, %v2099
  %v2104 = vmul.f32 %v70, %v2100
  %v2105 = vmul.f32 %v71, %v2101
  %v2106 = vmul.f32 %v80, %v2098
  %v2107 = vmul.f32 %v81, %v2099
  %v2108 = vmul.f32 %v82, %v2100
  %v2109 = vmul.f32 %v83, %v2101
  %v2110 = vadd.f32 %v2102, 0.0
  %v2111 = vadd.f32 %v2103, 0.0
  %v2112 = vadd.f32 %v2104, 0.0
  %v2113 = vadd.f32 %v2105, 0.0
  %v2114 = vadd.f32 %v2106, 0.0
  %v2115 = vadd.f32 %v2107, 0.0
  %v2116 = vadd.f32 %v2108, 0.0
  %v2117 = vadd.f32 %v2109, 0.0
  %v2118 = vmul.f32 %v1768, %v1602
  %v2119 = vmul.f32 %v1770, %v1604
  %v2120 = vmul.f32 %v1853, %v1691
  %v2121 = vmul.f32 %v1855, %v1693
  %v2122 = vmul.f32 %v1774, %v1608
  %v2123 = vmul.f32 %v1776, %v1610
  %v2124 = vmul.f32 %v1859, %v1697
  %v2125 = vmul.f32 %v1861, %v1699
  %v2126 = vadd.f32 %v2118, %v2122
  %v2127 = vrot.slane %v2126, 4
  %v2128 = vadd.f32 %v2126, %v2127
  %v2129 = vrot.slane %v2128, 2
  %v2130 = vadd.f32 %v2128, %v2129
  %v2131 = vrot.slane %v2130, 1
  %v2132 = vadd.f32 %v2130, %v2131
  %v2133 = vadd.f32 %v2119, %v2123
  %v2134 = vrot.slane %v2133, 4
  %v2135 = vadd.f32 %v2133, %v2134
  %v2136 = vrot.slane %v2135, 2
  %v2137 = vadd.f32 %v2135, %v2136
  %v2138 = vrot.slane %v2137, 1
  %v2139 = vadd.f32 %v2137, %v2138
  %v2140 = vadd.f32 %v2120, %v2124
  %v2141 = vrot.slane %v2140, 4
  %v2142 = vadd.f32 %v2140, %v2141
  %v2143 = vrot.slane %v2142, 2
  %v2144 = vadd.f32 %v2142, %v2143
  %v2145 = vrot.slane %v2144, 1
  %v2146 = vadd.f32 %v2144, %v2145
  %v2147 = vadd.f32 %v2121, %v2125
  %v2148 = vrot.slane %v2147, 4
  %v2149 = vadd.f32 %v2147, %v2148
  %v2150 = vrot.slane %v2149, 2
  %v2151 = vadd.f32 %v2149, %v2150
  %v2152 = vrot.slane %v2151, 1
  %v2153 = vadd.f32 %v2151, %v2152
  %v2154 = vmul.f32 %v2132, %v2077
  %v2155 = vmul.f32 %v2139, %v2077
  %v2156 = vmul.f32 %v2146, %v2077
  %v2157 = vmul.f32 %v2153, %v2077
  %v2158 = vsub.f32 0.0, %v2154
  %v2159 = vsub.f32 0.0, %v2155
  %v2160 = vsub.f32 0.0, %v2156
  %v2161 = vsub.f32 0.0, %v2157
  %v2162 = vmul.f32 %v2158, 1.442695
  %v2163 = vpow.pop %v2162
  %v2164 = vmul.f32 %v2159, 1.442695
  %v2165 = vpow.pop %v2164
  %v2166 = vmul.f32 %v2160, 1.442695
  %v2167 = vpow.pop %v2166
  %v2168 = vmul.f32 %v2161, 1.442695
  %v2169 = vpow.pop %v2168
  %v2170 = vadd.f32 %v2163, 1.0
  %v2171 = vadd.f32 %v2165, 1.0
  %v2172 = vadd.f32 %v2167, 1.0
  %v2173 = vadd.f32 %v2169, 1.0
  %v2174 = vrcp.pop %v2170
  %v2175 = vrcp.pop %v2171
  %v2176 = vrcp.pop %v2172
  %v2177 = vrcp.pop %v2173
  %v2178 = vmul.f32 %v72, %v2174
  %v2179 = vmul.f32 %v73, %v2175
  %v2180 = vmul.f32 %v74, %v2176
  %v2181 = vmul.f32 %v75, %v2177
  %v2182 = vmul.f32 %v84, %v2174
  %v2183 = vmul.f32 %v85, %v2175
  %v2184 = vmul.f32 %v86, %v2176
  %v2185 = vmul.f32 %v87, %v2177
  %v2186 = vadd.f32 %v2110, %v2178
  %v2187 = vadd.f32 %v2111, %v2179
  %v2188 = vadd.f32 %v2112, %v2180
  %v2189 = vadd.f32 %v2113, %v2181
  %v2190 = vadd.f32 %v2114, %v2182
  %v2191 = vadd.f32 %v2115, %v2183
  %v2192 = vadd.f32 %v2116, %v2184
  %v2193 = vadd.f32 %v2117, %v2185
  %v2194 = vmul.f32 %v1938, %v1602
  %v2195 = vmul.f32 %v1940, %v1604
  %v2196 = vmul.f32 %v2023, %v1691
  %v2197 = vmul.f32 %v2025, %v1693
  %v2198 = vmul.f32 %v1944, %v1608
  %v2199 = vmul.f32 %v1946, %v1610
  %v2200 = vmul.f32 %v2029, %v1697
  %v2201 = vmul.f32 %v2031, %v1699
  %v2202 = vadd.f32 %v2194, %v2198
  %v2203 = vrot.slane %v2202, 4
  %v2204 = vadd.f32 %v2202, %v2203
  %v2205 = vrot.slane %v2204, 2
  %v2206 = vadd.f32 %v2204, %v2205
  %v2207 = vrot.slane %v2206, 1
  %v2208 = vadd.f32 %v2206, %v2207
  %v2209 = vadd.f32 %v2195, %v2199
  %v2210 = vrot.slane %v2209, 4
  %v2211 = vadd.f32 %v2209, %v2210
  %v2212 = vrot.slane %v2211, 2
  %v2213 = vadd.f32 %v2211, %v2212
  %v2214 = vrot.slane %v2213, 1
  %v2215 = vadd.f32 %v2213, %v2214
  %v2216 = vadd.f32 %v2196, %v2200
  %v2217 = vrot.slane %v2216, 4
  %v2218 = vadd.f32 %v2216, %v2217
  %v2219 = vrot.slane %v2218, 2
  %v2220 = vadd.f32 %v2218, %v2219
  %v2221 = vrot.slane %v2220, 1
  %v2222 = vadd.f32 %v2220, %v2221
  %v2223 = vadd.f32 %v2197, %v2201
  %v2224 = vrot.slane %v2223, 4
  %v2225 = vadd.f32 %v2223, %v2224
  %v2226 = vrot.slane %v2225, 2
  %v2227 = vadd.f32 %v2225, %v2226
  %v2228 = vrot.slane %v2227, 1
  %v2229 = vadd.f32 %v2227, %v2228
  %v2230 = vmul.f32 %v2208, %v2077
  %v2231 = vmul.f32 %v2215, %v2077
  %v2232 = vmul.f32 %v2222, %v2077
  %v2233 = vmul.f32 %v2229, %v2077
  %v2234 = vsub.f32 0.0, %v2230
  %v2235 = vsub.f32 0.0, %v2231
  %v2236 = vsub.f32 0.0, %v2232
  %v2237 = vsub.f32 0.0, %v2233
  %v2238 = vmul.f32 %v2234, 1.442695
  %v2239 = vpow.pop %v2238
  %v2240 = vmul.f32 %v2235, 1.442695
  %v2241 = vpow.pop %v2240
  %v2242 = vmul.f32 %v2236, 1.442695
  %v2243 = vpow.pop %v2242
  %v2244 = vmul.f32 %v2237, 1.442695
  %v2245 = vpow.pop %v2244
  %v2246 = vadd.f32 %v2239, 1.0
  %v2247 = vadd.f32 %v2241, 1.0
  %v2248 = vadd.f32 %v2243, 1.0
  %v2249 = vadd.f32 %v2245, 1.0
  %v2250 = vrcp.pop %v2246
  %v2251 = vrcp.pop %v2247
  %v2252 = vrcp.pop %v2248
  %v2253 = vrcp.pop %v2249
  %v2254 = vmul.f32 %v76, %v2250
  %v2255 = vmul.f32 %v77, %v2251
  %v2256 = vmul.f32 %v78, %v2252
  %v2257 = vmul.f32 %v79, %v2253
  %v2258 = vmul.f32 %v88, %v2250
  %v2259 = vmul.f32 %v89, %v2251
  %v2260 = vmul.f32 %v90, %v2252
  %v2261 = vmul.f32 %v91, %v2253
  %v2262 = vadd.f32 %v2186, %v2254
  %v2263 = vadd.f32 %v2187, %v2255
  %v2264 = vadd.f32 %v2188, %v2256
  %v2265 = vadd.f32 %v2189, %v2257
  %v2266 = vadd.f32 %v2190, %v2258
  %v2267 = vadd.f32 %v2191, %v2259
  %v2268 = vadd.f32 %v2192, %v2260
  %v2269 = vadd.f32 %v2193, %v2261
  %v2270 = vmul.f32 %v2262, 0.33333334
  %v2271 = vmul.f32 %v2263, 0.33333334
  %v2272 = vmul.f32 %v2264, 0.33333334
  %v2273 = vmul.f32 %v2265, 0.33333334
  %v2274 = vmul.f32 %v2266, 0.33333334
  %v2275 = vmul.f32 %v2267, 0.33333334
  %v2276 = vmul.f32 %v2268, 0.33333334
  %v2277 = vmul.f32 %v2269, 0.33333334
  %v2278 = vld [vmem:[%s2] sm:$0xff]
  %v2279 = vld [vmem:[%s2 + $0x8] sm:$0xff]
  %v2280 = vld [vmem:[%s13 + $0x20] sm:$0xff]
  %v2281 = vld [vmem:[%s13 + $0x28] sm:$0xff]
  %2283 = vset.pattern.permute.xlu0 0
  %2284 = vperm.xlu0 %2283, %v2280
  %v2285 = vpop.permute.xlu0 %2284
  %2288 = vset.pattern.permute.xlu0 0
  %2289 = vperm.xlu0 %2288, %v2281
  %v2290 = vpop.permute.xlu0 %2289
  %v2293 = vsel %vm1510, %v2278, 0
  %v2296 = vsel %vm1510, %v2279, 0
  %2298 = vmatprep.subr.mxu0 0.0
  %2299 = vmatpush1.msra.mxu0 0.0
  %2300 = vmatprep.subr.mxu0 0.0
  %2301 = vmatpush1.msra.mxu0 0.0
  %2302 = vmatprep.subr.mxu0 0.0
  %2303 = vmatpush1.msra.mxu0 0.0
  %2304 = vmatprep.subr.mxu0 0.0
  %2305 = vmatpush1.msra.mxu0 0.0
  %2306 = vmatprep.subr.mxu0 0.0
  %2307 = vmatpush1.msra.mxu0 0.0
  %2308 = vmatprep.subr.mxu0 0.0
  %2309 = vmatpush1.msra.mxu0 0.0
  %2310 = vmatprep.subr.mxu0 0.0
  %2311 = vmatpush1.msra.mxu0 0.0
  %2312 = vmatprep.subr.mxu0 0.0
  %2313 = vmatpush1.msra.mxu0 0.0
  %2314 = vmatprep.subr.mxu0 0.0
  %2315 = vmatpush1.msra.mxu0 0.0
  %2316 = vmatprep.subr.mxu0 0.0
  %2317 = vmatpush1.msra.mxu0 0.0
  %2318 = vmatprep.subr.mxu0 0.0
  %2319 = vmatpush1.msra.mxu0 0.0
  %2320 = vmatprep.subr.mxu0 0.0
  %2321 = vmatpush1.msra.mxu0 0.0
  %2322 = vmatprep.subr.mxu0 0.0
  %2323 = vmatpush1.msra.mxu0 0.0
  %2324 = vmatprep.subr.mxu0 0.0
  %2325 = vmatpush1.msra.mxu0 0.0
  %2326 = vmatprep.subr.mxu0 %v81
  %2327 = vmatpush1.msra.mxu0 %v80
  %2328 = vmatprep.subr.mxu0 %v69
  %2329 = vmatpush1.msra.mxu0 %v68
  %2330 = vmatprep.subr.mxu0 0.0
  %2331 = vmatpush2.msra.mxu0 0.0
  %2332 = vmatprep.subr.mxu0 0.0
  %2333 = vmatpush2.msra.mxu0 0.0
  %2334 = vmatprep.subr.mxu0 0.0
  %2335 = vmatpush2.msra.mxu0 0.0
  %2336 = vmatprep.subr.mxu0 0.0
  %2337 = vmatpush2.msra.mxu0 0.0
  %2338 = vmatprep.subr.mxu0 0.0
  %2339 = vmatpush2.msra.mxu0 0.0
  %2340 = vmatprep.subr.mxu0 0.0
  %2341 = vmatpush2.msra.mxu0 0.0
  %2342 = vmatprep.subr.mxu0 0.0
  %2343 = vmatpush2.msra.mxu0 0.0
  %2344 = vmatprep.subr.mxu0 0.0
  %2345 = vmatpush2.msra.mxu0 0.0
  %2346 = vmatprep.subr.mxu0 0.0
  %2347 = vmatpush2.msra.mxu0 0.0
  %2348 = vmatprep.subr.mxu0 0.0
  %2349 = vmatpush2.msra.mxu0 0.0
  %2350 = vmatprep.subr.mxu0 0.0
  %2351 = vmatpush2.msra.mxu0 0.0
  %2352 = vmatprep.subr.mxu0 0.0
  %2353 = vmatpush2.msra.mxu0 0.0
  %2354 = vmatprep.subr.mxu0 0.0
  %2355 = vmatpush2.msra.mxu0 0.0
  %2356 = vmatprep.subr.mxu0 0.0
  %2357 = vmatpush2.msra.mxu0 0.0
  %2358 = vmatprep.subr.mxu0 0.0
  %2359 = vmatpush2.msra.mxu0 0.0
  %2360 = vmatprep.subr.mxu0 0.0
  %2361 = vmatpush2.msra.mxu0 0.0
  %2362 = vmatprep.mubr.f32.mxu0 0.0
  %2363 = vmatmul.mubr.f32.gmra.mxu0 %v2293
  %v2364 = vpop.f32.mrf.mxu0
  %v2365 = vadd.f32 %v2285, %v2364
  %v2366 = vpop.f32.mrf.mxu0
  %v2367 = vadd.f32 %v2285, %v2366
  %2368 = vmatprep.mubr.f32.mxu0 0.0
  %2369 = vmatmul.mubr.f32.gmra.mxu0 %v2296
  %v2370 = vpop.f32.mrf.mxu0
  %v2371 = vadd.f32 %v2290, %v2370
  %v2372 = vpop.f32.mrf.mxu0
  %v2373 = vadd.f32 %v2290, %v2372
  %2374 = vdwg.mxu0
  %2375 = vmatprep.subr.mxu0 0.0
  %2376 = vmatpush1.msra.mxu0 0.0
  %2377 = vmatprep.subr.mxu0 0.0
  %2378 = vmatpush1.msra.mxu0 0.0
  %2379 = vmatprep.subr.mxu0 0.0
  %2380 = vmatpush1.msra.mxu0 0.0
  %2381 = vmatprep.subr.mxu0 0.0
  %2382 = vmatpush1.msra.mxu0 0.0
  %2383 = vmatprep.subr.mxu0 0.0
  %2384 = vmatpush1.msra.mxu0 0.0
  %2385 = vmatprep.subr.mxu0 0.0
  %2386 = vmatpush1.msra.mxu0 0.0
  %2387 = vmatprep.subr.mxu0 0.0
  %2388 = vmatpush1.msra.mxu0 0.0
  %2389 = vmatprep.subr.mxu0 0.0
  %2390 = vmatpush1.msra.mxu0 0.0
  %2391 = vmatprep.subr.mxu0 0.0
  %2392 = vmatpush1.msra.mxu0 0.0
  %2393 = vmatprep.subr.mxu0 0.0
  %2394 = vmatpush1.msra.mxu0 0.0
  %2395 = vmatprep.subr.mxu0 0.0
  %2396 = vmatpush1.msra.mxu0 0.0
  %2397 = vmatprep.subr.mxu0 0.0
  %2398 = vmatpush1.msra.mxu0 0.0
  %2399 = vmatprep.subr.mxu0 0.0
  %2400 = vmatpush1.msra.mxu0 0.0
  %2401 = vmatprep.subr.mxu0 0.0
  %2402 = vmatpush1.msra.mxu0 0.0
  %2403 = vmatprep.subr.mxu0 %v83
  %2404 = vmatpush1.msra.mxu0 %v82
  %2405 = vmatprep.subr.mxu0 %v71
  %2406 = vmatpush1.msra.mxu0 %v70
  %2407 = vmatprep.subr.mxu0 0.0
  %2408 = vmatpush2.msra.mxu0 0.0
  %2409 = vmatprep.subr.mxu0 0.0
  %2410 = vmatpush2.msra.mxu0 0.0
  %2411 = vmatprep.subr.mxu0 0.0
  %2412 = vmatpush2.msra.mxu0 0.0
  %2413 = vmatprep.subr.mxu0 0.0
  %2414 = vmatpush2.msra.mxu0 0.0
  %2415 = vmatprep.subr.mxu0 0.0
  %2416 = vmatpush2.msra.mxu0 0.0
  %2417 = vmatprep.subr.mxu0 0.0
  %2418 = vmatpush2.msra.mxu0 0.0
  %2419 = vmatprep.subr.mxu0 0.0
  %2420 = vmatpush2.msra.mxu0 0.0
  %2421 = vmatprep.subr.mxu0 0.0
  %2422 = vmatpush2.msra.mxu0 0.0
  %2423 = vmatprep.subr.mxu0 0.0
  %2424 = vmatpush2.msra.mxu0 0.0
  %2425 = vmatprep.subr.mxu0 0.0
  %2426 = vmatpush2.msra.mxu0 0.0
  %2427 = vmatprep.subr.mxu0 0.0
  %2428 = vmatpush2.msra.mxu0 0.0
  %2429 = vmatprep.subr.mxu0 0.0
  %2430 = vmatpush2.msra.mxu0 0.0
  %2431 = vmatprep.subr.mxu0 0.0
  %2432 = vmatpush2.msra.mxu0 0.0
  %2433 = vmatprep.subr.mxu0 0.0
  %2434 = vmatpush2.msra.mxu0 0.0
  %2435 = vmatprep.subr.mxu0 0.0
  %2436 = vmatpush2.msra.mxu0 0.0
  %2437 = vmatprep.subr.mxu0 0.0
  %2438 = vmatpush2.msra.mxu0 0.0
  %2439 = vmatprep.mubr.f32.mxu0 0.0
  %2440 = vmatmul.mubr.f32.gmra.mxu0 %v2293
  %v2441 = vpop.f32.mrf.mxu0
  %v2442 = vadd.f32 %v2285, %v2441
  %v2443 = vpop.f32.mrf.mxu0
  %v2444 = vadd.f32 %v2285, %v2443
  %2445 = vmatprep.mubr.f32.mxu0 0.0
  %2446 = vmatmul.mubr.f32.gmra.mxu0 %v2296
  %v2447 = vpop.f32.mrf.mxu0
  %v2448 = vadd.f32 %v2290, %v2447
  %v2449 = vpop.f32.mrf.mxu0
  %v2450 = vadd.f32 %v2290, %v2449
  %2451 = vdwg.mxu0
  %vm2452 = vcmp.ge.f32.partialorder %v2365, 0.0
  %vm2453 = vcmp.ge.f32.partialorder %v2367, 0.0
  %vm2454 = vcmp.ge.f32.partialorder %v2442, 0.0
  %vm2455 = vcmp.ge.f32.partialorder %v2444, 0.0
  %vm2456 = vcmp.ge.f32.partialorder %v2371, 0.0
  %vm2457 = vcmp.ge.f32.partialorder %v2373, 0.0
  %vm2458 = vcmp.ge.f32.partialorder %v2448, 0.0
  %vm2459 = vcmp.ge.f32.partialorder %v2450, 0.0
  %v2460 = vmul.f32 %v2365, 0.1
  %v2461 = vmul.f32 %v2367, 0.1
  %v2462 = vmul.f32 %v2442, 0.1
  %v2463 = vmul.f32 %v2444, 0.1
  %v2464 = vmul.f32 %v2371, 0.1
  %v2465 = vmul.f32 %v2373, 0.1
  %v2466 = vmul.f32 %v2448, 0.1
  %v2467 = vmul.f32 %v2450, 0.1
  %v2468 = vsel %vm2452, %v2365, %v2460
  %v2469 = vsel %vm2453, %v2367, %v2461
  %v2470 = vsel %vm2454, %v2442, %v2462
  %v2471 = vsel %vm2455, %v2444, %v2463
  %v2472 = vsel %vm2456, %v2371, %v2464
  %v2473 = vsel %vm2457, %v2373, %v2465
  %v2474 = vsel %vm2458, %v2448, %v2466
  %v2475 = vsel %vm2459, %v2450, %v2467
  %2476 = vrot.lane.b32.xlu0 %v2468, 17
  %v2477 = vpop.permute.xlu0 %2476
  %2478 = vrot.lane.b32.xlu0 %v2472, 17
  %v2479 = vpop.permute.xlu0 %2478
  %2480 = vrot.lane.b32.xlu0 %v2469, 17
  %v2481 = vpop.permute.xlu0 %2480
  %2482 = vrot.lane.b32.xlu0 %v2473, 17
  %v2483 = vpop.permute.xlu0 %2482
  %2484 = vrot.lane.b32.xlu0 %v2470, 17
  %v2485 = vpop.permute.xlu0 %2484
  %2486 = vrot.lane.b32.xlu0 %v2474, 17
  %v2487 = vpop.permute.xlu0 %2486
  %2488 = vrot.lane.b32.xlu0 %v2471, 17
  %v2489 = vpop.permute.xlu0 %2488
  %2490 = vrot.lane.b32.xlu0 %v2475, 17
  %v2491 = vpop.permute.xlu0 %2490
  %v2492 = vsel %vm144, %v2485, %v2489
  %v2493 = vsel %vm144, %v2487, %v2491
  %v2494 = vsel %vm144, %v2481, %v2485
  %v2495 = vsel %vm144, %v2483, %v2487
  %v2496 = vsel %vm144, %v2477, %v2481
  %v2497 = vsel %vm144, %v2479, %v2483
  %v2498 = vsel %vm144, %v2489, %v2477
  %v2499 = vsel %vm144, %v2491, %v2479
  %v2500 = vmul.f32 %v2498, %v174
  %v2501 = vmul.f32 %v2496, %v178
  %v2502 = vmul.f32 %v2494, %v182
  %v2503 = vmul.f32 %v2492, %v186
  %v2504 = vmul.f32 %v2499, %v174
  %v2505 = vmul.f32 %v2497, %v178
  %v2506 = vmul.f32 %v2495, %v182
  %v2507 = vmul.f32 %v2493, %v186
  %v2508 = vsub.f32 1.0, %v92
  %v2509 = vmul.f32 %v2508, 1e+30
  %v2511 = vlaneseq
  %v2512 = vshrl.u32 %v2511, 7
  %v2513 = vsub.s32 0, %v2512
  %v2514 = vrot.slane %v2509, %v2513
  %v2515 = vlaneseq
  %v2516 = vshrl.u32 %v2515, 7
  %v2517 = vsub.s32 1, %v2516
  %v2518 = vrot.slane %v2509, %v2517
  %v2519 = vlaneseq
  %v2520 = vshrl.u32 %v2519, 7
  %v2521 = vsub.s32 2, %v2520
  %v2522 = vrot.slane %v2509, %v2521
  %v2523 = vlaneseq
  %v2524 = vshrl.u32 %v2523, 7
  %v2525 = vsub.s32 3, %v2524
  %v2526 = vrot.slane %v2509, %v2525
  %v2531 = vsub.f32 %v2500, %v2514
  %v2532 = vsub.f32 %v2501, %v2518
  %v2533 = vsub.f32 %v2502, %v2522
  %v2534 = vsub.f32 %v2503, %v2526
  %v2535 = vsub.f32 %v2504, %v2514
  %v2536 = vsub.f32 %v2505, %v2518
  %v2537 = vsub.f32 %v2506, %v2522
  %v2538 = vsub.f32 %v2507, %v2526
  %2539 = vrot.lane.b32.xlu0 %v2468, 16
  %v2540 = vpop.permute.xlu0 %2539
  %2541 = vrot.lane.b32.xlu0 %v2472, 16
  %v2542 = vpop.permute.xlu0 %2541
  %2543 = vrot.lane.b32.xlu0 %v2469, 16
  %v2544 = vpop.permute.xlu0 %2543
  %2545 = vrot.lane.b32.xlu0 %v2473, 16
  %v2546 = vpop.permute.xlu0 %2545
  %2547 = vrot.lane.b32.xlu0 %v2470, 16
  %v2548 = vpop.permute.xlu0 %2547
  %2549 = vrot.lane.b32.xlu0 %v2474, 16
  %v2550 = vpop.permute.xlu0 %2549
  %2551 = vrot.lane.b32.xlu0 %v2471, 16
  %v2552 = vpop.permute.xlu0 %2551
  %2553 = vrot.lane.b32.xlu0 %v2475, 16
  %v2554 = vpop.permute.xlu0 %2553
  %v2555 = vsel %vm306, %v2548, %v2552
  %v2556 = vsel %vm306, %v2550, %v2554
  %v2557 = vsel %vm306, %v2544, %v2548
  %v2558 = vsel %vm306, %v2546, %v2550
  %v2559 = vsel %vm306, %v2540, %v2544
  %v2560 = vsel %vm306, %v2542, %v2546
  %v2561 = vsel %vm306, %v2552, %v2540
  %v2562 = vsel %vm306, %v2554, %v2542
  %v2563 = vmul.f32 %v2561, %v336
  %v2564 = vmul.f32 %v2559, %v340
  %v2565 = vmul.f32 %v2557, %v344
  %v2566 = vmul.f32 %v2555, %v348
  %v2567 = vmul.f32 %v2562, %v336
  %v2568 = vmul.f32 %v2560, %v340
  %v2569 = vmul.f32 %v2558, %v344
  %v2570 = vmul.f32 %v2556, %v348
  %v2571 = vsub.f32 1.0, %v256
  %v2572 = vmul.f32 %v2571, 1e+30
  %v2574 = vlaneseq
  %v2575 = vshrl.u32 %v2574, 7
  %v2576 = vsub.s32 0, %v2575
  %v2577 = vrot.slane %v2572, %v2576
  %v2578 = vlaneseq
  %v2579 = vshrl.u32 %v2578, 7
  %v2580 = vsub.s32 1, %v2579
  %v2581 = vrot.slane %v2572, %v2580
  %v2582 = vlaneseq
  %v2583 = vshrl.u32 %v2582, 7
  %v2584 = vsub.s32 2, %v2583
  %v2585 = vrot.slane %v2572, %v2584
  %v2586 = vlaneseq
  %v2587 = vshrl.u32 %v2586, 7
  %v2588 = vsub.s32 3, %v2587
  %v2589 = vrot.slane %v2572, %v2588
  %v2594 = vsub.f32 %v2563, %v2577
  %v2595 = vsub.f32 %v2564, %v2581
  %v2596 = vsub.f32 %v2565, %v2585
  %v2597 = vsub.f32 %v2566, %v2589
  %v2598 = vsub.f32 %v2567, %v2577
  %v2599 = vsub.f32 %v2568, %v2581
  %v2600 = vsub.f32 %v2569, %v2585
  %v2601 = vsub.f32 %v2570, %v2589
  %v2602 = vadd.f32 %v2500, %v2563
  %v2603 = vadd.f32 %v2501, %v2564
  %v2604 = vadd.f32 %v2502, %v2565
  %v2605 = vadd.f32 %v2503, %v2566
  %v2606 = vadd.f32 %v2504, %v2567
  %v2607 = vadd.f32 %v2505, %v2568
  %v2608 = vadd.f32 %v2506, %v2569
  %v2609 = vadd.f32 %v2507, %v2570
  %v2610 = vmax.f32 %v2531, %v2594
  %v2611 = vmax.f32 %v2532, %v2595
  %v2612 = vmax.f32 %v2533, %v2596
  %v2613 = vmax.f32 %v2534, %v2597
  %v2614 = vmax.f32 %v2535, %v2598
  %v2615 = vmax.f32 %v2536, %v2599
  %v2616 = vmax.f32 %v2537, %v2600
  %v2617 = vmax.f32 %v2538, %v2601
  %2618 = vrot.lane.b32.xlu0 %v2468, 15
  %v2619 = vpop.permute.xlu0 %2618
  %2620 = vrot.lane.b32.xlu0 %v2472, 15
  %v2621 = vpop.permute.xlu0 %2620
  %2622 = vrot.lane.b32.xlu0 %v2469, 15
  %v2623 = vpop.permute.xlu0 %2622
  %2624 = vrot.lane.b32.xlu0 %v2473, 15
  %v2625 = vpop.permute.xlu0 %2624
  %2626 = vrot.lane.b32.xlu0 %v2470, 15
  %v2627 = vpop.permute.xlu0 %2626
  %2628 = vrot.lane.b32.xlu0 %v2474, 15
  %v2629 = vpop.permute.xlu0 %2628
  %2630 = vrot.lane.b32.xlu0 %v2471, 15
  %v2631 = vpop.permute.xlu0 %2630
  %2632 = vrot.lane.b32.xlu0 %v2475, 15
  %v2633 = vpop.permute.xlu0 %2632
  %v2634 = vsel %vm468, %v2627, %v2631
  %v2635 = vsel %vm468, %v2629, %v2633
  %v2636 = vsel %vm468, %v2623, %v2627
  %v2637 = vsel %vm468, %v2625, %v2629
  %v2638 = vsel %vm468, %v2619, %v2623
  %v2639 = vsel %vm468, %v2621, %v2625
  %v2640 = vsel %vm468, %v2631, %v2619
  %v2641 = vsel %vm468, %v2633, %v2621
  %v2642 = vmul.f32 %v2640, %v498
  %v2643 = vmul.f32 %v2638, %v502
  %v2644 = vmul.f32 %v2636, %v506
  %v2645 = vmul.f32 %v2634, %v510
  %v2646 = vmul.f32 %v2641, %v498
  %v2647 = vmul.f32 %v2639, %v502
  %v2648 = vmul.f32 %v2637, %v506
  %v2649 = vmul.f32 %v2635, %v510
  %v2650 = vsub.f32 1.0, %v418
  %v2651 = vmul.f32 %v2650, 1e+30
  %v2653 = vlaneseq
  %v2654 = vshrl.u32 %v2653, 7
  %v2655 = vsub.s32 0, %v2654
  %v2656 = vrot.slane %v2651, %v2655
  %v2657 = vlaneseq
  %v2658 = vshrl.u32 %v2657, 7
  %v2659 = vsub.s32 1, %v2658
  %v2660 = vrot.slane %v2651, %v2659
  %v2661 = vlaneseq
  %v2662 = vshrl.u32 %v2661, 7
  %v2663 = vsub.s32 2, %v2662
  %v2664 = vrot.slane %v2651, %v2663
  %v2665 = vlaneseq
  %v2666 = vshrl.u32 %v2665, 7
  %v2667 = vsub.s32 3, %v2666
  %v2668 = vrot.slane %v2651, %v2667
  %v2673 = vsub.f32 %v2642, %v2656
  %v2674 = vsub.f32 %v2643, %v2660
  %v2675 = vsub.f32 %v2644, %v2664
  %v2676 = vsub.f32 %v2645, %v2668
  %v2677 = vsub.f32 %v2646, %v2656
  %v2678 = vsub.f32 %v2647, %v2660
  %v2679 = vsub.f32 %v2648, %v2664
  %v2680 = vsub.f32 %v2649, %v2668
  %v2681 = vadd.f32 %v2602, %v2642
  %v2682 = vadd.f32 %v2603, %v2643
  %v2683 = vadd.f32 %v2604, %v2644
  %v2684 = vadd.f32 %v2605, %v2645
  %v2685 = vadd.f32 %v2606, %v2646
  %v2686 = vadd.f32 %v2607, %v2647
  %v2687 = vadd.f32 %v2608, %v2648
  %v2688 = vadd.f32 %v2609, %v2649
  %v2689 = vmax.f32 %v2610, %v2673
  %v2690 = vmax.f32 %v2611, %v2674
  %v2691 = vmax.f32 %v2612, %v2675
  %v2692 = vmax.f32 %v2613, %v2676
  %v2693 = vmax.f32 %v2614, %v2677
  %v2694 = vmax.f32 %v2615, %v2678
  %v2695 = vmax.f32 %v2616, %v2679
  %v2696 = vmax.f32 %v2617, %v2680
  %2697 = vrot.lane.b32.xlu0 %v2468, 1
  %v2698 = vpop.permute.xlu0 %2697
  %2699 = vrot.lane.b32.xlu0 %v2472, 1
  %v2700 = vpop.permute.xlu0 %2699
  %2701 = vrot.lane.b32.xlu0 %v2469, 1
  %v2702 = vpop.permute.xlu0 %2701
  %2703 = vrot.lane.b32.xlu0 %v2473, 1
  %v2704 = vpop.permute.xlu0 %2703
  %2705 = vrot.lane.b32.xlu0 %v2470, 1
  %v2706 = vpop.permute.xlu0 %2705
  %2707 = vrot.lane.b32.xlu0 %v2474, 1
  %v2708 = vpop.permute.xlu0 %2707
  %2709 = vrot.lane.b32.xlu0 %v2471, 1
  %v2710 = vpop.permute.xlu0 %2709
  %2711 = vrot.lane.b32.xlu0 %v2475, 1
  %v2712 = vpop.permute.xlu0 %2711
  %v2713 = vsel %vm630, %v2706, %v2710
  %v2714 = vsel %vm630, %v2708, %v2712
  %v2715 = vsel %vm630, %v2702, %v2706
  %v2716 = vsel %vm630, %v2704, %v2708
  %v2717 = vsel %vm630, %v2698, %v2702
  %v2718 = vsel %vm630, %v2700, %v2704
  %v2719 = vsel %vm630, %v2710, %v2698
  %v2720 = vsel %vm630, %v2712, %v2700
  %v2721 = vmul.f32 %v2719, %v660
  %v2722 = vmul.f32 %v2717, %v664
  %v2723 = vmul.f32 %v2715, %v668
  %v2724 = vmul.f32 %v2713, %v672
  %v2725 = vmul.f32 %v2720, %v660
  %v2726 = vmul.f32 %v2718, %v664
  %v2727 = vmul.f32 %v2716, %v668
  %v2728 = vmul.f32 %v2714, %v672
  %v2729 = vsub.f32 1.0, %v580
  %v2730 = vmul.f32 %v2729, 1e+30
  %v2732 = vlaneseq
  %v2733 = vshrl.u32 %v2732, 7
  %v2734 = vsub.s32 0, %v2733
  %v2735 = vrot.slane %v2730, %v2734
  %v2736 = vlaneseq
  %v2737 = vshrl.u32 %v2736, 7
  %v2738 = vsub.s32 1, %v2737
  %v2739 = vrot.slane %v2730, %v2738
  %v2740 = vlaneseq
  %v2741 = vshrl.u32 %v2740, 7
  %v2742 = vsub.s32 2, %v2741
  %v2743 = vrot.slane %v2730, %v2742
  %v2744 = vlaneseq
  %v2745 = vshrl.u32 %v2744, 7
  %v2746 = vsub.s32 3, %v2745
  %v2747 = vrot.slane %v2730, %v2746
  %v2752 = vsub.f32 %v2721, %v2735
  %v2753 = vsub.f32 %v2722, %v2739
  %v2754 = vsub.f32 %v2723, %v2743
  %v2755 = vsub.f32 %v2724, %v2747
  %v2756 = vsub.f32 %v2725, %v2735
  %v2757 = vsub.f32 %v2726, %v2739
  %v2758 = vsub.f32 %v2727, %v2743
  %v2759 = vsub.f32 %v2728, %v2747
  %v2760 = vadd.f32 %v2681, %v2721
  %v2761 = vadd.f32 %v2682, %v2722
  %v2762 = vadd.f32 %v2683, %v2723
  %v2763 = vadd.f32 %v2684, %v2724
  %v2764 = vadd.f32 %v2685, %v2725
  %v2765 = vadd.f32 %v2686, %v2726
  %v2766 = vadd.f32 %v2687, %v2727
  %v2767 = vadd.f32 %v2688, %v2728
  %v2768 = vmax.f32 %v2689, %v2752
  %v2769 = vmax.f32 %v2690, %v2753
  %v2770 = vmax.f32 %v2691, %v2754
  %v2771 = vmax.f32 %v2692, %v2755
  %v2772 = vmax.f32 %v2693, %v2756
  %v2773 = vmax.f32 %v2694, %v2757
  %v2774 = vmax.f32 %v2695, %v2758
  %v2775 = vmax.f32 %v2696, %v2759
  %v2776 = vmul.f32 %v2468, %v749
  %v2777 = vmul.f32 %v2469, %v753
  %v2778 = vmul.f32 %v2470, %v757
  %v2779 = vmul.f32 %v2471, %v761
  %v2780 = vmul.f32 %v2472, %v749
  %v2781 = vmul.f32 %v2473, %v753
  %v2782 = vmul.f32 %v2474, %v757
  %v2783 = vmul.f32 %v2475, %v761
  %v2784 = vsub.f32 1.0, %v742
  %v2785 = vmul.f32 %v2784, 1e+30
  %v2787 = vlaneseq
  %v2788 = vshrl.u32 %v2787, 7
  %v2789 = vsub.s32 0, %v2788
  %v2790 = vrot.slane %v2785, %v2789
  %v2791 = vlaneseq
  %v2792 = vshrl.u32 %v2791, 7
  %v2793 = vsub.s32 1, %v2792
  %v2794 = vrot.slane %v2785, %v2793
  %v2795 = vlaneseq
  %v2796 = vshrl.u32 %v2795, 7
  %v2797 = vsub.s32 2, %v2796
  %v2798 = vrot.slane %v2785, %v2797
  %v2799 = vlaneseq
  %v2800 = vshrl.u32 %v2799, 7
  %v2801 = vsub.s32 3, %v2800
  %v2802 = vrot.slane %v2785, %v2801
  %v2807 = vsub.f32 %v2776, %v2790
  %v2808 = vsub.f32 %v2777, %v2794
  %v2809 = vsub.f32 %v2778, %v2798
  %v2810 = vsub.f32 %v2779, %v2802
  %v2811 = vsub.f32 %v2780, %v2790
  %v2812 = vsub.f32 %v2781, %v2794
  %v2813 = vsub.f32 %v2782, %v2798
  %v2814 = vsub.f32 %v2783, %v2802
  %v2815 = vadd.f32 %v2760, %v2776
  %v2816 = vadd.f32 %v2761, %v2777
  %v2817 = vadd.f32 %v2762, %v2778
  %v2818 = vadd.f32 %v2763, %v2779
  %v2819 = vadd.f32 %v2764, %v2780
  %v2820 = vadd.f32 %v2765, %v2781
  %v2821 = vadd.f32 %v2766, %v2782
  %v2822 = vadd.f32 %v2767, %v2783
  %v2823 = vmax.f32 %v2768, %v2807
  %v2824 = vmax.f32 %v2769, %v2808
  %v2825 = vmax.f32 %v2770, %v2809
  %v2826 = vmax.f32 %v2771, %v2810
  %v2827 = vmax.f32 %v2772, %v2811
  %v2828 = vmax.f32 %v2773, %v2812
  %v2829 = vmax.f32 %v2774, %v2813
  %v2830 = vmax.f32 %v2775, %v2814
  %2831 = vrot.lane.b32.xlu0 %v2468, 127
  %v2832 = vpop.permute.xlu0 %2831
  %2833 = vrot.lane.b32.xlu0 %v2472, 127
  %v2834 = vpop.permute.xlu0 %2833
  %2835 = vrot.lane.b32.xlu0 %v2469, 127
  %v2836 = vpop.permute.xlu0 %2835
  %2837 = vrot.lane.b32.xlu0 %v2473, 127
  %v2838 = vpop.permute.xlu0 %2837
  %2839 = vrot.lane.b32.xlu0 %v2470, 127
  %v2840 = vpop.permute.xlu0 %2839
  %2841 = vrot.lane.b32.xlu0 %v2474, 127
  %v2842 = vpop.permute.xlu0 %2841
  %2843 = vrot.lane.b32.xlu0 %v2471, 127
  %v2844 = vpop.permute.xlu0 %2843
  %2845 = vrot.lane.b32.xlu0 %v2475, 127
  %v2846 = vpop.permute.xlu0 %2845
  %v2847 = vsel %vm881, %v2840, %v2844
  %v2848 = vsel %vm881, %v2842, %v2846
  %v2849 = vsel %vm881, %v2836, %v2840
  %v2850 = vsel %vm881, %v2838, %v2842
  %v2851 = vsel %vm881, %v2832, %v2836
  %v2852 = vsel %vm881, %v2834, %v2838
  %v2853 = vsel %vm881, %v2844, %v2832
  %v2854 = vsel %vm881, %v2846, %v2834
  %v2855 = vmul.f32 %v2851, %v911
  %v2856 = vmul.f32 %v2849, %v915
  %v2857 = vmul.f32 %v2847, %v919
  %v2858 = vmul.f32 %v2853, %v923
  %v2859 = vmul.f32 %v2852, %v911
  %v2860 = vmul.f32 %v2850, %v915
  %v2861 = vmul.f32 %v2848, %v919
  %v2862 = vmul.f32 %v2854, %v923
  %v2863 = vsub.f32 1.0, %v831
  %v2864 = vmul.f32 %v2863, 1e+30
  %v2866 = vlaneseq
  %v2867 = vshrl.u32 %v2866, 7
  %v2868 = vsub.s32 0, %v2867
  %v2869 = vrot.slane %v2864, %v2868
  %v2870 = vlaneseq
  %v2871 = vshrl.u32 %v2870, 7
  %v2872 = vsub.s32 1, %v2871
  %v2873 = vrot.slane %v2864, %v2872
  %v2874 = vlaneseq
  %v2875 = vshrl.u32 %v2874, 7
  %v2876 = vsub.s32 2, %v2875
  %v2877 = vrot.slane %v2864, %v2876
  %v2878 = vlaneseq
  %v2879 = vshrl.u32 %v2878, 7
  %v2880 = vsub.s32 3, %v2879
  %v2881 = vrot.slane %v2864, %v2880
  %v2886 = vsub.f32 %v2855, %v2869
  %v2887 = vsub.f32 %v2856, %v2873
  %v2888 = vsub.f32 %v2857, %v2877
  %v2889 = vsub.f32 %v2858, %v2881
  %v2890 = vsub.f32 %v2859, %v2869
  %v2891 = vsub.f32 %v2860, %v2873
  %v2892 = vsub.f32 %v2861, %v2877
  %v2893 = vsub.f32 %v2862, %v2881
  %v2894 = vadd.f32 %v2815, %v2855
  %v2895 = vadd.f32 %v2816, %v2856
  %v2896 = vadd.f32 %v2817, %v2857
  %v2897 = vadd.f32 %v2818, %v2858
  %v2898 = vadd.f32 %v2819, %v2859
  %v2899 = vadd.f32 %v2820, %v2860
  %v2900 = vadd.f32 %v2821, %v2861
  %v2901 = vadd.f32 %v2822, %v2862
  %v2902 = vmax.f32 %v2823, %v2886
  %v2903 = vmax.f32 %v2824, %v2887
  %v2904 = vmax.f32 %v2825, %v2888
  %v2905 = vmax.f32 %v2826, %v2889
  %v2906 = vmax.f32 %v2827, %v2890
  %v2907 = vmax.f32 %v2828, %v2891
  %v2908 = vmax.f32 %v2829, %v2892
  %v2909 = vmax.f32 %v2830, %v2893
  %2910 = vrot.lane.b32.xlu0 %v2468, 113
  %v2911 = vpop.permute.xlu0 %2910
  %2912 = vrot.lane.b32.xlu0 %v2472, 113
  %v2913 = vpop.permute.xlu0 %2912
  %2914 = vrot.lane.b32.xlu0 %v2469, 113
  %v2915 = vpop.permute.xlu0 %2914
  %2916 = vrot.lane.b32.xlu0 %v2473, 113
  %v2917 = vpop.permute.xlu0 %2916
  %2918 = vrot.lane.b32.xlu0 %v2470, 113
  %v2919 = vpop.permute.xlu0 %2918
  %2920 = vrot.lane.b32.xlu0 %v2474, 113
  %v2921 = vpop.permute.xlu0 %2920
  %2922 = vrot.lane.b32.xlu0 %v2471, 113
  %v2923 = vpop.permute.xlu0 %2922
  %2924 = vrot.lane.b32.xlu0 %v2475, 113
  %v2925 = vpop.permute.xlu0 %2924
  %v2926 = vsel %vm1043, %v2919, %v2923
  %v2927 = vsel %vm1043, %v2921, %v2925
  %v2928 = vsel %vm1043, %v2915, %v2919
  %v2929 = vsel %vm1043, %v2917, %v2921
  %v2930 = vsel %vm1043, %v2911, %v2915
  %v2931 = vsel %vm1043, %v2913, %v2917
  %v2932 = vsel %vm1043, %v2923, %v2911
  %v2933 = vsel %vm1043, %v2925, %v2913
  %v2934 = vmul.f32 %v2930, %v1073
  %v2935 = vmul.f32 %v2928, %v1077
  %v2936 = vmul.f32 %v2926, %v1081
  %v2937 = vmul.f32 %v2932, %v1085
  %v2938 = vmul.f32 %v2931, %v1073
  %v2939 = vmul.f32 %v2929, %v1077
  %v2940 = vmul.f32 %v2927, %v1081
  %v2941 = vmul.f32 %v2933, %v1085
  %v2942 = vsub.f32 1.0, %v993
  %v2943 = vmul.f32 %v2942, 1e+30
  %v2945 = vlaneseq
  %v2946 = vshrl.u32 %v2945, 7
  %v2947 = vsub.s32 0, %v2946
  %v2948 = vrot.slane %v2943, %v2947
  %v2949 = vlaneseq
  %v2950 = vshrl.u32 %v2949, 7
  %v2951 = vsub.s32 1, %v2950
  %v2952 = vrot.slane %v2943, %v2951
  %v2953 = vlaneseq
  %v2954 = vshrl.u32 %v2953, 7
  %v2955 = vsub.s32 2, %v2954
  %v2956 = vrot.slane %v2943, %v2955
  %v2957 = vlaneseq
  %v2958 = vshrl.u32 %v2957, 7
  %v2959 = vsub.s32 3, %v2958
  %v2960 = vrot.slane %v2943, %v2959
  %v2965 = vsub.f32 %v2934, %v2948
  %v2966 = vsub.f32 %v2935, %v2952
  %v2967 = vsub.f32 %v2936, %v2956
  %v2968 = vsub.f32 %v2937, %v2960
  %v2969 = vsub.f32 %v2938, %v2948
  %v2970 = vsub.f32 %v2939, %v2952
  %v2971 = vsub.f32 %v2940, %v2956
  %v2972 = vsub.f32 %v2941, %v2960
  %v2973 = vadd.f32 %v2894, %v2934
  %v2974 = vadd.f32 %v2895, %v2935
  %v2975 = vadd.f32 %v2896, %v2936
  %v2976 = vadd.f32 %v2897, %v2937
  %v2977 = vadd.f32 %v2898, %v2938
  %v2978 = vadd.f32 %v2899, %v2939
  %v2979 = vadd.f32 %v2900, %v2940
  %v2980 = vadd.f32 %v2901, %v2941
  %v2981 = vmax.f32 %v2902, %v2965
  %v2982 = vmax.f32 %v2903, %v2966
  %v2983 = vmax.f32 %v2904, %v2967
  %v2984 = vmax.f32 %v2905, %v2968
  %v2985 = vmax.f32 %v2906, %v2969
  %v2986 = vmax.f32 %v2907, %v2970
  %v2987 = vmax.f32 %v2908, %v2971
  %v2988 = vmax.f32 %v2909, %v2972
  %2989 = vrot.lane.b32.xlu0 %v2468, 112
  %v2990 = vpop.permute.xlu0 %2989
  %2991 = vrot.lane.b32.xlu0 %v2472, 112
  %v2992 = vpop.permute.xlu0 %2991
  %2993 = vrot.lane.b32.xlu0 %v2469, 112
  %v2994 = vpop.permute.xlu0 %2993
  %2995 = vrot.lane.b32.xlu0 %v2473, 112
  %v2996 = vpop.permute.xlu0 %2995
  %2997 = vrot.lane.b32.xlu0 %v2470, 112
  %v2998 = vpop.permute.xlu0 %2997
  %2999 = vrot.lane.b32.xlu0 %v2474, 112
  %v3000 = vpop.permute.xlu0 %2999
  %3001 = vrot.lane.b32.xlu0 %v2471, 112
  %v3002 = vpop.permute.xlu0 %3001
  %3003 = vrot.lane.b32.xlu0 %v2475, 112
  %v3004 = vpop.permute.xlu0 %3003
  %v3005 = vsel %vm1205, %v2998, %v3002
  %v3006 = vsel %vm1205, %v3000, %v3004
  %v3007 = vsel %vm1205, %v2994, %v2998
  %v3008 = vsel %vm1205, %v2996, %v3000
  %v3009 = vsel %vm1205, %v2990, %v2994
  %v3010 = vsel %vm1205, %v2992, %v2996
  %v3011 = vsel %vm1205, %v3002, %v2990
  %v3012 = vsel %vm1205, %v3004, %v2992
  %v3013 = vmul.f32 %v3009, %v1235
  %v3014 = vmul.f32 %v3007, %v1239
  %v3015 = vmul.f32 %v3005, %v1243
  %v3016 = vmul.f32 %v3011, %v1247
  %v3017 = vmul.f32 %v3010, %v1235
  %v3018 = vmul.f32 %v3008, %v1239
  %v3019 = vmul.f32 %v3006, %v1243
  %v3020 = vmul.f32 %v3012, %v1247
  %v3021 = vsub.f32 1.0, %v1155
  %v3022 = vmul.f32 %v3021, 1e+30
  %v3024 = vlaneseq
  %v3025 = vshrl.u32 %v3024, 7
  %v3026 = vsub.s32 0, %v3025
  %v3027 = vrot.slane %v3022, %v3026
  %v3028 = vlaneseq
  %v3029 = vshrl.u32 %v3028, 7
  %v3030 = vsub.s32 1, %v3029
  %v3031 = vrot.slane %v3022, %v3030
  %v3032 = vlaneseq
  %v3033 = vshrl.u32 %v3032, 7
  %v3034 = vsub.s32 2, %v3033
  %v3035 = vrot.slane %v3022, %v3034
  %v3036 = vlaneseq
  %v3037 = vshrl.u32 %v3036, 7
  %v3038 = vsub.s32 3, %v3037
  %v3039 = vrot.slane %v3022, %v3038
  %v3044 = vsub.f32 %v3013, %v3027
  %v3045 = vsub.f32 %v3014, %v3031
  %v3046 = vsub.f32 %v3015, %v3035
  %v3047 = vsub.f32 %v3016, %v3039
  %v3048 = vsub.f32 %v3017, %v3027
  %v3049 = vsub.f32 %v3018, %v3031
  %v3050 = vsub.f32 %v3019, %v3035
  %v3051 = vsub.f32 %v3020, %v3039
  %v3052 = vadd.f32 %v2973, %v3013
  %v3053 = vadd.f32 %v2974, %v3014
  %v3054 = vadd.f32 %v2975, %v3015
  %v3055 = vadd.f32 %v2976, %v3016
  %v3056 = vadd.f32 %v2977, %v3017
  %v3057 = vadd.f32 %v2978, %v3018
  %v3058 = vadd.f32 %v2979, %v3019
  %v3059 = vadd.f32 %v2980, %v3020
  %v3060 = vmax.f32 %v2981, %v3044
  %v3061 = vmax.f32 %v2982, %v3045
  %v3062 = vmax.f32 %v2983, %v3046
  %v3063 = vmax.f32 %v2984, %v3047
  %v3064 = vmax.f32 %v2985, %v3048
  %v3065 = vmax.f32 %v2986, %v3049
  %v3066 = vmax.f32 %v2987, %v3050
  %v3067 = vmax.f32 %v2988, %v3051
  %3068 = vrot.lane.b32.xlu0 %v2468, 111
  %v3069 = vpop.permute.xlu0 %3068
  %3070 = vrot.lane.b32.xlu0 %v2472, 111
  %v3071 = vpop.permute.xlu0 %3070
  %3072 = vrot.lane.b32.xlu0 %v2469, 111
  %v3073 = vpop.permute.xlu0 %3072
  %3074 = vrot.lane.b32.xlu0 %v2473, 111
  %v3075 = vpop.permute.xlu0 %3074
  %3076 = vrot.lane.b32.xlu0 %v2470, 111
  %v3077 = vpop.permute.xlu0 %3076
  %3078 = vrot.lane.b32.xlu0 %v2474, 111
  %v3079 = vpop.permute.xlu0 %3078
  %3080 = vrot.lane.b32.xlu0 %v2471, 111
  %v3081 = vpop.permute.xlu0 %3080
  %3082 = vrot.lane.b32.xlu0 %v2475, 111
  %v3083 = vpop.permute.xlu0 %3082
  %v3084 = vsel %vm1367, %v3077, %v3081
  %v3085 = vsel %vm1367, %v3079, %v3083
  %v3086 = vsel %vm1367, %v3073, %v3077
  %v3087 = vsel %vm1367, %v3075, %v3079
  %v3088 = vsel %vm1367, %v3069, %v3073
  %v3089 = vsel %vm1367, %v3071, %v3075
  %v3090 = vsel %vm1367, %v3081, %v3069
  %v3091 = vsel %vm1367, %v3083, %v3071
  %v3092 = vmul.f32 %v3088, %v1397
  %v3093 = vmul.f32 %v3086, %v1401
  %v3094 = vmul.f32 %v3084, %v1405
  %v3095 = vmul.f32 %v3090, %v1409
  %v3096 = vmul.f32 %v3089, %v1397
  %v3097 = vmul.f32 %v3087, %v1401
  %v3098 = vmul.f32 %v3085, %v1405
  %v3099 = vmul.f32 %v3091, %v1409
  %v3100 = vsub.f32 1.0, %v1317
  %v3101 = vmul.f32 %v3100, 1e+30
  %v3103 = vlaneseq
  %v3104 = vshrl.u32 %v3103, 7
  %v3105 = vsub.s32 0, %v3104
  %v3106 = vrot.slane %v3101, %v3105
  %v3107 = vlaneseq
  %v3108 = vshrl.u32 %v3107, 7
  %v3109 = vsub.s32 1, %v3108
  %v3110 = vrot.slane %v3101, %v3109
  %v3111 = vlaneseq
  %v3112 = vshrl.u32 %v3111, 7
  %v3113 = vsub.s32 2, %v3112
  %v3114 = vrot.slane %v3101, %v3113
  %v3115 = vlaneseq
  %v3116 = vshrl.u32 %v3115, 7
  %v3117 = vsub.s32 3, %v3116
  %v3118 = vrot.slane %v3101, %v3117
  %v3123 = vsub.f32 %v3092, %v3106
  %v3124 = vsub.f32 %v3093, %v3110
  %v3125 = vsub.f32 %v3094, %v3114
  %v3126 = vsub.f32 %v3095, %v3118
  %v3127 = vsub.f32 %v3096, %v3106
  %v3128 = vsub.f32 %v3097, %v3110
  %v3129 = vsub.f32 %v3098, %v3114
  %v3130 = vsub.f32 %v3099, %v3118
  %v3131 = vadd.f32 %v3052, %v3092
  %v3132 = vadd.f32 %v3053, %v3093
  %v3133 = vadd.f32 %v3054, %v3094
  %v3134 = vadd.f32 %v3055, %v3095
  %v3135 = vadd.f32 %v3056, %v3096
  %v3136 = vadd.f32 %v3057, %v3097
  %v3137 = vadd.f32 %v3058, %v3098
  %v3138 = vadd.f32 %v3059, %v3099
  %v3139 = vmax.f32 %v3060, %v3123
  %v3140 = vmax.f32 %v3061, %v3124
  %v3141 = vmax.f32 %v3062, %v3125
  %v3142 = vmax.f32 %v3063, %v3126
  %v3143 = vmax.f32 %v3064, %v3127
  %v3144 = vmax.f32 %v3065, %v3128
  %v3145 = vmax.f32 %v3066, %v3129
  %v3146 = vmax.f32 %v3067, %v3130
  %v3147 = vmul.f32 %v3131, 0.11111111
  %v3148 = vmul.f32 %v3132, 0.11111111
  %v3149 = vmul.f32 %v3133, 0.11111111
  %v3150 = vmul.f32 %v3134, 0.11111111
  %v3151 = vmul.f32 %v3135, 0.11111111
  %v3152 = vmul.f32 %v3136, 0.11111111
  %v3153 = vmul.f32 %v3137, 0.11111111
  %v3154 = vmul.f32 %v3138, 0.11111111
  %v3155 = vld [vmem:[%s17] sm:$0xff]
  %v3156 = vld [vmem:[%s17 + $0x8] sm:$0xff]
  %v3157 = vld [vmem:[%s17 + $0x10] sm:$0xff]
  %v3158 = vld [vmem:[%s17 + $0x18] sm:$0xff]
  %v3159 = vld [vmem:[%s17 + $0x20] sm:$0xff]
  %v3160 = vld [vmem:[%s17 + $0x28] sm:$0xff]
  %v3161 = vld [vmem:[%s17 + $0x30] sm:$0xff]
  %v3162 = vld [vmem:[%s17 + $0x38] sm:$0xff]
  %v3163 = vld [vmem:[%s17 + $0x40] sm:$0xff]
  %v3164 = vld [vmem:[%s17 + $0x48] sm:$0xff]
  %v3165 = vld [vmem:[%s17 + $0x50] sm:$0xff]
  %v3166 = vld [vmem:[%s17 + $0x58] sm:$0xff]
  %v3167 = vld [vmem:[%s17 + $0x60] sm:$0xff]
  %v3168 = vld [vmem:[%s17 + $0x68] sm:$0xff]
  %v3169 = vld [vmem:[%s17 + $0x70] sm:$0xff]
  %v3170 = vld [vmem:[%s17 + $0x78] sm:$0xff]
  %v3171 = vld [vmem:[%s17 + $0x80] sm:$0xff]
  %v3172 = vld [vmem:[%s17 + $0x88] sm:$0xff]
  %v3173 = vld [vmem:[%s17 + $0x90] sm:$0xff]
  %v3174 = vld [vmem:[%s17 + $0x98] sm:$0xff]
  %v3175 = vld [vmem:[%s17 + $0xa0] sm:$0xff]
  %v3176 = vld [vmem:[%s17 + $0xa8] sm:$0xff]
  %v3177 = vld [vmem:[%s17 + $0xb0] sm:$0xff]
  %v3178 = vld [vmem:[%s17 + $0xb8] sm:$0xff]
  %v3179 = vld [vmem:[%s17 + $0xc0] sm:$0xff]
  %v3180 = vld [vmem:[%s17 + $0xc8] sm:$0xff]
  %v3181 = vld [vmem:[%s17 + $0xd0] sm:$0xff]
  %v3182 = vld [vmem:[%s17 + $0xd8] sm:$0xff]
  %v3183 = vld [vmem:[%s17 + $0xe0] sm:$0xff]
  %v3184 = vld [vmem:[%s17 + $0xe8] sm:$0xff]
  %v3185 = vld [vmem:[%s17 + $0xf0] sm:$0xff]
  %v3186 = vld [vmem:[%s17 + $0xf8] sm:$0xff]
  %v3187 = vld [vmem:[%s17 + $0x100] sm:$0xff]
  %v3188 = vld [vmem:[%s17 + $0x108] sm:$0xff]
  %v3189 = vld [vmem:[%s17 + $0x110] sm:$0xff]
  %v3190 = vld [vmem:[%s17 + $0x118] sm:$0xff]
  %v3191 = vld [vmem:[%s17 + $0x120] sm:$0xff]
  %v3192 = vld [vmem:[%s17 + $0x128] sm:$0xff]
  %v3193 = vld [vmem:[%s17 + $0x130] sm:$0xff]
  %v3194 = vld [vmem:[%s17 + $0x138] sm:$0xff]
  %v3195 = vld [vmem:[%s17 + $0x140] sm:$0xff]
  %v3196 = vld [vmem:[%s17 + $0x148] sm:$0xff]
  %v3197 = vld [vmem:[%s17 + $0x150] sm:$0xff]
  %v3198 = vld [vmem:[%s17 + $0x158] sm:$0xff]
  %v3199 = vld [vmem:[%s17 + $0x160] sm:$0xff]
  %v3200 = vld [vmem:[%s17 + $0x168] sm:$0xff]
  %v3201 = vld [vmem:[%s17 + $0x170] sm:$0xff]
  %v3202 = vld [vmem:[%s17 + $0x178] sm:$0xff]
  %v3203 = vld [vmem:[%s17 + $0x180] sm:$0xff]
  %v3204 = vld [vmem:[%s17 + $0x188] sm:$0xff]
  %v3205 = vld [vmem:[%s17 + $0x190] sm:$0xff]
  %v3206 = vld [vmem:[%s17 + $0x198] sm:$0xff]
  %v3207 = vld [vmem:[%s17 + $0x1a0] sm:$0xff]
  %v3208 = vld [vmem:[%s17 + $0x1a8] sm:$0xff]
  %v3209 = vld [vmem:[%s17 + $0x1b0] sm:$0xff]
  %v3210 = vld [vmem:[%s17 + $0x1b8] sm:$0xff]
  %v3211 = vld [vmem:[%s17 + $0x1c0] sm:$0xff]
  %v3212 = vld [vmem:[%s17 + $0x1c8] sm:$0xff]
  %v3213 = vld [vmem:[%s17 + $0x1d0] sm:$0xff]
  %v3214 = vld [vmem:[%s17 + $0x1d8] sm:$0xff]
  %v3215 = vld [vmem:[%s17 + $0x1e0] sm:$0xff]
  %v3216 = vld [vmem:[%s17 + $0x1e8] sm:$0xff]
  %v3217 = vld [vmem:[%s17 + $0x1f0] sm:$0xff]
  %v3218 = vld [vmem:[%s17 + $0x1f8] sm:$0xff]
  %3219 = vmatprep.subr.mxu0 0.0
  %3220 = vmatpush1.msra.mxu0 %v3170
  %3221 = vmatprep.subr.mxu0 0.0
  %3222 = vmatpush1.msra.mxu0 %v3169
  %3223 = vmatprep.subr.mxu0 0.0
  %3224 = vmatpush1.msra.mxu0 %v3168
  %3225 = vmatprep.subr.mxu0 0.0
  %3226 = vmatpush1.msra.mxu0 %v3167
  %3227 = vmatprep.subr.mxu0 0.0
  %3228 = vmatpush1.msra.mxu0 %v3166
  %3229 = vmatprep.subr.mxu0 0.0
  %3230 = vmatpush1.msra.mxu0 %v3165
  %3231 = vmatprep.subr.mxu0 0.0
  %3232 = vmatpush1.msra.mxu0 %v3164
  %3233 = vmatprep.subr.mxu0 0.0
  %3234 = vmatpush1.msra.mxu0 %v3163
  %3235 = vmatprep.subr.mxu0 0.0
  %3236 = vmatpush1.msra.mxu0 %v3162
  %3237 = vmatprep.subr.mxu0 0.0
  %3238 = vmatpush1.msra.mxu0 %v3161
  %3239 = vmatprep.subr.mxu0 0.0
  %3240 = vmatpush1.msra.mxu0 %v3160
  %3241 = vmatprep.subr.mxu0 0.0
  %3242 = vmatpush1.msra.mxu0 %v3159
  %3243 = vmatprep.subr.mxu0 0.0
  %3244 = vmatpush1.msra.mxu0 %v3158
  %3245 = vmatprep.subr.mxu0 0.0
  %3246 = vmatpush1.msra.mxu0 %v3157
  %3247 = vmatprep.subr.mxu0 0.0
  %3248 = vmatpush1.msra.mxu0 %v3156
  %3249 = vmatprep.subr.mxu0 0.0
  %3250 = vmatpush1.msra.mxu0 %v3155
  %3251 = vmatprep.subr.mxu0 0.0
  %3252 = vmatpush2.msra.mxu0 %v3186
  %3253 = vmatprep.subr.mxu0 0.0
  %3254 = vmatpush2.msra.mxu0 %v3185
  %3255 = vmatprep.subr.mxu0 0.0
  %3256 = vmatpush2.msra.mxu0 %v3184
  %3257 = vmatprep.subr.mxu0 0.0
  %3258 = vmatpush2.msra.mxu0 %v3183
  %3259 = vmatprep.subr.mxu0 0.0
  %3260 = vmatpush2.msra.mxu0 %v3182
  %3261 = vmatprep.subr.mxu0 0.0
  %3262 = vmatpush2.msra.mxu0 %v3181
  %3263 = vmatprep.subr.mxu0 0.0
  %3264 = vmatpush2.msra.mxu0 %v3180
  %3265 = vmatprep.subr.mxu0 0.0
  %3266 = vmatpush2.msra.mxu0 %v3179
  %3267 = vmatprep.subr.mxu0 0.0
  %3268 = vmatpush2.msra.mxu0 %v3178
  %3269 = vmatprep.subr.mxu0 0.0
  %3270 = vmatpush2.msra.mxu0 %v3177
  %3271 = vmatprep.subr.mxu0 0.0
  %3272 = vmatpush2.msra.mxu0 %v3176
  %3273 = vmatprep.subr.mxu0 0.0
  %3274 = vmatpush2.msra.mxu0 %v3175
  %3275 = vmatprep.subr.mxu0 0.0
  %3276 = vmatpush2.msra.mxu0 %v3174
  %3277 = vmatprep.subr.mxu0 0.0
  %3278 = vmatpush2.msra.mxu0 %v3173
  %3279 = vmatprep.subr.mxu0 0.0
  %3280 = vmatpush2.msra.mxu0 %v3172
  %3281 = vmatprep.subr.mxu0 0.0
  %3282 = vmatpush2.msra.mxu0 %v3171
  %3283 = vmatprep.mubr.f32.mxu0 %v3140
  %3284 = vmatmul.mubr.f32.gmra.mxu0 %v3139
  %v3285 = vpop.f32.mrf.mxu0
  %v3286 = vadd.f32 0.0, %v3285
  %v3287 = vpop.f32.mrf.mxu0
  %3288 = vmatprep.mubr.f32.mxu0 %v3144
  %3289 = vmatmul.mubr.f32.gmra.mxu0 %v3143
  %v3290 = vpop.f32.mrf.mxu0
  %v3291 = vadd.f32 0.0, %v3290
  %v3292 = vpop.f32.mrf.mxu0
  %3293 = vmatprep.mubr.f32.mxu0 %v3148
  %3294 = vmatmul.mubr.f32.gmra.mxu0 %v3147
  %v3295 = vpop.f32.mrf.mxu0
  %v3296 = vadd.f32 0.0, %v3295
  %v3297 = vpop.f32.mrf.mxu0
  %3298 = vmatprep.mubr.f32.mxu0 %v3152
  %3299 = vmatmul.mubr.f32.gmra.mxu0 %v3151
  %v3300 = vpop.f32.mrf.mxu0
  %v3301 = vadd.f32 0.0, %v3300
  %v3302 = vpop.f32.mrf.mxu0
  %3303 = vdwg.mxu0
  %3304 = vmatprep.subr.mxu0 0.0
  %3305 = vmatpush1.msra.mxu0 %v3202
  %3306 = vmatprep.subr.mxu0 0.0
  %3307 = vmatpush1.msra.mxu0 %v3201
  %3308 = vmatprep.subr.mxu0 0.0
  %3309 = vmatpush1.msra.mxu0 %v3200
  %3310 = vmatprep.subr.mxu0 0.0
  %3311 = vmatpush1.msra.mxu0 %v3199
  %3312 = vmatprep.subr.mxu0 0.0
  %3313 = vmatpush1.msra.mxu0 %v3198
  %3314 = vmatprep.subr.mxu0 0.0
  %3315 = vmatpush1.msra.mxu0 %v3197
  %3316 = vmatprep.subr.mxu0 0.0
  %3317 = vmatpush1.msra.mxu0 %v3196
  %3318 = vmatprep.subr.mxu0 0.0
  %3319 = vmatpush1.msra.mxu0 %v3195
  %3320 = vmatprep.subr.mxu0 0.0
  %3321 = vmatpush1.msra.mxu0 %v3194
  %3322 = vmatprep.subr.mxu0 0.0
  %3323 = vmatpush1.msra.mxu0 %v3193
  %3324 = vmatprep.subr.mxu0 0.0
  %3325 = vmatpush1.msra.mxu0 %v3192
  %3326 = vmatprep.subr.mxu0 0.0
  %3327 = vmatpush1.msra.mxu0 %v3191
  %3328 = vmatprep.subr.mxu0 0.0
  %3329 = vmatpush1.msra.mxu0 %v3190
  %3330 = vmatprep.subr.mxu0 0.0
  %3331 = vmatpush1.msra.mxu0 %v3189
  %3332 = vmatprep.subr.mxu0 0.0
  %3333 = vmatpush1.msra.mxu0 %v3188
  %3334 = vmatprep.subr.mxu0 0.0
  %3335 = vmatpush1.msra.mxu0 %v3187
  %3336 = vmatprep.subr.mxu0 0.0
  %3337 = vmatpush2.msra.mxu0 %v3218
  %3338 = vmatprep.subr.mxu0 0.0
  %3339 = vmatpush2.msra.mxu0 %v3217
  %3340 = vmatprep.subr.mxu0 0.0
  %3341 = vmatpush2.msra.mxu0 %v3216
  %3342 = vmatprep.subr.mxu0 0.0
  %3343 = vmatpush2.msra.mxu0 %v3215
  %3344 = vmatprep.subr.mxu0 0.0
  %3345 = vmatpush2.msra.mxu0 %v3214
  %3346 = vmatprep.subr.mxu0 0.0
  %3347 = vmatpush2.msra.mxu0 %v3213
  %3348 = vmatprep.subr.mxu0 0.0
  %3349 = vmatpush2.msra.mxu0 %v3212
  %3350 = vmatprep.subr.mxu0 0.0
  %3351 = vmatpush2.msra.mxu0 %v3211
  %3352 = vmatprep.subr.mxu0 0.0
  %3353 = vmatpush2.msra.mxu0 %v3210
  %3354 = vmatprep.subr.mxu0 0.0
  %3355 = vmatpush2.msra.mxu0 %v3209
  %3356 = vmatprep.subr.mxu0 0.0
  %3357 = vmatpush2.msra.mxu0 %v3208
  %3358 = vmatprep.subr.mxu0 0.0
  %3359 = vmatpush2.msra.mxu0 %v3207
  %3360 = vmatprep.subr.mxu0 0.0
  %3361 = vmatpush2.msra.mxu0 %v3206
  %3362 = vmatprep.subr.mxu0 0.0
  %3363 = vmatpush2.msra.mxu0 %v3205
  %3364 = vmatprep.subr.mxu0 0.0
  %3365 = vmatpush2.msra.mxu0 %v3204
  %3366 = vmatprep.subr.mxu0 0.0
  %3367 = vmatpush2.msra.mxu0 %v3203
  %3368 = vmatprep.mubr.f32.mxu0 %v3142
  %3369 = vmatmul.mubr.f32.gmra.mxu0 %v3141
  %v3370 = vpop.f32.mrf.mxu0
  %v3371 = vadd.f32 %v3286, %v3370
  %v3372 = vpop.f32.mrf.mxu0
  %3373 = vmatprep.mubr.f32.mxu0 %v3146
  %3374 = vmatmul.mubr.f32.gmra.mxu0 %v3145
  %v3375 = vpop.f32.mrf.mxu0
  %v3376 = vadd.f32 %v3291, %v3375
  %v3377 = vpop.f32.mrf.mxu0
  %3378 = vmatprep.mubr.f32.mxu0 %v3150
  %3379 = vmatmul.mubr.f32.gmra.mxu0 %v3149
  %v3380 = vpop.f32.mrf.mxu0
  %v3381 = vadd.f32 %v3296, %v3380
  %v3382 = vpop.f32.mrf.mxu0
  %3383 = vmatprep.mubr.f32.mxu0 %v3154
  %3384 = vmatmul.mubr.f32.gmra.mxu0 %v3153
  %v3385 = vpop.f32.mrf.mxu0
  %v3386 = vadd.f32 %v3301, %v3385
  %v3387 = vpop.f32.mrf.mxu0
  %3388 = vdwg.mxu0
  %v3389 = vld [vmem:[%s3] sm:$0xff]
  %v3390 = vld [vmem:[%s3 + $0x8] sm:$0xff]
  %v3391 = vld [vmem:[%s13 + $0x30] sm:$0xff]
  %v3392 = vld [vmem:[%s13 + $0x38] sm:$0xff]
  %3394 = vset.pattern.permute.xlu0 0
  %3395 = vperm.xlu0 %3394, %v3391
  %v3396 = vpop.permute.xlu0 %3395
  %3399 = vset.pattern.permute.xlu0 0
  %3400 = vperm.xlu0 %3399, %v3392
  %v3401 = vpop.permute.xlu0 %3400
  %vm3403 = vcmask 261120
  %v3405 = vsel %vm3403, %v3389, 0
  %v3408 = vsel %vm3403, %v3390, 0
  %3410 = vmatprep.subr.mxu0 0.0
  %3411 = vmatpush1.msra.mxu0 0.0
  %3412 = vmatprep.subr.mxu0 0.0
  %3413 = vmatpush1.msra.mxu0 0.0
  %3414 = vmatprep.subr.mxu0 0.0
  %3415 = vmatpush1.msra.mxu0 0.0
  %3416 = vmatprep.subr.mxu0 0.0
  %3417 = vmatpush1.msra.mxu0 0.0
  %3418 = vmatprep.subr.mxu0 0.0
  %3419 = vmatpush1.msra.mxu0 0.0
  %3420 = vmatprep.subr.mxu0 0.0
  %3421 = vmatpush1.msra.mxu0 0.0
  %3422 = vmatprep.subr.mxu0 0.0
  %3423 = vmatpush1.msra.mxu0 0.0
  %3424 = vmatprep.subr.mxu0 0.0
  %3425 = vmatpush1.msra.mxu0 0.0
  %3426 = vmatprep.subr.mxu0 0.0
  %3427 = vmatpush1.msra.mxu0 0.0
  %3428 = vmatprep.subr.mxu0 0.0
  %3429 = vmatpush1.msra.mxu0 0.0
  %3430 = vmatprep.subr.mxu0 0.0
  %3431 = vmatpush1.msra.mxu0 0.0
  %3432 = vmatprep.subr.mxu0 0.0
  %3433 = vmatpush1.msra.mxu0 0.0
  %3434 = vmatprep.subr.mxu0 0.0
  %3435 = vmatpush1.msra.mxu0 %v3386
  %3436 = vmatprep.subr.mxu0 0.0
  %3437 = vmatpush1.msra.mxu0 %v3381
  %3438 = vmatprep.subr.mxu0 0.0
  %3439 = vmatpush1.msra.mxu0 %v3376
  %3440 = vmatprep.subr.mxu0 0.0
  %3441 = vmatpush1.msra.mxu0 %v3371
  %3442 = vmatprep.subr.mxu0 0.0
  %3443 = vmatpush2.msra.mxu0 0.0
  %3444 = vmatprep.subr.mxu0 0.0
  %3445 = vmatpush2.msra.mxu0 0.0
  %3446 = vmatprep.subr.mxu0 0.0
  %3447 = vmatpush2.msra.mxu0 0.0
  %3448 = vmatprep.subr.mxu0 0.0
  %3449 = vmatpush2.msra.mxu0 0.0
  %3450 = vmatprep.subr.mxu0 0.0
  %3451 = vmatpush2.msra.mxu0 0.0
  %3452 = vmatprep.subr.mxu0 0.0
  %3453 = vmatpush2.msra.mxu0 0.0
  %3454 = vmatprep.subr.mxu0 0.0
  %3455 = vmatpush2.msra.mxu0 0.0
  %3456 = vmatprep.subr.mxu0 0.0
  %3457 = vmatpush2.msra.mxu0 0.0
  %3458 = vmatprep.subr.mxu0 0.0
  %3459 = vmatpush2.msra.mxu0 0.0
  %3460 = vmatprep.subr.mxu0 0.0
  %3461 = vmatpush2.msra.mxu0 0.0
  %3462 = vmatprep.subr.mxu0 0.0
  %3463 = vmatpush2.msra.mxu0 0.0
  %3464 = vmatprep.subr.mxu0 0.0
  %3465 = vmatpush2.msra.mxu0 0.0
  %3466 = vmatprep.subr.mxu0 0.0
  %3467 = vmatpush2.msra.mxu0 0.0
  %3468 = vmatprep.subr.mxu0 0.0
  %3469 = vmatpush2.msra.mxu0 0.0
  %3470 = vmatprep.subr.mxu0 0.0
  %3471 = vmatpush2.msra.mxu0 0.0
  %3472 = vmatprep.subr.mxu0 0.0
  %3473 = vmatpush2.msra.mxu0 0.0
  %3474 = vmatprep.mubr.f32.mxu0 0.0
  %3475 = vmatmul.mubr.f32.gmra.mxu0 %v3405
  %v3476 = vpop.f32.mrf.mxu0
  %v3477 = vadd.f32 %v3396, %v3476
  %v3478 = vpop.f32.mrf.mxu0
  %3479 = vmatprep.mubr.f32.mxu0 0.0
  %3480 = vmatmul.mubr.f32.gmra.mxu0 %v3408
  %v3481 = vpop.f32.mrf.mxu0
  %v3482 = vadd.f32 %v3401, %v3481
  %v3483 = vpop.f32.mrf.mxu0
  %3484 = vdwg.mxu0
  %vm3485 = vcmp.ge.f32.partialorder %v3477, 0.0
  %vm3486 = vcmp.ge.f32.partialorder %v3482, 0.0
  %v3487 = vmul.f32 %v3477, 0.1
  %v3488 = vmul.f32 %v3482, 0.1
  %v3489 = vsel %vm3485, %v3477, %v3487
  %v3490 = vsel %vm3486, %v3482, %v3488
  %v3491 = vld [vmem:[%s7] sm:$0xff]
  %v3492 = vld [vmem:[%s7 + $0x8] sm:$0xff]
  %v3493 = vld [vmem:[%s13 + $0x70] sm:$0xff]
  %v3494 = vld [vmem:[%s13 + $0x78] sm:$0xff]
  %3496 = vset.pattern.permute.xlu0 0
  %3497 = vperm.xlu0 %3496, %v3493
  %v3498 = vpop.permute.xlu0 %3497
  %3501 = vset.pattern.permute.xlu0 0
  %3502 = vperm.xlu0 %3501, %v3494
  %v3503 = vpop.permute.xlu0 %3502
  %v3506 = vsel %vm1510, %v3491, 0
  %v3509 = vsel %vm1510, %v3492, 0
  %3511 = vmatprep.subr.mxu0 0.0
  %3512 = vmatpush1.msra.mxu0 0.0
  %3513 = vmatprep.subr.mxu0 0.0
  %3514 = vmatpush1.msra.mxu0 0.0
  %3515 = vmatprep.subr.mxu0 0.0
  %3516 = vmatpush1.msra.mxu0 0.0
  %3517 = vmatprep.subr.mxu0 0.0
  %3518 = vmatpush1.msra.mxu0 0.0
  %3519 = vmatprep.subr.mxu0 0.0
  %3520 = vmatpush1.msra.mxu0 0.0
  %3521 = vmatprep.subr.mxu0 0.0
  %3522 = vmatpush1.msra.mxu0 0.0
  %3523 = vmatprep.subr.mxu0 0.0
  %3524 = vmatpush1.msra.mxu0 0.0
  %3525 = vmatprep.subr.mxu0 0.0
  %3526 = vmatpush1.msra.mxu0 0.0
  %3527 = vmatprep.subr.mxu0 0.0
  %3528 = vmatpush1.msra.mxu0 0.0
  %3529 = vmatprep.subr.mxu0 0.0
  %3530 = vmatpush1.msra.mxu0 0.0
  %3531 = vmatprep.subr.mxu0 0.0
  %3532 = vmatpush1.msra.mxu0 0.0
  %3533 = vmatprep.subr.mxu0 0.0
  %3534 = vmatpush1.msra.mxu0 0.0
  %3535 = vmatprep.subr.mxu0 0.0
  %3536 = vmatpush1.msra.mxu0 0.0
  %3537 = vmatprep.subr.mxu0 0.0
  %3538 = vmatpush1.msra.mxu0 0.0
  %3539 = vmatprep.subr.mxu0 0.0
  %3540 = vmatpush1.msra.mxu0 %v3490
  %3541 = vmatprep.subr.mxu0 0.0
  %3542 = vmatpush1.msra.mxu0 %v3489
  %3543 = vmatprep.subr.mxu0 0.0
  %3544 = vmatpush2.msra.mxu0 0.0
  %3545 = vmatprep.subr.mxu0 0.0
  %3546 = vmatpush2.msra.mxu0 0.0
  %3547 = vmatprep.subr.mxu0 0.0
  %3548 = vmatpush2.msra.mxu0 0.0
  %3549 = vmatprep.subr.mxu0 0.0
  %3550 = vmatpush2.msra.mxu0 0.0
  %3551 = vmatprep.subr.mxu0 0.0
  %3552 = vmatpush2.msra.mxu0 0.0
  %3553 = vmatprep.subr.mxu0 0.0
  %3554 = vmatpush2.msra.mxu0 0.0
  %3555 = vmatprep.subr.mxu0 0.0
  %3556 = vmatpush2.msra.mxu0 0.0
  %3557 = vmatprep.subr.mxu0 0.0
  %3558 = vmatpush2.msra.mxu0 0.0
  %3559 = vmatprep.subr.mxu0 0.0
  %3560 = vmatpush2.msra.mxu0 0.0
  %3561 = vmatprep.subr.mxu0 0.0
  %3562 = vmatpush2.msra.mxu0 0.0
  %3563 = vmatprep.subr.mxu0 0.0
  %3564 = vmatpush2.msra.mxu0 0.0
  %3565 = vmatprep.subr.mxu0 0.0
  %3566 = vmatpush2.msra.mxu0 0.0
  %3567 = vmatprep.subr.mxu0 0.0
  %3568 = vmatpush2.msra.mxu0 0.0
  %3569 = vmatprep.subr.mxu0 0.0
  %3570 = vmatpush2.msra.mxu0 0.0
  %3571 = vmatprep.subr.mxu0 0.0
  %3572 = vmatpush2.msra.mxu0 0.0
  %3573 = vmatprep.subr.mxu0 0.0
  %3574 = vmatpush2.msra.mxu0 0.0
  %3575 = vmatprep.mubr.f32.mxu0 0.0
  %3576 = vmatmul.mubr.f32.gmra.mxu0 %v3506
  %v3577 = vpop.f32.mrf.mxu0
  %v3578 = vadd.f32 %v3498, %v3577
  %v3579 = vpop.f32.mrf.mxu0
  %3580 = vmatprep.mubr.f32.mxu0 0.0
  %3581 = vmatmul.mubr.f32.gmra.mxu0 %v3509
  %v3582 = vpop.f32.mrf.mxu0
  %v3583 = vadd.f32 %v3503, %v3582
  %v3584 = vpop.f32.mrf.mxu0
  %3585 = vdwg.mxu0
  %vm3586 = vcmp.ge.f32.partialorder %v3578, 0.0
  %vm3587 = vcmp.ge.f32.partialorder %v3583, 0.0
  %v3588 = vmul.f32 %v3578, 0.1
  %v3589 = vmul.f32 %v3583, 0.1
  %v3590 = vsel %vm3586, %v3578, %v3588
  %v3591 = vsel %vm3587, %v3583, %v3589
  %3592 = vrot.lane.b32.xlu0 %v3590, 9
  %v3593 = vpop.permute.xlu0 %3592
  %3594 = vrot.lane.b32.xlu0 %v3591, 9
  %v3595 = vpop.permute.xlu0 %3594
  %v3596 = vld [vmem:[%s15] sm:$0x1]
  %v3598 = vlaneseq
  %v3599 = vshrl.u32 %v3598, 7
  %v3600 = vsub.s32 0, %v3599
  %v3601 = vrot.slane %v3596, %v3600
  %v3603 = vmul.f32 %v3593, %v3601
  %v3604 = vmul.f32 %v3595, %v3601
  %v3605 = vsub.f32 1.0, %v3596
  %v3606 = vmul.f32 %v3605, 1e+30
  %v3608 = vlaneseq
  %v3609 = vshrl.u32 %v3608, 7
  %v3610 = vsub.s32 0, %v3609
  %v3611 = vrot.slane %v3606, %v3610
  %v3613 = vsub.f32 %v3603, %v3611
  %v3614 = vsub.f32 %v3604, %v3611
  %3615 = vrot.lane.b32.xlu0 %v3590, 8
  %v3616 = vpop.permute.xlu0 %3615
  %3617 = vrot.lane.b32.xlu0 %v3591, 8
  %v3618 = vpop.permute.xlu0 %3617
  %s3619 = scalar_lea.vmem %s15, 1
  %v3620 = vld [vmem:[%s3619] sm:$0x1]
  %v3622 = vlaneseq
  %v3623 = vshrl.u32 %v3622, 7
  %v3624 = vsub.s32 0, %v3623
  %v3625 = vrot.slane %v3620, %v3624
  %v3627 = vmul.f32 %v3616, %v3625
  %v3628 = vmul.f32 %v3618, %v3625
  %v3629 = vsub.f32 1.0, %v3620
  %v3630 = vmul.f32 %v3629, 1e+30
  %v3632 = vlaneseq
  %v3633 = vshrl.u32 %v3632, 7
  %v3634 = vsub.s32 0, %v3633
  %v3635 = vrot.slane %v3630, %v3634
  %v3637 = vsub.f32 %v3627, %v3635
  %v3638 = vsub.f32 %v3628, %v3635
  %v3639 = vadd.f32 %v3603, %v3627
  %v3640 = vadd.f32 %v3604, %v3628
  %v3641 = vmax.f32 %v3613, %v3637
  %v3642 = vmax.f32 %v3614, %v3638
  %3643 = vrot.lane.b32.xlu0 %v3590, 7
  %v3644 = vpop.permute.xlu0 %3643
  %3645 = vrot.lane.b32.xlu0 %v3591, 7
  %v3646 = vpop.permute.xlu0 %3645
  %s3647 = scalar_lea.vmem %s15, 2
  %v3648 = vld [vmem:[%s3647] sm:$0x1]
  %v3650 = vlaneseq
  %v3651 = vshrl.u32 %v3650, 7
  %v3652 = vsub.s32 0, %v3651
  %v3653 = vrot.slane %v3648, %v3652
  %v3655 = vmul.f32 %v3644, %v3653
  %v3656 = vmul.f32 %v3646, %v3653
  %v3657 = vsub.f32 1.0, %v3648
  %v3658 = vmul.f32 %v3657, 1e+30
  %v3660 = vlaneseq
  %v3661 = vshrl.u32 %v3660, 7
  %v3662 = vsub.s32 0, %v3661
  %v3663 = vrot.slane %v3658, %v3662
  %v3665 = vsub.f32 %v3655, %v3663
  %v3666 = vsub.f32 %v3656, %v3663
  %v3667 = vadd.f32 %v3639, %v3655
  %v3668 = vadd.f32 %v3640, %v3656
  %v3669 = vmax.f32 %v3641, %v3665
  %v3670 = vmax.f32 %v3642, %v3666
  %3671 = vrot.lane.b32.xlu0 %v3590, 1
  %v3672 = vpop.permute.xlu0 %3671
  %3673 = vrot.lane.b32.xlu0 %v3591, 1
  %v3674 = vpop.permute.xlu0 %3673
  %s3675 = scalar_lea.vmem %s15, 3
  %v3676 = vld [vmem:[%s3675] sm:$0x1]
  %v3678 = vlaneseq
  %v3679 = vshrl.u32 %v3678, 7
  %v3680 = vsub.s32 0, %v3679
  %v3681 = vrot.slane %v3676, %v3680
  %v3683 = vmul.f32 %v3672, %v3681
  %v3684 = vmul.f32 %v3674, %v3681
  %v3685 = vsub.f32 1.0, %v3676
  %v3686 = vmul.f32 %v3685, 1e+30
  %v3688 = vlaneseq
  %v3689 = vshrl.u32 %v3688, 7
  %v3690 = vsub.s32 0, %v3689
  %v3691 = vrot.slane %v3686, %v3690
  %v3693 = vsub.f32 %v3683, %v3691
  %v3694 = vsub.f32 %v3684, %v3691
  %v3695 = vadd.f32 %v3667, %v3683
  %v3696 = vadd.f32 %v3668, %v3684
  %v3697 = vmax.f32 %v3669, %v3693
  %v3698 = vmax.f32 %v3670, %v3694
  %s3699 = scalar_lea.vmem %s15, 4
  %v3700 = vld [vmem:[%s3699] sm:$0x1]
  %v3702 = vlaneseq
  %v3703 = vshrl.u32 %v3702, 7
  %v3704 = vsub.s32 0, %v3703
  %v3705 = vrot.slane %v3700, %v3704
  %v3707 = vmul.f32 %v3590, %v3705
  %v3708 = vmul.f32 %v3591, %v3705
  %v3709 = vsub.f32 1.0, %v3700
  %v3710 = vmul.f32 %v3709, 1e+30
  %v3712 = vlaneseq
  %v3713 = vshrl.u32 %v3712, 7
  %v3714 = vsub.s32 0, %v3713
  %v3715 = vrot.slane %v3710, %v3714
  %v3717 = vsub.f32 %v3707, %v3715
  %v3718 = vsub.f32 %v3708, %v3715
  %v3719 = vadd.f32 %v3695, %v3707
  %v3720 = vadd.f32 %v3696, %v3708
  %v3721 = vmax.f32 %v3697, %v3717
  %v3722 = vmax.f32 %v3698, %v3718
  %3723 = vrot.lane.b32.xlu0 %v3590, 127
  %v3724 = vpop.permute.xlu0 %3723
  %3725 = vrot.lane.b32.xlu0 %v3591, 127
  %v3726 = vpop.permute.xlu0 %3725
  %s3727 = scalar_lea.vmem %s15, 5
  %v3728 = vld [vmem:[%s3727] sm:$0x1]
  %v3730 = vlaneseq
  %v3731 = vshrl.u32 %v3730, 7
  %v3732 = vsub.s32 0, %v3731
  %v3733 = vrot.slane %v3728, %v3732
  %v3735 = vmul.f32 %v3724, %v3733
  %v3736 = vmul.f32 %v3726, %v3733
  %v3737 = vsub.f32 1.0, %v3728
  %v3738 = vmul.f32 %v3737, 1e+30
  %v3740 = vlaneseq
  %v3741 = vshrl.u32 %v3740, 7
  %v3742 = vsub.s32 0, %v3741
  %v3743 = vrot.slane %v3738, %v3742
  %v3745 = vsub.f32 %v3735, %v3743
  %v3746 = vsub.f32 %v3736, %v3743
  %v3747 = vadd.f32 %v3719, %v3735
  %v3748 = vadd.f32 %v3720, %v3736
  %v3749 = vmax.f32 %v3721, %v3745
  %v3750 = vmax.f32 %v3722, %v3746
  %3751 = vrot.lane.b32.xlu0 %v3590, 121
  %v3752 = vpop.permute.xlu0 %3751
  %3753 = vrot.lane.b32.xlu0 %v3591, 121
  %v3754 = vpop.permute.xlu0 %3753
  %s3755 = scalar_lea.vmem %s15, 6
  %v3756 = vld [vmem:[%s3755] sm:$0x1]
  %v3758 = vlaneseq
  %v3759 = vshrl.u32 %v3758, 7
  %v3760 = vsub.s32 0, %v3759
  %v3761 = vrot.slane %v3756, %v3760
  %v3763 = vmul.f32 %v3752, %v3761
  %v3764 = vmul.f32 %v3754, %v3761
  %v3765 = vsub.f32 1.0, %v3756
  %v3766 = vmul.f32 %v3765, 1e+30
  %v3768 = vlaneseq
  %v3769 = vshrl.u32 %v3768, 7
  %v3770 = vsub.s32 0, %v3769
  %v3771 = vrot.slane %v3766, %v3770
  %v3773 = vsub.f32 %v3763, %v3771
  %v3774 = vsub.f32 %v3764, %v3771
  %v3775 = vadd.f32 %v3747, %v3763
  %v3776 = vadd.f32 %v3748, %v3764
  %v3777 = vmax.f32 %v3749, %v3773
  %v3778 = vmax.f32 %v3750, %v3774
  %3779 = vrot.lane.b32.xlu0 %v3590, 120
  %v3780 = vpop.permute.xlu0 %3779
  %3781 = vrot.lane.b32.xlu0 %v3591, 120
  %v3782 = vpop.permute.xlu0 %3781
  %s3783 = scalar_lea.vmem %s15, 7
  %v3784 = vld [vmem:[%s3783] sm:$0x1]
  %v3786 = vlaneseq
  %v3787 = vshrl.u32 %v3786, 7
  %v3788 = vsub.s32 0, %v3787
  %v3789 = vrot.slane %v3784, %v3788
  %v3791 = vmul.f32 %v3780, %v3789
  %v3792 = vmul.f32 %v3782, %v3789
  %v3793 = vsub.f32 1.0, %v3784
  %v3794 = vmul.f32 %v3793, 1e+30
  %v3796 = vlaneseq
  %v3797 = vshrl.u32 %v3796, 7
  %v3798 = vsub.s32 0, %v3797
  %v3799 = vrot.slane %v3794, %v3798
  %v3801 = vsub.f32 %v3791, %v3799
  %v3802 = vsub.f32 %v3792, %v3799
  %v3803 = vadd.f32 %v3775, %v3791
  %v3804 = vadd.f32 %v3776, %v3792
  %v3805 = vmax.f32 %v3777, %v3801
  %v3806 = vmax.f32 %v3778, %v3802
  %3807 = vrot.lane.b32.xlu0 %v3590, 119
  %v3808 = vpop.permute.xlu0 %3807
  %3809 = vrot.lane.b32.xlu0 %v3591, 119
  %v3810 = vpop.permute.xlu0 %3809
  %s3811 = scalar_lea.vmem %s15, 8
  %v3812 = vld [vmem:[%s3811] sm:$0x1]
  %v3814 = vlaneseq
  %v3815 = vshrl.u32 %v3814, 7
  %v3816 = vsub.s32 0, %v3815
  %v3817 = vrot.slane %v3812, %v3816
  %v3819 = vmul.f32 %v3808, %v3817
  %v3820 = vmul.f32 %v3810, %v3817
  %v3821 = vsub.f32 1.0, %v3812
  %v3822 = vmul.f32 %v3821, 1e+30
  %v3824 = vlaneseq
  %v3825 = vshrl.u32 %v3824, 7
  %v3826 = vsub.s32 0, %v3825
  %v3827 = vrot.slane %v3822, %v3826
  %v3829 = vsub.f32 %v3819, %v3827
  %v3830 = vsub.f32 %v3820, %v3827
  %v3831 = vadd.f32 %v3803, %v3819
  %v3832 = vadd.f32 %v3804, %v3820
  %v3833 = vmax.f32 %v3805, %v3829
  %v3834 = vmax.f32 %v3806, %v3830
  %v3835 = vmul.f32 %v3831, 0.11111111
  %v3836 = vmul.f32 %v3832, 0.11111111
  %v3837 = vld [vmem:[%s18] sm:$0xff]
  %v3838 = vld [vmem:[%s18 + $0x8] sm:$0xff]
  %v3839 = vld [vmem:[%s18 + $0x10] sm:$0xff]
  %v3840 = vld [vmem:[%s18 + $0x18] sm:$0xff]
  %v3841 = vld [vmem:[%s18 + $0x20] sm:$0xff]
  %v3842 = vld [vmem:[%s18 + $0x28] sm:$0xff]
  %v3843 = vld [vmem:[%s18 + $0x30] sm:$0xff]
  %v3844 = vld [vmem:[%s18 + $0x38] sm:$0xff]
  %v3845 = vld [vmem:[%s18 + $0x40] sm:$0xff]
  %v3846 = vld [vmem:[%s18 + $0x48] sm:$0xff]
  %v3847 = vld [vmem:[%s18 + $0x50] sm:$0xff]
  %v3848 = vld [vmem:[%s18 + $0x58] sm:$0xff]
  %v3849 = vld [vmem:[%s18 + $0x60] sm:$0xff]
  %v3850 = vld [vmem:[%s18 + $0x68] sm:$0xff]
  %v3851 = vld [vmem:[%s18 + $0x70] sm:$0xff]
  %v3852 = vld [vmem:[%s18 + $0x78] sm:$0xff]
  %3853 = vmatprep.subr.mxu0 0.0
  %3854 = vmatpush1.msra.mxu0 %v3852
  %3855 = vmatprep.subr.mxu0 0.0
  %3856 = vmatpush1.msra.mxu0 %v3851
  %3857 = vmatprep.subr.mxu0 0.0
  %3858 = vmatpush1.msra.mxu0 %v3850
  %3859 = vmatprep.subr.mxu0 0.0
  %3860 = vmatpush1.msra.mxu0 %v3849
  %3861 = vmatprep.subr.mxu0 0.0
  %3862 = vmatpush1.msra.mxu0 %v3848
  %3863 = vmatprep.subr.mxu0 0.0
  %3864 = vmatpush1.msra.mxu0 %v3847
  %3865 = vmatprep.subr.mxu0 0.0
  %3866 = vmatpush1.msra.mxu0 %v3846
  %3867 = vmatprep.subr.mxu0 0.0
  %3868 = vmatpush1.msra.mxu0 %v3845
  %3869 = vmatprep.subr.mxu0 0.0
  %3870 = vmatpush1.msra.mxu0 %v3844
  %3871 = vmatprep.subr.mxu0 0.0
  %3872 = vmatpush1.msra.mxu0 %v3843
  %3873 = vmatprep.subr.mxu0 0.0
  %3874 = vmatpush1.msra.mxu0 %v3842
  %3875 = vmatprep.subr.mxu0 0.0
  %3876 = vmatpush1.msra.mxu0 %v3841
  %3877 = vmatprep.subr.mxu0 0.0
  %3878 = vmatpush1.msra.mxu0 %v3840
  %3879 = vmatprep.subr.mxu0 0.0
  %3880 = vmatpush1.msra.mxu0 %v3839
  %3881 = vmatprep.subr.mxu0 0.0
  %3882 = vmatpush1.msra.mxu0 %v3838
  %3883 = vmatprep.subr.mxu0 0.0
  %3884 = vmatpush1.msra.mxu0 %v3837
  %3885 = vmatprep.subr.mxu0 0.0
  %3886 = vmatpush2.msra.mxu0 0.0
  %3887 = vmatprep.subr.mxu0 0.0
  %3888 = vmatpush2.msra.mxu0 0.0
  %3889 = vmatprep.subr.mxu0 0.0
  %3890 = vmatpush2.msra.mxu0 0.0
  %3891 = vmatprep.subr.mxu0 0.0
  %3892 = vmatpush2.msra.mxu0 0.0
  %3893 = vmatprep.subr.mxu0 0.0
  %3894 = vmatpush2.msra.mxu0 0.0
  %3895 = vmatprep.subr.mxu0 0.0
  %3896 = vmatpush2.msra.mxu0 0.0
  %3897 = vmatprep.subr.mxu0 0.0
  %3898 = vmatpush2.msra.mxu0 0.0
  %3899 = vmatprep.subr.mxu0 0.0
  %3900 = vmatpush2.msra.mxu0 0.0
  %3901 = vmatprep.subr.mxu0 0.0
  %3902 = vmatpush2.msra.mxu0 0.0
  %3903 = vmatprep.subr.mxu0 0.0
  %3904 = vmatpush2.msra.mxu0 0.0
  %3905 = vmatprep.subr.mxu0 0.0
  %3906 = vmatpush2.msra.mxu0 0.0
  %3907 = vmatprep.subr.mxu0 0.0
  %3908 = vmatpush2.msra.mxu0 0.0
  %3909 = vmatprep.subr.mxu0 0.0
  %3910 = vmatpush2.msra.mxu0 0.0
  %3911 = vmatprep.subr.mxu0 0.0
  %3912 = vmatpush2.msra.mxu0 0.0
  %3913 = vmatprep.subr.mxu0 0.0
  %3914 = vmatpush2.msra.mxu0 0.0
  %3915 = vmatprep.subr.mxu0 0.0
  %3916 = vmatpush2.msra.mxu0 0.0
  %3917 = vmatprep.mubr.f32.mxu0 0.0
  %3918 = vmatmul.mubr.f32.gmra.mxu0 %v3833
  %v3919 = vpop.f32.mrf.mxu0
  %v3920 = vadd.f32 0.0, %v3919
  %v3921 = vpop.f32.mrf.mxu0
  %3922 = vmatprep.mubr.f32.mxu0 0.0
  %3923 = vmatmul.mubr.f32.gmra.mxu0 %v3834
  %v3924 = vpop.f32.mrf.mxu0
  %v3925 = vadd.f32 0.0, %v3924
  %v3926 = vpop.f32.mrf.mxu0
  %3927 = vmatprep.mubr.f32.mxu0 0.0
  %3928 = vmatmul.mubr.f32.gmra.mxu0 %v3835
  %v3929 = vpop.f32.mrf.mxu0
  %v3930 = vadd.f32 0.0, %v3929
  %v3931 = vpop.f32.mrf.mxu0
  %3932 = vmatprep.mubr.f32.mxu0 0.0
  %3933 = vmatmul.mubr.f32.gmra.mxu0 %v3836
  %v3934 = vpop.f32.mrf.mxu0
  %v3935 = vadd.f32 0.0, %v3934
  %v3936 = vpop.f32.mrf.mxu0
  %3937 = vdwg.mxu0
  %v3938 = vld [vmem:[%s16] sm:$0xff]
  %v3939 = vld [vmem:[%s16 + $0x8] sm:$0xff]
  %v3940 = vld [vmem:[%s16 + $0x10] sm:$0xff]
  %v3941 = vld [vmem:[%s16 + $0x18] sm:$0xff]
  %v3943 = vsel %vm3403, %v3920, 0
  %v3946 = vsel %vm3403, %v3925, 0
  %v3949 = vsel %vm3403, %v3930, 0
  %v3952 = vsel %vm3403, %v3935, 0
  %3954 = vmatprep.subr.mxu0 0.0
  %3955 = vmatpush1.msra.mxu0 0.0
  %3956 = vmatprep.subr.mxu0 0.0
  %3957 = vmatpush1.msra.mxu0 0.0
  %3958 = vmatprep.subr.mxu0 0.0
  %3959 = vmatpush1.msra.mxu0 0.0
  %3960 = vmatprep.subr.mxu0 0.0
  %3961 = vmatpush1.msra.mxu0 0.0
  %3962 = vmatprep.subr.mxu0 0.0
  %3963 = vmatpush1.msra.mxu0 0.0
  %3964 = vmatprep.subr.mxu0 0.0
  %3965 = vmatpush1.msra.mxu0 0.0
  %3966 = vmatprep.subr.mxu0 0.0
  %3967 = vmatpush1.msra.mxu0 0.0
  %3968 = vmatprep.subr.mxu0 0.0
  %3969 = vmatpush1.msra.mxu0 0.0
  %3970 = vmatprep.subr.mxu0 0.0
  %3971 = vmatpush1.msra.mxu0 0.0
  %3972 = vmatprep.subr.mxu0 0.0
  %3973 = vmatpush1.msra.mxu0 0.0
  %3974 = vmatprep.subr.mxu0 0.0
  %3975 = vmatpush1.msra.mxu0 0.0
  %3976 = vmatprep.subr.mxu0 0.0
  %3977 = vmatpush1.msra.mxu0 0.0
  %3978 = vmatprep.subr.mxu0 0.0
  %3979 = vmatpush1.msra.mxu0 %v3941
  %3980 = vmatprep.subr.mxu0 0.0
  %3981 = vmatpush1.msra.mxu0 %v3940
  %3982 = vmatprep.subr.mxu0 0.0
  %3983 = vmatpush1.msra.mxu0 %v3939
  %3984 = vmatprep.subr.mxu0 0.0
  %3985 = vmatpush1.msra.mxu0 %v3938
  %3986 = vmatprep.subr.mxu0 0.0
  %3987 = vmatpush2.msra.mxu0 0.0
  %3988 = vmatprep.subr.mxu0 0.0
  %3989 = vmatpush2.msra.mxu0 0.0
  %3990 = vmatprep.subr.mxu0 0.0
  %3991 = vmatpush2.msra.mxu0 0.0
  %3992 = vmatprep.subr.mxu0 0.0
  %3993 = vmatpush2.msra.mxu0 0.0
  %3994 = vmatprep.subr.mxu0 0.0
  %3995 = vmatpush2.msra.mxu0 0.0
  %3996 = vmatprep.subr.mxu0 0.0
  %3997 = vmatpush2.msra.mxu0 0.0
  %3998 = vmatprep.subr.mxu0 0.0
  %3999 = vmatpush2.msra.mxu0 0.0
  %4000 = vmatprep.subr.mxu0 0.0
  %4001 = vmatpush2.msra.mxu0 0.0
  %4002 = vmatprep.subr.mxu0 0.0
  %4003 = vmatpush2.msra.mxu0 0.0
  %4004 = vmatprep.subr.mxu0 0.0
  %4005 = vmatpush2.msra.mxu0 0.0
  %4006 = vmatprep.subr.mxu0 0.0
  %4007 = vmatpush2.msra.mxu0 0.0
  %4008 = vmatprep.subr.mxu0 0.0
  %4009 = vmatpush2.msra.mxu0 0.0
  %4010 = vmatprep.subr.mxu0 0.0
  %4011 = vmatpush2.msra.mxu0 0.0
  %4012 = vmatprep.subr.mxu0 0.0
  %4013 = vmatpush2.msra.mxu0 0.0
  %4014 = vmatprep.subr.mxu0 0.0
  %4015 = vmatpush2.msra.mxu0 0.0
  %4016 = vmatprep.subr.mxu0 0.0
  %4017 = vmatpush2.msra.mxu0 0.0
  %4018 = vmatprep.mubr.f32.mxu0 0.0
  %4019 = vmatmul.mubr.f32.gmra.mxu0 %v3943
  %v4020 = vpop.f32.mrf.mxu0
  %v4021 = vadd.f32 0.0, %v4020
  %v4022 = vpop.f32.mrf.mxu0
  %4023 = vmatprep.mubr.f32.mxu0 0.0
  %4024 = vmatmul.mubr.f32.gmra.mxu0 %v3946
  %v4025 = vpop.f32.mrf.mxu0
  %v4026 = vadd.f32 0.0, %v4025
  %v4027 = vpop.f32.mrf.mxu0
  %4028 = vmatprep.mubr.f32.mxu0 0.0
  %4029 = vmatmul.mubr.f32.gmra.mxu0 %v3949
  %v4030 = vpop.f32.mrf.mxu0
  %v4031 = vadd.f32 0.0, %v4030
  %v4032 = vpop.f32.mrf.mxu0
  %4033 = vmatprep.mubr.f32.mxu0 0.0
  %4034 = vmatmul.mubr.f32.gmra.mxu0 %v3952
  %v4035 = vpop.f32.mrf.mxu0
  %v4036 = vadd.f32 0.0, %v4035
  %v4037 = vpop.f32.mrf.mxu0
  %4038 = vdwg.mxu0
  %s4039 = scalar_lea.vmem %s16, 32
  %v4040 = vld [vmem:[%s4039] sm:$0xff]
  %v4041 = vld [vmem:[%s4039 + $0x8] sm:$0xff]
  %v4042 = vld [vmem:[%s4039 + $0x10] sm:$0xff]
  %v4043 = vld [vmem:[%s4039 + $0x18] sm:$0xff]
  %4044 = vmatprep.subr.mxu0 0.0
  %4045 = vmatpush1.msra.mxu0 0.0
  %4046 = vmatprep.subr.mxu0 0.0
  %4047 = vmatpush1.msra.mxu0 0.0
  %4048 = vmatprep.subr.mxu0 0.0
  %4049 = vmatpush1.msra.mxu0 0.0
  %4050 = vmatprep.subr.mxu0 0.0
  %4051 = vmatpush1.msra.mxu0 0.0
  %4052 = vmatprep.subr.mxu0 0.0
  %4053 = vmatpush1.msra.mxu0 0.0
  %4054 = vmatprep.subr.mxu0 0.0
  %4055 = vmatpush1.msra.mxu0 0.0
  %4056 = vmatprep.subr.mxu0 0.0
  %4057 = vmatpush1.msra.mxu0 0.0
  %4058 = vmatprep.subr.mxu0 0.0
  %4059 = vmatpush1.msra.mxu0 0.0
  %4060 = vmatprep.subr.mxu0 0.0
  %4061 = vmatpush1.msra.mxu0 0.0
  %4062 = vmatprep.subr.mxu0 0.0
  %4063 = vmatpush1.msra.mxu0 0.0
  %4064 = vmatprep.subr.mxu0 0.0
  %4065 = vmatpush1.msra.mxu0 0.0
  %4066 = vmatprep.subr.mxu0 0.0
  %4067 = vmatpush1.msra.mxu0 0.0
  %4068 = vmatprep.subr.mxu0 0.0
  %4069 = vmatpush1.msra.mxu0 %v4043
  %4070 = vmatprep.subr.mxu0 0.0
  %4071 = vmatpush1.msra.mxu0 %v4042
  %4072 = vmatprep.subr.mxu0 0.0
  %4073 = vmatpush1.msra.mxu0 %v4041
  %4074 = vmatprep.subr.mxu0 0.0
  %4075 = vmatpush1.msra.mxu0 %v4040
  %4076 = vmatprep.subr.mxu0 0.0
  %4077 = vmatpush2.msra.mxu0 0.0
  %4078 = vmatprep.subr.mxu0 0.0
  %4079 = vmatpush2.msra.mxu0 0.0
  %4080 = vmatprep.subr.mxu0 0.0
  %4081 = vmatpush2.msra.mxu0 0.0
  %4082 = vmatprep.subr.mxu0 0.0
  %4083 = vmatpush2.msra.mxu0 0.0
  %4084 = vmatprep.subr.mxu0 0.0
  %4085 = vmatpush2.msra.mxu0 0.0
  %4086 = vmatprep.subr.mxu0 0.0
  %4087 = vmatpush2.msra.mxu0 0.0
  %4088 = vmatprep.subr.mxu0 0.0
  %4089 = vmatpush2.msra.mxu0 0.0
  %4090 = vmatprep.subr.mxu0 0.0
  %4091 = vmatpush2.msra.mxu0 0.0
  %4092 = vmatprep.subr.mxu0 0.0
  %4093 = vmatpush2.msra.mxu0 0.0
  %4094 = vmatprep.subr.mxu0 0.0
  %4095 = vmatpush2.msra.mxu0 0.0
  %4096 = vmatprep.subr.mxu0 0.0
  %4097 = vmatpush2.msra.mxu0 0.0
  %4098 = vmatprep.subr.mxu0 0.0
  %4099 = vmatpush2.msra.mxu0 0.0
  %4100 = vmatprep.subr.mxu0 0.0
  %4101 = vmatpush2.msra.mxu0 0.0
  %4102 = vmatprep.subr.mxu0 0.0
  %4103 = vmatpush2.msra.mxu0 0.0
  %4104 = vmatprep.subr.mxu0 0.0
  %4105 = vmatpush2.msra.mxu0 0.0
  %4106 = vmatprep.subr.mxu0 0.0
  %4107 = vmatpush2.msra.mxu0 0.0
  %4108 = vmatprep.mubr.f32.mxu0 0.0
  %4109 = vmatmul.mubr.f32.gmra.mxu0 %v3943
  %v4110 = vpop.f32.mrf.mxu0
  %v4111 = vadd.f32 0.0, %v4110
  %v4112 = vpop.f32.mrf.mxu0
  %4113 = vmatprep.mubr.f32.mxu0 0.0
  %4114 = vmatmul.mubr.f32.gmra.mxu0 %v3946
  %v4115 = vpop.f32.mrf.mxu0
  %v4116 = vadd.f32 0.0, %v4115
  %v4117 = vpop.f32.mrf.mxu0
  %4118 = vmatprep.mubr.f32.mxu0 0.0
  %4119 = vmatmul.mubr.f32.gmra.mxu0 %v3949
  %v4120 = vpop.f32.mrf.mxu0
  %v4121 = vadd.f32 0.0, %v4120
  %v4122 = vpop.f32.mrf.mxu0
  %4123 = vmatprep.mubr.f32.mxu0 0.0
  %4124 = vmatmul.mubr.f32.gmra.mxu0 %v3952
  %v4125 = vpop.f32.mrf.mxu0
  %v4126 = vadd.f32 0.0, %v4125
  %v4127 = vpop.f32.mrf.mxu0
  %4128 = vdwg.mxu0
  %s4129 = scalar_lea.vmem %s16, 64
  %v4130 = vld [vmem:[%s4129] sm:$0xff]
  %v4131 = vld [vmem:[%s4129 + $0x8] sm:$0xff]
  %v4132 = vld [vmem:[%s4129 + $0x10] sm:$0xff]
  %v4133 = vld [vmem:[%s4129 + $0x18] sm:$0xff]
  %4134 = vmatprep.subr.mxu0 0.0
  %4135 = vmatpush1.msra.mxu0 0.0
  %4136 = vmatprep.subr.mxu0 0.0
  %4137 = vmatpush1.msra.mxu0 0.0
  %4138 = vmatprep.subr.mxu0 0.0
  %4139 = vmatpush1.msra.mxu0 0.0
  %4140 = vmatprep.subr.mxu0 0.0
  %4141 = vmatpush1.msra.mxu0 0.0
  %4142 = vmatprep.subr.mxu0 0.0
  %4143 = vmatpush1.msra.mxu0 0.0
  %4144 = vmatprep.subr.mxu0 0.0
  %4145 = vmatpush1.msra.mxu0 0.0
  %4146 = vmatprep.subr.mxu0 0.0
  %4147 = vmatpush1.msra.mxu0 0.0
  %4148 = vmatprep.subr.mxu0 0.0
  %4149 = vmatpush1.msra.mxu0 0.0
  %4150 = vmatprep.subr.mxu0 0.0
  %4151 = vmatpush1.msra.mxu0 0.0
  %4152 = vmatprep.subr.mxu0 0.0
  %4153 = vmatpush1.msra.mxu0 0.0
  %4154 = vmatprep.subr.mxu0 0.0
  %4155 = vmatpush1.msra.mxu0 0.0
  %4156 = vmatprep.subr.mxu0 0.0
  %4157 = vmatpush1.msra.mxu0 0.0
  %4158 = vmatprep.subr.mxu0 0.0
  %4159 = vmatpush1.msra.mxu0 %v4133
  %4160 = vmatprep.subr.mxu0 0.0
  %4161 = vmatpush1.msra.mxu0 %v4132
  %4162 = vmatprep.subr.mxu0 0.0
  %4163 = vmatpush1.msra.mxu0 %v4131
  %4164 = vmatprep.subr.mxu0 0.0
  %4165 = vmatpush1.msra.mxu0 %v4130
  %4166 = vmatprep.subr.mxu0 0.0
  %4167 = vmatpush2.msra.mxu0 0.0
  %4168 = vmatprep.subr.mxu0 0.0
  %4169 = vmatpush2.msra.mxu0 0.0
  %4170 = vmatprep.subr.mxu0 0.0
  %4171 = vmatpush2.msra.mxu0 0.0
  %4172 = vmatprep.subr.mxu0 0.0
  %4173 = vmatpush2.msra.mxu0 0.0
  %4174 = vmatprep.subr.mxu0 0.0
  %4175 = vmatpush2.msra.mxu0 0.0
  %4176 = vmatprep.subr.mxu0 0.0
  %4177 = vmatpush2.msra.mxu0 0.0
  %4178 = vmatprep.subr.mxu0 0.0
  %4179 = vmatpush2.msra.mxu0 0.0
  %4180 = vmatprep.subr.mxu0 0.0
  %4181 = vmatpush2.msra.mxu0 0.0
  %4182 = vmatprep.subr.mxu0 0.0
  %4183 = vmatpush2.msra.mxu0 0.0
  %4184 = vmatprep.subr.mxu0 0.0
  %4185 = vmatpush2.msra.mxu0 0.0
  %4186 = vmatprep.subr.mxu0 0.0
  %4187 = vmatpush2.msra.mxu0 0.0
  %4188 = vmatprep.subr.mxu0 0.0
  %4189 = vmatpush2.msra.mxu0 0.0
  %4190 = vmatprep.subr.mxu0 0.0
  %4191 = vmatpush2.msra.mxu0 0.0
  %4192 = vmatprep.subr.mxu0 0.0
  %4193 = vmatpush2.msra.mxu0 0.0
  %4194 = vmatprep.subr.mxu0 0.0
  %4195 = vmatpush2.msra.mxu0 0.0
  %4196 = vmatprep.subr.mxu0 0.0
  %4197 = vmatpush2.msra.mxu0 0.0
  %4198 = vmatprep.mubr.f32.mxu0 0.0
  %4199 = vmatmul.mubr.f32.gmra.mxu0 %v3943
  %v4200 = vpop.f32.mrf.mxu0
  %v4201 = vadd.f32 0.0, %v4200
  %v4202 = vpop.f32.mrf.mxu0
  %4203 = vmatprep.mubr.f32.mxu0 0.0
  %4204 = vmatmul.mubr.f32.gmra.mxu0 %v3946
  %v4205 = vpop.f32.mrf.mxu0
  %v4206 = vadd.f32 0.0, %v4205
  %v4207 = vpop.f32.mrf.mxu0
  %4208 = vmatprep.mubr.f32.mxu0 0.0
  %4209 = vmatmul.mubr.f32.gmra.mxu0 %v3949
  %v4210 = vpop.f32.mrf.mxu0
  %v4211 = vadd.f32 0.0, %v4210
  %v4212 = vpop.f32.mrf.mxu0
  %4213 = vmatprep.mubr.f32.mxu0 0.0
  %4214 = vmatmul.mubr.f32.gmra.mxu0 %v3952
  %v4215 = vpop.f32.mrf.mxu0
  %v4216 = vadd.f32 0.0, %v4215
  %v4217 = vpop.f32.mrf.mxu0
  %4218 = vdwg.mxu0
  %s4219 = scalar_lea.vmem %s16, 96
  %v4220 = vld [vmem:[%s4219] sm:$0xff]
  %v4221 = vld [vmem:[%s4219 + $0x8] sm:$0xff]
  %v4222 = vld [vmem:[%s4219 + $0x10] sm:$0xff]
  %v4223 = vld [vmem:[%s4219 + $0x18] sm:$0xff]
  %4224 = vmatprep.subr.mxu0 0.0
  %4225 = vmatpush1.msra.mxu0 0.0
  %4226 = vmatprep.subr.mxu0 0.0
  %4227 = vmatpush1.msra.mxu0 0.0
  %4228 = vmatprep.subr.mxu0 0.0
  %4229 = vmatpush1.msra.mxu0 0.0
  %4230 = vmatprep.subr.mxu0 0.0
  %4231 = vmatpush1.msra.mxu0 0.0
  %4232 = vmatprep.subr.mxu0 0.0
  %4233 = vmatpush1.msra.mxu0 0.0
  %4234 = vmatprep.subr.mxu0 0.0
  %4235 = vmatpush1.msra.mxu0 0.0
  %4236 = vmatprep.subr.mxu0 0.0
  %4237 = vmatpush1.msra.mxu0 0.0
  %4238 = vmatprep.subr.mxu0 0.0
  %4239 = vmatpush1.msra.mxu0 0.0
  %4240 = vmatprep.subr.mxu0 0.0
  %4241 = vmatpush1.msra.mxu0 0.0
  %4242 = vmatprep.subr.mxu0 0.0
  %4243 = vmatpush1.msra.mxu0 0.0
  %4244 = vmatprep.subr.mxu0 0.0
  %4245 = vmatpush1.msra.mxu0 0.0
  %4246 = vmatprep.subr.mxu0 0.0
  %4247 = vmatpush1.msra.mxu0 0.0
  %4248 = vmatprep.subr.mxu0 0.0
  %4249 = vmatpush1.msra.mxu0 %v4223
  %4250 = vmatprep.subr.mxu0 0.0
  %4251 = vmatpush1.msra.mxu0 %v4222
  %4252 = vmatprep.subr.mxu0 0.0
  %4253 = vmatpush1.msra.mxu0 %v4221
  %4254 = vmatprep.subr.mxu0 0.0
  %4255 = vmatpush1.msra.mxu0 %v4220
  %4256 = vmatprep.subr.mxu0 0.0
  %4257 = vmatpush2.msra.mxu0 0.0
  %4258 = vmatprep.subr.mxu0 0.0
  %4259 = vmatpush2.msra.mxu0 0.0
  %4260 = vmatprep.subr.mxu0 0.0
  %4261 = vmatpush2.msra.mxu0 0.0
  %4262 = vmatprep.subr.mxu0 0.0
  %4263 = vmatpush2.msra.mxu0 0.0
  %4264 = vmatprep.subr.mxu0 0.0
  %4265 = vmatpush2.msra.mxu0 0.0
  %4266 = vmatprep.subr.mxu0 0.0
  %4267 = vmatpush2.msra.mxu0 0.0
  %4268 = vmatprep.subr.mxu0 0.0
  %4269 = vmatpush2.msra.mxu0 0.0
  %4270 = vmatprep.subr.mxu0 0.0
  %4271 = vmatpush2.msra.mxu0 0.0
  %4272 = vmatprep.subr.mxu0 0.0
  %4273 = vmatpush2.msra.mxu0 0.0
  %4274 = vmatprep.subr.mxu0 0.0
  %4275 = vmatpush2.msra.mxu0 0.0
  %4276 = vmatprep.subr.mxu0 0.0
  %4277 = vmatpush2.msra.mxu0 0.0
  %4278 = vmatprep.subr.mxu0 0.0
  %4279 = vmatpush2.msra.mxu0 0.0
  %4280 = vmatprep.subr.mxu0 0.0
  %4281 = vmatpush2.msra.mxu0 0.0
  %4282 = vmatprep.subr.mxu0 0.0
  %4283 = vmatpush2.msra.mxu0 0.0
  %4284 = vmatprep.subr.mxu0 0.0
  %4285 = vmatpush2.msra.mxu0 0.0
  %4286 = vmatprep.subr.mxu0 0.0
  %4287 = vmatpush2.msra.mxu0 0.0
  %4288 = vmatprep.mubr.f32.mxu0 0.0
  %4289 = vmatmul.mubr.f32.gmra.mxu0 %v3943
  %v4290 = vpop.f32.mrf.mxu0
  %v4291 = vadd.f32 0.0, %v4290
  %v4292 = vpop.f32.mrf.mxu0
  %4293 = vmatprep.mubr.f32.mxu0 0.0
  %4294 = vmatmul.mubr.f32.gmra.mxu0 %v3946
  %v4295 = vpop.f32.mrf.mxu0
  %v4296 = vadd.f32 0.0, %v4295
  %v4297 = vpop.f32.mrf.mxu0
  %4298 = vmatprep.mubr.f32.mxu0 0.0
  %4299 = vmatmul.mubr.f32.gmra.mxu0 %v3949
  %v4300 = vpop.f32.mrf.mxu0
  %v4301 = vadd.f32 0.0, %v4300
  %v4302 = vpop.f32.mrf.mxu0
  %4303 = vmatprep.mubr.f32.mxu0 0.0
  %4304 = vmatmul.mubr.f32.gmra.mxu0 %v3952
  %v4305 = vpop.f32.mrf.mxu0
  %v4306 = vadd.f32 0.0, %v4305
  %v4307 = vpop.f32.mrf.mxu0
  %4308 = vdwg.mxu0
  %s4309 = scalar_lea.vmem %s16, 128
  %v4310 = vld [vmem:[%s4309] sm:$0xff]
  %v4311 = vld [vmem:[%s4309 + $0x8] sm:$0xff]
  %v4312 = vld [vmem:[%s4309 + $0x10] sm:$0xff]
  %v4313 = vld [vmem:[%s4309 + $0x18] sm:$0xff]
  %4314 = vmatprep.subr.mxu0 0.0
  %4315 = vmatpush1.msra.mxu0 0.0
  %4316 = vmatprep.subr.mxu0 0.0
  %4317 = vmatpush1.msra.mxu0 0.0
  %4318 = vmatprep.subr.mxu0 0.0
  %4319 = vmatpush1.msra.mxu0 0.0
  %4320 = vmatprep.subr.mxu0 0.0
  %4321 = vmatpush1.msra.mxu0 0.0
  %4322 = vmatprep.subr.mxu0 0.0
  %4323 = vmatpush1.msra.mxu0 0.0
  %4324 = vmatprep.subr.mxu0 0.0
  %4325 = vmatpush1.msra.mxu0 0.0
  %4326 = vmatprep.subr.mxu0 0.0
  %4327 = vmatpush1.msra.mxu0 0.0
  %4328 = vmatprep.subr.mxu0 0.0
  %4329 = vmatpush1.msra.mxu0 0.0
  %4330 = vmatprep.subr.mxu0 0.0
  %4331 = vmatpush1.msra.mxu0 0.0
  %4332 = vmatprep.subr.mxu0 0.0
  %4333 = vmatpush1.msra.mxu0 0.0
  %4334 = vmatprep.subr.mxu0 0.0
  %4335 = vmatpush1.msra.mxu0 0.0
  %4336 = vmatprep.subr.mxu0 0.0
  %4337 = vmatpush1.msra.mxu0 0.0
  %4338 = vmatprep.subr.mxu0 0.0
  %4339 = vmatpush1.msra.mxu0 %v4313
  %4340 = vmatprep.subr.mxu0 0.0
  %4341 = vmatpush1.msra.mxu0 %v4312
  %4342 = vmatprep.subr.mxu0 0.0
  %4343 = vmatpush1.msra.mxu0 %v4311
  %4344 = vmatprep.subr.mxu0 0.0
  %4345 = vmatpush1.msra.mxu0 %v4310
  %4346 = vmatprep.subr.mxu0 0.0
  %4347 = vmatpush2.msra.mxu0 0.0
  %4348 = vmatprep.subr.mxu0 0.0
  %4349 = vmatpush2.msra.mxu0 0.0
  %4350 = vmatprep.subr.mxu0 0.0
  %4351 = vmatpush2.msra.mxu0 0.0
  %4352 = vmatprep.subr.mxu0 0.0
  %4353 = vmatpush2.msra.mxu0 0.0
  %4354 = vmatprep.subr.mxu0 0.0
  %4355 = vmatpush2.msra.mxu0 0.0
  %4356 = vmatprep.subr.mxu0 0.0
  %4357 = vmatpush2.msra.mxu0 0.0
  %4358 = vmatprep.subr.mxu0 0.0
  %4359 = vmatpush2.msra.mxu0 0.0
  %4360 = vmatprep.subr.mxu0 0.0
  %4361 = vmatpush2.msra.mxu0 0.0
  %4362 = vmatprep.subr.mxu0 0.0
  %4363 = vmatpush2.msra.mxu0 0.0
  %4364 = vmatprep.subr.mxu0 0.0
  %4365 = vmatpush2.msra.mxu0 0.0
  %4366 = vmatprep.subr.mxu0 0.0
  %4367 = vmatpush2.msra.mxu0 0.0
  %4368 = vmatprep.subr.mxu0 0.0
  %4369 = vmatpush2.msra.mxu0 0.0
  %4370 = vmatprep.subr.mxu0 0.0
  %4371 = vmatpush2.msra.mxu0 0.0
  %4372 = vmatprep.subr.mxu0 0.0
  %4373 = vmatpush2.msra.mxu0 0.0
  %4374 = vmatprep.subr.mxu0 0.0
  %4375 = vmatpush2.msra.mxu0 0.0
  %4376 = vmatprep.subr.mxu0 0.0
  %4377 = vmatpush2.msra.mxu0 0.0
  %4378 = vmatprep.mubr.f32.mxu0 0.0
  %4379 = vmatmul.mubr.f32.gmra.mxu0 %v3943
  %v4380 = vpop.f32.mrf.mxu0
  %v4381 = vadd.f32 0.0, %v4380
  %v4382 = vpop.f32.mrf.mxu0
  %4383 = vmatprep.mubr.f32.mxu0 0.0
  %4384 = vmatmul.mubr.f32.gmra.mxu0 %v3946
  %v4385 = vpop.f32.mrf.mxu0
  %v4386 = vadd.f32 0.0, %v4385
  %v4387 = vpop.f32.mrf.mxu0
  %4388 = vmatprep.mubr.f32.mxu0 0.0
  %4389 = vmatmul.mubr.f32.gmra.mxu0 %v3949
  %v4390 = vpop.f32.mrf.mxu0
  %v4391 = vadd.f32 0.0, %v4390
  %v4392 = vpop.f32.mrf.mxu0
  %4393 = vmatprep.mubr.f32.mxu0 0.0
  %4394 = vmatmul.mubr.f32.gmra.mxu0 %v3952
  %v4395 = vpop.f32.mrf.mxu0
  %v4396 = vadd.f32 0.0, %v4395
  %v4397 = vpop.f32.mrf.mxu0
  %4398 = vdwg.mxu0
  %s4399 = scalar_lea.vmem %s16, 160
  %v4400 = vld [vmem:[%s4399] sm:$0xff]
  %v4401 = vld [vmem:[%s4399 + $0x8] sm:$0xff]
  %v4402 = vld [vmem:[%s4399 + $0x10] sm:$0xff]
  %v4403 = vld [vmem:[%s4399 + $0x18] sm:$0xff]
  %4404 = vmatprep.subr.mxu0 0.0
  %4405 = vmatpush1.msra.mxu0 0.0
  %4406 = vmatprep.subr.mxu0 0.0
  %4407 = vmatpush1.msra.mxu0 0.0
  %4408 = vmatprep.subr.mxu0 0.0
  %4409 = vmatpush1.msra.mxu0 0.0
  %4410 = vmatprep.subr.mxu0 0.0
  %4411 = vmatpush1.msra.mxu0 0.0
  %4412 = vmatprep.subr.mxu0 0.0
  %4413 = vmatpush1.msra.mxu0 0.0
  %4414 = vmatprep.subr.mxu0 0.0
  %4415 = vmatpush1.msra.mxu0 0.0
  %4416 = vmatprep.subr.mxu0 0.0
  %4417 = vmatpush1.msra.mxu0 0.0
  %4418 = vmatprep.subr.mxu0 0.0
  %4419 = vmatpush1.msra.mxu0 0.0
  %4420 = vmatprep.subr.mxu0 0.0
  %4421 = vmatpush1.msra.mxu0 0.0
  %4422 = vmatprep.subr.mxu0 0.0
  %4423 = vmatpush1.msra.mxu0 0.0
  %4424 = vmatprep.subr.mxu0 0.0
  %4425 = vmatpush1.msra.mxu0 0.0
  %4426 = vmatprep.subr.mxu0 0.0
  %4427 = vmatpush1.msra.mxu0 0.0
  %4428 = vmatprep.subr.mxu0 0.0
  %4429 = vmatpush1.msra.mxu0 %v4403
  %4430 = vmatprep.subr.mxu0 0.0
  %4431 = vmatpush1.msra.mxu0 %v4402
  %4432 = vmatprep.subr.mxu0 0.0
  %4433 = vmatpush1.msra.mxu0 %v4401
  %4434 = vmatprep.subr.mxu0 0.0
  %4435 = vmatpush1.msra.mxu0 %v4400
  %4436 = vmatprep.subr.mxu0 0.0
  %4437 = vmatpush2.msra.mxu0 0.0
  %4438 = vmatprep.subr.mxu0 0.0
  %4439 = vmatpush2.msra.mxu0 0.0
  %4440 = vmatprep.subr.mxu0 0.0
  %4441 = vmatpush2.msra.mxu0 0.0
  %4442 = vmatprep.subr.mxu0 0.0
  %4443 = vmatpush2.msra.mxu0 0.0
  %4444 = vmatprep.subr.mxu0 0.0
  %4445 = vmatpush2.msra.mxu0 0.0
  %4446 = vmatprep.subr.mxu0 0.0
  %4447 = vmatpush2.msra.mxu0 0.0
  %4448 = vmatprep.subr.mxu0 0.0
  %4449 = vmatpush2.msra.mxu0 0.0
  %4450 = vmatprep.subr.mxu0 0.0
  %4451 = vmatpush2.msra.mxu0 0.0
  %4452 = vmatprep.subr.mxu0 0.0
  %4453 = vmatpush2.msra.mxu0 0.0
  %4454 = vmatprep.subr.mxu0 0.0
  %4455 = vmatpush2.msra.mxu0 0.0
  %4456 = vmatprep.subr.mxu0 0.0
  %4457 = vmatpush2.msra.mxu0 0.0
  %4458 = vmatprep.subr.mxu0 0.0
  %4459 = vmatpush2.msra.mxu0 0.0
  %4460 = vmatprep.subr.mxu0 0.0
  %4461 = vmatpush2.msra.mxu0 0.0
  %4462 = vmatprep.subr.mxu0 0.0
  %4463 = vmatpush2.msra.mxu0 0.0
  %4464 = vmatprep.subr.mxu0 0.0
  %4465 = vmatpush2.msra.mxu0 0.0
  %4466 = vmatprep.subr.mxu0 0.0
  %4467 = vmatpush2.msra.mxu0 0.0
  %4468 = vmatprep.mubr.f32.mxu0 0.0
  %4469 = vmatmul.mubr.f32.gmra.mxu0 %v3943
  %v4470 = vpop.f32.mrf.mxu0
  %v4471 = vadd.f32 0.0, %v4470
  %v4472 = vpop.f32.mrf.mxu0
  %4473 = vmatprep.mubr.f32.mxu0 0.0
  %4474 = vmatmul.mubr.f32.gmra.mxu0 %v3946
  %v4475 = vpop.f32.mrf.mxu0
  %v4476 = vadd.f32 0.0, %v4475
  %v4477 = vpop.f32.mrf.mxu0
  %4478 = vmatprep.mubr.f32.mxu0 0.0
  %4479 = vmatmul.mubr.f32.gmra.mxu0 %v3949
  %v4480 = vpop.f32.mrf.mxu0
  %v4481 = vadd.f32 0.0, %v4480
  %v4482 = vpop.f32.mrf.mxu0
  %4483 = vmatprep.mubr.f32.mxu0 0.0
  %4484 = vmatmul.mubr.f32.gmra.mxu0 %v3952
  %v4485 = vpop.f32.mrf.mxu0
  %v4486 = vadd.f32 0.0, %v4485
  %v4487 = vpop.f32.mrf.mxu0
  %4488 = vdwg.mxu0
  %s4489 = scalar_lea.vmem %s16, 192
  %v4490 = vld [vmem:[%s4489] sm:$0xff]
  %v4491 = vld [vmem:[%s4489 + $0x8] sm:$0xff]
  %v4492 = vld [vmem:[%s4489 + $0x10] sm:$0xff]
  %v4493 = vld [vmem:[%s4489 + $0x18] sm:$0xff]
  %4494 = vmatprep.subr.mxu0 0.0
  %4495 = vmatpush1.msra.mxu0 0.0
  %4496 = vmatprep.subr.mxu0 0.0
  %4497 = vmatpush1.msra.mxu0 0.0
  %4498 = vmatprep.subr.mxu0 0.0
  %4499 = vmatpush1.msra.mxu0 0.0
  %4500 = vmatprep.subr.mxu0 0.0
  %4501 = vmatpush1.msra.mxu0 0.0
  %4502 = vmatprep.subr.mxu0 0.0
  %4503 = vmatpush1.msra.mxu0 0.0
  %4504 = vmatprep.subr.mxu0 0.0
  %4505 = vmatpush1.msra.mxu0 0.0
  %4506 = vmatprep.subr.mxu0 0.0
  %4507 = vmatpush1.msra.mxu0 0.0
  %4508 = vmatprep.subr.mxu0 0.0
  %4509 = vmatpush1.msra.mxu0 0.0
  %4510 = vmatprep.subr.mxu0 0.0
  %4511 = vmatpush1.msra.mxu0 0.0
  %4512 = vmatprep.subr.mxu0 0.0
  %4513 = vmatpush1.msra.mxu0 0.0
  %4514 = vmatprep.subr.mxu0 0.0
  %4515 = vmatpush1.msra.mxu0 0.0
  %4516 = vmatprep.subr.mxu0 0.0
  %4517 = vmatpush1.msra.mxu0 0.0
  %4518 = vmatprep.subr.mxu0 0.0
  %4519 = vmatpush1.msra.mxu0 %v4493
  %4520 = vmatprep.subr.mxu0 0.0
  %4521 = vmatpush1.msra.mxu0 %v4492
  %4522 = vmatprep.subr.mxu0 0.0
  %4523 = vmatpush1.msra.mxu0 %v4491
  %4524 = vmatprep.subr.mxu0 0.0
  %4525 = vmatpush1.msra.mxu0 %v4490
  %4526 = vmatprep.subr.mxu0 0.0
  %4527 = vmatpush2.msra.mxu0 0.0
  %4528 = vmatprep.subr.mxu0 0.0
  %4529 = vmatpush2.msra.mxu0 0.0
  %4530 = vmatprep.subr.mxu0 0.0
  %4531 = vmatpush2.msra.mxu0 0.0
  %4532 = vmatprep.subr.mxu0 0.0
  %4533 = vmatpush2.msra.mxu0 0.0
  %4534 = vmatprep.subr.mxu0 0.0
  %4535 = vmatpush2.msra.mxu0 0.0
  %4536 = vmatprep.subr.mxu0 0.0
  %4537 = vmatpush2.msra.mxu0 0.0
  %4538 = vmatprep.subr.mxu0 0.0
  %4539 = vmatpush2.msra.mxu0 0.0
  %4540 = vmatprep.subr.mxu0 0.0
  %4541 = vmatpush2.msra.mxu0 0.0
  %4542 = vmatprep.subr.mxu0 0.0
  %4543 = vmatpush2.msra.mxu0 0.0
  %4544 = vmatprep.subr.mxu0 0.0
  %4545 = vmatpush2.msra.mxu0 0.0
  %4546 = vmatprep.subr.mxu0 0.0
  %4547 = vmatpush2.msra.mxu0 0.0
  %4548 = vmatprep.subr.mxu0 0.0
  %4549 = vmatpush2.msra.mxu0 0.0
  %4550 = vmatprep.subr.mxu0 0.0
  %4551 = vmatpush2.msra.mxu0 0.0
  %4552 = vmatprep.subr.mxu0 0.0
  %4553 = vmatpush2.msra.mxu0 0.0
  %4554 = vmatprep.subr.mxu0 0.0
  %4555 = vmatpush2.msra.mxu0 0.0
  %4556 = vmatprep.subr.mxu0 0.0
  %4557 = vmatpush2.msra.mxu0 0.0
  %4558 = vmatprep.mubr.f32.mxu0 0.0
  %4559 = vmatmul.mubr.f32.gmra.mxu0 %v3943
  %v4560 = vpop.f32.mrf.mxu0
  %v4561 = vadd.f32 0.0, %v4560
  %v4562 = vpop.f32.mrf.mxu0
  %4563 = vmatprep.mubr.f32.mxu0 0.0
  %4564 = vmatmul.mubr.f32.gmra.mxu0 %v3946
  %v4565 = vpop.f32.mrf.mxu0
  %v4566 = vadd.f32 0.0, %v4565
  %v4567 = vpop.f32.mrf.mxu0
  %4568 = vmatprep.mubr.f32.mxu0 0.0
  %4569 = vmatmul.mubr.f32.gmra.mxu0 %v3949
  %v4570 = vpop.f32.mrf.mxu0
  %v4571 = vadd.f32 0.0, %v4570
  %v4572 = vpop.f32.mrf.mxu0
  %4573 = vmatprep.mubr.f32.mxu0 0.0
  %4574 = vmatmul.mubr.f32.gmra.mxu0 %v3952
  %v4575 = vpop.f32.mrf.mxu0
  %v4576 = vadd.f32 0.0, %v4575
  %v4577 = vpop.f32.mrf.mxu0
  %4578 = vdwg.mxu0
  %s4579 = scalar_lea.vmem %s16, 224
  %v4580 = vld [vmem:[%s4579] sm:$0xff]
  %v4581 = vld [vmem:[%s4579 + $0x8] sm:$0xff]
  %v4582 = vld [vmem:[%s4579 + $0x10] sm:$0xff]
  %v4583 = vld [vmem:[%s4579 + $0x18] sm:$0xff]
  %4584 = vmatprep.subr.mxu0 0.0
  %4585 = vmatpush1.msra.mxu0 0.0
  %4586 = vmatprep.subr.mxu0 0.0
  %4587 = vmatpush1.msra.mxu0 0.0
  %4588 = vmatprep.subr.mxu0 0.0
  %4589 = vmatpush1.msra.mxu0 0.0
  %4590 = vmatprep.subr.mxu0 0.0
  %4591 = vmatpush1.msra.mxu0 0.0
  %4592 = vmatprep.subr.mxu0 0.0
  %4593 = vmatpush1.msra.mxu0 0.0
  %4594 = vmatprep.subr.mxu0 0.0
  %4595 = vmatpush1.msra.mxu0 0.0
  %4596 = vmatprep.subr.mxu0 0.0
  %4597 = vmatpush1.msra.mxu0 0.0
  %4598 = vmatprep.subr.mxu0 0.0
  %4599 = vmatpush1.msra.mxu0 0.0
  %4600 = vmatprep.subr.mxu0 0.0
  %4601 = vmatpush1.msra.mxu0 0.0
  %4602 = vmatprep.subr.mxu0 0.0
  %4603 = vmatpush1.msra.mxu0 0.0
  %4604 = vmatprep.subr.mxu0 0.0
  %4605 = vmatpush1.msra.mxu0 0.0
  %4606 = vmatprep.subr.mxu0 0.0
  %4607 = vmatpush1.msra.mxu0 0.0
  %4608 = vmatprep.subr.mxu0 0.0
  %4609 = vmatpush1.msra.mxu0 %v4583
  %4610 = vmatprep.subr.mxu0 0.0
  %4611 = vmatpush1.msra.mxu0 %v4582
  %4612 = vmatprep.subr.mxu0 0.0
  %4613 = vmatpush1.msra.mxu0 %v4581
  %4614 = vmatprep.subr.mxu0 0.0
  %4615 = vmatpush1.msra.mxu0 %v4580
  %4616 = vmatprep.subr.mxu0 0.0
  %4617 = vmatpush2.msra.mxu0 0.0
  %4618 = vmatprep.subr.mxu0 0.0
  %4619 = vmatpush2.msra.mxu0 0.0
  %4620 = vmatprep.subr.mxu0 0.0
  %4621 = vmatpush2.msra.mxu0 0.0
  %4622 = vmatprep.subr.mxu0 0.0
  %4623 = vmatpush2.msra.mxu0 0.0
  %4624 = vmatprep.subr.mxu0 0.0
  %4625 = vmatpush2.msra.mxu0 0.0
  %4626 = vmatprep.subr.mxu0 0.0
  %4627 = vmatpush2.msra.mxu0 0.0
  %4628 = vmatprep.subr.mxu0 0.0
  %4629 = vmatpush2.msra.mxu0 0.0
  %4630 = vmatprep.subr.mxu0 0.0
  %4631 = vmatpush2.msra.mxu0 0.0
  %4632 = vmatprep.subr.mxu0 0.0
  %4633 = vmatpush2.msra.mxu0 0.0
  %4634 = vmatprep.subr.mxu0 0.0
  %4635 = vmatpush2.msra.mxu0 0.0
  %4636 = vmatprep.subr.mxu0 0.0
  %4637 = vmatpush2.msra.mxu0 0.0
  %4638 = vmatprep.subr.mxu0 0.0
  %4639 = vmatpush2.msra.mxu0 0.0
  %4640 = vmatprep.subr.mxu0 0.0
  %4641 = vmatpush2.msra.mxu0 0.0
  %4642 = vmatprep.subr.mxu0 0.0
  %4643 = vmatpush2.msra.mxu0 0.0
  %4644 = vmatprep.subr.mxu0 0.0
  %4645 = vmatpush2.msra.mxu0 0.0
  %4646 = vmatprep.subr.mxu0 0.0
  %4647 = vmatpush2.msra.mxu0 0.0
  %4648 = vmatprep.mubr.f32.mxu0 0.0
  %4649 = vmatmul.mubr.f32.gmra.mxu0 %v3943
  %v4650 = vpop.f32.mrf.mxu0
  %v4651 = vadd.f32 0.0, %v4650
  %v4652 = vpop.f32.mrf.mxu0
  %4653 = vmatprep.mubr.f32.mxu0 0.0
  %4654 = vmatmul.mubr.f32.gmra.mxu0 %v3946
  %v4655 = vpop.f32.mrf.mxu0
  %v4656 = vadd.f32 0.0, %v4655
  %v4657 = vpop.f32.mrf.mxu0
  %4658 = vmatprep.mubr.f32.mxu0 0.0
  %4659 = vmatmul.mubr.f32.gmra.mxu0 %v3949
  %v4660 = vpop.f32.mrf.mxu0
  %v4661 = vadd.f32 0.0, %v4660
  %v4662 = vpop.f32.mrf.mxu0
  %4663 = vmatprep.mubr.f32.mxu0 0.0
  %4664 = vmatmul.mubr.f32.gmra.mxu0 %v3952
  %v4665 = vpop.f32.mrf.mxu0
  %v4666 = vadd.f32 0.0, %v4665
  %v4667 = vpop.f32.mrf.mxu0
  %4668 = vdwg.mxu0
  %s4669 = scalar_lea.vmem %s16, 256
  %v4670 = vld [vmem:[%s4669] sm:$0xff]
  %v4671 = vld [vmem:[%s4669 + $0x8] sm:$0xff]
  %v4672 = vld [vmem:[%s4669 + $0x10] sm:$0xff]
  %v4673 = vld [vmem:[%s4669 + $0x18] sm:$0xff]
  %4674 = vmatprep.subr.mxu0 0.0
  %4675 = vmatpush1.msra.mxu0 0.0
  %4676 = vmatprep.subr.mxu0 0.0
  %4677 = vmatpush1.msra.mxu0 0.0
  %4678 = vmatprep.subr.mxu0 0.0
  %4679 = vmatpush1.msra.mxu0 0.0
  %4680 = vmatprep.subr.mxu0 0.0
  %4681 = vmatpush1.msra.mxu0 0.0
  %4682 = vmatprep.subr.mxu0 0.0
  %4683 = vmatpush1.msra.mxu0 0.0
  %4684 = vmatprep.subr.mxu0 0.0
  %4685 = vmatpush1.msra.mxu0 0.0
  %4686 = vmatprep.subr.mxu0 0.0
  %4687 = vmatpush1.msra.mxu0 0.0
  %4688 = vmatprep.subr.mxu0 0.0
  %4689 = vmatpush1.msra.mxu0 0.0
  %4690 = vmatprep.subr.mxu0 0.0
  %4691 = vmatpush1.msra.mxu0 0.0
  %4692 = vmatprep.subr.mxu0 0.0
  %4693 = vmatpush1.msra.mxu0 0.0
  %4694 = vmatprep.subr.mxu0 0.0
  %4695 = vmatpush1.msra.mxu0 0.0
  %4696 = vmatprep.subr.mxu0 0.0
  %4697 = vmatpush1.msra.mxu0 0.0
  %4698 = vmatprep.subr.mxu0 0.0
  %4699 = vmatpush1.msra.mxu0 %v4673
  %4700 = vmatprep.subr.mxu0 0.0
  %4701 = vmatpush1.msra.mxu0 %v4672
  %4702 = vmatprep.subr.mxu0 0.0
  %4703 = vmatpush1.msra.mxu0 %v4671
  %4704 = vmatprep.subr.mxu0 0.0
  %4705 = vmatpush1.msra.mxu0 %v4670
  %4706 = vmatprep.subr.mxu0 0.0
  %4707 = vmatpush2.msra.mxu0 0.0
  %4708 = vmatprep.subr.mxu0 0.0
  %4709 = vmatpush2.msra.mxu0 0.0
  %4710 = vmatprep.subr.mxu0 0.0
  %4711 = vmatpush2.msra.mxu0 0.0
  %4712 = vmatprep.subr.mxu0 0.0
  %4713 = vmatpush2.msra.mxu0 0.0
  %4714 = vmatprep.subr.mxu0 0.0
  %4715 = vmatpush2.msra.mxu0 0.0
  %4716 = vmatprep.subr.mxu0 0.0
  %4717 = vmatpush2.msra.mxu0 0.0
  %4718 = vmatprep.subr.mxu0 0.0
  %4719 = vmatpush2.msra.mxu0 0.0
  %4720 = vmatprep.subr.mxu0 0.0
  %4721 = vmatpush2.msra.mxu0 0.0
  %4722 = vmatprep.subr.mxu0 0.0
  %4723 = vmatpush2.msra.mxu0 0.0
  %4724 = vmatprep.subr.mxu0 0.0
  %4725 = vmatpush2.msra.mxu0 0.0
  %4726 = vmatprep.subr.mxu0 0.0
  %4727 = vmatpush2.msra.mxu0 0.0
  %4728 = vmatprep.subr.mxu0 0.0
  %4729 = vmatpush2.msra.mxu0 0.0
  %4730 = vmatprep.subr.mxu0 0.0
  %4731 = vmatpush2.msra.mxu0 0.0
  %4732 = vmatprep.subr.mxu0 0.0
  %4733 = vmatpush2.msra.mxu0 0.0
  %4734 = vmatprep.subr.mxu0 0.0
  %4735 = vmatpush2.msra.mxu0 0.0
  %4736 = vmatprep.subr.mxu0 0.0
  %4737 = vmatpush2.msra.mxu0 0.0
  %4738 = vmatprep.mubr.f32.mxu0 0.0
  %4739 = vmatmul.mubr.f32.gmra.mxu0 %v3943
  %v4740 = vpop.f32.mrf.mxu0
  %v4741 = vadd.f32 0.0, %v4740
  %v4742 = vpop.f32.mrf.mxu0
  %4743 = vmatprep.mubr.f32.mxu0 0.0
  %4744 = vmatmul.mubr.f32.gmra.mxu0 %v3946
  %v4745 = vpop.f32.mrf.mxu0
  %v4746 = vadd.f32 0.0, %v4745
  %v4747 = vpop.f32.mrf.mxu0
  %4748 = vmatprep.mubr.f32.mxu0 0.0
  %4749 = vmatmul.mubr.f32.gmra.mxu0 %v3949
  %v4750 = vpop.f32.mrf.mxu0
  %v4751 = vadd.f32 0.0, %v4750
  %v4752 = vpop.f32.mrf.mxu0
  %4753 = vmatprep.mubr.f32.mxu0 0.0
  %4754 = vmatmul.mubr.f32.gmra.mxu0 %v3952
  %v4755 = vpop.f32.mrf.mxu0
  %v4756 = vadd.f32 0.0, %v4755
  %v4757 = vpop.f32.mrf.mxu0
  %4758 = vdwg.mxu0
  %v4759 = vld [vmem:[%s8] sm:$0xff]
  %v4760 = vld [vmem:[%s8 + $0x8] sm:$0xff]
  %v4761 = vld [vmem:[%s8 + $0x10] sm:$0xff]
  %v4762 = vld [vmem:[%s8 + $0x18] sm:$0xff]
  %v4763 = vld [vmem:[%s8 + $0x20] sm:$0xff]
  %v4764 = vld [vmem:[%s8 + $0x28] sm:$0xff]
  %v4765 = vld [vmem:[%s13 + $0x80] sm:$0xff]
  %v4766 = vld [vmem:[%s13 + $0x88] sm:$0xff]
  %4768 = vset.pattern.permute.xlu0 0
  %4769 = vperm.xlu0 %4768, %v4765
  %v4770 = vpop.permute.xlu0 %4769
  %4773 = vset.pattern.permute.xlu0 0
  %4774 = vperm.xlu0 %4773, %v4766
  %v4775 = vpop.permute.xlu0 %4774
  %v4778 = vsel %vm3403, %v4761, 0
  %v4781 = vsel %vm3403, %v4764, 0
  %4783 = vmatprep.subr.mxu0 0.0
  %4784 = vmatpush1.msra.mxu0 %v4306
  %4785 = vmatprep.subr.mxu0 0.0
  %4786 = vmatpush1.msra.mxu0 %v4301
  %4787 = vmatprep.subr.mxu0 0.0
  %4788 = vmatpush1.msra.mxu0 %v4296
  %4789 = vmatprep.subr.mxu0 0.0
  %4790 = vmatpush1.msra.mxu0 %v4291
  %4791 = vmatprep.subr.mxu0 0.0
  %4792 = vmatpush1.msra.mxu0 %v4216
  %4793 = vmatprep.subr.mxu0 0.0
  %4794 = vmatpush1.msra.mxu0 %v4211
  %4795 = vmatprep.subr.mxu0 0.0
  %4796 = vmatpush1.msra.mxu0 %v4206
  %4797 = vmatprep.subr.mxu0 0.0
  %4798 = vmatpush1.msra.mxu0 %v4201
  %4799 = vmatprep.subr.mxu0 0.0
  %4800 = vmatpush1.msra.mxu0 %v4126
  %4801 = vmatprep.subr.mxu0 0.0
  %4802 = vmatpush1.msra.mxu0 %v4121
  %4803 = vmatprep.subr.mxu0 0.0
  %4804 = vmatpush1.msra.mxu0 %v4116
  %4805 = vmatprep.subr.mxu0 0.0
  %4806 = vmatpush1.msra.mxu0 %v4111
  %4807 = vmatprep.subr.mxu0 0.0
  %4808 = vmatpush1.msra.mxu0 %v4036
  %4809 = vmatprep.subr.mxu0 0.0
  %4810 = vmatpush1.msra.mxu0 %v4031
  %4811 = vmatprep.subr.mxu0 0.0
  %4812 = vmatpush1.msra.mxu0 %v4026
  %4813 = vmatprep.subr.mxu0 0.0
  %4814 = vmatpush1.msra.mxu0 %v4021
  %4815 = vmatprep.subr.mxu0 0.0
  %4816 = vmatpush2.msra.mxu0 %v4666
  %4817 = vmatprep.subr.mxu0 0.0
  %4818 = vmatpush2.msra.mxu0 %v4661
  %4819 = vmatprep.subr.mxu0 0.0
  %4820 = vmatpush2.msra.mxu0 %v4656
  %4821 = vmatprep.subr.mxu0 0.0
  %4822 = vmatpush2.msra.mxu0 %v4651
  %4823 = vmatprep.subr.mxu0 0.0
  %4824 = vmatpush2.msra.mxu0 %v4576
  %4825 = vmatprep.subr.mxu0 0.0
  %4826 = vmatpush2.msra.mxu0 %v4571
  %4827 = vmatprep.subr.mxu0 0.0
  %4828 = vmatpush2.msra.mxu0 %v4566
  %4829 = vmatprep.subr.mxu0 0.0
  %4830 = vmatpush2.msra.mxu0 %v4561
  %4831 = vmatprep.subr.mxu0 0.0
  %4832 = vmatpush2.msra.mxu0 %v4486
  %4833 = vmatprep.subr.mxu0 0.0
  %4834 = vmatpush2.msra.mxu0 %v4481
  %4835 = vmatprep.subr.mxu0 0.0
  %4836 = vmatpush2.msra.mxu0 %v4476
  %4837 = vmatprep.subr.mxu0 0.0
  %4838 = vmatpush2.msra.mxu0 %v4471
  %4839 = vmatprep.subr.mxu0 0.0
  %4840 = vmatpush2.msra.mxu0 %v4396
  %4841 = vmatprep.subr.mxu0 0.0
  %4842 = vmatpush2.msra.mxu0 %v4391
  %4843 = vmatprep.subr.mxu0 0.0
  %4844 = vmatpush2.msra.mxu0 %v4386
  %4845 = vmatprep.subr.mxu0 0.0
  %4846 = vmatpush2.msra.mxu0 %v4381
  %4847 = vmatprep.mubr.f32.mxu0 %v4760
  %4848 = vmatmul.mubr.f32.gmra.mxu0 %v4759
  %v4849 = vpop.f32.mrf.mxu0
  %v4850 = vadd.f32 %v4770, %v4849
  %v4851 = vpop.f32.mrf.mxu0
  %4852 = vmatprep.mubr.f32.mxu0 %v4763
  %4853 = vmatmul.mubr.f32.gmra.mxu0 %v4762
  %v4854 = vpop.f32.mrf.mxu0
  %v4855 = vadd.f32 %v4775, %v4854
  %v4856 = vpop.f32.mrf.mxu0
  %4857 = vdwg.mxu0
  %4858 = vmatprep.subr.mxu0 0.0
  %4859 = vmatpush1.msra.mxu0 0.0
  %4860 = vmatprep.subr.mxu0 0.0
  %4861 = vmatpush1.msra.mxu0 0.0
  %4862 = vmatprep.subr.mxu0 0.0
  %4863 = vmatpush1.msra.mxu0 0.0
  %4864 = vmatprep.subr.mxu0 0.0
  %4865 = vmatpush1.msra.mxu0 0.0
  %4866 = vmatprep.subr.mxu0 0.0
  %4867 = vmatpush1.msra.mxu0 0.0
  %4868 = vmatprep.subr.mxu0 0.0
  %4869 = vmatpush1.msra.mxu0 0.0
  %4870 = vmatprep.subr.mxu0 0.0
  %4871 = vmatpush1.msra.mxu0 0.0
  %4872 = vmatprep.subr.mxu0 0.0
  %4873 = vmatpush1.msra.mxu0 0.0
  %4874 = vmatprep.subr.mxu0 0.0
  %4875 = vmatpush1.msra.mxu0 0.0
  %4876 = vmatprep.subr.mxu0 0.0
  %4877 = vmatpush1.msra.mxu0 0.0
  %4878 = vmatprep.subr.mxu0 0.0
  %4879 = vmatpush1.msra.mxu0 0.0
  %4880 = vmatprep.subr.mxu0 0.0
  %4881 = vmatpush1.msra.mxu0 0.0
  %4882 = vmatprep.subr.mxu0 0.0
  %4883 = vmatpush1.msra.mxu0 %v4756
  %4884 = vmatprep.subr.mxu0 0.0
  %4885 = vmatpush1.msra.mxu0 %v4751
  %4886 = vmatprep.subr.mxu0 0.0
  %4887 = vmatpush1.msra.mxu0 %v4746
  %4888 = vmatprep.subr.mxu0 0.0
  %4889 = vmatpush1.msra.mxu0 %v4741
  %4890 = vmatprep.subr.mxu0 0.0
  %4891 = vmatpush2.msra.mxu0 0.0
  %4892 = vmatprep.subr.mxu0 0.0
  %4893 = vmatpush2.msra.mxu0 0.0
  %4894 = vmatprep.subr.mxu0 0.0
  %4895 = vmatpush2.msra.mxu0 0.0
  %4896 = vmatprep.subr.mxu0 0.0
  %4897 = vmatpush2.msra.mxu0 0.0
  %4898 = vmatprep.subr.mxu0 0.0
  %4899 = vmatpush2.msra.mxu0 0.0
  %4900 = vmatprep.subr.mxu0 0.0
  %4901 = vmatpush2.msra.mxu0 0.0
  %4902 = vmatprep.subr.mxu0 0.0
  %4903 = vmatpush2.msra.mxu0 0.0
  %4904 = vmatprep.subr.mxu0 0.0
  %4905 = vmatpush2.msra.mxu0 0.0
  %4906 = vmatprep.subr.mxu0 0.0
  %4907 = vmatpush2.msra.mxu0 0.0
  %4908 = vmatprep.subr.mxu0 0.0
  %4909 = vmatpush2.msra.mxu0 0.0
  %4910 = vmatprep.subr.mxu0 0.0
  %4911 = vmatpush2.msra.mxu0 0.0
  %4912 = vmatprep.subr.mxu0 0.0
  %4913 = vmatpush2.msra.mxu0 0.0
  %4914 = vmatprep.subr.mxu0 0.0
  %4915 = vmatpush2.msra.mxu0 0.0
  %4916 = vmatprep.subr.mxu0 0.0
  %4917 = vmatpush2.msra.mxu0 0.0
  %4918 = vmatprep.subr.mxu0 0.0
  %4919 = vmatpush2.msra.mxu0 0.0
  %4920 = vmatprep.subr.mxu0 0.0
  %4921 = vmatpush2.msra.mxu0 0.0
  %4922 = vmatprep.mubr.f32.mxu0 0.0
  %4923 = vmatmul.mubr.f32.gmra.mxu0 %v4778
  %v4924 = vpop.f32.mrf.mxu0
  %v4925 = vadd.f32 %v4850, %v4924
  %v4926 = vpop.f32.mrf.mxu0
  %4927 = vmatprep.mubr.f32.mxu0 0.0
  %4928 = vmatmul.mubr.f32.gmra.mxu0 %v4781
  %v4929 = vpop.f32.mrf.mxu0
  %v4930 = vadd.f32 %v4855, %v4929
  %v4931 = vpop.f32.mrf.mxu0
  %4932 = vdwg.mxu0
  %vm4933 = vcmp.ge.f32.partialorder %v4925, 0.0
  %vm4934 = vcmp.ge.f32.partialorder %v4930, 0.0
  %v4935 = vmul.f32 %v4925, 0.1
  %v4936 = vmul.f32 %v4930, 0.1
  %v4937 = vsel %vm4933, %v4925, %v4935
  %v4938 = vsel %vm4934, %v4930, %v4936
  %v4940 = vsel %vm3403, %v4937, 0
  %v4943 = vsel %vm3403, %v4938, 0
  %4945 = vmatprep.subr.mxu0 0.0
  %4946 = vmatpush1.msra.mxu0 0.0
  %4947 = vmatprep.subr.mxu0 0.0
  %4948 = vmatpush1.msra.mxu0 0.0
  %4949 = vmatprep.subr.mxu0 0.0
  %4950 = vmatpush1.msra.mxu0 0.0
  %4951 = vmatprep.subr.mxu0 0.0
  %4952 = vmatpush1.msra.mxu0 0.0
  %4953 = vmatprep.subr.mxu0 0.0
  %4954 = vmatpush1.msra.mxu0 0.0
  %4955 = vmatprep.subr.mxu0 0.0
  %4956 = vmatpush1.msra.mxu0 0.0
  %4957 = vmatprep.subr.mxu0 0.0
  %4958 = vmatpush1.msra.mxu0 0.0
  %4959 = vmatprep.subr.mxu0 0.0
  %4960 = vmatpush1.msra.mxu0 0.0
  %4961 = vmatprep.subr.mxu0 0.0
  %4962 = vmatpush1.msra.mxu0 0.0
  %4963 = vmatprep.subr.mxu0 0.0
  %4964 = vmatpush1.msra.mxu0 0.0
  %4965 = vmatprep.subr.mxu0 0.0
  %4966 = vmatpush1.msra.mxu0 0.0
  %4967 = vmatprep.subr.mxu0 0.0
  %4968 = vmatpush1.msra.mxu0 0.0
  %4969 = vmatprep.subr.mxu0 0.0
  %4970 = vmatpush1.msra.mxu0 %v3941
  %4971 = vmatprep.subr.mxu0 0.0
  %4972 = vmatpush1.msra.mxu0 %v3940
  %4973 = vmatprep.subr.mxu0 0.0
  %4974 = vmatpush1.msra.mxu0 %v3939
  %4975 = vmatprep.subr.mxu0 0.0
  %4976 = vmatpush1.msra.mxu0 %v3938
  %4977 = vmatprep.subr.mxu0 0.0
  %4978 = vmatpush2.msra.mxu0 0.0
  %4979 = vmatprep.subr.mxu0 0.0
  %4980 = vmatpush2.msra.mxu0 0.0
  %4981 = vmatprep.subr.mxu0 0.0
  %4982 = vmatpush2.msra.mxu0 0.0
  %4983 = vmatprep.subr.mxu0 0.0
  %4984 = vmatpush2.msra.mxu0 0.0
  %4985 = vmatprep.subr.mxu0 0.0
  %4986 = vmatpush2.msra.mxu0 0.0
  %4987 = vmatprep.subr.mxu0 0.0
  %4988 = vmatpush2.msra.mxu0 0.0
  %4989 = vmatprep.subr.mxu0 0.0
  %4990 = vmatpush2.msra.mxu0 0.0
  %4991 = vmatprep.subr.mxu0 0.0
  %4992 = vmatpush2.msra.mxu0 0.0
  %4993 = vmatprep.subr.mxu0 0.0
  %4994 = vmatpush2.msra.mxu0 0.0
  %4995 = vmatprep.subr.mxu0 0.0
  %4996 = vmatpush2.msra.mxu0 0.0
  %4997 = vmatprep.subr.mxu0 0.0
  %4998 = vmatpush2.msra.mxu0 0.0
  %4999 = vmatprep.subr.mxu0 0.0
  %5000 = vmatpush2.msra.mxu0 0.0
  %5001 = vmatprep.subr.mxu0 0.0
  %5002 = vmatpush2.msra.mxu0 0.0
  %5003 = vmatprep.subr.mxu0 0.0
  %5004 = vmatpush2.msra.mxu0 0.0
  %5005 = vmatprep.subr.mxu0 0.0
  %5006 = vmatpush2.msra.mxu0 0.0
  %5007 = vmatprep.subr.mxu0 0.0
  %5008 = vmatpush2.msra.mxu0 0.0
  %5009 = vmatprep.mubr.f32.mxu0 0.0
  %5010 = vmatmul.mubr.f32.gmra.mxu0 %v4940
  %v5011 = vpop.f32.mrf.mxu0
  %v5012 = vadd.f32 0.0, %v5011
  %v5013 = vpop.f32.mrf.mxu0
  %5014 = vmatprep.mubr.f32.mxu0 0.0
  %5015 = vmatmul.mubr.f32.gmra.mxu0 %v4943
  %v5016 = vpop.f32.mrf.mxu0
  %v5017 = vadd.f32 0.0, %v5016
  %v5018 = vpop.f32.mrf.mxu0
  %5019 = vdwg.mxu0
  %5020 = vmatprep.subr.mxu0 0.0
  %5021 = vmatpush1.msra.mxu0 0.0
  %5022 = vmatprep.subr.mxu0 0.0
  %5023 = vmatpush1.msra.mxu0 0.0
  %5024 = vmatprep.subr.mxu0 0.0
  %5025 = vmatpush1.msra.mxu0 0.0
  %5026 = vmatprep.subr.mxu0 0.0
  %5027 = vmatpush1.msra.mxu0 0.0
  %5028 = vmatprep.subr.mxu0 0.0
  %5029 = vmatpush1.msra.mxu0 0.0
  %5030 = vmatprep.subr.mxu0 0.0
  %5031 = vmatpush1.msra.mxu0 0.0
  %5032 = vmatprep.subr.mxu0 0.0
  %5033 = vmatpush1.msra.mxu0 0.0
  %5034 = vmatprep.subr.mxu0 0.0
  %5035 = vmatpush1.msra.mxu0 0.0
  %5036 = vmatprep.subr.mxu0 0.0
  %5037 = vmatpush1.msra.mxu0 0.0
  %5038 = vmatprep.subr.mxu0 0.0
  %5039 = vmatpush1.msra.mxu0 0.0
  %5040 = vmatprep.subr.mxu0 0.0
  %5041 = vmatpush1.msra.mxu0 0.0
  %5042 = vmatprep.subr.mxu0 0.0
  %5043 = vmatpush1.msra.mxu0 0.0
  %5044 = vmatprep.subr.mxu0 0.0
  %5045 = vmatpush1.msra.mxu0 %v4043
  %5046 = vmatprep.subr.mxu0 0.0
  %5047 = vmatpush1.msra.mxu0 %v4042
  %5048 = vmatprep.subr.mxu0 0.0
  %5049 = vmatpush1.msra.mxu0 %v4041
  %5050 = vmatprep.subr.mxu0 0.0
  %5051 = vmatpush1.msra.mxu0 %v4040
  %5052 = vmatprep.subr.mxu0 0.0
  %5053 = vmatpush2.msra.mxu0 0.0
  %5054 = vmatprep.subr.mxu0 0.0
  %5055 = vmatpush2.msra.mxu0 0.0
  %5056 = vmatprep.subr.mxu0 0.0
  %5057 = vmatpush2.msra.mxu0 0.0
  %5058 = vmatprep.subr.mxu0 0.0
  %5059 = vmatpush2.msra.mxu0 0.0
  %5060 = vmatprep.subr.mxu0 0.0
  %5061 = vmatpush2.msra.mxu0 0.0
  %5062 = vmatprep.subr.mxu0 0.0
  %5063 = vmatpush2.msra.mxu0 0.0
  %5064 = vmatprep.subr.mxu0 0.0
  %5065 = vmatpush2.msra.mxu0 0.0
  %5066 = vmatprep.subr.mxu0 0.0
  %5067 = vmatpush2.msra.mxu0 0.0
  %5068 = vmatprep.subr.mxu0 0.0
  %5069 = vmatpush2.msra.mxu0 0.0
  %5070 = vmatprep.subr.mxu0 0.0
  %5071 = vmatpush2.msra.mxu0 0.0
  %5072 = vmatprep.subr.mxu0 0.0
  %5073 = vmatpush2.msra.mxu0 0.0
  %5074 = vmatprep.subr.mxu0 0.0
  %5075 = vmatpush2.msra.mxu0 0.0
  %5076 = vmatprep.subr.mxu0 0.0
  %5077 = vmatpush2.msra.mxu0 0.0
  %5078 = vmatprep.subr.mxu0 0.0
  %5079 = vmatpush2.msra.mxu0 0.0
  %5080 = vmatprep.subr.mxu0 0.0
  %5081 = vmatpush2.msra.mxu0 0.0
  %5082 = vmatprep.subr.mxu0 0.0
  %5083 = vmatpush2.msra.mxu0 0.0
  %5084 = vmatprep.mubr.f32.mxu0 0.0
  %5085 = vmatmul.mubr.f32.gmra.mxu0 %v4940
  %v5086 = vpop.f32.mrf.mxu0
  %v5087 = vadd.f32 0.0, %v5086
  %v5088 = vpop.f32.mrf.mxu0
  %5089 = vmatprep.mubr.f32.mxu0 0.0
  %5090 = vmatmul.mubr.f32.gmra.mxu0 %v4943
  %v5091 = vpop.f32.mrf.mxu0
  %v5092 = vadd.f32 0.0, %v5091
  %v5093 = vpop.f32.mrf.mxu0
  %5094 = vdwg.mxu0
  %5095 = vmatprep.subr.mxu0 0.0
  %5096 = vmatpush1.msra.mxu0 0.0
  %5097 = vmatprep.subr.mxu0 0.0
  %5098 = vmatpush1.msra.mxu0 0.0
  %5099 = vmatprep.subr.mxu0 0.0
  %5100 = vmatpush1.msra.mxu0 0.0
  %5101 = vmatprep.subr.mxu0 0.0
  %5102 = vmatpush1.msra.mxu0 0.0
  %5103 = vmatprep.subr.mxu0 0.0
  %5104 = vmatpush1.msra.mxu0 0.0
  %5105 = vmatprep.subr.mxu0 0.0
  %5106 = vmatpush1.msra.mxu0 0.0
  %5107 = vmatprep.subr.mxu0 0.0
  %5108 = vmatpush1.msra.mxu0 0.0
  %5109 = vmatprep.subr.mxu0 0.0
  %5110 = vmatpush1.msra.mxu0 0.0
  %5111 = vmatprep.subr.mxu0 0.0
  %5112 = vmatpush1.msra.mxu0 0.0
  %5113 = vmatprep.subr.mxu0 0.0
  %5114 = vmatpush1.msra.mxu0 0.0
  %5115 = vmatprep.subr.mxu0 0.0
  %5116 = vmatpush1.msra.mxu0 0.0
  %5117 = vmatprep.subr.mxu0 0.0
  %5118 = vmatpush1.msra.mxu0 0.0
  %5119 = vmatprep.subr.mxu0 0.0
  %5120 = vmatpush1.msra.mxu0 %v4133
  %5121 = vmatprep.subr.mxu0 0.0
  %5122 = vmatpush1.msra.mxu0 %v4132
  %5123 = vmatprep.subr.mxu0 0.0
  %5124 = vmatpush1.msra.mxu0 %v4131
  %5125 = vmatprep.subr.mxu0 0.0
  %5126 = vmatpush1.msra.mxu0 %v4130
  %5127 = vmatprep.subr.mxu0 0.0
  %5128 = vmatpush2.msra.mxu0 0.0
  %5129 = vmatprep.subr.mxu0 0.0
  %5130 = vmatpush2.msra.mxu0 0.0
  %5131 = vmatprep.subr.mxu0 0.0
  %5132 = vmatpush2.msra.mxu0 0.0
  %5133 = vmatprep.subr.mxu0 0.0
  %5134 = vmatpush2.msra.mxu0 0.0
  %5135 = vmatprep.subr.mxu0 0.0
  %5136 = vmatpush2.msra.mxu0 0.0
  %5137 = vmatprep.subr.mxu0 0.0
  %5138 = vmatpush2.msra.mxu0 0.0
  %5139 = vmatprep.subr.mxu0 0.0
  %5140 = vmatpush2.msra.mxu0 0.0
  %5141 = vmatprep.subr.mxu0 0.0
  %5142 = vmatpush2.msra.mxu0 0.0
  %5143 = vmatprep.subr.mxu0 0.0
  %5144 = vmatpush2.msra.mxu0 0.0
  %5145 = vmatprep.subr.mxu0 0.0
  %5146 = vmatpush2.msra.mxu0 0.0
  %5147 = vmatprep.subr.mxu0 0.0
  %5148 = vmatpush2.msra.mxu0 0.0
  %5149 = vmatprep.subr.mxu0 0.0
  %5150 = vmatpush2.msra.mxu0 0.0
  %5151 = vmatprep.subr.mxu0 0.0
  %5152 = vmatpush2.msra.mxu0 0.0
  %5153 = vmatprep.subr.mxu0 0.0
  %5154 = vmatpush2.msra.mxu0 0.0
  %5155 = vmatprep.subr.mxu0 0.0
  %5156 = vmatpush2.msra.mxu0 0.0
  %5157 = vmatprep.subr.mxu0 0.0
  %5158 = vmatpush2.msra.mxu0 0.0
  %5159 = vmatprep.mubr.f32.mxu0 0.0
  %5160 = vmatmul.mubr.f32.gmra.mxu0 %v4940
  %v5161 = vpop.f32.mrf.mxu0
  %v5162 = vadd.f32 0.0, %v5161
  %v5163 = vpop.f32.mrf.mxu0
  %5164 = vmatprep.mubr.f32.mxu0 0.0
  %5165 = vmatmul.mubr.f32.gmra.mxu0 %v4943
  %v5166 = vpop.f32.mrf.mxu0
  %v5167 = vadd.f32 0.0, %v5166
  %v5168 = vpop.f32.mrf.mxu0
  %5169 = vdwg.mxu0
  %5170 = vmatprep.subr.mxu0 0.0
  %5171 = vmatpush1.msra.mxu0 0.0
  %5172 = vmatprep.subr.mxu0 0.0
  %5173 = vmatpush1.msra.mxu0 0.0
  %5174 = vmatprep.subr.mxu0 0.0
  %5175 = vmatpush1.msra.mxu0 0.0
  %5176 = vmatprep.subr.mxu0 0.0
  %5177 = vmatpush1.msra.mxu0 0.0
  %5178 = vmatprep.subr.mxu0 0.0
  %5179 = vmatpush1.msra.mxu0 0.0
  %5180 = vmatprep.subr.mxu0 0.0
  %5181 = vmatpush1.msra.mxu0 0.0
  %5182 = vmatprep.subr.mxu0 0.0
  %5183 = vmatpush1.msra.mxu0 0.0
  %5184 = vmatprep.subr.mxu0 0.0
  %5185 = vmatpush1.msra.mxu0 0.0
  %5186 = vmatprep.subr.mxu0 0.0
  %5187 = vmatpush1.msra.mxu0 0.0
  %5188 = vmatprep.subr.mxu0 0.0
  %5189 = vmatpush1.msra.mxu0 0.0
  %5190 = vmatprep.subr.mxu0 0.0
  %5191 = vmatpush1.msra.mxu0 0.0
  %5192 = vmatprep.subr.mxu0 0.0
  %5193 = vmatpush1.msra.mxu0 0.0
  %5194 = vmatprep.subr.mxu0 0.0
  %5195 = vmatpush1.msra.mxu0 %v4223
  %5196 = vmatprep.subr.mxu0 0.0
  %5197 = vmatpush1.msra.mxu0 %v4222
  %5198 = vmatprep.subr.mxu0 0.0
  %5199 = vmatpush1.msra.mxu0 %v4221
  %5200 = vmatprep.subr.mxu0 0.0
  %5201 = vmatpush1.msra.mxu0 %v4220
  %5202 = vmatprep.subr.mxu0 0.0
  %5203 = vmatpush2.msra.mxu0 0.0
  %5204 = vmatprep.subr.mxu0 0.0
  %5205 = vmatpush2.msra.mxu0 0.0
  %5206 = vmatprep.subr.mxu0 0.0
  %5207 = vmatpush2.msra.mxu0 0.0
  %5208 = vmatprep.subr.mxu0 0.0
  %5209 = vmatpush2.msra.mxu0 0.0
  %5210 = vmatprep.subr.mxu0 0.0
  %5211 = vmatpush2.msra.mxu0 0.0
  %5212 = vmatprep.subr.mxu0 0.0
  %5213 = vmatpush2.msra.mxu0 0.0
  %5214 = vmatprep.subr.mxu0 0.0
  %5215 = vmatpush2.msra.mxu0 0.0
  %5216 = vmatprep.subr.mxu0 0.0
  %5217 = vmatpush2.msra.mxu0 0.0
  %5218 = vmatprep.subr.mxu0 0.0
  %5219 = vmatpush2.msra.mxu0 0.0
  %5220 = vmatprep.subr.mxu0 0.0
  %5221 = vmatpush2.msra.mxu0 0.0
  %5222 = vmatprep.subr.mxu0 0.0
  %5223 = vmatpush2.msra.mxu0 0.0
  %5224 = vmatprep.subr.mxu0 0.0
  %5225 = vmatpush2.msra.mxu0 0.0
  %5226 = vmatprep.subr.mxu0 0.0
  %5227 = vmatpush2.msra.mxu0 0.0
  %5228 = vmatprep.subr.mxu0 0.0
  %5229 = vmatpush2.msra.mxu0 0.0
  %5230 = vmatprep.subr.mxu0 0.0
  %5231 = vmatpush2.msra.mxu0 0.0
  %5232 = vmatprep.subr.mxu0 0.0
  %5233 = vmatpush2.msra.mxu0 0.0
  %5234 = vmatprep.mubr.f32.mxu0 0.0
  %5235 = vmatmul.mubr.f32.gmra.mxu0 %v4940
  %v5236 = vpop.f32.mrf.mxu0
  %v5237 = vadd.f32 0.0, %v5236
  %v5238 = vpop.f32.mrf.mxu0
  %5239 = vmatprep.mubr.f32.mxu0 0.0
  %5240 = vmatmul.mubr.f32.gmra.mxu0 %v4943
  %v5241 = vpop.f32.mrf.mxu0
  %v5242 = vadd.f32 0.0, %v5241
  %v5243 = vpop.f32.mrf.mxu0
  %5244 = vdwg.mxu0
  %5245 = vmatprep.subr.mxu0 0.0
  %5246 = vmatpush1.msra.mxu0 0.0
  %5247 = vmatprep.subr.mxu0 0.0
  %5248 = vmatpush1.msra.mxu0 0.0
  %5249 = vmatprep.subr.mxu0 0.0
  %5250 = vmatpush1.msra.mxu0 0.0
  %5251 = vmatprep.subr.mxu0 0.0
  %5252 = vmatpush1.msra.mxu0 0.0
  %5253 = vmatprep.subr.mxu0 0.0
  %5254 = vmatpush1.msra.mxu0 0.0
  %5255 = vmatprep.subr.mxu0 0.0
  %5256 = vmatpush1.msra.mxu0 0.0
  %5257 = vmatprep.subr.mxu0 0.0
  %5258 = vmatpush1.msra.mxu0 0.0
  %5259 = vmatprep.subr.mxu0 0.0
  %5260 = vmatpush1.msra.mxu0 0.0
  %5261 = vmatprep.subr.mxu0 0.0
  %5262 = vmatpush1.msra.mxu0 0.0
  %5263 = vmatprep.subr.mxu0 0.0
  %5264 = vmatpush1.msra.mxu0 0.0
  %5265 = vmatprep.subr.mxu0 0.0
  %5266 = vmatpush1.msra.mxu0 0.0
  %5267 = vmatprep.subr.mxu0 0.0
  %5268 = vmatpush1.msra.mxu0 0.0
  %5269 = vmatprep.subr.mxu0 0.0
  %5270 = vmatpush1.msra.mxu0 %v4313
  %5271 = vmatprep.subr.mxu0 0.0
  %5272 = vmatpush1.msra.mxu0 %v4312
  %5273 = vmatprep.subr.mxu0 0.0
  %5274 = vmatpush1.msra.mxu0 %v4311
  %5275 = vmatprep.subr.mxu0 0.0
  %5276 = vmatpush1.msra.mxu0 %v4310
  %5277 = vmatprep.subr.mxu0 0.0
  %5278 = vmatpush2.msra.mxu0 0.0
  %5279 = vmatprep.subr.mxu0 0.0
  %5280 = vmatpush2.msra.mxu0 0.0
  %5281 = vmatprep.subr.mxu0 0.0
  %5282 = vmatpush2.msra.mxu0 0.0
  %5283 = vmatprep.subr.mxu0 0.0
  %5284 = vmatpush2.msra.mxu0 0.0
  %5285 = vmatprep.subr.mxu0 0.0
  %5286 = vmatpush2.msra.mxu0 0.0
  %5287 = vmatprep.subr.mxu0 0.0
  %5288 = vmatpush2.msra.mxu0 0.0
  %5289 = vmatprep.subr.mxu0 0.0
  %5290 = vmatpush2.msra.mxu0 0.0
  %5291 = vmatprep.subr.mxu0 0.0
  %5292 = vmatpush2.msra.mxu0 0.0
  %5293 = vmatprep.subr.mxu0 0.0
  %5294 = vmatpush2.msra.mxu0 0.0
  %5295 = vmatprep.subr.mxu0 0.0
  %5296 = vmatpush2.msra.mxu0 0.0
  %5297 = vmatprep.subr.mxu0 0.0
  %5298 = vmatpush2.msra.mxu0 0.0
  %5299 = vmatprep.subr.mxu0 0.0
  %5300 = vmatpush2.msra.mxu0 0.0
  %5301 = vmatprep.subr.mxu0 0.0
  %5302 = vmatpush2.msra.mxu0 0.0
  %5303 = vmatprep.subr.mxu0 0.0
  %5304 = vmatpush2.msra.mxu0 0.0
  %5305 = vmatprep.subr.mxu0 0.0
  %5306 = vmatpush2.msra.mxu0 0.0
  %5307 = vmatprep.subr.mxu0 0.0
  %5308 = vmatpush2.msra.mxu0 0.0
  %5309 = vmatprep.mubr.f32.mxu0 0.0
  %5310 = vmatmul.mubr.f32.gmra.mxu0 %v4940
  %v5311 = vpop.f32.mrf.mxu0
  %v5312 = vadd.f32 0.0, %v5311
  %v5313 = vpop.f32.mrf.mxu0
  %5314 = vmatprep.mubr.f32.mxu0 0.0
  %5315 = vmatmul.mubr.f32.gmra.mxu0 %v4943
  %v5316 = vpop.f32.mrf.mxu0
  %v5317 = vadd.f32 0.0, %v5316
  %v5318 = vpop.f32.mrf.mxu0
  %5319 = vdwg.mxu0
  %5320 = vmatprep.subr.mxu0 0.0
  %5321 = vmatpush1.msra.mxu0 0.0
  %5322 = vmatprep.subr.mxu0 0.0
  %5323 = vmatpush1.msra.mxu0 0.0
  %5324 = vmatprep.subr.mxu0 0.0
  %5325 = vmatpush1.msra.mxu0 0.0
  %5326 = vmatprep.subr.mxu0 0.0
  %5327 = vmatpush1.msra.mxu0 0.0
  %5328 = vmatprep.subr.mxu0 0.0
  %5329 = vmatpush1.msra.mxu0 0.0
  %5330 = vmatprep.subr.mxu0 0.0
  %5331 = vmatpush1.msra.mxu0 0.0
  %5332 = vmatprep.subr.mxu0 0.0
  %5333 = vmatpush1.msra.mxu0 0.0
  %5334 = vmatprep.subr.mxu0 0.0
  %5335 = vmatpush1.msra.mxu0 0.0
  %5336 = vmatprep.subr.mxu0 0.0
  %5337 = vmatpush1.msra.mxu0 0.0
  %5338 = vmatprep.subr.mxu0 0.0
  %5339 = vmatpush1.msra.mxu0 0.0
  %5340 = vmatprep.subr.mxu0 0.0
  %5341 = vmatpush1.msra.mxu0 0.0
  %5342 = vmatprep.subr.mxu0 0.0
  %5343 = vmatpush1.msra.mxu0 0.0
  %5344 = vmatprep.subr.mxu0 0.0
  %5345 = vmatpush1.msra.mxu0 %v4403
  %5346 = vmatprep.subr.mxu0 0.0
  %5347 = vmatpush1.msra.mxu0 %v4402
  %5348 = vmatprep.subr.mxu0 0.0
  %5349 = vmatpush1.msra.mxu0 %v4401
  %5350 = vmatprep.subr.mxu0 0.0
  %5351 = vmatpush1.msra.mxu0 %v4400
  %5352 = vmatprep.subr.mxu0 0.0
  %5353 = vmatpush2.msra.mxu0 0.0
  %5354 = vmatprep.subr.mxu0 0.0
  %5355 = vmatpush2.msra.mxu0 0.0
  %5356 = vmatprep.subr.mxu0 0.0
  %5357 = vmatpush2.msra.mxu0 0.0
  %5358 = vmatprep.subr.mxu0 0.0
  %5359 = vmatpush2.msra.mxu0 0.0
  %5360 = vmatprep.subr.mxu0 0.0
  %5361 = vmatpush2.msra.mxu0 0.0
  %5362 = vmatprep.subr.mxu0 0.0
  %5363 = vmatpush2.msra.mxu0 0.0
  %5364 = vmatprep.subr.mxu0 0.0
  %5365 = vmatpush2.msra.mxu0 0.0
  %5366 = vmatprep.subr.mxu0 0.0
  %5367 = vmatpush2.msra.mxu0 0.0
  %5368 = vmatprep.subr.mxu0 0.0
  %5369 = vmatpush2.msra.mxu0 0.0
  %5370 = vmatprep.subr.mxu0 0.0
  %5371 = vmatpush2.msra.mxu0 0.0
  %5372 = vmatprep.subr.mxu0 0.0
  %5373 = vmatpush2.msra.mxu0 0.0
  %5374 = vmatprep.subr.mxu0 0.0
  %5375 = vmatpush2.msra.mxu0 0.0
  %5376 = vmatprep.subr.mxu0 0.0
  %5377 = vmatpush2.msra.mxu0 0.0
  %5378 = vmatprep.subr.mxu0 0.0
  %5379 = vmatpush2.msra.mxu0 0.0
  %5380 = vmatprep.subr.mxu0 0.0
  %5381 = vmatpush2.msra.mxu0 0.0
  %5382 = vmatprep.subr.mxu0 0.0
  %5383 = vmatpush2.msra.mxu0 0.0
  %5384 = vmatprep.mubr.f32.mxu0 0.0
  %5385 = vmatmul.mubr.f32.gmra.mxu0 %v4940
  %v5386 = vpop.f32.mrf.mxu0
  %v5387 = vadd.f32 0.0, %v5386
  %v5388 = vpop.f32.mrf.mxu0
  %5389 = vmatprep.mubr.f32.mxu0 0.0
  %5390 = vmatmul.mubr.f32.gmra.mxu0 %v4943
  %v5391 = vpop.f32.mrf.mxu0
  %v5392 = vadd.f32 0.0, %v5391
  %v5393 = vpop.f32.mrf.mxu0
  %5394 = vdwg.mxu0
  %5395 = vmatprep.subr.mxu0 0.0
  %5396 = vmatpush1.msra.mxu0 0.0
  %5397 = vmatprep.subr.mxu0 0.0
  %5398 = vmatpush1.msra.mxu0 0.0
  %5399 = vmatprep.subr.mxu0 0.0
  %5400 = vmatpush1.msra.mxu0 0.0
  %5401 = vmatprep.subr.mxu0 0.0
  %5402 = vmatpush1.msra.mxu0 0.0
  %5403 = vmatprep.subr.mxu0 0.0
  %5404 = vmatpush1.msra.mxu0 0.0
  %5405 = vmatprep.subr.mxu0 0.0
  %5406 = vmatpush1.msra.mxu0 0.0
  %5407 = vmatprep.subr.mxu0 0.0
  %5408 = vmatpush1.msra.mxu0 0.0
  %5409 = vmatprep.subr.mxu0 0.0
  %5410 = vmatpush1.msra.mxu0 0.0
  %5411 = vmatprep.subr.mxu0 0.0
  %5412 = vmatpush1.msra.mxu0 0.0
  %5413 = vmatprep.subr.mxu0 0.0
  %5414 = vmatpush1.msra.mxu0 0.0
  %5415 = vmatprep.subr.mxu0 0.0
  %5416 = vmatpush1.msra.mxu0 0.0
  %5417 = vmatprep.subr.mxu0 0.0
  %5418 = vmatpush1.msra.mxu0 0.0
  %5419 = vmatprep.subr.mxu0 0.0
  %5420 = vmatpush1.msra.mxu0 %v4493
  %5421 = vmatprep.subr.mxu0 0.0
  %5422 = vmatpush1.msra.mxu0 %v4492
  %5423 = vmatprep.subr.mxu0 0.0
  %5424 = vmatpush1.msra.mxu0 %v4491
  %5425 = vmatprep.subr.mxu0 0.0
  %5426 = vmatpush1.msra.mxu0 %v4490
  %5427 = vmatprep.subr.mxu0 0.0
  %5428 = vmatpush2.msra.mxu0 0.0
  %5429 = vmatprep.subr.mxu0 0.0
  %5430 = vmatpush2.msra.mxu0 0.0
  %5431 = vmatprep.subr.mxu0 0.0
  %5432 = vmatpush2.msra.mxu0 0.0
  %5433 = vmatprep.subr.mxu0 0.0
  %5434 = vmatpush2.msra.mxu0 0.0
  %5435 = vmatprep.subr.mxu0 0.0
  %5436 = vmatpush2.msra.mxu0 0.0
  %5437 = vmatprep.subr.mxu0 0.0
  %5438 = vmatpush2.msra.mxu0 0.0
  %5439 = vmatprep.subr.mxu0 0.0
  %5440 = vmatpush2.msra.mxu0 0.0
  %5441 = vmatprep.subr.mxu0 0.0
  %5442 = vmatpush2.msra.mxu0 0.0
  %5443 = vmatprep.subr.mxu0 0.0
  %5444 = vmatpush2.msra.mxu0 0.0
  %5445 = vmatprep.subr.mxu0 0.0
  %5446 = vmatpush2.msra.mxu0 0.0
  %5447 = vmatprep.subr.mxu0 0.0
  %5448 = vmatpush2.msra.mxu0 0.0
  %5449 = vmatprep.subr.mxu0 0.0
  %5450 = vmatpush2.msra.mxu0 0.0
  %5451 = vmatprep.subr.mxu0 0.0
  %5452 = vmatpush2.msra.mxu0 0.0
  %5453 = vmatprep.subr.mxu0 0.0
  %5454 = vmatpush2.msra.mxu0 0.0
  %5455 = vmatprep.subr.mxu0 0.0
  %5456 = vmatpush2.msra.mxu0 0.0
  %5457 = vmatprep.subr.mxu0 0.0
  %5458 = vmatpush2.msra.mxu0 0.0
  %5459 = vmatprep.mubr.f32.mxu0 0.0
  %5460 = vmatmul.mubr.f32.gmra.mxu0 %v4940
  %v5461 = vpop.f32.mrf.mxu0
  %v5462 = vadd.f32 0.0, %v5461
  %v5463 = vpop.f32.mrf.mxu0
  %5464 = vmatprep.mubr.f32.mxu0 0.0
  %5465 = vmatmul.mubr.f32.gmra.mxu0 %v4943
  %v5466 = vpop.f32.mrf.mxu0
  %v5467 = vadd.f32 0.0, %v5466
  %v5468 = vpop.f32.mrf.mxu0
  %5469 = vdwg.mxu0
  %5470 = vmatprep.subr.mxu0 0.0
  %5471 = vmatpush1.msra.mxu0 0.0
  %5472 = vmatprep.subr.mxu0 0.0
  %5473 = vmatpush1.msra.mxu0 0.0
  %5474 = vmatprep.subr.mxu0 0.0
  %5475 = vmatpush1.msra.mxu0 0.0
  %5476 = vmatprep.subr.mxu0 0.0
  %5477 = vmatpush1.msra.mxu0 0.0
  %5478 = vmatprep.subr.mxu0 0.0
  %5479 = vmatpush1.msra.mxu0 0.0
  %5480 = vmatprep.subr.mxu0 0.0
  %5481 = vmatpush1.msra.mxu0 0.0
  %5482 = vmatprep.subr.mxu0 0.0
  %5483 = vmatpush1.msra.mxu0 0.0
  %5484 = vmatprep.subr.mxu0 0.0
  %5485 = vmatpush1.msra.mxu0 0.0
  %5486 = vmatprep.subr.mxu0 0.0
  %5487 = vmatpush1.msra.mxu0 0.0
  %5488 = vmatprep.subr.mxu0 0.0
  %5489 = vmatpush1.msra.mxu0 0.0
  %5490 = vmatprep.subr.mxu0 0.0
  %5491 = vmatpush1.msra.mxu0 0.0
  %5492 = vmatprep.subr.mxu0 0.0
  %5493 = vmatpush1.msra.mxu0 0.0
  %5494 = vmatprep.subr.mxu0 0.0
  %5495 = vmatpush1.msra.mxu0 %v4583
  %5496 = vmatprep.subr.mxu0 0.0
  %5497 = vmatpush1.msra.mxu0 %v4582
  %5498 = vmatprep.subr.mxu0 0.0
  %5499 = vmatpush1.msra.mxu0 %v4581
  %5500 = vmatprep.subr.mxu0 0.0
  %5501 = vmatpush1.msra.mxu0 %v4580
  %5502 = vmatprep.subr.mxu0 0.0
  %5503 = vmatpush2.msra.mxu0 0.0
  %5504 = vmatprep.subr.mxu0 0.0
  %5505 = vmatpush2.msra.mxu0 0.0
  %5506 = vmatprep.subr.mxu0 0.0
  %5507 = vmatpush2.msra.mxu0 0.0
  %5508 = vmatprep.subr.mxu0 0.0
  %5509 = vmatpush2.msra.mxu0 0.0
  %5510 = vmatprep.subr.mxu0 0.0
  %5511 = vmatpush2.msra.mxu0 0.0
  %5512 = vmatprep.subr.mxu0 0.0
  %5513 = vmatpush2.msra.mxu0 0.0
  %5514 = vmatprep.subr.mxu0 0.0
  %5515 = vmatpush2.msra.mxu0 0.0
  %5516 = vmatprep.subr.mxu0 0.0
  %5517 = vmatpush2.msra.mxu0 0.0
  %5518 = vmatprep.subr.mxu0 0.0
  %5519 = vmatpush2.msra.mxu0 0.0
  %5520 = vmatprep.subr.mxu0 0.0
  %5521 = vmatpush2.msra.mxu0 0.0
  %5522 = vmatprep.subr.mxu0 0.0
  %5523 = vmatpush2.msra.mxu0 0.0
  %5524 = vmatprep.subr.mxu0 0.0
  %5525 = vmatpush2.msra.mxu0 0.0
  %5526 = vmatprep.subr.mxu0 0.0
  %5527 = vmatpush2.msra.mxu0 0.0
  %5528 = vmatprep.subr.mxu0 0.0
  %5529 = vmatpush2.msra.mxu0 0.0
  %5530 = vmatprep.subr.mxu0 0.0
  %5531 = vmatpush2.msra.mxu0 0.0
  %5532 = vmatprep.subr.mxu0 0.0
  %5533 = vmatpush2.msra.mxu0 0.0
  %5534 = vmatprep.mubr.f32.mxu0 0.0
  %5535 = vmatmul.mubr.f32.gmra.mxu0 %v4940
  %v5536 = vpop.f32.mrf.mxu0
  %v5537 = vadd.f32 0.0, %v5536
  %v5538 = vpop.f32.mrf.mxu0
  %5539 = vmatprep.mubr.f32.mxu0 0.0
  %5540 = vmatmul.mubr.f32.gmra.mxu0 %v4943
  %v5541 = vpop.f32.mrf.mxu0
  %v5542 = vadd.f32 0.0, %v5541
  %v5543 = vpop.f32.mrf.mxu0
  %5544 = vdwg.mxu0
  %5545 = vmatprep.subr.mxu0 0.0
  %5546 = vmatpush1.msra.mxu0 0.0
  %5547 = vmatprep.subr.mxu0 0.0
  %5548 = vmatpush1.msra.mxu0 0.0
  %5549 = vmatprep.subr.mxu0 0.0
  %5550 = vmatpush1.msra.mxu0 0.0
  %5551 = vmatprep.subr.mxu0 0.0
  %5552 = vmatpush1.msra.mxu0 0.0
  %5553 = vmatprep.subr.mxu0 0.0
  %5554 = vmatpush1.msra.mxu0 0.0
  %5555 = vmatprep.subr.mxu0 0.0
  %5556 = vmatpush1.msra.mxu0 0.0
  %5557 = vmatprep.subr.mxu0 0.0
  %5558 = vmatpush1.msra.mxu0 0.0
  %5559 = vmatprep.subr.mxu0 0.0
  %5560 = vmatpush1.msra.mxu0 0.0
  %5561 = vmatprep.subr.mxu0 0.0
  %5562 = vmatpush1.msra.mxu0 0.0
  %5563 = vmatprep.subr.mxu0 0.0
  %5564 = vmatpush1.msra.mxu0 0.0
  %5565 = vmatprep.subr.mxu0 0.0
  %5566 = vmatpush1.msra.mxu0 0.0
  %5567 = vmatprep.subr.mxu0 0.0
  %5568 = vmatpush1.msra.mxu0 0.0
  %5569 = vmatprep.subr.mxu0 0.0
  %5570 = vmatpush1.msra.mxu0 %v4673
  %5571 = vmatprep.subr.mxu0 0.0
  %5572 = vmatpush1.msra.mxu0 %v4672
  %5573 = vmatprep.subr.mxu0 0.0
  %5574 = vmatpush1.msra.mxu0 %v4671
  %5575 = vmatprep.subr.mxu0 0.0
  %5576 = vmatpush1.msra.mxu0 %v4670
  %5577 = vmatprep.subr.mxu0 0.0
  %5578 = vmatpush2.msra.mxu0 0.0
  %5579 = vmatprep.subr.mxu0 0.0
  %5580 = vmatpush2.msra.mxu0 0.0
  %5581 = vmatprep.subr.mxu0 0.0
  %5582 = vmatpush2.msra.mxu0 0.0
  %5583 = vmatprep.subr.mxu0 0.0
  %5584 = vmatpush2.msra.mxu0 0.0
  %5585 = vmatprep.subr.mxu0 0.0
  %5586 = vmatpush2.msra.mxu0 0.0
  %5587 = vmatprep.subr.mxu0 0.0
  %5588 = vmatpush2.msra.mxu0 0.0
  %5589 = vmatprep.subr.mxu0 0.0
  %5590 = vmatpush2.msra.mxu0 0.0
  %5591 = vmatprep.subr.mxu0 0.0
  %5592 = vmatpush2.msra.mxu0 0.0
  %5593 = vmatprep.subr.mxu0 0.0
  %5594 = vmatpush2.msra.mxu0 0.0
  %5595 = vmatprep.subr.mxu0 0.0
  %5596 = vmatpush2.msra.mxu0 0.0
  %5597 = vmatprep.subr.mxu0 0.0
  %5598 = vmatpush2.msra.mxu0 0.0
  %5599 = vmatprep.subr.mxu0 0.0
  %5600 = vmatpush2.msra.mxu0 0.0
  %5601 = vmatprep.subr.mxu0 0.0
  %5602 = vmatpush2.msra.mxu0 0.0
  %5603 = vmatprep.subr.mxu0 0.0
  %5604 = vmatpush2.msra.mxu0 0.0
  %5605 = vmatprep.subr.mxu0 0.0
  %5606 = vmatpush2.msra.mxu0 0.0
  %5607 = vmatprep.subr.mxu0 0.0
  %5608 = vmatpush2.msra.mxu0 0.0
  %5609 = vmatprep.mubr.f32.mxu0 0.0
  %5610 = vmatmul.mubr.f32.gmra.mxu0 %v4940
  %v5611 = vpop.f32.mrf.mxu0
  %v5612 = vadd.f32 0.0, %v5611
  %v5613 = vpop.f32.mrf.mxu0
  %5614 = vmatprep.mubr.f32.mxu0 0.0
  %5615 = vmatmul.mubr.f32.gmra.mxu0 %v4943
  %v5616 = vpop.f32.mrf.mxu0
  %v5617 = vadd.f32 0.0, %v5616
  %v5618 = vpop.f32.mrf.mxu0
  %5619 = vdwg.mxu0
  %v5620 = vld [vmem:[%s9] sm:$0xff]
  %v5621 = vld [vmem:[%s9 + $0x8] sm:$0xff]
  %v5622 = vld [vmem:[%s9 + $0x10] sm:$0xff]
  %v5623 = vld [vmem:[%s9 + $0x18] sm:$0xff]
  %v5624 = vld [vmem:[%s13 + $0x90] sm:$0xff]
  %v5625 = vld [vmem:[%s13 + $0x98] sm:$0xff]
  %5627 = vset.pattern.permute.xlu0 0
  %5628 = vperm.xlu0 %5627, %v5624
  %v5629 = vpop.permute.xlu0 %5628
  %5632 = vset.pattern.permute.xlu0 0
  %5633 = vperm.xlu0 %5632, %v5625
  %v5634 = vpop.permute.xlu0 %5633
  %v5637 = vsel %vm1510, %v5621, 0
  %v5640 = vsel %vm1510, %v5623, 0
  %5642 = vmatprep.subr.mxu0 0.0
  %5643 = vmatpush1.msra.mxu0 %v5542
  %5644 = vmatprep.subr.mxu0 0.0
  %5645 = vmatpush1.msra.mxu0 %v5537
  %5646 = vmatprep.subr.mxu0 0.0
  %5647 = vmatpush1.msra.mxu0 %v5467
  %5648 = vmatprep.subr.mxu0 0.0
  %5649 = vmatpush1.msra.mxu0 %v5462
  %5650 = vmatprep.subr.mxu0 0.0
  %5651 = vmatpush1.msra.mxu0 %v5392
  %5652 = vmatprep.subr.mxu0 0.0
  %5653 = vmatpush1.msra.mxu0 %v5387
  %5654 = vmatprep.subr.mxu0 0.0
  %5655 = vmatpush1.msra.mxu0 %v5317
  %5656 = vmatprep.subr.mxu0 0.0
  %5657 = vmatpush1.msra.mxu0 %v5312
  %5658 = vmatprep.subr.mxu0 0.0
  %5659 = vmatpush1.msra.mxu0 %v5242
  %5660 = vmatprep.subr.mxu0 0.0
  %5661 = vmatpush1.msra.mxu0 %v5237
  %5662 = vmatprep.subr.mxu0 0.0
  %5663 = vmatpush1.msra.mxu0 %v5167
  %5664 = vmatprep.subr.mxu0 0.0
  %5665 = vmatpush1.msra.mxu0 %v5162
  %5666 = vmatprep.subr.mxu0 0.0
  %5667 = vmatpush1.msra.mxu0 %v5092
  %5668 = vmatprep.subr.mxu0 0.0
  %5669 = vmatpush1.msra.mxu0 %v5087
  %5670 = vmatprep.subr.mxu0 0.0
  %5671 = vmatpush1.msra.mxu0 %v5017
  %5672 = vmatprep.subr.mxu0 0.0
  %5673 = vmatpush1.msra.mxu0 %v5012
  %5674 = vmatprep.subr.mxu0 0.0
  %5675 = vmatpush2.msra.mxu0 0.0
  %5676 = vmatprep.subr.mxu0 0.0
  %5677 = vmatpush2.msra.mxu0 0.0
  %5678 = vmatprep.subr.mxu0 0.0
  %5679 = vmatpush2.msra.mxu0 0.0
  %5680 = vmatprep.subr.mxu0 0.0
  %5681 = vmatpush2.msra.mxu0 0.0
  %5682 = vmatprep.subr.mxu0 0.0
  %5683 = vmatpush2.msra.mxu0 0.0
  %5684 = vmatprep.subr.mxu0 0.0
  %5685 = vmatpush2.msra.mxu0 0.0
  %5686 = vmatprep.subr.mxu0 0.0
  %5687 = vmatpush2.msra.mxu0 0.0
  %5688 = vmatprep.subr.mxu0 0.0
  %5689 = vmatpush2.msra.mxu0 0.0
  %5690 = vmatprep.subr.mxu0 0.0
  %5691 = vmatpush2.msra.mxu0 0.0
  %5692 = vmatprep.subr.mxu0 0.0
  %5693 = vmatpush2.msra.mxu0 0.0
  %5694 = vmatprep.subr.mxu0 0.0
  %5695 = vmatpush2.msra.mxu0 0.0
  %5696 = vmatprep.subr.mxu0 0.0
  %5697 = vmatpush2.msra.mxu0 0.0
  %5698 = vmatprep.subr.mxu0 0.0
  %5699 = vmatpush2.msra.mxu0 0.0
  %5700 = vmatprep.subr.mxu0 0.0
  %5701 = vmatpush2.msra.mxu0 0.0
  %5702 = vmatprep.subr.mxu0 0.0
  %5703 = vmatpush2.msra.mxu0 %v5617
  %5704 = vmatprep.subr.mxu0 0.0
  %5705 = vmatpush2.msra.mxu0 %v5612
  %5706 = vmatprep.mubr.f32.mxu0 %v5637
  %5707 = vmatmul.mubr.f32.gmra.mxu0 %v5620
  %v5708 = vpop.f32.mrf.mxu0
  %v5709 = vadd.f32 %v5629, %v5708
  %v5710 = vpop.f32.mrf.mxu0
  %5711 = vmatprep.mubr.f32.mxu0 %v5640
  %5712 = vmatmul.mubr.f32.gmra.mxu0 %v5622
  %v5713 = vpop.f32.mrf.mxu0
  %v5714 = vadd.f32 %v5634, %v5713
  %v5715 = vpop.f32.mrf.mxu0
  %5716 = vdwg.mxu0
  %vm5717 = vcmp.ge.f32.partialorder %v5709, 0.0
  %vm5718 = vcmp.ge.f32.partialorder %v5714, 0.0
  %v5719 = vmul.f32 %v5709, 0.1
  %v5720 = vmul.f32 %v5714, 0.1
  %v5721 = vsel %vm5717, %v5709, %v5719
  %v5722 = vsel %vm5718, %v5714, %v5720
  %v5723 = vld [vmem:[%s19] sm:$0xff]
  %v5724 = vld [vmem:[%s19 + $0x8] sm:$0xff]
  %v5725 = vld [vmem:[%s19 + $0x10] sm:$0xff]
  %v5726 = vld [vmem:[%s19 + $0x18] sm:$0xff]
  %v5728 = vsel %vm3403, %v5721, 0
  %v5731 = vsel %vm3403, %v5722, 0
  %5733 = vmatprep.subr.mxu0 0.0
  %5734 = vmatpush1.msra.mxu0 0.0
  %5735 = vmatprep.subr.mxu0 0.0
  %5736 = vmatpush1.msra.mxu0 0.0
  %5737 = vmatprep.subr.mxu0 0.0
  %5738 = vmatpush1.msra.mxu0 0.0
  %5739 = vmatprep.subr.mxu0 0.0
  %5740 = vmatpush1.msra.mxu0 0.0
  %5741 = vmatprep.subr.mxu0 0.0
  %5742 = vmatpush1.msra.mxu0 0.0
  %5743 = vmatprep.subr.mxu0 0.0
  %5744 = vmatpush1.msra.mxu0 0.0
  %5745 = vmatprep.subr.mxu0 0.0
  %5746 = vmatpush1.msra.mxu0 0.0
  %5747 = vmatprep.subr.mxu0 0.0
  %5748 = vmatpush1.msra.mxu0 0.0
  %5749 = vmatprep.subr.mxu0 0.0
  %5750 = vmatpush1.msra.mxu0 0.0
  %5751 = vmatprep.subr.mxu0 0.0
  %5752 = vmatpush1.msra.mxu0 0.0
  %5753 = vmatprep.subr.mxu0 0.0
  %5754 = vmatpush1.msra.mxu0 0.0
  %5755 = vmatprep.subr.mxu0 0.0
  %5756 = vmatpush1.msra.mxu0 0.0
  %5757 = vmatprep.subr.mxu0 0.0
  %5758 = vmatpush1.msra.mxu0 %v5726
  %5759 = vmatprep.subr.mxu0 0.0
  %5760 = vmatpush1.msra.mxu0 %v5725
  %5761 = vmatprep.subr.mxu0 0.0
  %5762 = vmatpush1.msra.mxu0 %v5724
  %5763 = vmatprep.subr.mxu0 0.0
  %5764 = vmatpush1.msra.mxu0 %v5723
  %5765 = vmatprep.subr.mxu0 0.0
  %5766 = vmatpush2.msra.mxu0 0.0
  %5767 = vmatprep.subr.mxu0 0.0
  %5768 = vmatpush2.msra.mxu0 0.0
  %5769 = vmatprep.subr.mxu0 0.0
  %5770 = vmatpush2.msra.mxu0 0.0
  %5771 = vmatprep.subr.mxu0 0.0
  %5772 = vmatpush2.msra.mxu0 0.0
  %5773 = vmatprep.subr.mxu0 0.0
  %5774 = vmatpush2.msra.mxu0 0.0
  %5775 = vmatprep.subr.mxu0 0.0
  %5776 = vmatpush2.msra.mxu0 0.0
  %5777 = vmatprep.subr.mxu0 0.0
  %5778 = vmatpush2.msra.mxu0 0.0
  %5779 = vmatprep.subr.mxu0 0.0
  %5780 = vmatpush2.msra.mxu0 0.0
  %5781 = vmatprep.subr.mxu0 0.0
  %5782 = vmatpush2.msra.mxu0 0.0
  %5783 = vmatprep.subr.mxu0 0.0
  %5784 = vmatpush2.msra.mxu0 0.0
  %5785 = vmatprep.subr.mxu0 0.0
  %5786 = vmatpush2.msra.mxu0 0.0
  %5787 = vmatprep.subr.mxu0 0.0
  %5788 = vmatpush2.msra.mxu0 0.0
  %5789 = vmatprep.subr.mxu0 0.0
  %5790 = vmatpush2.msra.mxu0 0.0
  %5791 = vmatprep.subr.mxu0 0.0
  %5792 = vmatpush2.msra.mxu0 0.0
  %5793 = vmatprep.subr.mxu0 0.0
  %5794 = vmatpush2.msra.mxu0 0.0
  %5795 = vmatprep.subr.mxu0 0.0
  %5796 = vmatpush2.msra.mxu0 0.0
  %5797 = vmatprep.mubr.f32.mxu0 0.0
  %5798 = vmatmul.mubr.f32.gmra.mxu0 %v5728
  %v5799 = vpop.f32.mrf.mxu0
  %v5800 = vadd.f32 0.0, %v5799
  %v5801 = vpop.f32.mrf.mxu0
  %5802 = vmatprep.mubr.f32.mxu0 0.0
  %5803 = vmatmul.mubr.f32.gmra.mxu0 %v5731
  %v5804 = vpop.f32.mrf.mxu0
  %v5805 = vadd.f32 0.0, %v5804
  %v5806 = vpop.f32.mrf.mxu0
  %5807 = vdwg.mxu0
  %5808 = vrot.lane.b32.xlu0 %v3489, 9
  %v5809 = vpop.permute.xlu0 %5808
  %5810 = vrot.lane.b32.xlu0 %v3490, 9
  %v5811 = vpop.permute.xlu0 %5810
  %v5812 = vmul.f32 %v5809, %v3601
  %v5813 = vmul.f32 %v5811, %v3601
  %5814 = vrot.lane.b32.xlu0 %v3489, 8
  %v5815 = vpop.permute.xlu0 %5814
  %5816 = vrot.lane.b32.xlu0 %v3490, 8
  %v5817 = vpop.permute.xlu0 %5816
  %v5818 = vmul.f32 %v5815, %v3625
  %v5819 = vmul.f32 %v5817, %v3625
  %5820 = vrot.lane.b32.xlu0 %v3489, 7
  %v5821 = vpop.permute.xlu0 %5820
  %5822 = vrot.lane.b32.xlu0 %v3490, 7
  %v5823 = vpop.permute.xlu0 %5822
  %v5824 = vmul.f32 %v5821, %v3653
  %v5825 = vmul.f32 %v5823, %v3653
  %5826 = vrot.lane.b32.xlu0 %v3489, 1
  %v5827 = vpop.permute.xlu0 %5826
  %5828 = vrot.lane.b32.xlu0 %v3490, 1
  %v5829 = vpop.permute.xlu0 %5828
  %v5830 = vmul.f32 %v5827, %v3681
  %v5831 = vmul.f32 %v5829, %v3681
  %v5832 = vmul.f32 %v3489, %v3705
  %v5833 = vmul.f32 %v3490, %v3705
  %5834 = vrot.lane.b32.xlu0 %v3489, 127
  %v5835 = vpop.permute.xlu0 %5834
  %5836 = vrot.lane.b32.xlu0 %v3490, 127
  %v5837 = vpop.permute.xlu0 %5836
  %v5838 = vmul.f32 %v5835, %v3733
  %v5839 = vmul.f32 %v5837, %v3733
  %5840 = vrot.lane.b32.xlu0 %v3489, 121
  %v5841 = vpop.permute.xlu0 %5840
  %5842 = vrot.lane.b32.xlu0 %v3490, 121
  %v5843 = vpop.permute.xlu0 %5842
  %v5844 = vmul.f32 %v5841, %v3761
  %v5845 = vmul.f32 %v5843, %v3761
  %5846 = vrot.lane.b32.xlu0 %v3489, 120
  %v5847 = vpop.permute.xlu0 %5846
  %5848 = vrot.lane.b32.xlu0 %v3490, 120
  %v5849 = vpop.permute.xlu0 %5848
  %v5850 = vmul.f32 %v5847, %v3789
  %v5851 = vmul.f32 %v5849, %v3789
  %5852 = vrot.lane.b32.xlu0 %v3489, 119
  %v5853 = vpop.permute.xlu0 %5852
  %5854 = vrot.lane.b32.xlu0 %v3490, 119
  %v5855 = vpop.permute.xlu0 %5854
  %v5856 = vmul.f32 %v5853, %v3817
  %v5857 = vmul.f32 %v5855, %v3817
  %v5858 = vld [vmem:[%s4] sm:$0xff]
  %v5859 = vld [vmem:[%s4 + $0x8] sm:$0xff]
  %v5860 = vld [vmem:[%s4 + $0x10] sm:$0xff]
  %v5861 = vld [vmem:[%s4 + $0x18] sm:$0xff]
  %v5862 = vld [vmem:[%s13 + $0x40] sm:$0xff]
  %v5863 = vld [vmem:[%s13 + $0x48] sm:$0xff]
  %5865 = vset.pattern.permute.xlu0 0
  %5866 = vperm.xlu0 %5865, %v5862
  %v5867 = vpop.permute.xlu0 %5866
  %5870 = vset.pattern.permute.xlu0 0
  %5871 = vperm.xlu0 %5870, %v5863
  %v5872 = vpop.permute.xlu0 %5871
  %v5875 = vsel %vm1510, %v5859, 0
  %v5878 = vsel %vm1510, %v5861, 0
  %5880 = vmatprep.subr.mxu0 0.0
  %5881 = vmatpush1.msra.mxu0 %v5851
  %5882 = vmatprep.subr.mxu0 0.0
  %5883 = vmatpush1.msra.mxu0 %v5850
  %5884 = vmatprep.subr.mxu0 0.0
  %5885 = vmatpush1.msra.mxu0 %v5845
  %5886 = vmatprep.subr.mxu0 0.0
  %5887 = vmatpush1.msra.mxu0 %v5844
  %5888 = vmatprep.subr.mxu0 0.0
  %5889 = vmatpush1.msra.mxu0 %v5839
  %5890 = vmatprep.subr.mxu0 0.0
  %5891 = vmatpush1.msra.mxu0 %v5838
  %5892 = vmatprep.subr.mxu0 0.0
  %5893 = vmatpush1.msra.mxu0 %v5833
  %5894 = vmatprep.subr.mxu0 0.0
  %5895 = vmatpush1.msra.mxu0 %v5832
  %5896 = vmatprep.subr.mxu0 0.0
  %5897 = vmatpush1.msra.mxu0 %v5831
  %5898 = vmatprep.subr.mxu0 0.0
  %5899 = vmatpush1.msra.mxu0 %v5830
  %5900 = vmatprep.subr.mxu0 0.0
  %5901 = vmatpush1.msra.mxu0 %v5825
  %5902 = vmatprep.subr.mxu0 0.0
  %5903 = vmatpush1.msra.mxu0 %v5824
  %5904 = vmatprep.subr.mxu0 0.0
  %5905 = vmatpush1.msra.mxu0 %v5819
  %5906 = vmatprep.subr.mxu0 0.0
  %5907 = vmatpush1.msra.mxu0 %v5818
  %5908 = vmatprep.subr.mxu0 0.0
  %5909 = vmatpush1.msra.mxu0 %v5813
  %5910 = vmatprep.subr.mxu0 0.0
  %5911 = vmatpush1.msra.mxu0 %v5812
  %5912 = vmatprep.subr.mxu0 0.0
  %5913 = vmatpush2.msra.mxu0 0.0
  %5914 = vmatprep.subr.mxu0 0.0
  %5915 = vmatpush2.msra.mxu0 0.0
  %5916 = vmatprep.subr.mxu0 0.0
  %5917 = vmatpush2.msra.mxu0 0.0
  %5918 = vmatprep.subr.mxu0 0.0
  %5919 = vmatpush2.msra.mxu0 0.0
  %5920 = vmatprep.subr.mxu0 0.0
  %5921 = vmatpush2.msra.mxu0 0.0
  %5922 = vmatprep.subr.mxu0 0.0
  %5923 = vmatpush2.msra.mxu0 0.0
  %5924 = vmatprep.subr.mxu0 0.0
  %5925 = vmatpush2.msra.mxu0 0.0
  %5926 = vmatprep.subr.mxu0 0.0
  %5927 = vmatpush2.msra.mxu0 0.0
  %5928 = vmatprep.subr.mxu0 0.0
  %5929 = vmatpush2.msra.mxu0 0.0
  %5930 = vmatprep.subr.mxu0 0.0
  %5931 = vmatpush2.msra.mxu0 0.0
  %5932 = vmatprep.subr.mxu0 0.0
  %5933 = vmatpush2.msra.mxu0 0.0
  %5934 = vmatprep.subr.mxu0 0.0
  %5935 = vmatpush2.msra.mxu0 0.0
  %5936 = vmatprep.subr.mxu0 0.0
  %5937 = vmatpush2.msra.mxu0 0.0
  %5938 = vmatprep.subr.mxu0 0.0
  %5939 = vmatpush2.msra.mxu0 0.0
  %5940 = vmatprep.subr.mxu0 0.0
  %5941 = vmatpush2.msra.mxu0 %v5857
  %5942 = vmatprep.subr.mxu0 0.0
  %5943 = vmatpush2.msra.mxu0 %v5856
  %5944 = vmatprep.mubr.f32.mxu0 %v5875
  %5945 = vmatmul.mubr.f32.gmra.mxu0 %v5858
  %v5946 = vpop.f32.mrf.mxu0
  %v5947 = vadd.f32 %v5867, %v5946
  %v5948 = vpop.f32.mrf.mxu0
  %5949 = vmatprep.mubr.f32.mxu0 %v5878
  %5950 = vmatmul.mubr.f32.gmra.mxu0 %v5860
  %v5951 = vpop.f32.mrf.mxu0
  %v5952 = vadd.f32 %v5872, %v5951
  %v5953 = vpop.f32.mrf.mxu0
  %5954 = vdwg.mxu0
  %vm5955 = vcmp.ge.f32.partialorder %v5947, 0.0
  %vm5956 = vcmp.ge.f32.partialorder %v5952, 0.0
  %v5957 = vmul.f32 %v5947, 0.1
  %v5958 = vmul.f32 %v5952, 0.1
  %v5959 = vsel %vm5955, %v5947, %v5957
  %v5960 = vsel %vm5956, %v5952, %v5958
  %v5961 = vadd.f32 %v5959, %v5800
  %v5962 = vadd.f32 %v5960, %v5805
  %v5963 = vld [vmem:[%s5] sm:$0xff]
  %v5964 = vld [vmem:[%s5 + $0x8] sm:$0xff]
  %v5965 = vld [vmem:[%s13 + $0x50] sm:$0xff]
  %v5966 = vld [vmem:[%s13 + $0x58] sm:$0xff]
  %5968 = vset.pattern.permute.xlu0 0
  %5969 = vperm.xlu0 %5968, %v5965
  %v5970 = vpop.permute.xlu0 %5969
  %5973 = vset.pattern.permute.xlu0 0
  %5974 = vperm.xlu0 %5973, %v5966
  %v5975 = vpop.permute.xlu0 %5974
  %v5978 = vsel %vm1510, %v5963, 0
  %v5981 = vsel %vm1510, %v5964, 0
  %5983 = vmatprep.subr.mxu0 0.0
  %5984 = vmatpush1.msra.mxu0 0.0
  %5985 = vmatprep.subr.mxu0 0.0
  %5986 = vmatpush1.msra.mxu0 0.0
  %5987 = vmatprep.subr.mxu0 0.0
  %5988 = vmatpush1.msra.mxu0 0.0
  %5989 = vmatprep.subr.mxu0 0.0
  %5990 = vmatpush1.msra.mxu0 0.0
  %5991 = vmatprep.subr.mxu0 0.0
  %5992 = vmatpush1.msra.mxu0 0.0
  %5993 = vmatprep.subr.mxu0 0.0
  %5994 = vmatpush1.msra.mxu0 0.0
  %5995 = vmatprep.subr.mxu0 0.0
  %5996 = vmatpush1.msra.mxu0 0.0
  %5997 = vmatprep.subr.mxu0 0.0
  %5998 = vmatpush1.msra.mxu0 0.0
  %5999 = vmatprep.subr.mxu0 0.0
  %6000 = vmatpush1.msra.mxu0 0.0
  %6001 = vmatprep.subr.mxu0 0.0
  %6002 = vmatpush1.msra.mxu0 0.0
  %6003 = vmatprep.subr.mxu0 0.0
  %6004 = vmatpush1.msra.mxu0 0.0
  %6005 = vmatprep.subr.mxu0 0.0
  %6006 = vmatpush1.msra.mxu0 0.0
  %6007 = vmatprep.subr.mxu0 0.0
  %6008 = vmatpush1.msra.mxu0 0.0
  %6009 = vmatprep.subr.mxu0 0.0
  %6010 = vmatpush1.msra.mxu0 0.0
  %6011 = vmatprep.subr.mxu0 0.0
  %6012 = vmatpush1.msra.mxu0 %v5962
  %6013 = vmatprep.subr.mxu0 0.0
  %6014 = vmatpush1.msra.mxu0 %v5961
  %6015 = vmatprep.subr.mxu0 0.0
  %6016 = vmatpush2.msra.mxu0 0.0
  %6017 = vmatprep.subr.mxu0 0.0
  %6018 = vmatpush2.msra.mxu0 0.0
  %6019 = vmatprep.subr.mxu0 0.0
  %6020 = vmatpush2.msra.mxu0 0.0
  %6021 = vmatprep.subr.mxu0 0.0
  %6022 = vmatpush2.msra.mxu0 0.0
  %6023 = vmatprep.subr.mxu0 0.0
  %6024 = vmatpush2.msra.mxu0 0.0
  %6025 = vmatprep.subr.mxu0 0.0
  %6026 = vmatpush2.msra.mxu0 0.0
  %6027 = vmatprep.subr.mxu0 0.0
  %6028 = vmatpush2.msra.mxu0 0.0
  %6029 = vmatprep.subr.mxu0 0.0
  %6030 = vmatpush2.msra.mxu0 0.0
  %6031 = vmatprep.subr.mxu0 0.0
  %6032 = vmatpush2.msra.mxu0 0.0
  %6033 = vmatprep.subr.mxu0 0.0
  %6034 = vmatpush2.msra.mxu0 0.0
  %6035 = vmatprep.subr.mxu0 0.0
  %6036 = vmatpush2.msra.mxu0 0.0
  %6037 = vmatprep.subr.mxu0 0.0
  %6038 = vmatpush2.msra.mxu0 0.0
  %6039 = vmatprep.subr.mxu0 0.0
  %6040 = vmatpush2.msra.mxu0 0.0
  %6041 = vmatprep.subr.mxu0 0.0
  %6042 = vmatpush2.msra.mxu0 0.0
  %6043 = vmatprep.subr.mxu0 0.0
  %6044 = vmatpush2.msra.mxu0 0.0
  %6045 = vmatprep.subr.mxu0 0.0
  %6046 = vmatpush2.msra.mxu0 0.0
  %6047 = vmatprep.mubr.f32.mxu0 0.0
  %6048 = vmatmul.mubr.f32.gmra.mxu0 %v5978
  %v6049 = vpop.f32.mrf.mxu0
  %v6050 = vadd.f32 %v5970, %v6049
  %v6051 = vpop.f32.mrf.mxu0
  %6052 = vmatprep.mubr.f32.mxu0 0.0
  %6053 = vmatmul.mubr.f32.gmra.mxu0 %v5981
  %v6054 = vpop.f32.mrf.mxu0
  %v6055 = vadd.f32 %v5975, %v6054
  %v6056 = vpop.f32.mrf.mxu0
  %6057 = vdwg.mxu0
  %vm6058 = vcmp.ge.f32.partialorder %v6050, 0.0
  %vm6059 = vcmp.ge.f32.partialorder %v6055, 0.0
  %v6060 = vmul.f32 %v6050, 0.1
  %v6061 = vmul.f32 %v6055, 0.1
  %v6062 = vsel %vm6058, %v6050, %v6060
  %v6063 = vsel %vm6059, %v6055, %v6061
  %v6064 = vld [vmem:[%s20] sm:$0xff]
  %v6065 = vld [vmem:[%s20 + $0x8] sm:$0xff]
  %v6066 = vld [vmem:[%s20 + $0x10] sm:$0xff]
  %v6067 = vld [vmem:[%s20 + $0x18] sm:$0xff]
  %v6068 = vld [vmem:[%s20 + $0x20] sm:$0xff]
  %v6069 = vld [vmem:[%s20 + $0x28] sm:$0xff]
  %v6070 = vld [vmem:[%s20 + $0x30] sm:$0xff]
  %v6071 = vld [vmem:[%s20 + $0x38] sm:$0xff]
  %v6072 = vld [vmem:[%s20 + $0x40] sm:$0xff]
  %v6073 = vld [vmem:[%s20 + $0x48] sm:$0xff]
  %v6074 = vld [vmem:[%s20 + $0x50] sm:$0xff]
  %v6075 = vld [vmem:[%s20 + $0x58] sm:$0xff]
  %v6076 = vld [vmem:[%s20 + $0x60] sm:$0xff]
  %v6077 = vld [vmem:[%s20 + $0x68] sm:$0xff]
  %v6078 = vld [vmem:[%s20 + $0x70] sm:$0xff]
  %v6079 = vld [vmem:[%s20 + $0x78] sm:$0xff]
  %v6080 = vld [vmem:[%s20 + $0x80] sm:$0xff]
  %v6081 = vld [vmem:[%s20 + $0x88] sm:$0xff]
  %v6082 = vld [vmem:[%s20 + $0x90] sm:$0xff]
  %v6083 = vld [vmem:[%s20 + $0x98] sm:$0xff]
  %v6084 = vld [vmem:[%s20 + $0xa0] sm:$0xff]
  %v6085 = vld [vmem:[%s20 + $0xa8] sm:$0xff]
  %v6086 = vld [vmem:[%s20 + $0xb0] sm:$0xff]
  %v6087 = vld [vmem:[%s20 + $0xb8] sm:$0xff]
  %v6088 = vld [vmem:[%s20 + $0xc0] sm:$0xff]
  %v6089 = vld [vmem:[%s20 + $0xc8] sm:$0xff]
  %v6090 = vld [vmem:[%s20 + $0xd0] sm:$0xff]
  %v6091 = vld [vmem:[%s20 + $0xd8] sm:$0xff]
  %v6092 = vld [vmem:[%s20 + $0xe0] sm:$0xff]
  %v6093 = vld [vmem:[%s20 + $0xe8] sm:$0xff]
  %v6094 = vld [vmem:[%s20 + $0xf0] sm:$0xff]
  %v6095 = vld [vmem:[%s20 + $0xf8] sm:$0xff]
  %v6096 = vld [vmem:[%s20 + $0x100] sm:$0xff]
  %v6097 = vld [vmem:[%s20 + $0x108] sm:$0xff]
  %v6098 = vld [vmem:[%s20 + $0x110] sm:$0xff]
  %v6099 = vld [vmem:[%s20 + $0x118] sm:$0xff]
  %v6100 = vld [vmem:[%s20 + $0x120] sm:$0xff]
  %v6101 = vld [vmem:[%s20 + $0x128] sm:$0xff]
  %v6102 = vld [vmem:[%s20 + $0x130] sm:$0xff]
  %v6103 = vld [vmem:[%s20 + $0x138] sm:$0xff]
  %v6104 = vld [vmem:[%s20 + $0x140] sm:$0xff]
  %v6105 = vld [vmem:[%s20 + $0x148] sm:$0xff]
  %v6106 = vld [vmem:[%s20 + $0x150] sm:$0xff]
  %v6107 = vld [vmem:[%s20 + $0x158] sm:$0xff]
  %v6108 = vld [vmem:[%s20 + $0x160] sm:$0xff]
  %v6109 = vld [vmem:[%s20 + $0x168] sm:$0xff]
  %v6110 = vld [vmem:[%s20 + $0x170] sm:$0xff]
  %v6111 = vld [vmem:[%s20 + $0x178] sm:$0xff]
  %v6112 = vld [vmem:[%s20 + $0x180] sm:$0xff]
  %v6113 = vld [vmem:[%s20 + $0x188] sm:$0xff]
  %v6114 = vld [vmem:[%s20 + $0x190] sm:$0xff]
  %v6115 = vld [vmem:[%s20 + $0x198] sm:$0xff]
  %v6116 = vld [vmem:[%s20 + $0x1a0] sm:$0xff]
  %v6117 = vld [vmem:[%s20 + $0x1a8] sm:$0xff]
  %v6118 = vld [vmem:[%s20 + $0x1b0] sm:$0xff]
  %v6119 = vld [vmem:[%s20 + $0x1b8] sm:$0xff]
  %v6120 = vld [vmem:[%s20 + $0x1c0] sm:$0xff]
  %v6121 = vld [vmem:[%s20 + $0x1c8] sm:$0xff]
  %v6122 = vld [vmem:[%s20 + $0x1d0] sm:$0xff]
  %v6123 = vld [vmem:[%s20 + $0x1d8] sm:$0xff]
  %v6124 = vld [vmem:[%s20 + $0x1e0] sm:$0xff]
  %v6125 = vld [vmem:[%s20 + $0x1e8] sm:$0xff]
  %v6126 = vld [vmem:[%s20 + $0x1f0] sm:$0xff]
  %v6127 = vld [vmem:[%s20 + $0x1f8] sm:$0xff]
  %6128 = vmatprep.subr.mxu0 %v6125
  %6129 = vmatpush1.msra.mxu0 %v6124
  %6130 = vmatprep.subr.mxu0 %v6121
  %6131 = vmatpush1.msra.mxu0 %v6120
  %6132 = vmatprep.subr.mxu0 %v6117
  %6133 = vmatpush1.msra.mxu0 %v6116
  %6134 = vmatprep.subr.mxu0 %v6113
  %6135 = vmatpush1.msra.mxu0 %v6112
  %6136 = vmatprep.subr.mxu0 %v6109
  %6137 = vmatpush1.msra.mxu0 %v6108
  %6138 = vmatprep.subr.mxu0 %v6105
  %6139 = vmatpush1.msra.mxu0 %v6104
  %6140 = vmatprep.subr.mxu0 %v6101
  %6141 = vmatpush1.msra.mxu0 %v6100
  %6142 = vmatprep.subr.mxu0 %v6097
  %6143 = vmatpush1.msra.mxu0 %v6096
  %6144 = vmatprep.subr.mxu0 %v6093
  %6145 = vmatpush1.msra.mxu0 %v6092
  %6146 = vmatprep.subr.mxu0 %v6089
  %6147 = vmatpush1.msra.mxu0 %v6088
  %6148 = vmatprep.subr.mxu0 %v6085
  %6149 = vmatpush1.msra.mxu0 %v6084
  %6150 = vmatprep.subr.mxu0 %v6081
  %6151 = vmatpush1.msra.mxu0 %v6080
  %6152 = vmatprep.subr.mxu0 %v6077
  %6153 = vmatpush1.msra.mxu0 %v6076
  %6154 = vmatprep.subr.mxu0 %v6073
  %6155 = vmatpush1.msra.mxu0 %v6072
  %6156 = vmatprep.subr.mxu0 %v6069
  %6157 = vmatpush1.msra.mxu0 %v6068
  %6158 = vmatprep.subr.mxu0 %v6065
  %6159 = vmatpush1.msra.mxu0 %v6064
  %6160 = vmatprep.subr.mxu0 0.0
  %6161 = vmatpush2.msra.mxu0 0.0
  %6162 = vmatprep.subr.mxu0 0.0
  %6163 = vmatpush2.msra.mxu0 0.0
  %6164 = vmatprep.subr.mxu0 0.0
  %6165 = vmatpush2.msra.mxu0 0.0
  %6166 = vmatprep.subr.mxu0 0.0
  %6167 = vmatpush2.msra.mxu0 0.0
  %6168 = vmatprep.subr.mxu0 0.0
  %6169 = vmatpush2.msra.mxu0 0.0
  %6170 = vmatprep.subr.mxu0 0.0
  %6171 = vmatpush2.msra.mxu0 0.0
  %6172 = vmatprep.subr.mxu0 0.0
  %6173 = vmatpush2.msra.mxu0 0.0
  %6174 = vmatprep.subr.mxu0 0.0
  %6175 = vmatpush2.msra.mxu0 0.0
  %6176 = vmatprep.subr.mxu0 0.0
  %6177 = vmatpush2.msra.mxu0 0.0
  %6178 = vmatprep.subr.mxu0 0.0
  %6179 = vmatpush2.msra.mxu0 0.0
  %6180 = vmatprep.subr.mxu0 0.0
  %6181 = vmatpush2.msra.mxu0 0.0
  %6182 = vmatprep.subr.mxu0 0.0
  %6183 = vmatpush2.msra.mxu0 0.0
  %6184 = vmatprep.subr.mxu0 0.0
  %6185 = vmatpush2.msra.mxu0 0.0
  %6186 = vmatprep.subr.mxu0 0.0
  %6187 = vmatpush2.msra.mxu0 0.0
  %6188 = vmatprep.subr.mxu0 0.0
  %6189 = vmatpush2.msra.mxu0 0.0
  %6190 = vmatprep.subr.mxu0 0.0
  %6191 = vmatpush2.msra.mxu0 0.0
  %6192 = vmatprep.mubr.f32.mxu0 0.0
  %6193 = vmatmul.mubr.f32.gmra.mxu0 %v6062
  %v6194 = vpop.f32.mrf.mxu0
  %v6195 = vadd.f32 0.0, %v6194
  %v6196 = vpop.f32.mrf.mxu0
  %v6197 = vadd.f32 0.0, %v6196
  %6198 = vmatprep.mubr.f32.mxu0 0.0
  %6199 = vmatmul.mubr.f32.gmra.mxu0 %v6063
  %v6200 = vpop.f32.mrf.mxu0
  %v6201 = vadd.f32 0.0, %v6200
  %v6202 = vpop.f32.mrf.mxu0
  %v6203 = vadd.f32 0.0, %v6202
  %6204 = vdwg.mxu0
  %6205 = vmatprep.subr.mxu0 %v6127
  %6206 = vmatpush1.msra.mxu0 %v6126
  %6207 = vmatprep.subr.mxu0 %v6123
  %6208 = vmatpush1.msra.mxu0 %v6122
  %6209 = vmatprep.subr.mxu0 %v6119
  %6210 = vmatpush1.msra.mxu0 %v6118
  %6211 = vmatprep.subr.mxu0 %v6115
  %6212 = vmatpush1.msra.mxu0 %v6114
  %6213 = vmatprep.subr.mxu0 %v6111
  %6214 = vmatpush1.msra.mxu0 %v6110
  %6215 = vmatprep.subr.mxu0 %v6107
  %6216 = vmatpush1.msra.mxu0 %v6106
  %6217 = vmatprep.subr.mxu0 %v6103
  %6218 = vmatpush1.msra.mxu0 %v6102
  %6219 = vmatprep.subr.mxu0 %v6099
  %6220 = vmatpush1.msra.mxu0 %v6098
  %6221 = vmatprep.subr.mxu0 %v6095
  %6222 = vmatpush1.msra.mxu0 %v6094
  %6223 = vmatprep.subr.mxu0 %v6091
  %6224 = vmatpush1.msra.mxu0 %v6090
  %6225 = vmatprep.subr.mxu0 %v6087
  %6226 = vmatpush1.msra.mxu0 %v6086
  %6227 = vmatprep.subr.mxu0 %v6083
  %6228 = vmatpush1.msra.mxu0 %v6082
  %6229 = vmatprep.subr.mxu0 %v6079
  %6230 = vmatpush1.msra.mxu0 %v6078
  %6231 = vmatprep.subr.mxu0 %v6075
  %6232 = vmatpush1.msra.mxu0 %v6074
  %6233 = vmatprep.subr.mxu0 %v6071
  %6234 = vmatpush1.msra.mxu0 %v6070
  %6235 = vmatprep.subr.mxu0 %v6067
  %6236 = vmatpush1.msra.mxu0 %v6066
  %6237 = vmatprep.subr.mxu0 0.0
  %6238 = vmatpush2.msra.mxu0 0.0
  %6239 = vmatprep.subr.mxu0 0.0
  %6240 = vmatpush2.msra.mxu0 0.0
  %6241 = vmatprep.subr.mxu0 0.0
  %6242 = vmatpush2.msra.mxu0 0.0
  %6243 = vmatprep.subr.mxu0 0.0
  %6244 = vmatpush2.msra.mxu0 0.0
  %6245 = vmatprep.subr.mxu0 0.0
  %6246 = vmatpush2.msra.mxu0 0.0
  %6247 = vmatprep.subr.mxu0 0.0
  %6248 = vmatpush2.msra.mxu0 0.0
  %6249 = vmatprep.subr.mxu0 0.0
  %6250 = vmatpush2.msra.mxu0 0.0
  %6251 = vmatprep.subr.mxu0 0.0
  %6252 = vmatpush2.msra.mxu0 0.0
  %6253 = vmatprep.subr.mxu0 0.0
  %6254 = vmatpush2.msra.mxu0 0.0
  %6255 = vmatprep.subr.mxu0 0.0
  %6256 = vmatpush2.msra.mxu0 0.0
  %6257 = vmatprep.subr.mxu0 0.0
  %6258 = vmatpush2.msra.mxu0 0.0
  %6259 = vmatprep.subr.mxu0 0.0
  %6260 = vmatpush2.msra.mxu0 0.0
  %6261 = vmatprep.subr.mxu0 0.0
  %6262 = vmatpush2.msra.mxu0 0.0
  %6263 = vmatprep.subr.mxu0 0.0
  %6264 = vmatpush2.msra.mxu0 0.0
  %6265 = vmatprep.subr.mxu0 0.0
  %6266 = vmatpush2.msra.mxu0 0.0
  %6267 = vmatprep.subr.mxu0 0.0
  %6268 = vmatpush2.msra.mxu0 0.0
  %6269 = vmatprep.mubr.f32.mxu0 0.0
  %6270 = vmatmul.mubr.f32.gmra.mxu0 %v6062
  %v6271 = vpop.f32.mrf.mxu0
  %v6272 = vadd.f32 0.0, %v6271
  %v6273 = vpop.f32.mrf.mxu0
  %v6274 = vadd.f32 0.0, %v6273
  %6275 = vmatprep.mubr.f32.mxu0 0.0
  %6276 = vmatmul.mubr.f32.gmra.mxu0 %v6063
  %v6277 = vpop.f32.mrf.mxu0
  %v6278 = vadd.f32 0.0, %v6277
  %v6279 = vpop.f32.mrf.mxu0
  %v6280 = vadd.f32 0.0, %v6279
  %6281 = vdwg.mxu0
  %6282 = vrot.lane.b32.xlu0 %v6195, 17
  %v6283 = vpop.permute.xlu0 %6282
  %6284 = vrot.lane.b32.xlu0 %v6201, 17
  %v6285 = vpop.permute.xlu0 %6284
  %6286 = vrot.lane.b32.xlu0 %v6197, 17
  %v6287 = vpop.permute.xlu0 %6286
  %6288 = vrot.lane.b32.xlu0 %v6203, 17
  %v6289 = vpop.permute.xlu0 %6288
  %6290 = vrot.lane.b32.xlu0 %v6272, 17
  %v6291 = vpop.permute.xlu0 %6290
  %6292 = vrot.lane.b32.xlu0 %v6278, 17
  %v6293 = vpop.permute.xlu0 %6292
  %6294 = vrot.lane.b32.xlu0 %v6274, 17
  %v6295 = vpop.permute.xlu0 %6294
  %6296 = vrot.lane.b32.xlu0 %v6280, 17
  %v6297 = vpop.permute.xlu0 %6296
  %v6298 = vsel %vm144, %v6291, %v6295
  %v6299 = vsel %vm144, %v6293, %v6297
  %v6300 = vsel %vm144, %v6287, %v6291
  %v6301 = vsel %vm144, %v6289, %v6293
  %v6302 = vsel %vm144, %v6283, %v6287
  %v6303 = vsel %vm144, %v6285, %v6289
  %v6304 = vsel %vm144, %v6295, %v6283
  %v6305 = vsel %vm144, %v6297, %v6285
  %v6306 = vmul.f32 %v6304, %v174
  %v6307 = vmul.f32 %v6302, %v178
  %v6308 = vmul.f32 %v6300, %v182
  %v6309 = vmul.f32 %v6298, %v186
  %v6310 = vmul.f32 %v6305, %v174
  %v6311 = vmul.f32 %v6303, %v178
  %v6312 = vmul.f32 %v6301, %v182
  %v6313 = vmul.f32 %v6299, %v186
  %6314 = vrot.lane.b32.xlu0 %v6195, 16
  %v6315 = vpop.permute.xlu0 %6314
  %6316 = vrot.lane.b32.xlu0 %v6201, 16
  %v6317 = vpop.permute.xlu0 %6316
  %6318 = vrot.lane.b32.xlu0 %v6197, 16
  %v6319 = vpop.permute.xlu0 %6318
  %6320 = vrot.lane.b32.xlu0 %v6203, 16
  %v6321 = vpop.permute.xlu0 %6320
  %6322 = vrot.lane.b32.xlu0 %v6272, 16
  %v6323 = vpop.permute.xlu0 %6322
  %6324 = vrot.lane.b32.xlu0 %v6278, 16
  %v6325 = vpop.permute.xlu0 %6324
  %6326 = vrot.lane.b32.xlu0 %v6274, 16
  %v6327 = vpop.permute.xlu0 %6326
  %6328 = vrot.lane.b32.xlu0 %v6280, 16
  %v6329 = vpop.permute.xlu0 %6328
  %v6330 = vsel %vm306, %v6323, %v6327
  %v6331 = vsel %vm306, %v6325, %v6329
  %v6332 = vsel %vm306, %v6319, %v6323
  %v6333 = vsel %vm306, %v6321, %v6325
  %v6334 = vsel %vm306, %v6315, %v6319
  %v6335 = vsel %vm306, %v6317, %v6321
  %v6336 = vsel %vm306, %v6327, %v6315
  %v6337 = vsel %vm306, %v6329, %v6317
  %v6338 = vmul.f32 %v6336, %v336
  %v6339 = vmul.f32 %v6334, %v340
  %v6340 = vmul.f32 %v6332, %v344
  %v6341 = vmul.f32 %v6330, %v348
  %v6342 = vmul.f32 %v6337, %v336
  %v6343 = vmul.f32 %v6335, %v340
  %v6344 = vmul.f32 %v6333, %v344
  %v6345 = vmul.f32 %v6331, %v348
  %6346 = vrot.lane.b32.xlu0 %v6195, 15
  %v6347 = vpop.permute.xlu0 %6346
  %6348 = vrot.lane.b32.xlu0 %v6201, 15
  %v6349 = vpop.permute.xlu0 %6348
  %6350 = vrot.lane.b32.xlu0 %v6197, 15
  %v6351 = vpop.permute.xlu0 %6350
  %6352 = vrot.lane.b32.xlu0 %v6203, 15
  %v6353 = vpop.permute.xlu0 %6352
  %6354 = vrot.lane.b32.xlu0 %v6272, 15
  %v6355 = vpop.permute.xlu0 %6354
  %6356 = vrot.lane.b32.xlu0 %v6278, 15
  %v6357 = vpop.permute.xlu0 %6356
  %6358 = vrot.lane.b32.xlu0 %v6274, 15
  %v6359 = vpop.permute.xlu0 %6358
  %6360 = vrot.lane.b32.xlu0 %v6280, 15
  %v6361 = vpop.permute.xlu0 %6360
  %v6362 = vsel %vm468, %v6355, %v6359
  %v6363 = vsel %vm468, %v6357, %v6361
  %v6364 = vsel %vm468, %v6351, %v6355
  %v6365 = vsel %vm468, %v6353, %v6357
  %v6366 = vsel %vm468, %v6347, %v6351
  %v6367 = vsel %vm468, %v6349, %v6353
  %v6368 = vsel %vm468, %v6359, %v6347
  %v6369 = vsel %vm468, %v6361, %v6349
  %v6370 = vmul.f32 %v6368, %v498
  %v6371 = vmul.f32 %v6366, %v502
  %v6372 = vmul.f32 %v6364, %v506
  %v6373 = vmul.f32 %v6362, %v510
  %v6374 = vmul.f32 %v6369, %v498
  %v6375 = vmul.f32 %v6367, %v502
  %v6376 = vmul.f32 %v6365, %v506
  %v6377 = vmul.f32 %v6363, %v510
  %6378 = vrot.lane.b32.xlu0 %v6195, 1
  %v6379 = vpop.permute.xlu0 %6378
  %6380 = vrot.lane.b32.xlu0 %v6201, 1
  %v6381 = vpop.permute.xlu0 %6380
  %6382 = vrot.lane.b32.xlu0 %v6197, 1
  %v6383 = vpop.permute.xlu0 %6382
  %6384 = vrot.lane.b32.xlu0 %v6203, 1
  %v6385 = vpop.permute.xlu0 %6384
  %6386 = vrot.lane.b32.xlu0 %v6272, 1
  %v6387 = vpop.permute.xlu0 %6386
  %6388 = vrot.lane.b32.xlu0 %v6278, 1
  %v6389 = vpop.permute.xlu0 %6388
  %6390 = vrot.lane.b32.xlu0 %v6274, 1
  %v6391 = vpop.permute.xlu0 %6390
  %6392 = vrot.lane.b32.xlu0 %v6280, 1
  %v6393 = vpop.permute.xlu0 %6392
  %v6394 = vsel %vm630, %v6387, %v6391
  %v6395 = vsel %vm630, %v6389, %v6393
  %v6396 = vsel %vm630, %v6383, %v6387
  %v6397 = vsel %vm630, %v6385, %v6389
  %v6398 = vsel %vm630, %v6379, %v6383
  %v6399 = vsel %vm630, %v6381, %v6385
  %v6400 = vsel %vm630, %v6391, %v6379
  %v6401 = vsel %vm630, %v6393, %v6381
  %v6402 = vmul.f32 %v6400, %v660
  %v6403 = vmul.f32 %v6398, %v664
  %v6404 = vmul.f32 %v6396, %v668
  %v6405 = vmul.f32 %v6394, %v672
  %v6406 = vmul.f32 %v6401, %v660
  %v6407 = vmul.f32 %v6399, %v664
  %v6408 = vmul.f32 %v6397, %v668
  %v6409 = vmul.f32 %v6395, %v672
  %v6410 = vmul.f32 %v6195, %v749
  %v6411 = vmul.f32 %v6197, %v753
  %v6412 = vmul.f32 %v6272, %v757
  %v6413 = vmul.f32 %v6274, %v761
  %v6414 = vmul.f32 %v6201, %v749
  %v6415 = vmul.f32 %v6203, %v753
  %v6416 = vmul.f32 %v6278, %v757
  %v6417 = vmul.f32 %v6280, %v761
  %6418 = vrot.lane.b32.xlu0 %v6195, 127
  %v6419 = vpop.permute.xlu0 %6418
  %6420 = vrot.lane.b32.xlu0 %v6201, 127
  %v6421 = vpop.permute.xlu0 %6420
  %6422 = vrot.lane.b32.xlu0 %v6197, 127
  %v6423 = vpop.permute.xlu0 %6422
  %6424 = vrot.lane.b32.xlu0 %v6203, 127
  %v6425 = vpop.permute.xlu0 %6424
  %6426 = vrot.lane.b32.xlu0 %v6272, 127
  %v6427 = vpop.permute.xlu0 %6426
  %6428 = vrot.lane.b32.xlu0 %v6278, 127
  %v6429 = vpop.permute.xlu0 %6428
  %6430 = vrot.lane.b32.xlu0 %v6274, 127
  %v6431 = vpop.permute.xlu0 %6430
  %6432 = vrot.lane.b32.xlu0 %v6280, 127
  %v6433 = vpop.permute.xlu0 %6432
  %v6434 = vsel %vm881, %v6427, %v6431
  %v6435 = vsel %vm881, %v6429, %v6433
  %v6436 = vsel %vm881, %v6423, %v6427
  %v6437 = vsel %vm881, %v6425, %v6429
  %v6438 = vsel %vm881, %v6419, %v6423
  %v6439 = vsel %vm881, %v6421, %v6425
  %v6440 = vsel %vm881, %v6431, %v6419
  %v6441 = vsel %vm881, %v6433, %v6421
  %v6442 = vmul.f32 %v6438, %v911
  %v6443 = vmul.f32 %v6436, %v915
  %v6444 = vmul.f32 %v6434, %v919
  %v6445 = vmul.f32 %v6440, %v923
  %v6446 = vmul.f32 %v6439, %v911
  %v6447 = vmul.f32 %v6437, %v915
  %v6448 = vmul.f32 %v6435, %v919
  %v6449 = vmul.f32 %v6441, %v923
  %6450 = vrot.lane.b32.xlu0 %v6195, 113
  %v6451 = vpop.permute.xlu0 %6450
  %6452 = vrot.lane.b32.xlu0 %v6201, 113
  %v6453 = vpop.permute.xlu0 %6452
  %6454 = vrot.lane.b32.xlu0 %v6197, 113
  %v6455 = vpop.permute.xlu0 %6454
  %6456 = vrot.lane.b32.xlu0 %v6203, 113
  %v6457 = vpop.permute.xlu0 %6456
  %6458 = vrot.lane.b32.xlu0 %v6272, 113
  %v6459 = vpop.permute.xlu0 %6458
  %6460 = vrot.lane.b32.xlu0 %v6278, 113
  %v6461 = vpop.permute.xlu0 %6460
  %6462 = vrot.lane.b32.xlu0 %v6274, 113
  %v6463 = vpop.permute.xlu0 %6462
  %6464 = vrot.lane.b32.xlu0 %v6280, 113
  %v6465 = vpop.permute.xlu0 %6464
  %v6466 = vsel %vm1043, %v6459, %v6463
  %v6467 = vsel %vm1043, %v6461, %v6465
  %v6468 = vsel %vm1043, %v6455, %v6459
  %v6469 = vsel %vm1043, %v6457, %v6461
  %v6470 = vsel %vm1043, %v6451, %v6455
  %v6471 = vsel %vm1043, %v6453, %v6457
  %v6472 = vsel %vm1043, %v6463, %v6451
  %v6473 = vsel %vm1043, %v6465, %v6453
  %v6474 = vmul.f32 %v6470, %v1073
  %v6475 = vmul.f32 %v6468, %v1077
  %v6476 = vmul.f32 %v6466, %v1081
  %v6477 = vmul.f32 %v6472, %v1085
  %v6478 = vmul.f32 %v6471, %v1073
  %v6479 = vmul.f32 %v6469, %v1077
  %v6480 = vmul.f32 %v6467, %v1081
  %v6481 = vmul.f32 %v6473, %v1085
  %6482 = vrot.lane.b32.xlu0 %v6195, 112
  %v6483 = vpop.permute.xlu0 %6482
  %6484 = vrot.lane.b32.xlu0 %v6201, 112
  %v6485 = vpop.permute.xlu0 %6484
  %6486 = vrot.lane.b32.xlu0 %v6197, 112
  %v6487 = vpop.permute.xlu0 %6486
  %6488 = vrot.lane.b32.xlu0 %v6203, 112
  %v6489 = vpop.permute.xlu0 %6488
  %6490 = vrot.lane.b32.xlu0 %v6272, 112
  %v6491 = vpop.permute.xlu0 %6490
  %6492 = vrot.lane.b32.xlu0 %v6278, 112
  %v6493 = vpop.permute.xlu0 %6492
  %6494 = vrot.lane.b32.xlu0 %v6274, 112
  %v6495 = vpop.permute.xlu0 %6494
  %6496 = vrot.lane.b32.xlu0 %v6280, 112
  %v6497 = vpop.permute.xlu0 %6496
  %v6498 = vsel %vm1205, %v6491, %v6495
  %v6499 = vsel %vm1205, %v6493, %v6497
  %v6500 = vsel %vm1205, %v6487, %v6491
  %v6501 = vsel %vm1205, %v6489, %v6493
  %v6502 = vsel %vm1205, %v6483, %v6487
  %v6503 = vsel %vm1205, %v6485, %v6489
  %v6504 = vsel %vm1205, %v6495, %v6483
  %v6505 = vsel %vm1205, %v6497, %v6485
  %v6506 = vmul.f32 %v6502, %v1235
  %v6507 = vmul.f32 %v6500, %v1239
  %v6508 = vmul.f32 %v6498, %v1243
  %v6509 = vmul.f32 %v6504, %v1247
  %v6510 = vmul.f32 %v6503, %v1235
  %v6511 = vmul.f32 %v6501, %v1239
  %v6512 = vmul.f32 %v6499, %v1243
  %v6513 = vmul.f32 %v6505, %v1247
  %6514 = vrot.lane.b32.xlu0 %v6195, 111
  %v6515 = vpop.permute.xlu0 %6514
  %6516 = vrot.lane.b32.xlu0 %v6201, 111
  %v6517 = vpop.permute.xlu0 %6516
  %6518 = vrot.lane.b32.xlu0 %v6197, 111
  %v6519 = vpop.permute.xlu0 %6518
  %6520 = vrot.lane.b32.xlu0 %v6203, 111
  %v6521 = vpop.permute.xlu0 %6520
  %6522 = vrot.lane.b32.xlu0 %v6272, 111
  %v6523 = vpop.permute.xlu0 %6522
  %6524 = vrot.lane.b32.xlu0 %v6278, 111
  %v6525 = vpop.permute.xlu0 %6524
  %6526 = vrot.lane.b32.xlu0 %v6274, 111
  %v6527 = vpop.permute.xlu0 %6526
  %6528 = vrot.lane.b32.xlu0 %v6280, 111
  %v6529 = vpop.permute.xlu0 %6528
  %v6530 = vsel %vm1367, %v6523, %v6527
  %v6531 = vsel %vm1367, %v6525, %v6529
  %v6532 = vsel %vm1367, %v6519, %v6523
  %v6533 = vsel %vm1367, %v6521, %v6525
  %v6534 = vsel %vm1367, %v6515, %v6519
  %v6535 = vsel %vm1367, %v6517, %v6521
  %v6536 = vsel %vm1367, %v6527, %v6515
  %v6537 = vsel %vm1367, %v6529, %v6517
  %v6538 = vmul.f32 %v6534, %v1397
  %v6539 = vmul.f32 %v6532, %v1401
  %v6540 = vmul.f32 %v6530, %v1405
  %v6541 = vmul.f32 %v6536, %v1409
  %v6542 = vmul.f32 %v6535, %v1397
  %v6543 = vmul.f32 %v6533, %v1401
  %v6544 = vmul.f32 %v6531, %v1405
  %v6545 = vmul.f32 %v6537, %v1409
  %v6546 = vld [vmem:[%s6] sm:$0xff]
  %v6547 = vld [vmem:[%s6 + $0x8] sm:$0xff]
  %v6548 = vld [vmem:[%s6 + $0x10] sm:$0xff]
  %v6549 = vld [vmem:[%s6 + $0x18] sm:$0xff]
  %v6550 = vld [vmem:[%s13 + $0x60] sm:$0xff]
  %v6551 = vld [vmem:[%s13 + $0x68] sm:$0xff]
  %6553 = vset.pattern.permute.xlu0 0
  %6554 = vperm.xlu0 %6553, %v6550
  %v6555 = vpop.permute.xlu0 %6554
  %6558 = vset.pattern.permute.xlu0 0
  %6559 = vperm.xlu0 %6558, %v6551
  %v6560 = vpop.permute.xlu0 %6559
  %v6563 = vsel %vm1510, %v6547, 0
  %v6566 = vsel %vm1510, %v6549, 0
  %6568 = vmatprep.subr.mxu0 %v6511
  %6569 = vmatpush1.msra.mxu0 %v6510
  %6570 = vmatprep.subr.mxu0 %v6507
  %6571 = vmatpush1.msra.mxu0 %v6506
  %6572 = vmatprep.subr.mxu0 %v6479
  %6573 = vmatpush1.msra.mxu0 %v6478
  %6574 = vmatprep.subr.mxu0 %v6475
  %6575 = vmatpush1.msra.mxu0 %v6474
  %6576 = vmatprep.subr.mxu0 %v6447
  %6577 = vmatpush1.msra.mxu0 %v6446
  %6578 = vmatprep.subr.mxu0 %v6443
  %6579 = vmatpush1.msra.mxu0 %v6442
  %6580 = vmatprep.subr.mxu0 %v6415
  %6581 = vmatpush1.msra.mxu0 %v6414
  %6582 = vmatprep.subr.mxu0 %v6411
  %6583 = vmatpush1.msra.mxu0 %v6410
  %6584 = vmatprep.subr.mxu0 %v6407
  %6585 = vmatpush1.msra.mxu0 %v6406
  %6586 = vmatprep.subr.mxu0 %v6403
  %6587 = vmatpush1.msra.mxu0 %v6402
  %6588 = vmatprep.subr.mxu0 %v6375
  %6589 = vmatpush1.msra.mxu0 %v6374
  %6590 = vmatprep.subr.mxu0 %v6371
  %6591 = vmatpush1.msra.mxu0 %v6370
  %6592 = vmatprep.subr.mxu0 %v6343
  %6593 = vmatpush1.msra.mxu0 %v6342
  %6594 = vmatprep.subr.mxu0 %v6339
  %6595 = vmatpush1.msra.mxu0 %v6338
  %6596 = vmatprep.subr.mxu0 %v6311
  %6597 = vmatpush1.msra.mxu0 %v6310
  %6598 = vmatprep.subr.mxu0 %v6307
  %6599 = vmatpush1.msra.mxu0 %v6306
  %6600 = vmatprep.subr.mxu0 0.0
  %6601 = vmatpush2.msra.mxu0 0.0
  %6602 = vmatprep.subr.mxu0 0.0
  %6603 = vmatpush2.msra.mxu0 0.0
  %6604 = vmatprep.subr.mxu0 0.0
  %6605 = vmatpush2.msra.mxu0 0.0
  %6606 = vmatprep.subr.mxu0 0.0
  %6607 = vmatpush2.msra.mxu0 0.0
  %6608 = vmatprep.subr.mxu0 0.0
  %6609 = vmatpush2.msra.mxu0 0.0
  %6610 = vmatprep.subr.mxu0 0.0
  %6611 = vmatpush2.msra.mxu0 0.0
  %6612 = vmatprep.subr.mxu0 0.0
  %6613 = vmatpush2.msra.mxu0 0.0
  %6614 = vmatprep.subr.mxu0 0.0
  %6615 = vmatpush2.msra.mxu0 0.0
  %6616 = vmatprep.subr.mxu0 0.0
  %6617 = vmatpush2.msra.mxu0 0.0
  %6618 = vmatprep.subr.mxu0 0.0
  %6619 = vmatpush2.msra.mxu0 0.0
  %6620 = vmatprep.subr.mxu0 0.0
  %6621 = vmatpush2.msra.mxu0 0.0
  %6622 = vmatprep.subr.mxu0 0.0
  %6623 = vmatpush2.msra.mxu0 0.0
  %6624 = vmatprep.subr.mxu0 0.0
  %6625 = vmatpush2.msra.mxu0 0.0
  %6626 = vmatprep.subr.mxu0 0.0
  %6627 = vmatpush2.msra.mxu0 0.0
  %6628 = vmatprep.subr.mxu0 %v6543
  %6629 = vmatpush2.msra.mxu0 %v6542
  %6630 = vmatprep.subr.mxu0 %v6539
  %6631 = vmatpush2.msra.mxu0 %v6538
  %6632 = vmatprep.mubr.f32.mxu0 %v6563
  %6633 = vmatmul.mubr.f32.gmra.mxu0 %v6546
  %v6634 = vpop.f32.mrf.mxu0
  %v6635 = vadd.f32 %v6555, %v6634
  %v6636 = vpop.f32.mrf.mxu0
  %v6637 = vadd.f32 %v6555, %v6636
  %6638 = vmatprep.mubr.f32.mxu0 %v6566
  %6639 = vmatmul.mubr.f32.gmra.mxu0 %v6548
  %v6640 = vpop.f32.mrf.mxu0
  %v6641 = vadd.f32 %v6560, %v6640
  %v6642 = vpop.f32.mrf.mxu0
  %v6643 = vadd.f32 %v6560, %v6642
  %6644 = vdwg.mxu0
  %6645 = vmatprep.subr.mxu0 %v6513
  %6646 = vmatpush1.msra.mxu0 %v6512
  %6647 = vmatprep.subr.mxu0 %v6509
  %6648 = vmatpush1.msra.mxu0 %v6508
  %6649 = vmatprep.subr.mxu0 %v6481
  %6650 = vmatpush1.msra.mxu0 %v6480
  %6651 = vmatprep.subr.mxu0 %v6477
  %6652 = vmatpush1.msra.mxu0 %v6476
  %6653 = vmatprep.subr.mxu0 %v6449
  %6654 = vmatpush1.msra.mxu0 %v6448
  %6655 = vmatprep.subr.mxu0 %v6445
  %6656 = vmatpush1.msra.mxu0 %v6444
  %6657 = vmatprep.subr.mxu0 %v6417
  %6658 = vmatpush1.msra.mxu0 %v6416
  %6659 = vmatprep.subr.mxu0 %v6413
  %6660 = vmatpush1.msra.mxu0 %v6412
  %6661 = vmatprep.subr.mxu0 %v6409
  %6662 = vmatpush1.msra.mxu0 %v6408
  %6663 = vmatprep.subr.mxu0 %v6405
  %6664 = vmatpush1.msra.mxu0 %v6404
  %6665 = vmatprep.subr.mxu0 %v6377
  %6666 = vmatpush1.msra.mxu0 %v6376
  %6667 = vmatprep.subr.mxu0 %v6373
  %6668 = vmatpush1.msra.mxu0 %v6372
  %6669 = vmatprep.subr.mxu0 %v6345
  %6670 = vmatpush1.msra.mxu0 %v6344
  %6671 = vmatprep.subr.mxu0 %v6341
  %6672 = vmatpush1.msra.mxu0 %v6340
  %6673 = vmatprep.subr.mxu0 %v6313
  %6674 = vmatpush1.msra.mxu0 %v6312
  %6675 = vmatprep.subr.mxu0 %v6309
  %6676 = vmatpush1.msra.mxu0 %v6308
  %6677 = vmatprep.subr.mxu0 0.0
  %6678 = vmatpush2.msra.mxu0 0.0
  %6679 = vmatprep.subr.mxu0 0.0
  %6680 = vmatpush2.msra.mxu0 0.0
  %6681 = vmatprep.subr.mxu0 0.0
  %6682 = vmatpush2.msra.mxu0 0.0
  %6683 = vmatprep.subr.mxu0 0.0
  %6684 = vmatpush2.msra.mxu0 0.0
  %6685 = vmatprep.subr.mxu0 0.0
  %6686 = vmatpush2.msra.mxu0 0.0
  %6687 = vmatprep.subr.mxu0 0.0
  %6688 = vmatpush2.msra.mxu0 0.0
  %6689 = vmatprep.subr.mxu0 0.0
  %6690 = vmatpush2.msra.mxu0 0.0
  %6691 = vmatprep.subr.mxu0 0.0
  %6692 = vmatpush2.msra.mxu0 0.0
  %6693 = vmatprep.subr.mxu0 0.0
  %6694 = vmatpush2.msra.mxu0 0.0
  %6695 = vmatprep.subr.mxu0 0.0
  %6696 = vmatpush2.msra.mxu0 0.0
  %6697 = vmatprep.subr.mxu0 0.0
  %6698 = vmatpush2.msra.mxu0 0.0
  %6699 = vmatprep.subr.mxu0 0.0
  %6700 = vmatpush2.msra.mxu0 0.0
  %6701 = vmatprep.subr.mxu0 0.0
  %6702 = vmatpush2.msra.mxu0 0.0
  %6703 = vmatprep.subr.mxu0 0.0
  %6704 = vmatpush2.msra.mxu0 0.0
  %6705 = vmatprep.subr.mxu0 %v6545
  %6706 = vmatpush2.msra.mxu0 %v6544
  %6707 = vmatprep.subr.mxu0 %v6541
  %6708 = vmatpush2.msra.mxu0 %v6540
  %6709 = vmatprep.mubr.f32.mxu0 %v6563
  %6710 = vmatmul.mubr.f32.gmra.mxu0 %v6546
  %v6711 = vpop.f32.mrf.mxu0
  %v6712 = vadd.f32 %v6555, %v6711
  %v6713 = vpop.f32.mrf.mxu0
  %v6714 = vadd.f32 %v6555, %v6713
  %6715 = vmatprep.mubr.f32.mxu0 %v6566
  %6716 = vmatmul.mubr.f32.gmra.mxu0 %v6548
  %v6717 = vpop.f32.mrf.mxu0
  %v6718 = vadd.f32 %v6560, %v6717
  %v6719 = vpop.f32.mrf.mxu0
  %v6720 = vadd.f32 %v6560, %v6719
  %6721 = vdwg.mxu0
  %v6722 = vld [vmem:[%s10] sm:$0xff]
  %v6723 = vld [vmem:[%s10 + $0x8] sm:$0xff]
  %v6724 = vld [vmem:[%s13 + $0xa0] sm:$0xff]
  %v6725 = vld [vmem:[%s13 + $0xa8] sm:$0xff]
  %6727 = vset.pattern.permute.xlu0 0
  %6728 = vperm.xlu0 %6727, %v6724
  %v6729 = vpop.permute.xlu0 %6728
  %6732 = vset.pattern.permute.xlu0 0
  %6733 = vperm.xlu0 %6732, %v6725
  %v6734 = vpop.permute.xlu0 %6733
  %v6737 = vsel %vm1510, %v6722, 0
  %v6740 = vsel %vm1510, %v6723, 0
  %6742 = vmatprep.subr.mxu0 0.0
  %6743 = vmatpush1.msra.mxu0 0.0
  %6744 = vmatprep.subr.mxu0 0.0
  %6745 = vmatpush1.msra.mxu0 0.0
  %6746 = vmatprep.subr.mxu0 0.0
  %6747 = vmatpush1.msra.mxu0 0.0
  %6748 = vmatprep.subr.mxu0 0.0
  %6749 = vmatpush1.msra.mxu0 0.0
  %6750 = vmatprep.subr.mxu0 0.0
  %6751 = vmatpush1.msra.mxu0 0.0
  %6752 = vmatprep.subr.mxu0 0.0
  %6753 = vmatpush1.msra.mxu0 0.0
  %6754 = vmatprep.subr.mxu0 0.0
  %6755 = vmatpush1.msra.mxu0 0.0
  %6756 = vmatprep.subr.mxu0 0.0
  %6757 = vmatpush1.msra.mxu0 0.0
  %6758 = vmatprep.subr.mxu0 0.0
  %6759 = vmatpush1.msra.mxu0 0.0
  %6760 = vmatprep.subr.mxu0 0.0
  %6761 = vmatpush1.msra.mxu0 0.0
  %6762 = vmatprep.subr.mxu0 0.0
  %6763 = vmatpush1.msra.mxu0 0.0
  %6764 = vmatprep.subr.mxu0 0.0
  %6765 = vmatpush1.msra.mxu0 0.0
  %6766 = vmatprep.subr.mxu0 0.0
  %6767 = vmatpush1.msra.mxu0 0.0
  %6768 = vmatprep.subr.mxu0 0.0
  %6769 = vmatpush1.msra.mxu0 0.0
  %6770 = vmatprep.subr.mxu0 %v6643
  %6771 = vmatpush1.msra.mxu0 %v6641
  %6772 = vmatprep.subr.mxu0 %v6637
  %6773 = vmatpush1.msra.mxu0 %v6635
  %6774 = vmatprep.subr.mxu0 0.0
  %6775 = vmatpush2.msra.mxu0 0.0
  %6776 = vmatprep.subr.mxu0 0.0
  %6777 = vmatpush2.msra.mxu0 0.0
  %6778 = vmatprep.subr.mxu0 0.0
  %6779 = vmatpush2.msra.mxu0 0.0
  %6780 = vmatprep.subr.mxu0 0.0
  %6781 = vmatpush2.msra.mxu0 0.0
  %6782 = vmatprep.subr.mxu0 0.0
  %6783 = vmatpush2.msra.mxu0 0.0
  %6784 = vmatprep.subr.mxu0 0.0
  %6785 = vmatpush2.msra.mxu0 0.0
  %6786 = vmatprep.subr.mxu0 0.0
  %6787 = vmatpush2.msra.mxu0 0.0
  %6788 = vmatprep.subr.mxu0 0.0
  %6789 = vmatpush2.msra.mxu0 0.0
  %6790 = vmatprep.subr.mxu0 0.0
  %6791 = vmatpush2.msra.mxu0 0.0
  %6792 = vmatprep.subr.mxu0 0.0
  %6793 = vmatpush2.msra.mxu0 0.0
  %6794 = vmatprep.subr.mxu0 0.0
  %6795 = vmatpush2.msra.mxu0 0.0
  %6796 = vmatprep.subr.mxu0 0.0
  %6797 = vmatpush2.msra.mxu0 0.0
  %6798 = vmatprep.subr.mxu0 0.0
  %6799 = vmatpush2.msra.mxu0 0.0
  %6800 = vmatprep.subr.mxu0 0.0
  %6801 = vmatpush2.msra.mxu0 0.0
  %6802 = vmatprep.subr.mxu0 0.0
  %6803 = vmatpush2.msra.mxu0 0.0
  %6804 = vmatprep.subr.mxu0 0.0
  %6805 = vmatpush2.msra.mxu0 0.0
  %6806 = vmatprep.mubr.f32.mxu0 0.0
  %6807 = vmatmul.mubr.f32.gmra.mxu0 %v6737
  %v6808 = vpop.f32.mrf.mxu0
  %v6809 = vadd.f32 %v6729, %v6808
  %v6810 = vpop.f32.mrf.mxu0
  %v6811 = vadd.f32 %v6729, %v6810
  %6812 = vmatprep.mubr.f32.mxu0 0.0
  %6813 = vmatmul.mubr.f32.gmra.mxu0 %v6740
  %v6814 = vpop.f32.mrf.mxu0
  %v6815 = vadd.f32 %v6734, %v6814
  %v6816 = vpop.f32.mrf.mxu0
  %v6817 = vadd.f32 %v6734, %v6816
  %6818 = vdwg.mxu0
  %6819 = vmatprep.subr.mxu0 0.0
  %6820 = vmatpush1.msra.mxu0 0.0
  %6821 = vmatprep.subr.mxu0 0.0
  %6822 = vmatpush1.msra.mxu0 0.0
  %6823 = vmatprep.subr.mxu0 0.0
  %6824 = vmatpush1.msra.mxu0 0.0
  %6825 = vmatprep.subr.mxu0 0.0
  %6826 = vmatpush1.msra.mxu0 0.0
  %6827 = vmatprep.subr.mxu0 0.0
  %6828 = vmatpush1.msra.mxu0 0.0
  %6829 = vmatprep.subr.mxu0 0.0
  %6830 = vmatpush1.msra.mxu0 0.0
  %6831 = vmatprep.subr.mxu0 0.0
  %6832 = vmatpush1.msra.mxu0 0.0
  %6833 = vmatprep.subr.mxu0 0.0
  %6834 = vmatpush1.msra.mxu0 0.0
  %6835 = vmatprep.subr.mxu0 0.0
  %6836 = vmatpush1.msra.mxu0 0.0
  %6837 = vmatprep.subr.mxu0 0.0
  %6838 = vmatpush1.msra.mxu0 0.0
  %6839 = vmatprep.subr.mxu0 0.0
  %6840 = vmatpush1.msra.mxu0 0.0
  %6841 = vmatprep.subr.mxu0 0.0
  %6842 = vmatpush1.msra.mxu0 0.0
  %6843 = vmatprep.subr.mxu0 0.0
  %6844 = vmatpush1.msra.mxu0 0.0
  %6845 = vmatprep.subr.mxu0 0.0
  %6846 = vmatpush1.msra.mxu0 0.0
  %6847 = vmatprep.subr.mxu0 %v6720
  %6848 = vmatpush1.msra.mxu0 %v6718
  %6849 = vmatprep.subr.mxu0 %v6714
  %6850 = vmatpush1.msra.mxu0 %v6712
  %6851 = vmatprep.subr.mxu0 0.0
  %6852 = vmatpush2.msra.mxu0 0.0
  %6853 = vmatprep.subr.mxu0 0.0
  %6854 = vmatpush2.msra.mxu0 0.0
  %6855 = vmatprep.subr.mxu0 0.0
  %6856 = vmatpush2.msra.mxu0 0.0
  %6857 = vmatprep.subr.mxu0 0.0
  %6858 = vmatpush2.msra.mxu0 0.0
  %6859 = vmatprep.subr.mxu0 0.0
  %6860 = vmatpush2.msra.mxu0 0.0
  %6861 = vmatprep.subr.mxu0 0.0
  %6862 = vmatpush2.msra.mxu0 0.0
  %6863 = vmatprep.subr.mxu0 0.0
  %6864 = vmatpush2.msra.mxu0 0.0
  %6865 = vmatprep.subr.mxu0 0.0
  %6866 = vmatpush2.msra.mxu0 0.0
  %6867 = vmatprep.subr.mxu0 0.0
  %6868 = vmatpush2.msra.mxu0 0.0
  %6869 = vmatprep.subr.mxu0 0.0
  %6870 = vmatpush2.msra.mxu0 0.0
  %6871 = vmatprep.subr.mxu0 0.0
  %6872 = vmatpush2.msra.mxu0 0.0
  %6873 = vmatprep.subr.mxu0 0.0
  %6874 = vmatpush2.msra.mxu0 0.0
  %6875 = vmatprep.subr.mxu0 0.0
  %6876 = vmatpush2.msra.mxu0 0.0
  %6877 = vmatprep.subr.mxu0 0.0
  %6878 = vmatpush2.msra.mxu0 0.0
  %6879 = vmatprep.subr.mxu0 0.0
  %6880 = vmatpush2.msra.mxu0 0.0
  %6881 = vmatprep.subr.mxu0 0.0
  %6882 = vmatpush2.msra.mxu0 0.0
  %6883 = vmatprep.mubr.f32.mxu0 0.0
  %6884 = vmatmul.mubr.f32.gmra.mxu0 %v6737
  %v6885 = vpop.f32.mrf.mxu0
  %v6886 = vadd.f32 %v6729, %v6885
  %v6887 = vpop.f32.mrf.mxu0
  %v6888 = vadd.f32 %v6729, %v6887
  %6889 = vmatprep.mubr.f32.mxu0 0.0
  %6890 = vmatmul.mubr.f32.gmra.mxu0 %v6740
  %v6891 = vpop.f32.mrf.mxu0
  %v6892 = vadd.f32 %v6734, %v6891
  %v6893 = vpop.f32.mrf.mxu0
  %v6894 = vadd.f32 %v6734, %v6893
  %6895 = vdwg.mxu0
  %vm6896 = vcmp.ge.f32.partialorder %v6809, 0.0
  %vm6897 = vcmp.ge.f32.partialorder %v6811, 0.0
  %vm6898 = vcmp.ge.f32.partialorder %v6886, 0.0
  %vm6899 = vcmp.ge.f32.partialorder %v6888, 0.0
  %vm6900 = vcmp.ge.f32.partialorder %v6815, 0.0
  %vm6901 = vcmp.ge.f32.partialorder %v6817, 0.0
  %vm6902 = vcmp.ge.f32.partialorder %v6892, 0.0
  %vm6903 = vcmp.ge.f32.partialorder %v6894, 0.0
  %v6904 = vmul.f32 %v6809, 0.1
  %v6905 = vmul.f32 %v6811, 0.1
  %v6906 = vmul.f32 %v6886, 0.1
  %v6907 = vmul.f32 %v6888, 0.1
  %v6908 = vmul.f32 %v6815, 0.1
  %v6909 = vmul.f32 %v6817, 0.1
  %v6910 = vmul.f32 %v6892, 0.1
  %v6911 = vmul.f32 %v6894, 0.1
  %v6912 = vsel %vm6896, %v6809, %v6904
  %v6913 = vsel %vm6897, %v6811, %v6905
  %v6914 = vsel %vm6898, %v6886, %v6906
  %v6915 = vsel %vm6899, %v6888, %v6907
  %v6916 = vsel %vm6900, %v6815, %v6908
  %v6917 = vsel %vm6901, %v6817, %v6909
  %v6918 = vsel %vm6902, %v6892, %v6910
  %v6919 = vsel %vm6903, %v6894, %v6911
  %v6920 = vld [vmem:[%s11] sm:$0xff]
  %v6921 = vld [vmem:[%s11 + $0x8] sm:$0xff]
  %v6922 = vld [vmem:[%s13 + $0xb0] sm:$0xff]
  %v6923 = vld [vmem:[%s13 + $0xb8] sm:$0xff]
  %6925 = vset.pattern.permute.xlu0 0
  %6926 = vperm.xlu0 %6925, %v6922
  %v6927 = vpop.permute.xlu0 %6926
  %6930 = vset.pattern.permute.xlu0 0
  %6931 = vperm.xlu0 %6930, %v6923
  %v6932 = vpop.permute.xlu0 %6931
  %v6935 = vsel %vm1510, %v6920, 0
  %v6938 = vsel %vm1510, %v6921, 0
  %6940 = vmatprep.subr.mxu0 0.0
  %6941 = vmatpush1.msra.mxu0 0.0
  %6942 = vmatprep.subr.mxu0 0.0
  %6943 = vmatpush1.msra.mxu0 0.0
  %6944 = vmatprep.subr.mxu0 0.0
  %6945 = vmatpush1.msra.mxu0 0.0
  %6946 = vmatprep.subr.mxu0 0.0
  %6947 = vmatpush1.msra.mxu0 0.0
  %6948 = vmatprep.subr.mxu0 0.0
  %6949 = vmatpush1.msra.mxu0 0.0
  %6950 = vmatprep.subr.mxu0 0.0
  %6951 = vmatpush1.msra.mxu0 0.0
  %6952 = vmatprep.subr.mxu0 0.0
  %6953 = vmatpush1.msra.mxu0 0.0
  %6954 = vmatprep.subr.mxu0 0.0
  %6955 = vmatpush1.msra.mxu0 0.0
  %6956 = vmatprep.subr.mxu0 0.0
  %6957 = vmatpush1.msra.mxu0 0.0
  %6958 = vmatprep.subr.mxu0 0.0
  %6959 = vmatpush1.msra.mxu0 0.0
  %6960 = vmatprep.subr.mxu0 0.0
  %6961 = vmatpush1.msra.mxu0 0.0
  %6962 = vmatprep.subr.mxu0 0.0
  %6963 = vmatpush1.msra.mxu0 0.0
  %6964 = vmatprep.subr.mxu0 0.0
  %6965 = vmatpush1.msra.mxu0 0.0
  %6966 = vmatprep.subr.mxu0 0.0
  %6967 = vmatpush1.msra.mxu0 0.0
  %6968 = vmatprep.subr.mxu0 %v6917
  %6969 = vmatpush1.msra.mxu0 %v6916
  %6970 = vmatprep.subr.mxu0 %v6913
  %6971 = vmatpush1.msra.mxu0 %v6912
  %6972 = vmatprep.subr.mxu0 0.0
  %6973 = vmatpush2.msra.mxu0 0.0
  %6974 = vmatprep.subr.mxu0 0.0
  %6975 = vmatpush2.msra.mxu0 0.0
  %6976 = vmatprep.subr.mxu0 0.0
  %6977 = vmatpush2.msra.mxu0 0.0
  %6978 = vmatprep.subr.mxu0 0.0
  %6979 = vmatpush2.msra.mxu0 0.0
  %6980 = vmatprep.subr.mxu0 0.0
  %6981 = vmatpush2.msra.mxu0 0.0
  %6982 = vmatprep.subr.mxu0 0.0
  %6983 = vmatpush2.msra.mxu0 0.0
  %6984 = vmatprep.subr.mxu0 0.0
  %6985 = vmatpush2.msra.mxu0 0.0
  %6986 = vmatprep.subr.mxu0 0.0
  %6987 = vmatpush2.msra.mxu0 0.0
  %6988 = vmatprep.subr.mxu0 0.0
  %6989 = vmatpush2.msra.mxu0 0.0
  %6990 = vmatprep.subr.mxu0 0.0
  %6991 = vmatpush2.msra.mxu0 0.0
  %6992 = vmatprep.subr.mxu0 0.0
  %6993 = vmatpush2.msra.mxu0 0.0
  %6994 = vmatprep.subr.mxu0 0.0
  %6995 = vmatpush2.msra.mxu0 0.0
  %6996 = vmatprep.subr.mxu0 0.0
  %6997 = vmatpush2.msra.mxu0 0.0
  %6998 = vmatprep.subr.mxu0 0.0
  %6999 = vmatpush2.msra.mxu0 0.0
  %7000 = vmatprep.subr.mxu0 0.0
  %7001 = vmatpush2.msra.mxu0 0.0
  %7002 = vmatprep.subr.mxu0 0.0
  %7003 = vmatpush2.msra.mxu0 0.0
  %7004 = vmatprep.mubr.f32.mxu0 0.0
  %7005 = vmatmul.mubr.f32.gmra.mxu0 %v6935
  %v7006 = vpop.f32.mrf.mxu0
  %v7007 = vadd.f32 %v6927, %v7006
  %v7008 = vpop.f32.mrf.mxu0
  %v7009 = vadd.f32 %v6927, %v7008
  %7010 = vmatprep.mubr.f32.mxu0 0.0
  %7011 = vmatmul.mubr.f32.gmra.mxu0 %v6938
  %v7012 = vpop.f32.mrf.mxu0
  %v7013 = vadd.f32 %v6932, %v7012
  %v7014 = vpop.f32.mrf.mxu0
  %v7015 = vadd.f32 %v6932, %v7014
  %7016 = vdwg.mxu0
  %7017 = vmatprep.subr.mxu0 0.0
  %7018 = vmatpush1.msra.mxu0 0.0
  %7019 = vmatprep.subr.mxu0 0.0
  %7020 = vmatpush1.msra.mxu0 0.0
  %7021 = vmatprep.subr.mxu0 0.0
  %7022 = vmatpush1.msra.mxu0 0.0
  %7023 = vmatprep.subr.mxu0 0.0
  %7024 = vmatpush1.msra.mxu0 0.0
  %7025 = vmatprep.subr.mxu0 0.0
  %7026 = vmatpush1.msra.mxu0 0.0
  %7027 = vmatprep.subr.mxu0 0.0
  %7028 = vmatpush1.msra.mxu0 0.0
  %7029 = vmatprep.subr.mxu0 0.0
  %7030 = vmatpush1.msra.mxu0 0.0
  %7031 = vmatprep.subr.mxu0 0.0
  %7032 = vmatpush1.msra.mxu0 0.0
  %7033 = vmatprep.subr.mxu0 0.0
  %7034 = vmatpush1.msra.mxu0 0.0
  %7035 = vmatprep.subr.mxu0 0.0
  %7036 = vmatpush1.msra.mxu0 0.0
  %7037 = vmatprep.subr.mxu0 0.0
  %7038 = vmatpush1.msra.mxu0 0.0
  %7039 = vmatprep.subr.mxu0 0.0
  %7040 = vmatpush1.msra.mxu0 0.0
  %7041 = vmatprep.subr.mxu0 0.0
  %7042 = vmatpush1.msra.mxu0 0.0
  %7043 = vmatprep.subr.mxu0 0.0
  %7044 = vmatpush1.msra.mxu0 0.0
  %7045 = vmatprep.subr.mxu0 %v6919
  %7046 = vmatpush1.msra.mxu0 %v6918
  %7047 = vmatprep.subr.mxu0 %v6915
  %7048 = vmatpush1.msra.mxu0 %v6914
  %7049 = vmatprep.subr.mxu0 0.0
  %7050 = vmatpush2.msra.mxu0 0.0
  %7051 = vmatprep.subr.mxu0 0.0
  %7052 = vmatpush2.msra.mxu0 0.0
  %7053 = vmatprep.subr.mxu0 0.0
  %7054 = vmatpush2.msra.mxu0 0.0
  %7055 = vmatprep.subr.mxu0 0.0
  %7056 = vmatpush2.msra.mxu0 0.0
  %7057 = vmatprep.subr.mxu0 0.0
  %7058 = vmatpush2.msra.mxu0 0.0
  %7059 = vmatprep.subr.mxu0 0.0
  %7060 = vmatpush2.msra.mxu0 0.0
  %7061 = vmatprep.subr.mxu0 0.0
  %7062 = vmatpush2.msra.mxu0 0.0
  %7063 = vmatprep.subr.mxu0 0.0
  %7064 = vmatpush2.msra.mxu0 0.0
  %7065 = vmatprep.subr.mxu0 0.0
  %7066 = vmatpush2.msra.mxu0 0.0
  %7067 = vmatprep.subr.mxu0 0.0
  %7068 = vmatpush2.msra.mxu0 0.0
  %7069 = vmatprep.subr.mxu0 0.0
  %7070 = vmatpush2.msra.mxu0 0.0
  %7071 = vmatprep.subr.mxu0 0.0
  %7072 = vmatpush2.msra.mxu0 0.0
  %7073 = vmatprep.subr.mxu0 0.0
  %7074 = vmatpush2.msra.mxu0 0.0
  %7075 = vmatprep.subr.mxu0 0.0
  %7076 = vmatpush2.msra.mxu0 0.0
  %7077 = vmatprep.subr.mxu0 0.0
  %7078 = vmatpush2.msra.mxu0 0.0
  %7079 = vmatprep.subr.mxu0 0.0
  %7080 = vmatpush2.msra.mxu0 0.0
  %7081 = vmatprep.mubr.f32.mxu0 0.0
  %7082 = vmatmul.mubr.f32.gmra.mxu0 %v6935
  %v7083 = vpop.f32.mrf.mxu0
  %v7084 = vadd.f32 %v6927, %v7083
  %v7085 = vpop.f32.mrf.mxu0
  %v7086 = vadd.f32 %v6927, %v7085
  %7087 = vmatprep.mubr.f32.mxu0 0.0
  %7088 = vmatmul.mubr.f32.gmra.mxu0 %v6938
  %v7089 = vpop.f32.mrf.mxu0
  %v7090 = vadd.f32 %v6932, %v7089
  %v7091 = vpop.f32.mrf.mxu0
  %v7092 = vadd.f32 %v6932, %v7091
  %7093 = vdwg.mxu0
  %v7094 = vsub.f32 0.0, %v6635
  %v7095 = vsub.f32 0.0, %v6637
  %v7096 = vsub.f32 0.0, %v6712
  %v7097 = vsub.f32 0.0, %v6714
  %v7098 = vsub.f32 0.0, %v6641
  %v7099 = vsub.f32 0.0, %v6643
  %v7100 = vsub.f32 0.0, %v6718
  %v7101 = vsub.f32 0.0, %v6720
  %v7102 = vmul.f32 %v7094, 1.442695
  %v7103 = vpow.pop %v7102
  %v7104 = vmul.f32 %v7095, 1.442695
  %v7105 = vpow.pop %v7104
  %v7106 = vmul.f32 %v7096, 1.442695
  %v7107 = vpow.pop %v7106
  %v7108 = vmul.f32 %v7097, 1.442695
  %v7109 = vpow.pop %v7108
  %v7110 = vmul.f32 %v7098, 1.442695
  %v7111 = vpow.pop %v7110
  %v7112 = vmul.f32 %v7099, 1.442695
  %v7113 = vpow.pop %v7112
  %v7114 = vmul.f32 %v7100, 1.442695
  %v7115 = vpow.pop %v7114
  %v7116 = vmul.f32 %v7101, 1.442695
  %v7117 = vpow.pop %v7116
  %v7118 = vadd.f32 %v7103, 1.0
  %v7119 = vadd.f32 %v7105, 1.0
  %v7120 = vadd.f32 %v7107, 1.0
  %v7121 = vadd.f32 %v7109, 1.0
  %v7122 = vadd.f32 %v7111, 1.0
  %v7123 = vadd.f32 %v7113, 1.0
  %v7124 = vadd.f32 %v7115, 1.0
  %v7125 = vadd.f32 %v7117, 1.0
  %v7126 = vrcp.pop %v7118
  %v7127 = vrcp.pop %v7119
  %v7128 = vrcp.pop %v7120
  %v7129 = vrcp.pop %v7121
  %v7130 = vrcp.pop %v7122
  %v7131 = vrcp.pop %v7123
  %v7132 = vrcp.pop %v7124
  %v7133 = vrcp.pop %v7125
  %v7134 = vmul.f32 %v68, %v7126
  %v7135 = vmul.f32 %v69, %v7127
  %v7136 = vmul.f32 %v70, %v7128
  %v7137 = vmul.f32 %v71, %v7129
  %v7138 = vmul.f32 %v80, %v7130
  %v7139 = vmul.f32 %v81, %v7131
  %v7140 = vmul.f32 %v82, %v7132
  %v7141 = vmul.f32 %v83, %v7133
  %v7142 = vmul.f32 %v7134, 2.0
  %v7143 = vmul.f32 %v7135, 2.0
  %v7144 = vmul.f32 %v7136, 2.0
  %v7145 = vmul.f32 %v7137, 2.0
  %v7146 = vmul.f32 %v7138, 2.0
  %v7147 = vmul.f32 %v7139, 2.0
  %v7148 = vmul.f32 %v7140, 2.0
  %v7149 = vmul.f32 %v7141, 2.0
  %v7150 = vadd.f32 %v7142, %v7007
  %v7151 = vadd.f32 %v7143, %v7009
  %v7152 = vadd.f32 %v7144, %v7084
  %v7153 = vadd.f32 %v7145, %v7086
  %v7154 = vadd.f32 %v7146, %v7013
  %v7155 = vadd.f32 %v7147, %v7015
  %v7156 = vadd.f32 %v7148, %v7090
  %v7157 = vadd.f32 %v7149, %v7092
  %v7158 = vld [vmem:[%s12] sm:$0xff]
  %v7159 = vld [vmem:[%s12 + $0x8] sm:$0xff]
  %v7160 = vld [vmem:[%s13 + $0xc0] sm:$0xff]
  %v7161 = vld [vmem:[%s13 + $0xc8] sm:$0xff]
  %7163 = vset.pattern.permute.xlu0 0
  %7164 = vperm.xlu0 %7163, %v7160
  %v7165 = vpop.permute.xlu0 %7164
  %7168 = vset.pattern.permute.xlu0 0
  %7169 = vperm.xlu0 %7168, %v7161
  %v7170 = vpop.permute.xlu0 %7169
  %v7173 = vsel %vm3403, %v7158, 0
  %v7176 = vsel %vm3403, %v7159, 0
  %7178 = vmatprep.subr.mxu0 0.0
  %7179 = vmatpush1.msra.mxu0 0.0
  %7180 = vmatprep.subr.mxu0 0.0
  %7181 = vmatpush1.msra.mxu0 0.0
  %7182 = vmatprep.subr.mxu0 0.0
  %7183 = vmatpush1.msra.mxu0 0.0
  %7184 = vmatprep.subr.mxu0 0.0
  %7185 = vmatpush1.msra.mxu0 0.0
  %7186 = vmatprep.subr.mxu0 0.0
  %7187 = vmatpush1.msra.mxu0 0.0
  %7188 = vmatprep.subr.mxu0 0.0
  %7189 = vmatpush1.msra.mxu0 0.0
  %7190 = vmatprep.subr.mxu0 0.0
  %7191 = vmatpush1.msra.mxu0 0.0
  %7192 = vmatprep.subr.mxu0 0.0
  %7193 = vmatpush1.msra.mxu0 0.0
  %7194 = vmatprep.subr.mxu0 0.0
  %7195 = vmatpush1.msra.mxu0 0.0
  %7196 = vmatprep.subr.mxu0 0.0
  %7197 = vmatpush1.msra.mxu0 0.0
  %7198 = vmatprep.subr.mxu0 0.0
  %7199 = vmatpush1.msra.mxu0 0.0
  %7200 = vmatprep.subr.mxu0 0.0
  %7201 = vmatpush1.msra.mxu0 0.0
  %7202 = vmatprep.subr.mxu0 %v7155
  %7203 = vmatpush1.msra.mxu0 %v7154
  %7204 = vmatprep.subr.mxu0 %v7151
  %7205 = vmatpush1.msra.mxu0 %v7150
  %7206 = vmatprep.subr.mxu0 %v2275
  %7207 = vmatpush1.msra.mxu0 %v2274
  %7208 = vmatprep.subr.mxu0 %v2271
  %7209 = vmatpush1.msra.mxu0 %v2270
  %7210 = vmatprep.subr.mxu0 0.0
  %7211 = vmatpush2.msra.mxu0 0.0
  %7212 = vmatprep.subr.mxu0 0.0
  %7213 = vmatpush2.msra.mxu0 0.0
  %7214 = vmatprep.subr.mxu0 0.0
  %7215 = vmatpush2.msra.mxu0 0.0
  %7216 = vmatprep.subr.mxu0 0.0
  %7217 = vmatpush2.msra.mxu0 0.0
  %7218 = vmatprep.subr.mxu0 0.0
  %7219 = vmatpush2.msra.mxu0 0.0
  %7220 = vmatprep.subr.mxu0 0.0
  %7221 = vmatpush2.msra.mxu0 0.0
  %7222 = vmatprep.subr.mxu0 0.0
  %7223 = vmatpush2.msra.mxu0 0.0
  %7224 = vmatprep.subr.mxu0 0.0
  %7225 = vmatpush2.msra.mxu0 0.0
  %7226 = vmatprep.subr.mxu0 0.0
  %7227 = vmatpush2.msra.mxu0 0.0
  %7228 = vmatprep.subr.mxu0 0.0
  %7229 = vmatpush2.msra.mxu0 0.0
  %7230 = vmatprep.subr.mxu0 0.0
  %7231 = vmatpush2.msra.mxu0 0.0
  %7232 = vmatprep.subr.mxu0 0.0
  %7233 = vmatpush2.msra.mxu0 0.0
  %7234 = vmatprep.subr.mxu0 0.0
  %7235 = vmatpush2.msra.mxu0 0.0
  %7236 = vmatprep.subr.mxu0 0.0
  %7237 = vmatpush2.msra.mxu0 0.0
  %7238 = vmatprep.subr.mxu0 0.0
  %7239 = vmatpush2.msra.mxu0 0.0
  %7240 = vmatprep.subr.mxu0 0.0
  %7241 = vmatpush2.msra.mxu0 0.0
  %7242 = vmatprep.mubr.f32.mxu0 0.0
  %7243 = vmatmul.mubr.f32.gmra.mxu0 %v7173
  %v7244 = vpop.f32.mrf.mxu0
  %v7245 = vadd.f32 %v7165, %v7244
  %v7246 = vpop.f32.mrf.mxu0
  %v7247 = vadd.f32 %v7165, %v7246
  %7248 = vmatprep.mubr.f32.mxu0 0.0
  %7249 = vmatmul.mubr.f32.gmra.mxu0 %v7176
  %v7250 = vpop.f32.mrf.mxu0
  %v7251 = vadd.f32 %v7170, %v7250
  %v7252 = vpop.f32.mrf.mxu0
  %v7253 = vadd.f32 %v7170, %v7252
  %7254 = vdwg.mxu0
  %7255 = vmatprep.subr.mxu0 0.0
  %7256 = vmatpush1.msra.mxu0 0.0
  %7257 = vmatprep.subr.mxu0 0.0
  %7258 = vmatpush1.msra.mxu0 0.0
  %7259 = vmatprep.subr.mxu0 0.0
  %7260 = vmatpush1.msra.mxu0 0.0
  %7261 = vmatprep.subr.mxu0 0.0
  %7262 = vmatpush1.msra.mxu0 0.0
  %7263 = vmatprep.subr.mxu0 0.0
  %7264 = vmatpush1.msra.mxu0 0.0
  %7265 = vmatprep.subr.mxu0 0.0
  %7266 = vmatpush1.msra.mxu0 0.0
  %7267 = vmatprep.subr.mxu0 0.0
  %7268 = vmatpush1.msra.mxu0 0.0
  %7269 = vmatprep.subr.mxu0 0.0
  %7270 = vmatpush1.msra.mxu0 0.0
  %7271 = vmatprep.subr.mxu0 0.0
  %7272 = vmatpush1.msra.mxu0 0.0
  %7273 = vmatprep.subr.mxu0 0.0
  %7274 = vmatpush1.msra.mxu0 0.0
  %7275 = vmatprep.subr.mxu0 0.0
  %7276 = vmatpush1.msra.mxu0 0.0
  %7277 = vmatprep.subr.mxu0 0.0
  %7278 = vmatpush1.msra.mxu0 0.0
  %7279 = vmatprep.subr.mxu0 %v7157
  %7280 = vmatpush1.msra.mxu0 %v7156
  %7281 = vmatprep.subr.mxu0 %v7153
  %7282 = vmatpush1.msra.mxu0 %v7152
  %7283 = vmatprep.subr.mxu0 %v2277
  %7284 = vmatpush1.msra.mxu0 %v2276
  %7285 = vmatprep.subr.mxu0 %v2273
  %7286 = vmatpush1.msra.mxu0 %v2272
  %7287 = vmatprep.subr.mxu0 0.0
  %7288 = vmatpush2.msra.mxu0 0.0
  %7289 = vmatprep.subr.mxu0 0.0
  %7290 = vmatpush2.msra.mxu0 0.0
  %7291 = vmatprep.subr.mxu0 0.0
  %7292 = vmatpush2.msra.mxu0 0.0
  %7293 = vmatprep.subr.mxu0 0.0
  %7294 = vmatpush2.msra.mxu0 0.0
  %7295 = vmatprep.subr.mxu0 0.0
  %7296 = vmatpush2.msra.mxu0 0.0
  %7297 = vmatprep.subr.mxu0 0.0
  %7298 = vmatpush2.msra.mxu0 0.0
  %7299 = vmatprep.subr.mxu0 0.0
  %7300 = vmatpush2.msra.mxu0 0.0
  %7301 = vmatprep.subr.mxu0 0.0
  %7302 = vmatpush2.msra.mxu0 0.0
  %7303 = vmatprep.subr.mxu0 0.0
  %7304 = vmatpush2.msra.mxu0 0.0
  %7305 = vmatprep.subr.mxu0 0.0
  %7306 = vmatpush2.msra.mxu0 0.0
  %7307 = vmatprep.subr.mxu0 0.0
  %7308 = vmatpush2.msra.mxu0 0.0
  %7309 = vmatprep.subr.mxu0 0.0
  %7310 = vmatpush2.msra.mxu0 0.0
  %7311 = vmatprep.subr.mxu0 0.0
  %7312 = vmatpush2.msra.mxu0 0.0
  %7313 = vmatprep.subr.mxu0 0.0
  %7314 = vmatpush2.msra.mxu0 0.0
  %7315 = vmatprep.subr.mxu0 0.0
  %7316 = vmatpush2.msra.mxu0 0.0
  %7317 = vmatprep.subr.mxu0 0.0
  %7318 = vmatpush2.msra.mxu0 0.0
  %7319 = vmatprep.mubr.f32.mxu0 0.0
  %7320 = vmatmul.mubr.f32.gmra.mxu0 %v7173
  %v7321 = vpop.f32.mrf.mxu0
  %v7322 = vadd.f32 %v7165, %v7321
  %v7323 = vpop.f32.mrf.mxu0
  %v7324 = vadd.f32 %v7165, %v7323
  %7325 = vmatprep.mubr.f32.mxu0 0.0
  %7326 = vmatmul.mubr.f32.gmra.mxu0 %v7176
  %v7327 = vpop.f32.mrf.mxu0
  %v7328 = vadd.f32 %v7170, %v7327
  %v7329 = vpop.f32.mrf.mxu0
  %v7330 = vadd.f32 %v7170, %v7329
  %7331 = vdwg.mxu0
  %vm7332 = vcmp.ge.f32.partialorder %v7245, 0.0
  %vm7333 = vcmp.ge.f32.partialorder %v7247, 0.0
  %vm7334 = vcmp.ge.f32.partialorder %v7322, 0.0
  %vm7335 = vcmp.ge.f32.partialorder %v7324, 0.0
  %vm7336 = vcmp.ge.f32.partialorder %v7251, 0.0
  %vm7337 = vcmp.ge.f32.partialorder %v7253, 0.0
  %vm7338 = vcmp.ge.f32.partialorder %v7328, 0.0
  %vm7339 = vcmp.ge.f32.partialorder %v7330, 0.0
  %v7340 = vmul.f32 %v7245, 0.1
  %v7341 = vmul.f32 %v7247, 0.1
  %v7342 = vmul.f32 %v7322, 0.1
  %v7343 = vmul.f32 %v7324, 0.1
  %v7344 = vmul.f32 %v7251, 0.1
  %v7345 = vmul.f32 %v7253, 0.1
  %v7346 = vmul.f32 %v7328, 0.1
  %v7347 = vmul.f32 %v7330, 0.1
  %v7348 = vsel %vm7332, %v7245, %v7340
  %v7349 = vsel %vm7333, %v7247, %v7341
  %v7350 = vsel %vm7334, %v7322, %v7342
  %v7351 = vsel %vm7335, %v7324, %v7343
  %v7352 = vsel %vm7336, %v7251, %v7344
  %v7353 = vsel %vm7337, %v7253, %v7345
  %v7354 = vsel %vm7338, %v7328, %v7346
  %v7355 = vsel %vm7339, %v7330, %v7347
  %7356 = vst [vmem:[%s21] sm:$0xff] %v7348
  %7357 = vst [vmem:[%s21 + $0x8] sm:$0xff] %v7349
  %7358 = vst [vmem:[%s21 + $0x10] sm:$0xff] %v7350
  %7359 = vst [vmem:[%s21 + $0x18] sm:$0xff] %v7351
  %7360 = vst [vmem:[%s21 + $0x20] sm:$0xff] %v7352
  %7361 = vst [vmem:[%s21 + $0x28] sm:$0xff] %v7353
  %7362 = vst [vmem:[%s21 + $0x30] sm:$0xff] %v7354
  %7363 = vst [vmem:[%s21 + $0x38] sm:$0xff] %v7355
  // Predicated region
  $region86: #{fea_tfusion_forward.1} parent=0 // pred_check
    _
  $region87: #{fea_tfusion_forward.1} parent=0 // pred_check_branch
    %7365 = sbr.rel (0) target = $region89
  $region88: #{fea_tfusion_forward.1} parent=0 // pred_region
    _
  $region89: #{fea_tfusion_forward.1} parent=0 // pred_fallthru
    _
  // Predicated region
  $region90: #{fea_tfusion_forward.1} parent=0 // pred_check
    _
  $region91: #{fea_tfusion_forward.1} parent=0 // pred_check_branch
    %7367 = sbr.rel (0) target = $region93
  $region92: #{fea_tfusion_forward.1} parent=0 // pred_region
    _
  $region93: #{fea_tfusion_forward.1} parent=0 // pred_fallthru
    _

</llo_original>
